<compile_context>
chip_gen: v5e
topology: v5e:2x2
jax: 0.10.0
libtpu: 0.0.40
codegen_flags: <defaults>
</compile_context>

<pallas_src>
import jax
import jax.numpy as jnp
from jax.experimental import pallas as pl
from jax.experimental.pallas import tpu as pltpu

EPS = 1e-5


def convblock_kernel(xp_ref, w1_ref, g1_ref, bt1_ref, w2_ref, g2_ref, bt2_ref,
                     out_ref):
    """Fused (conv3x3 -> BN(batch stats) -> ReLU) x 2.

    xp_ref : (N, H+4, Wg+2, Cin)  input zero-padded by 2 (right-padded so that
                                  the padded output grid width Wg is a multiple of 8)
    w1_ref : (9*Cin,  Cout)       conv1 weight, im2col layout (kh, kw, cin)-major
    w2_ref : (9*Cout, Cout)       conv2 weight, im2col layout
    g1/bt1 : (1, Cout)            BN1 gamma / beta
    g2/bt2 : (Cout, 1)            BN2 gamma / beta (column form for the transposed store)
    out_ref: (Cout, N*H*W)        lane-dense output (channel-major, row = n*H*W + h*W + w)
    """
    N, Hin, Win, Cin = xp_ref.shape
    Cout, M = out_ref.shape
    Hg = Hin - 2                 # padded output-grid height = H + 2
    Wg = Win - 2                 # padded output-grid width  (multiple of 8)
    H = Hg - 2
    W = M // (N * H)
    Mg = N * Hg * Wg
    inv_m = 1.0 / M              # BN divisor: only the N*H*W interior positions count

    xp = xp_ref[...]

    # ---------------- stage 1: conv1 as one im2col matmul (padded grid) ----------------
    cols = []
    for kh in range(3):
        for kw in range(3):
            cols.append(xp[:, kh:kh + Hg, kw:kw + Wg, :].reshape(Mg, Cin))
    patches1 = jnp.concatenate(cols, axis=1)                       # (Mg, 9*Cin)
    acc1 = jnp.dot(patches1, w1_ref[...],
                   preferred_element_type=jnp.float32)             # (Mg, Cout)

    # interior mask on the padded grid (1-pixel border + right overhang are invalid)
    r = jax.lax.broadcasted_iota(jnp.int32, (N, Hg, Wg, Cout), 1).reshape(Mg, Cout)
    c = jax.lax.broadcasted_iota(jnp.int32, (N, Hg, Wg, Cout), 2).reshape(Mg, Cout)
    valid = (r >= 1) & (r <= H) & (c >= 1) & (c <= W)

    # single-pass BN stats over the valid positions (conv bias omitted: it is
    # cancelled exactly by the batch-mean subtraction), folded into scale/shift.
    acc1m = jnp.where(valid, acc1, 0.0)
    s1 = jnp.sum(acc1m, axis=0, keepdims=True)                     # (1, Cout)
    ss1 = jnp.sum(acc1m * acc1, axis=0, keepdims=True)             # sum of x^2 on interior
    mean1 = s1 * inv_m
    var1 = jnp.maximum(ss1 * inv_m - mean1 * mean1, 0.0)
    scale1 = g1_ref[...] * jax.lax.rsqrt(var1 + EPS)
    shift1 = bt1_ref[...] - mean1 * scale1
    # fused normalize+affine+ReLU; masking the border gives h1 zero-padded by 1
    h1p = jnp.where(valid, jnp.maximum(acc1 * scale1 + shift1, 0.0), 0.0)
    h1p = h1p.reshape(N, Hg, Wg, Cout)

    # ---------------- stage 2: conv2 as one im2col matmul ----------------
    cols2 = []
    for kh in range(3):
        for kw in range(3):
            cols2.append(h1p[:, kh:kh + H, kw:kw + W, :].reshape(M, Cout))
    patches2 = jnp.concatenate(cols2, axis=1)                      # (M, 9*Cout)
    acc2 = jnp.dot(patches2, w2_ref[...],
                   preferred_element_type=jnp.float32)             # (M, Cout)

    # transpose so the lane axis is M (dense, multiple of 128 at these shapes)
    acc2t = acc2.T                                                 # (Cout, M)
    s2 = jnp.sum(acc2t, axis=1, keepdims=True)                     # (Cout, 1)
    ss2 = jnp.sum(acc2t * acc2t, axis=1, keepdims=True)
    mean2 = s2 * inv_m
    var2 = jnp.maximum(ss2 * inv_m - mean2 * mean2, 0.0)
    scale2 = g2_ref[...] * jax.lax.rsqrt(var2 + EPS)
    shift2 = bt2_ref[...] - mean2 * scale2
    out_ref[...] = jnp.maximum(acc2t * scale2 + shift2, 0.0).astype(out_ref.dtype)


def conv_block(x_nchw, params):
    """Wrapper: NCHW in -> NCHW out, matching PyTorch ConvBlock.forward."""
    N, Cin, H, W = x_nchw.shape
    Cout = params["w1"].shape[-1]
    M = N * H * W

    x = jnp.transpose(x_nchw, (0, 2, 3, 1)).astype(jnp.float32)    # -> NHWC
    # padded output-grid width rounded up to a multiple of 8 (tile-aligned reshapes)
    Wg = ((W + 2 + 7) // 8) * 8
    pad_r = Wg + 2 - 2 - W
    xp = jnp.pad(x, ((0, 0), (2, 2), (2, pad_r), (0, 0)))          # (N, H+4, Wg+2, Cin)

    w1 = params["w1"].reshape(9 * Cin, Cout)                       # im2col weight layout
    w2 = params["w2"].reshape(9 * Cout, Cout)
    g1, bt1 = params["g1"], params["bt1"]                          # (1, Cout)
    g2 = params["g2"].reshape(Cout, 1)                             # column form
    bt2 = params["bt2"].reshape(Cout, 1)
    # note: params["b1"]/["b2"] (conv biases) are intentionally NOT passed — a
    # per-channel bias is cancelled exactly by training-mode BatchNorm.

    vmem = pl.BlockSpec(memory_space=pltpu.MemorySpace.VMEM)
    out = pl.pallas_call(
        convblock_kernel,
        out_shape=jax.ShapeDtypeStruct((Cout, M), jnp.float32),
        in_specs=[vmem] * 7,
        out_specs=vmem,
    )(xp, w1, g1, bt1, w2, g2, bt2)

    # (Cout, N*H*W) -> (N, Cout, H, W)
    return jnp.transpose(out.reshape(Cout, N, H, W), (1, 0, 2, 3))


def ref_conv_block(x_nchw, params):
    """Pure-JAX reference (same semantics, includes the conv biases)."""
    def conv(x, w, b):
        y = jax.lax.conv_general_dilated(
            x, w, window_strides=(1, 1), padding="SAME",
            dimension_numbers=("NHWC", "HWIO", "NHWC"))
        return y + b

    def bn_relu(y, g, bt):
        mean = jnp.mean(y, axis=(0, 1, 2), keepdims=True)
        var = jnp.mean((y - mean) ** 2, axis=(0, 1, 2), keepdims=True)
        return jnp.maximum((y - mean) * jax.lax.rsqrt(var + EPS) * g + bt, 0.0)

    x = jnp.transpose(x_nchw, (0, 2, 3, 1)).astype(jnp.float32)
    h = bn_relu(conv(x, params["w1"], params["b1"]), params["g1"], params["bt1"])
    h = bn_relu(conv(h, params["w2"], params["b2"]), params["g2"], params["bt2"])
    return jnp.transpose(h, (0, 3, 1, 2))


def init_params(key, cin, cout):
    ks = jax.random.split(key, 8)
    scale1 = 1.0 / jnp.sqrt(cin * 9.0)
    scale2 = 1.0 / jnp.sqrt(cout * 9.0)
    return {
        "w1": jax.random.normal(ks[0], (3, 3, cin, cout), jnp.float32) * scale1,
        "b1": jax.random.normal(ks[1], (1, cout), jnp.float32) * 0.1,
        "g1": 1.0 + 0.1 * jax.random.normal(ks[2], (1, cout), jnp.float32),
        "bt1": 0.1 * jax.random.normal(ks[3], (1, cout), jnp.float32),
        "w2": jax.random.normal(ks[4], (3, 3, cout, cout), jnp.float32) * scale2,
        "b2": jax.random.normal(ks[5], (1, cout), jnp.float32) * 0.1,
        "g2": 1.0 + 0.1 * jax.random.normal(ks[6], (1, cout), jnp.float32),
        "bt2": 0.1 * jax.random.normal(ks[7], (1, cout), jnp.float32),
    }


if __name__ == "__main__":
    key = jax.random.PRNGKey(0)
    kx, kp = jax.random.split(key)

    N, Cin, Cout, H, W = 2, 4, 8, 16, 16
    x = jax.random.normal(kx, (N, Cin, H, W), jnp.float32)   # NCHW like PyTorch
    params = init_params(kp, Cin, Cout)

    out = jax.block_until_ready(conv_block(x, params))
    ref = jax.block_until_ready(ref_conv_block(x, params))

    assert out.shape == (N, Cout, H, W), out.shape
    assert jnp.allclose(out, ref, atol=1e-4, rtol=1e-4), \
        float(jnp.max(jnp.abs(out - ref)))
    print("KERNEL_OK")
</pallas_src>

<mosaic_0001>
module attributes {stable_mosaic.version = 11 : i64} {
  func.func @convblock_kernel(%arg0: memref<2x20x26x4xf32, #tpu.memory_space<vmem>>, %arg1: memref<36x8xf32, #tpu.memory_space<vmem>>, %arg2: memref<1x8xf32, #tpu.memory_space<vmem>>, %arg3: memref<1x8xf32, #tpu.memory_space<vmem>>, %arg4: memref<72x8xf32, #tpu.memory_space<vmem>>, %arg5: memref<8x1xf32, #tpu.memory_space<vmem>>, %arg6: memref<8x1xf32, #tpu.memory_space<vmem>>, %arg7: memref<8x512xf32, #tpu.memory_space<vmem>>) attributes {dimension_semantics = [], scalar_prefetch = 0 : i64, scratch_operands = 0 : i64, tpu.core_type = #tpu.core_type<tc>} {
    %c0 = arith.constant 0 : index
    %c0_0 = arith.constant 0 : index
    %c0_1 = arith.constant 0 : index
    %c0_2 = arith.constant 0 : index
    %0 = vector.load %arg0[%c0, %c0_0, %c0_1, %c0_2] : memref<2x20x26x4xf32, #tpu.memory_space<vmem>>, vector<2x20x26x4xf32>
    %1 = vector.extract_strided_slice %0 {offsets = [0, 0, 0, 0], sizes = [2, 18, 24, 4], strides = [1, 1, 1, 1]} : vector<2x20x26x4xf32> to vector<2x18x24x4xf32>
    %2 = vector.shape_cast %1 : vector<2x18x24x4xf32> to vector<864x4xf32>
    %3 = vector.extract_strided_slice %0 {offsets = [0, 0, 1, 0], sizes = [2, 18, 24, 4], strides = [1, 1, 1, 1]} : vector<2x20x26x4xf32> to vector<2x18x24x4xf32>
    %4 = vector.shape_cast %3 : vector<2x18x24x4xf32> to vector<864x4xf32>
    %5 = vector.extract_strided_slice %0 {offsets = [0, 0, 2, 0], sizes = [2, 18, 24, 4], strides = [1, 1, 1, 1]} : vector<2x20x26x4xf32> to vector<2x18x24x4xf32>
    %6 = vector.shape_cast %5 : vector<2x18x24x4xf32> to vector<864x4xf32>
    %7 = vector.extract_strided_slice %0 {offsets = [0, 1, 0, 0], sizes = [2, 18, 24, 4], strides = [1, 1, 1, 1]} : vector<2x20x26x4xf32> to vector<2x18x24x4xf32>
    %8 = vector.shape_cast %7 : vector<2x18x24x4xf32> to vector<864x4xf32>
    %9 = vector.extract_strided_slice %0 {offsets = [0, 1, 1, 0], sizes = [2, 18, 24, 4], strides = [1, 1, 1, 1]} : vector<2x20x26x4xf32> to vector<2x18x24x4xf32>
    %10 = vector.shape_cast %9 : vector<2x18x24x4xf32> to vector<864x4xf32>
    %11 = vector.extract_strided_slice %0 {offsets = [0, 1, 2, 0], sizes = [2, 18, 24, 4], strides = [1, 1, 1, 1]} : vector<2x20x26x4xf32> to vector<2x18x24x4xf32>
    %12 = vector.shape_cast %11 : vector<2x18x24x4xf32> to vector<864x4xf32>
    %13 = vector.extract_strided_slice %0 {offsets = [0, 2, 0, 0], sizes = [2, 18, 24, 4], strides = [1, 1, 1, 1]} : vector<2x20x26x4xf32> to vector<2x18x24x4xf32>
    %14 = vector.shape_cast %13 : vector<2x18x24x4xf32> to vector<864x4xf32>
    %15 = vector.extract_strided_slice %0 {offsets = [0, 2, 1, 0], sizes = [2, 18, 24, 4], strides = [1, 1, 1, 1]} : vector<2x20x26x4xf32> to vector<2x18x24x4xf32>
    %16 = vector.shape_cast %15 : vector<2x18x24x4xf32> to vector<864x4xf32>
    %17 = vector.extract_strided_slice %0 {offsets = [0, 2, 2, 0], sizes = [2, 18, 24, 4], strides = [1, 1, 1, 1]} : vector<2x20x26x4xf32> to vector<2x18x24x4xf32>
    %18 = vector.shape_cast %17 : vector<2x18x24x4xf32> to vector<864x4xf32>
    %19 = tpu.concatenate %2, %4, %6, %8, %10, %12, %14, %16, %18 in 1 : vector<864x4xf32>, vector<864x4xf32>, vector<864x4xf32>, vector<864x4xf32>, vector<864x4xf32>, vector<864x4xf32>, vector<864x4xf32>, vector<864x4xf32>, vector<864x4xf32> -> vector<864x36xf32>
    %c0_3 = arith.constant 0 : index
    %c0_4 = arith.constant 0 : index
    %20 = vector.load %arg1[%c0_3, %c0_4] : memref<36x8xf32, #tpu.memory_space<vmem>>, vector<36x8xf32>
    %cst = arith.constant dense<0.000000e+00> : vector<864x8xf32>
    %21 = tpu.matmul %19, %20, %cst {dimension_numbers = #tpu.dot_dimension_numbers<[1], [0], [0], [1], [0, 0, 1, 1], [], []>} : vector<864x36xf32>, vector<36x8xf32>, vector<864x8xf32> -> vector<864x8xf32>
    %22 = tpu.iota {dimensions = array<i32: 1>} : vector<2x18x24x8xi32>
    %23 = vector.shape_cast %22 : vector<2x18x24x8xi32> to vector<864x8xi32>
    %24 = tpu.iota {dimensions = array<i32: 2>} : vector<2x18x24x8xi32>
    %25 = vector.shape_cast %24 : vector<2x18x24x8xi32> to vector<864x8xi32>
    %c1_i32 = arith.constant 1 : i32
    %26 = vector.broadcast %c1_i32 : i32 to vector<864x8xi32>
    %27 = arith.cmpi sge, %23, %26 : vector<864x8xi32>
    %c16_i32 = arith.constant 16 : i32
    %28 = vector.broadcast %c16_i32 : i32 to vector<864x8xi32>
    %29 = arith.cmpi sle, %23, %28 : vector<864x8xi32>
    %30 = arith.andi %27, %29 : vector<864x8xi1>
    %c1_i32_5 = arith.constant 1 : i32
    %31 = vector.broadcast %c1_i32_5 : i32 to vector<864x8xi32>
    %32 = arith.cmpi sge, %25, %31 : vector<864x8xi32>
    %33 = arith.andi %30, %32 : vector<864x8xi1>
    %c16_i32_6 = arith.constant 16 : i32
    %34 = vector.broadcast %c16_i32_6 : i32 to vector<864x8xi32>
    %35 = arith.cmpi sle, %25, %34 : vector<864x8xi32>
    %36 = arith.andi %33, %35 : vector<864x8xi1>
    %cst_7 = arith.constant 0.000000e+00 : f32
    %37 = vector.broadcast %cst_7 : f32 to vector<864x8xf32>
    %38 = arith.select %36, %21, %37 : vector<864x8xi1>, vector<864x8xf32>
    %cst_8 = arith.constant dense<0.000000e+00> : vector<8xf32>
    %39 = vector.multi_reduction <add>, %38, %cst_8 [0] : vector<864x8xf32> to vector<8xf32>
    %40 = vector.shape_cast %39 : vector<8xf32> to vector<1x8xf32>
    %41 = arith.mulf %38, %21 : vector<864x8xf32>
    %cst_9 = arith.constant dense<0.000000e+00> : vector<8xf32>
    %42 = vector.multi_reduction <add>, %41, %cst_9 [0] : vector<864x8xf32> to vector<8xf32>
    %43 = vector.shape_cast %42 : vector<8xf32> to vector<1x8xf32>
    %cst_10 = arith.constant 0.001953125 : f32
    %44 = vector.broadcast %cst_10 : f32 to vector<1x8xf32>
    %45 = arith.mulf %40, %44 : vector<1x8xf32>
    %cst_11 = arith.constant 0.001953125 : f32
    %46 = vector.broadcast %cst_11 : f32 to vector<1x8xf32>
    %47 = arith.mulf %43, %46 : vector<1x8xf32>
    %48 = arith.mulf %45, %45 : vector<1x8xf32>
    %49 = arith.subf %47, %48 : vector<1x8xf32>
    %cst_12 = arith.constant 0.000000e+00 : f32
    %50 = vector.broadcast %cst_12 : f32 to vector<1x8xf32>
    %51 = arith.maximumf %49, %50 : vector<1x8xf32>
    %c0_13 = arith.constant 0 : index
    %c0_14 = arith.constant 0 : index
    %52 = vector.load %arg2[%c0_13, %c0_14] : memref<1x8xf32, #tpu.memory_space<vmem>>, vector<1x8xf32>
    %cst_15 = arith.constant 9.99999974E-6 : f32
    %53 = vector.broadcast %cst_15 : f32 to vector<1x8xf32>
    %54 = arith.addf %51, %53 : vector<1x8xf32>
    %55 = math.rsqrt %54 : vector<1x8xf32>
    %56 = arith.mulf %52, %55 : vector<1x8xf32>
    %c0_16 = arith.constant 0 : index
    %c0_17 = arith.constant 0 : index
    %57 = vector.load %arg3[%c0_16, %c0_17] : memref<1x8xf32, #tpu.memory_space<vmem>>, vector<1x8xf32>
    %58 = arith.mulf %45, %56 : vector<1x8xf32>
    %59 = arith.subf %57, %58 : vector<1x8xf32>
    %60 = vector.broadcast %56 : vector<1x8xf32> to vector<864x8xf32>
    %61 = arith.mulf %21, %60 : vector<864x8xf32>
    %62 = vector.broadcast %59 : vector<1x8xf32> to vector<864x8xf32>
    %63 = arith.addf %61, %62 : vector<864x8xf32>
    %cst_18 = arith.constant 0.000000e+00 : f32
    %64 = vector.broadcast %cst_18 : f32 to vector<864x8xf32>
    %65 = arith.maximumf %63, %64 : vector<864x8xf32>
    %cst_19 = arith.constant 0.000000e+00 : f32
    %66 = vector.broadcast %cst_19 : f32 to vector<864x8xf32>
    %67 = arith.select %36, %65, %66 : vector<864x8xi1>, vector<864x8xf32>
    %68 = vector.shape_cast %67 : vector<864x8xf32> to vector<2x18x24x8xf32>
    %69 = vector.extract_strided_slice %68 {offsets = [0, 0, 0, 0], sizes = [2, 16, 16, 8], strides = [1, 1, 1, 1]} : vector<2x18x24x8xf32> to vector<2x16x16x8xf32>
    %70 = vector.shape_cast %69 : vector<2x16x16x8xf32> to vector<512x8xf32>
    %71 = vector.extract_strided_slice %68 {offsets = [0, 0, 1, 0], sizes = [2, 16, 16, 8], strides = [1, 1, 1, 1]} : vector<2x18x24x8xf32> to vector<2x16x16x8xf32>
    %72 = vector.shape_cast %71 : vector<2x16x16x8xf32> to vector<512x8xf32>
    %73 = vector.extract_strided_slice %68 {offsets = [0, 0, 2, 0], sizes = [2, 16, 16, 8], strides = [1, 1, 1, 1]} : vector<2x18x24x8xf32> to vector<2x16x16x8xf32>
    %74 = vector.shape_cast %73 : vector<2x16x16x8xf32> to vector<512x8xf32>
    %75 = vector.extract_strided_slice %68 {offsets = [0, 1, 0, 0], sizes = [2, 16, 16, 8], strides = [1, 1, 1, 1]} : vector<2x18x24x8xf32> to vector<2x16x16x8xf32>
    %76 = vector.shape_cast %75 : vector<2x16x16x8xf32> to vector<512x8xf32>
    %77 = vector.extract_strided_slice %68 {offsets = [0, 1, 1, 0], sizes = [2, 16, 16, 8], strides = [1, 1, 1, 1]} : vector<2x18x24x8xf32> to vector<2x16x16x8xf32>
    %78 = vector.shape_cast %77 : vector<2x16x16x8xf32> to vector<512x8xf32>
    %79 = vector.extract_strided_slice %68 {offsets = [0, 1, 2, 0], sizes = [2, 16, 16, 8], strides = [1, 1, 1, 1]} : vector<2x18x24x8xf32> to vector<2x16x16x8xf32>
    %80 = vector.shape_cast %79 : vector<2x16x16x8xf32> to vector<512x8xf32>
    %81 = vector.extract_strided_slice %68 {offsets = [0, 2, 0, 0], sizes = [2, 16, 16, 8], strides = [1, 1, 1, 1]} : vector<2x18x24x8xf32> to vector<2x16x16x8xf32>
    %82 = vector.shape_cast %81 : vector<2x16x16x8xf32> to vector<512x8xf32>
    %83 = vector.extract_strided_slice %68 {offsets = [0, 2, 1, 0], sizes = [2, 16, 16, 8], strides = [1, 1, 1, 1]} : vector<2x18x24x8xf32> to vector<2x16x16x8xf32>
    %84 = vector.shape_cast %83 : vector<2x16x16x8xf32> to vector<512x8xf32>
    %85 = vector.extract_strided_slice %68 {offsets = [0, 2, 2, 0], sizes = [2, 16, 16, 8], strides = [1, 1, 1, 1]} : vector<2x18x24x8xf32> to vector<2x16x16x8xf32>
    %86 = vector.shape_cast %85 : vector<2x16x16x8xf32> to vector<512x8xf32>
    %87 = tpu.concatenate %70, %72, %74, %76, %78, %80, %82, %84, %86 in 1 : vector<512x8xf32>, vector<512x8xf32>, vector<512x8xf32>, vector<512x8xf32>, vector<512x8xf32>, vector<512x8xf32>, vector<512x8xf32>, vector<512x8xf32>, vector<512x8xf32> -> vector<512x72xf32>
    %c0_20 = arith.constant 0 : index
    %c0_21 = arith.constant 0 : index
    %88 = vector.load %arg4[%c0_20, %c0_21] : memref<72x8xf32, #tpu.memory_space<vmem>>, vector<72x8xf32>
    %cst_22 = arith.constant dense<0.000000e+00> : vector<512x8xf32>
    %89 = tpu.matmul %87, %88, %cst_22 {dimension_numbers = #tpu.dot_dimension_numbers<[1], [0], [0], [1], [0, 0, 1, 1], [], []>} : vector<512x72xf32>, vector<72x8xf32>, vector<512x8xf32> -> vector<512x8xf32>
    %90 = tpu.transpose %89, [1, 0] : vector<512x8xf32> -> vector<8x512xf32>
    %cst_23 = arith.constant dense<0.000000e+00> : vector<8xf32>
    %91 = vector.multi_reduction <add>, %90, %cst_23 [1] : vector<8x512xf32> to vector<8xf32>
    %92 = vector.shape_cast %91 : vector<8xf32> to vector<8x1xf32>
    %93 = arith.mulf %90, %90 : vector<8x512xf32>
    %cst_24 = arith.constant dense<0.000000e+00> : vector<8xf32>
    %94 = vector.multi_reduction <add>, %93, %cst_24 [1] : vector<8x512xf32> to vector<8xf32>
    %95 = vector.shape_cast %94 : vector<8xf32> to vector<8x1xf32>
    %cst_25 = arith.constant 0.001953125 : f32
    %96 = vector.broadcast %cst_25 : f32 to vector<8x1xf32>
    %97 = arith.mulf %92, %96 : vector<8x1xf32>
    %cst_26 = arith.constant 0.001953125 : f32
    %98 = vector.broadcast %cst_26 : f32 to vector<8x1xf32>
    %99 = arith.mulf %95, %98 : vector<8x1xf32>
    %100 = arith.mulf %97, %97 : vector<8x1xf32>
    %101 = arith.subf %99, %100 : vector<8x1xf32>
    %cst_27 = arith.constant 0.000000e+00 : f32
    %102 = vector.broadcast %cst_27 : f32 to vector<8x1xf32>
    %103 = arith.maximumf %101, %102 : vector<8x1xf32>
    %c0_28 = arith.constant 0 : index
    %c0_29 = arith.constant 0 : index
    %104 = vector.load %arg5[%c0_28, %c0_29] : memref<8x1xf32, #tpu.memory_space<vmem>>, vector<8x1xf32>
    %cst_30 = arith.constant 9.99999974E-6 : f32
    %105 = vector.broadcast %cst_30 : f32 to vector<8x1xf32>
    %106 = arith.addf %103, %105 : vector<8x1xf32>
    %107 = math.rsqrt %106 : vector<8x1xf32>
    %108 = arith.mulf %104, %107 : vector<8x1xf32>
    %c0_31 = arith.constant 0 : index
    %c0_32 = arith.constant 0 : index
    %109 = vector.load %arg6[%c0_31, %c0_32] : memref<8x1xf32, #tpu.memory_space<vmem>>, vector<8x1xf32>
    %110 = arith.mulf %97, %108 : vector<8x1xf32>
    %111 = arith.subf %109, %110 : vector<8x1xf32>
    %112 = vector.broadcast %108 : vector<8x1xf32> to vector<8x512xf32>
    %113 = arith.mulf %90, %112 : vector<8x512xf32>
    %114 = vector.broadcast %111 : vector<8x1xf32> to vector<8x512xf32>
    %115 = arith.addf %113, %114 : vector<8x512xf32>
    %cst_33 = arith.constant 0.000000e+00 : f32
    %116 = vector.broadcast %cst_33 : f32 to vector<8x512xf32>
    %117 = arith.maximumf %115, %116 : vector<8x512xf32>
    %c0_34 = arith.constant 0 : index
    %c0_35 = arith.constant 0 : index
    %118 = vector.load %arg7[%c0_34, %c0_35] : memref<8x512xf32, #tpu.memory_space<vmem>>, vector<8x512xf32>
    tpu.vector_store %arg7[%c0_34, %c0_35], %117 {strides = array<i32>} : memref<8x512xf32, #tpu.memory_space<vmem>>, vector<8x512xf32>,
    return
  }
}

</mosaic_0001>

<llo_original>
// kernel: tpu_custom_call.1
$region0: #{tpu_custom_call.1}
  #allocation0 [shape = 'u32[]', space=smem, size = 0x4, offset = 0x4, fixed_abs, tag = 'smem constant byte address 0x4 - core index']
  #allocation1 [shape = 'u32[72,128]{1,0:T(1,128)}', space=vmem, size = 0x9000, scoped, tag = 'internal scratch']
  %s0 = inlined_call_operand.vmem [shape: f32[2,20,26,4], index: 0, kind: input, shape index: {}]
  %s1 = inlined_call_operand.vmem [shape: f32[36,8], index: 1, kind: input, shape index: {}]
  %s2 = inlined_call_operand.vmem [shape: f32[1,8], index: 2, kind: input, shape index: {}]
  %s3 = inlined_call_operand.vmem [shape: f32[1,8], index: 3, kind: input, shape index: {}]
  %s4 = inlined_call_operand.vmem [shape: f32[72,8], index: 4, kind: input, shape index: {}]
  %s5 = inlined_call_operand.vmem [shape: f32[8,1], index: 5, kind: input, shape index: {}]
  %s6 = inlined_call_operand.vmem [shape: f32[8,1], index: 6, kind: input, shape index: {}]
  %s7 = inlined_call_operand.hbm [shape: f32[8,512], index: 7, kind: output, shape index: {}]
  %s8 = sld [smem:[#allocation0]]
  $region38: #{tpu_custom_call.1} parent=0
    _
  %s10 = ssub.s32 1, %s8
  %s11 = scalar_select 0, %s10, %s8
  $region1: #{tpu_custom_call.1} parent=0
    #allocation2 [shape = 'u8[16384]{0}', space=vmem, size = 0x4000, scoped, tag = 'output window, operand 0, single buffered']
    #allocation3 [shape = 's32[1]{0}', space=sflag, size = 0x4, scoped, tag = 'scoped memory for tpu_custom_call.1']
    %12 = vsyncpa [#allocation3], 0
    // Predicated region
    $region2: #{tpu_custom_call.1} parent=1 // pred_check
      _
    $region3: #{tpu_custom_call.1} parent=1 // pred_check_branch
      %14 = sbr.rel (0) target = $region5
    $region4: #{tpu_custom_call.1} parent=1 // pred_region
      _
    $region5: #{tpu_custom_call.1} parent=1 // pred_fallthru
      _
    // Predicated region
    $region6: #{tpu_custom_call.1} parent=1 // pred_check
      _
    $region7: #{tpu_custom_call.1} parent=1 // pred_check_branch
      %16 = sbr.rel (0) target = $region9
    $region8: #{tpu_custom_call.1} parent=1 // pred_region
      _
    $region9: #{tpu_custom_call.1} parent=1 // pred_fallthru
      _
    // Predicated region
    $region10: #{tpu_custom_call.1} parent=1 // pred_check
      _
    $region11: #{tpu_custom_call.1} parent=1 // pred_check_branch
      %18 = sbr.rel (0) target = $region13
    $region12: #{tpu_custom_call.1} parent=1 // pred_region
      _
    $region13: #{tpu_custom_call.1} parent=1 // pred_fallthru
      _
    // Predicated region
    $region14: #{tpu_custom_call.1} parent=1 // pred_check
      _
    $region15: #{tpu_custom_call.1} parent=1 // pred_check_branch
      %20 = sbr.rel (0) target = $region17
    $region16: #{tpu_custom_call.1} parent=1 // pred_region
      _
    $region17: #{tpu_custom_call.1} parent=1 // pred_fallthru
      _
    // Predicated region
    $region18: #{tpu_custom_call.1} parent=1 // pred_check
      _
    $region19: #{tpu_custom_call.1} parent=1 // pred_check_branch
      %22 = sbr.rel (0) target = $region21
    $region20: #{tpu_custom_call.1} parent=1 // pred_region
      _
    $region21: #{tpu_custom_call.1} parent=1 // pred_fallthru
      _
    // Predicated region
    $region22: #{tpu_custom_call.1} parent=1 // pred_check
      _
    $region23: #{tpu_custom_call.1} parent=1 // pred_check_branch
      %24 = sbr.rel (0) target = $region25
    $region24: #{tpu_custom_call.1} parent=1 // pred_region
      _
    $region25: #{tpu_custom_call.1} parent=1 // pred_fallthru
      _
    // Predicated region
    $region26: #{tpu_custom_call.1} parent=1 // pred_check
      _
    $region27: #{tpu_custom_call.1} parent=1 // pred_check_branch
      %26 = sbr.rel (0) target = $region29
    $region28: #{tpu_custom_call.1} parent=1 // pred_region
      _
    $region29: #{tpu_custom_call.1} parent=1 // pred_fallthru
      _
    %v27 = vld [vmem:[%s0] sm:$0xff]
    %v28 = vld [vmem:[%s0 + $0x8] sm:$0xff]
    %v29 = vld [vmem:[%s0 + $0x10] sm:$0xff]
    %v30 = vld [vmem:[%s0 + $0x18] sm:$0x3]
    %v31 = vld [vmem:[%s0 + $0x20] sm:$0xff]
    %v32 = vld [vmem:[%s0 + $0x28] sm:$0xff]
    %v33 = vld [vmem:[%s0 + $0x30] sm:$0xff]
    %v34 = vld [vmem:[%s0 + $0x38] sm:$0x3]
    %v35 = vld [vmem:[%s0 + $0x40] sm:$0xff]
    %v36 = vld [vmem:[%s0 + $0x48] sm:$0xff]
    %v37 = vld [vmem:[%s0 + $0x50] sm:$0xff]
    %v38 = vld [vmem:[%s0 + $0x58] sm:$0x3]
    %v39 = vld [vmem:[%s0 + $0x60] sm:$0xff]
    %v40 = vld [vmem:[%s0 + $0x68] sm:$0xff]
    %v41 = vld [vmem:[%s0 + $0x70] sm:$0xff]
    %v42 = vld [vmem:[%s0 + $0x78] sm:$0x3]
    %v43 = vld [vmem:[%s0 + $0x80] sm:$0xff]
    %v44 = vld [vmem:[%s0 + $0x88] sm:$0xff]
    %v45 = vld [vmem:[%s0 + $0x90] sm:$0xff]
    %v46 = vld [vmem:[%s0 + $0x98] sm:$0x3]
    %v47 = vld [vmem:[%s0 + $0xa0] sm:$0xff]
    %v48 = vld [vmem:[%s0 + $0xa8] sm:$0xff]
    %v49 = vld [vmem:[%s0 + $0xb0] sm:$0xff]
    %v50 = vld [vmem:[%s0 + $0xb8] sm:$0x3]
    %v51 = vld [vmem:[%s0 + $0xc0] sm:$0xff]
    %v52 = vld [vmem:[%s0 + $0xc8] sm:$0xff]
    %v53 = vld [vmem:[%s0 + $0xd0] sm:$0xff]
    %v54 = vld [vmem:[%s0 + $0xd8] sm:$0x3]
    %v55 = vld [vmem:[%s0 + $0xe0] sm:$0xff]
    %v56 = vld [vmem:[%s0 + $0xe8] sm:$0xff]
    %v57 = vld [vmem:[%s0 + $0xf0] sm:$0xff]
    %v58 = vld [vmem:[%s0 + $0xf8] sm:$0x3]
    %v59 = vld [vmem:[%s0 + $0x100] sm:$0xff]
    %v60 = vld [vmem:[%s0 + $0x108] sm:$0xff]
    %v61 = vld [vmem:[%s0 + $0x110] sm:$0xff]
    %v62 = vld [vmem:[%s0 + $0x118] sm:$0x3]
    %v63 = vld [vmem:[%s0 + $0x120] sm:$0xff]
    %v64 = vld [vmem:[%s0 + $0x128] sm:$0xff]
    %v65 = vld [vmem:[%s0 + $0x130] sm:$0xff]
    %v66 = vld [vmem:[%s0 + $0x138] sm:$0x3]
    %v67 = vld [vmem:[%s0 + $0x140] sm:$0xff]
    %v68 = vld [vmem:[%s0 + $0x148] sm:$0xff]
    %v69 = vld [vmem:[%s0 + $0x150] sm:$0xff]
    %v70 = vld [vmem:[%s0 + $0x158] sm:$0x3]
    %v71 = vld [vmem:[%s0 + $0x160] sm:$0xff]
    %v72 = vld [vmem:[%s0 + $0x168] sm:$0xff]
    %v73 = vld [vmem:[%s0 + $0x170] sm:$0xff]
    %v74 = vld [vmem:[%s0 + $0x178] sm:$0x3]
    %v75 = vld [vmem:[%s0 + $0x180] sm:$0xff]
    %v76 = vld [vmem:[%s0 + $0x188] sm:$0xff]
    %v77 = vld [vmem:[%s0 + $0x190] sm:$0xff]
    %v78 = vld [vmem:[%s0 + $0x198] sm:$0x3]
    %v79 = vld [vmem:[%s0 + $0x1a0] sm:$0xff]
    %v80 = vld [vmem:[%s0 + $0x1a8] sm:$0xff]
    %v81 = vld [vmem:[%s0 + $0x1b0] sm:$0xff]
    %v82 = vld [vmem:[%s0 + $0x1b8] sm:$0x3]
    %v83 = vld [vmem:[%s0 + $0x1c0] sm:$0xff]
    %v84 = vld [vmem:[%s0 + $0x1c8] sm:$0xff]
    %v85 = vld [vmem:[%s0 + $0x1d0] sm:$0xff]
    %v86 = vld [vmem:[%s0 + $0x1d8] sm:$0x3]
    %v87 = vld [vmem:[%s0 + $0x1e0] sm:$0xff]
    %v88 = vld [vmem:[%s0 + $0x1e8] sm:$0xff]
    %v89 = vld [vmem:[%s0 + $0x1f0] sm:$0xff]
    %v90 = vld [vmem:[%s0 + $0x1f8] sm:$0x3]
    %v91 = vld [vmem:[%s0 + $0x200] sm:$0xff]
    %v92 = vld [vmem:[%s0 + $0x208] sm:$0xff]
    %v93 = vld [vmem:[%s0 + $0x210] sm:$0xff]
    %v94 = vld [vmem:[%s0 + $0x218] sm:$0x3]
    %v95 = vld [vmem:[%s0 + $0x220] sm:$0xff]
    %v96 = vld [vmem:[%s0 + $0x228] sm:$0xff]
    %v97 = vld [vmem:[%s0 + $0x230] sm:$0xff]
    %v98 = vld [vmem:[%s0 + $0x238] sm:$0x3]
    %v99 = vld [vmem:[%s0 + $0x240] sm:$0xff]
    %v100 = vld [vmem:[%s0 + $0x248] sm:$0xff]
    %v101 = vld [vmem:[%s0 + $0x250] sm:$0xff]
    %v102 = vld [vmem:[%s0 + $0x258] sm:$0x3]
    %v103 = vld [vmem:[%s0 + $0x260] sm:$0xff]
    %v104 = vld [vmem:[%s0 + $0x268] sm:$0xff]
    %v105 = vld [vmem:[%s0 + $0x270] sm:$0xff]
    %v106 = vld [vmem:[%s0 + $0x278] sm:$0x3]
    %v107 = vld [vmem:[%s0 + $0x280] sm:$0xff]
    %v108 = vld [vmem:[%s0 + $0x288] sm:$0xff]
    %v109 = vld [vmem:[%s0 + $0x290] sm:$0xff]
    %v110 = vld [vmem:[%s0 + $0x298] sm:$0x3]
    %v111 = vld [vmem:[%s0 + $0x2a0] sm:$0xff]
    %v112 = vld [vmem:[%s0 + $0x2a8] sm:$0xff]
    %v113 = vld [vmem:[%s0 + $0x2b0] sm:$0xff]
    %v114 = vld [vmem:[%s0 + $0x2b8] sm:$0x3]
    %v115 = vld [vmem:[%s0 + $0x2c0] sm:$0xff]
    %v116 = vld [vmem:[%s0 + $0x2c8] sm:$0xff]
    %v117 = vld [vmem:[%s0 + $0x2d0] sm:$0xff]
    %v118 = vld [vmem:[%s0 + $0x2d8] sm:$0x3]
    %v119 = vld [vmem:[%s0 + $0x2e0] sm:$0xff]
    %v120 = vld [vmem:[%s0 + $0x2e8] sm:$0xff]
    %v121 = vld [vmem:[%s0 + $0x2f0] sm:$0xff]
    %v122 = vld [vmem:[%s0 + $0x2f8] sm:$0x3]
    %v123 = vld [vmem:[%s0 + $0x300] sm:$0xff]
    %v124 = vld [vmem:[%s0 + $0x308] sm:$0xff]
    %v125 = vld [vmem:[%s0 + $0x310] sm:$0xff]
    %v126 = vld [vmem:[%s0 + $0x318] sm:$0x3]
    %v127 = vld [vmem:[%s0 + $0x320] sm:$0xff]
    %v128 = vld [vmem:[%s0 + $0x328] sm:$0xff]
    %v129 = vld [vmem:[%s0 + $0x330] sm:$0xff]
    %v130 = vld [vmem:[%s0 + $0x338] sm:$0x3]
    %v131 = vld [vmem:[%s0 + $0x340] sm:$0xff]
    %v132 = vld [vmem:[%s0 + $0x348] sm:$0xff]
    %v133 = vld [vmem:[%s0 + $0x350] sm:$0xff]
    %v134 = vld [vmem:[%s0 + $0x358] sm:$0x3]
    %v135 = vld [vmem:[%s0 + $0x360] sm:$0xff]
    %v136 = vld [vmem:[%s0 + $0x368] sm:$0xff]
    %v137 = vld [vmem:[%s0 + $0x370] sm:$0xff]
    %v138 = vld [vmem:[%s0 + $0x378] sm:$0x3]
    %v139 = vld [vmem:[%s0 + $0x380] sm:$0xff]
    %v140 = vld [vmem:[%s0 + $0x388] sm:$0xff]
    %v141 = vld [vmem:[%s0 + $0x390] sm:$0xff]
    %v142 = vld [vmem:[%s0 + $0x398] sm:$0x3]
    %v143 = vld [vmem:[%s0 + $0x3a0] sm:$0xff]
    %v144 = vld [vmem:[%s0 + $0x3a8] sm:$0xff]
    %v145 = vld [vmem:[%s0 + $0x3b0] sm:$0xff]
    %v146 = vld [vmem:[%s0 + $0x3b8] sm:$0x3]
    %v147 = vld [vmem:[%s0 + $0x3c0] sm:$0xff]
    %v148 = vld [vmem:[%s0 + $0x3c8] sm:$0xff]
    %v149 = vld [vmem:[%s0 + $0x3d0] sm:$0xff]
    %v150 = vld [vmem:[%s0 + $0x3d8] sm:$0x3]
    %v151 = vld [vmem:[%s0 + $0x3e0] sm:$0xff]
    %v152 = vld [vmem:[%s0 + $0x3e8] sm:$0xff]
    %v153 = vld [vmem:[%s0 + $0x3f0] sm:$0xff]
    %v154 = vld [vmem:[%s0 + $0x3f8] sm:$0x3]
    %v155 = vld [vmem:[%s0 + $0x400] sm:$0xff]
    %v156 = vld [vmem:[%s0 + $0x408] sm:$0xff]
    %v157 = vld [vmem:[%s0 + $0x410] sm:$0xff]
    %v158 = vld [vmem:[%s0 + $0x418] sm:$0x3]
    %v159 = vld [vmem:[%s0 + $0x420] sm:$0xff]
    %v160 = vld [vmem:[%s0 + $0x428] sm:$0xff]
    %v161 = vld [vmem:[%s0 + $0x430] sm:$0xff]
    %v162 = vld [vmem:[%s0 + $0x438] sm:$0x3]
    %v163 = vld [vmem:[%s0 + $0x440] sm:$0xff]
    %v164 = vld [vmem:[%s0 + $0x448] sm:$0xff]
    %v165 = vld [vmem:[%s0 + $0x450] sm:$0xff]
    %v166 = vld [vmem:[%s0 + $0x458] sm:$0x3]
    %v167 = vld [vmem:[%s0 + $0x460] sm:$0xff]
    %v168 = vld [vmem:[%s0 + $0x468] sm:$0xff]
    %v169 = vld [vmem:[%s0 + $0x470] sm:$0xff]
    %v170 = vld [vmem:[%s0 + $0x478] sm:$0x3]
    %v171 = vld [vmem:[%s0 + $0x480] sm:$0xff]
    %v172 = vld [vmem:[%s0 + $0x488] sm:$0xff]
    %v173 = vld [vmem:[%s0 + $0x490] sm:$0xff]
    %v174 = vld [vmem:[%s0 + $0x498] sm:$0x3]
    %v175 = vld [vmem:[%s0 + $0x4a0] sm:$0xff]
    %v176 = vld [vmem:[%s0 + $0x4a8] sm:$0xff]
    %v177 = vld [vmem:[%s0 + $0x4b0] sm:$0xff]
    %v178 = vld [vmem:[%s0 + $0x4b8] sm:$0x3]
    %v179 = vld [vmem:[%s0 + $0x4c0] sm:$0xff]
    %v180 = vld [vmem:[%s0 + $0x4c8] sm:$0xff]
    %v181 = vld [vmem:[%s0 + $0x4d0] sm:$0xff]
    %v182 = vld [vmem:[%s0 + $0x4d8] sm:$0x3]
    %v183 = vld [vmem:[%s0 + $0x4e0] sm:$0xff]
    %v184 = vld [vmem:[%s0 + $0x4e8] sm:$0xff]
    %v185 = vld [vmem:[%s0 + $0x4f0] sm:$0xff]
    %v186 = vld [vmem:[%s0 + $0x4f8] sm:$0x3]
    %vm331 = vcmask 1046528
    %v332 = vrot.slane %v27, 1
    %v333 = vrot.slane %v28, 1
    %v334 = vsel %vm331, %v332, %v333
    %v335 = vrot.slane %v29, 1
    %v336 = vsel %vm331, %v333, %v335
    %v337 = vrot.slane %v30, 1
    %v338 = vsel %vm331, %v335, %v337
    %v339 = vrot.slane %v31, 1
    %v340 = vrot.slane %v32, 1
    %v341 = vsel %vm331, %v339, %v340
    %v342 = vrot.slane %v33, 1
    %v343 = vsel %vm331, %v340, %v342
    %v344 = vrot.slane %v34, 1
    %v345 = vsel %vm331, %v342, %v344
    %v346 = vrot.slane %v35, 1
    %v347 = vrot.slane %v36, 1
    %v348 = vsel %vm331, %v346, %v347
    %v349 = vrot.slane %v37, 1
    %v350 = vsel %vm331, %v347, %v349
    %v351 = vrot.slane %v38, 1
    %v352 = vsel %vm331, %v349, %v351
    %v353 = vrot.slane %v39, 1
    %v354 = vrot.slane %v40, 1
    %v355 = vsel %vm331, %v353, %v354
    %v356 = vrot.slane %v41, 1
    %v357 = vsel %vm331, %v354, %v356
    %v358 = vrot.slane %v42, 1
    %v359 = vsel %vm331, %v356, %v358
    %v360 = vrot.slane %v43, 1
    %v361 = vrot.slane %v44, 1
    %v362 = vsel %vm331, %v360, %v361
    %v363 = vrot.slane %v45, 1
    %v364 = vsel %vm331, %v361, %v363
    %v365 = vrot.slane %v46, 1
    %v366 = vsel %vm331, %v363, %v365
    %v367 = vrot.slane %v47, 1
    %v368 = vrot.slane %v48, 1
    %v369 = vsel %vm331, %v367, %v368
    %v370 = vrot.slane %v49, 1
    %v371 = vsel %vm331, %v368, %v370
    %v372 = vrot.slane %v50, 1
    %v373 = vsel %vm331, %v370, %v372
    %v374 = vrot.slane %v51, 1
    %v375 = vrot.slane %v52, 1
    %v376 = vsel %vm331, %v374, %v375
    %v377 = vrot.slane %v53, 1
    %v378 = vsel %vm331, %v375, %v377
    %v379 = vrot.slane %v54, 1
    %v380 = vsel %vm331, %v377, %v379
    %v381 = vrot.slane %v55, 1
    %v382 = vrot.slane %v56, 1
    %v383 = vsel %vm331, %v381, %v382
    %v384 = vrot.slane %v57, 1
    %v385 = vsel %vm331, %v382, %v384
    %v386 = vrot.slane %v58, 1
    %v387 = vsel %vm331, %v384, %v386
    %v388 = vrot.slane %v59, 1
    %v389 = vrot.slane %v60, 1
    %v390 = vsel %vm331, %v388, %v389
    %v391 = vrot.slane %v61, 1
    %v392 = vsel %vm331, %v389, %v391
    %v393 = vrot.slane %v62, 1
    %v394 = vsel %vm331, %v391, %v393
    %v395 = vrot.slane %v63, 1
    %v396 = vrot.slane %v64, 1
    %v397 = vsel %vm331, %v395, %v396
    %v398 = vrot.slane %v65, 1
    %v399 = vsel %vm331, %v396, %v398
    %v400 = vrot.slane %v66, 1
    %v401 = vsel %vm331, %v398, %v400
    %v402 = vrot.slane %v67, 1
    %v403 = vrot.slane %v68, 1
    %v404 = vsel %vm331, %v402, %v403
    %v405 = vrot.slane %v69, 1
    %v406 = vsel %vm331, %v403, %v405
    %v407 = vrot.slane %v70, 1
    %v408 = vsel %vm331, %v405, %v407
    %v409 = vrot.slane %v71, 1
    %v410 = vrot.slane %v72, 1
    %v411 = vsel %vm331, %v409, %v410
    %v412 = vrot.slane %v73, 1
    %v413 = vsel %vm331, %v410, %v412
    %v414 = vrot.slane %v74, 1
    %v415 = vsel %vm331, %v412, %v414
    %v416 = vrot.slane %v75, 1
    %v417 = vrot.slane %v76, 1
    %v418 = vsel %vm331, %v416, %v417
    %v419 = vrot.slane %v77, 1
    %v420 = vsel %vm331, %v417, %v419
    %v421 = vrot.slane %v78, 1
    %v422 = vsel %vm331, %v419, %v421
    %v423 = vrot.slane %v79, 1
    %v424 = vrot.slane %v80, 1
    %v425 = vsel %vm331, %v423, %v424
    %v426 = vrot.slane %v81, 1
    %v427 = vsel %vm331, %v424, %v426
    %v428 = vrot.slane %v82, 1
    %v429 = vsel %vm331, %v426, %v428
    %v430 = vrot.slane %v83, 1
    %v431 = vrot.slane %v84, 1
    %v432 = vsel %vm331, %v430, %v431
    %v433 = vrot.slane %v85, 1
    %v434 = vsel %vm331, %v431, %v433
    %v435 = vrot.slane %v86, 1
    %v436 = vsel %vm331, %v433, %v435
    %v437 = vrot.slane %v87, 1
    %v438 = vrot.slane %v88, 1
    %v439 = vsel %vm331, %v437, %v438
    %v440 = vrot.slane %v89, 1
    %v441 = vsel %vm331, %v438, %v440
    %v442 = vrot.slane %v90, 1
    %v443 = vsel %vm331, %v440, %v442
    %v444 = vrot.slane %v91, 1
    %v445 = vrot.slane %v92, 1
    %v446 = vsel %vm331, %v444, %v445
    %v447 = vrot.slane %v93, 1
    %v448 = vsel %vm331, %v445, %v447
    %v449 = vrot.slane %v94, 1
    %v450 = vsel %vm331, %v447, %v449
    %v451 = vrot.slane %v95, 1
    %v452 = vrot.slane %v96, 1
    %v453 = vsel %vm331, %v451, %v452
    %v454 = vrot.slane %v97, 1
    %v455 = vsel %vm331, %v452, %v454
    %v456 = vrot.slane %v98, 1
    %v457 = vsel %vm331, %v454, %v456
    %v458 = vrot.slane %v107, 1
    %v459 = vrot.slane %v108, 1
    %v460 = vsel %vm331, %v458, %v459
    %v461 = vrot.slane %v109, 1
    %v462 = vsel %vm331, %v459, %v461
    %v463 = vrot.slane %v110, 1
    %v464 = vsel %vm331, %v461, %v463
    %v465 = vrot.slane %v111, 1
    %v466 = vrot.slane %v112, 1
    %v467 = vsel %vm331, %v465, %v466
    %v468 = vrot.slane %v113, 1
    %v469 = vsel %vm331, %v466, %v468
    %v470 = vrot.slane %v114, 1
    %v471 = vsel %vm331, %v468, %v470
    %v472 = vrot.slane %v115, 1
    %v473 = vrot.slane %v116, 1
    %v474 = vsel %vm331, %v472, %v473
    %v475 = vrot.slane %v117, 1
    %v476 = vsel %vm331, %v473, %v475
    %v477 = vrot.slane %v118, 1
    %v478 = vsel %vm331, %v475, %v477
    %v479 = vrot.slane %v119, 1
    %v480 = vrot.slane %v120, 1
    %v481 = vsel %vm331, %v479, %v480
    %v482 = vrot.slane %v121, 1
    %v483 = vsel %vm331, %v480, %v482
    %v484 = vrot.slane %v122, 1
    %v485 = vsel %vm331, %v482, %v484
    %v486 = vrot.slane %v123, 1
    %v487 = vrot.slane %v124, 1
    %v488 = vsel %vm331, %v486, %v487
    %v489 = vrot.slane %v125, 1
    %v490 = vsel %vm331, %v487, %v489
    %v491 = vrot.slane %v126, 1
    %v492 = vsel %vm331, %v489, %v491
    %v493 = vrot.slane %v127, 1
    %v494 = vrot.slane %v128, 1
    %v495 = vsel %vm331, %v493, %v494
    %v496 = vrot.slane %v129, 1
    %v497 = vsel %vm331, %v494, %v496
    %v498 = vrot.slane %v130, 1
    %v499 = vsel %vm331, %v496, %v498
    %v500 = vrot.slane %v131, 1
    %v501 = vrot.slane %v132, 1
    %v502 = vsel %vm331, %v500, %v501
    %v503 = vrot.slane %v133, 1
    %v504 = vsel %vm331, %v501, %v503
    %v505 = vrot.slane %v134, 1
    %v506 = vsel %vm331, %v503, %v505
    %v507 = vrot.slane %v135, 1
    %v508 = vrot.slane %v136, 1
    %v509 = vsel %vm331, %v507, %v508
    %v510 = vrot.slane %v137, 1
    %v511 = vsel %vm331, %v508, %v510
    %v512 = vrot.slane %v138, 1
    %v513 = vsel %vm331, %v510, %v512
    %v514 = vrot.slane %v139, 1
    %v515 = vrot.slane %v140, 1
    %v516 = vsel %vm331, %v514, %v515
    %v517 = vrot.slane %v141, 1
    %v518 = vsel %vm331, %v515, %v517
    %v519 = vrot.slane %v142, 1
    %v520 = vsel %vm331, %v517, %v519
    %v521 = vrot.slane %v143, 1
    %v522 = vrot.slane %v144, 1
    %v523 = vsel %vm331, %v521, %v522
    %v524 = vrot.slane %v145, 1
    %v525 = vsel %vm331, %v522, %v524
    %v526 = vrot.slane %v146, 1
    %v527 = vsel %vm331, %v524, %v526
    %v528 = vrot.slane %v147, 1
    %v529 = vrot.slane %v148, 1
    %v530 = vsel %vm331, %v528, %v529
    %v531 = vrot.slane %v149, 1
    %v532 = vsel %vm331, %v529, %v531
    %v533 = vrot.slane %v150, 1
    %v534 = vsel %vm331, %v531, %v533
    %v535 = vrot.slane %v151, 1
    %v536 = vrot.slane %v152, 1
    %v537 = vsel %vm331, %v535, %v536
    %v538 = vrot.slane %v153, 1
    %v539 = vsel %vm331, %v536, %v538
    %v540 = vrot.slane %v154, 1
    %v541 = vsel %vm331, %v538, %v540
    %v542 = vrot.slane %v155, 1
    %v543 = vrot.slane %v156, 1
    %v544 = vsel %vm331, %v542, %v543
    %v545 = vrot.slane %v157, 1
    %v546 = vsel %vm331, %v543, %v545
    %v547 = vrot.slane %v158, 1
    %v548 = vsel %vm331, %v545, %v547
    %v549 = vrot.slane %v159, 1
    %v550 = vrot.slane %v160, 1
    %v551 = vsel %vm331, %v549, %v550
    %v552 = vrot.slane %v161, 1
    %v553 = vsel %vm331, %v550, %v552
    %v554 = vrot.slane %v162, 1
    %v555 = vsel %vm331, %v552, %v554
    %v556 = vrot.slane %v163, 1
    %v557 = vrot.slane %v164, 1
    %v558 = vsel %vm331, %v556, %v557
    %v559 = vrot.slane %v165, 1
    %v560 = vsel %vm331, %v557, %v559
    %v561 = vrot.slane %v166, 1
    %v562 = vsel %vm331, %v559, %v561
    %v563 = vrot.slane %v167, 1
    %v564 = vrot.slane %v168, 1
    %v565 = vsel %vm331, %v563, %v564
    %v566 = vrot.slane %v169, 1
    %v567 = vsel %vm331, %v564, %v566
    %v568 = vrot.slane %v170, 1
    %v569 = vsel %vm331, %v566, %v568
    %v570 = vrot.slane %v171, 1
    %v571 = vrot.slane %v172, 1
    %v572 = vsel %vm331, %v570, %v571
    %v573 = vrot.slane %v173, 1
    %v574 = vsel %vm331, %v571, %v573
    %v575 = vrot.slane %v174, 1
    %v576 = vsel %vm331, %v573, %v575
    %v577 = vrot.slane %v175, 1
    %v578 = vrot.slane %v176, 1
    %v579 = vsel %vm331, %v577, %v578
    %v580 = vrot.slane %v177, 1
    %v581 = vsel %vm331, %v578, %v580
    %v582 = vrot.slane %v178, 1
    %v583 = vsel %vm331, %v580, %v582
    %vm584 = vcmask 1045504
    %v585 = vrot.slane %v27, 2
    %v586 = vrot.slane %v28, 2
    %v587 = vsel %vm584, %v585, %v586
    %v588 = vrot.slane %v29, 2
    %v589 = vsel %vm584, %v586, %v588
    %v590 = vrot.slane %v30, 2
    %v591 = vsel %vm584, %v588, %v590
    %v592 = vrot.slane %v31, 2
    %v593 = vrot.slane %v32, 2
    %v594 = vsel %vm584, %v592, %v593
    %v595 = vrot.slane %v33, 2
    %v596 = vsel %vm584, %v593, %v595
    %v597 = vrot.slane %v34, 2
    %v598 = vsel %vm584, %v595, %v597
    %v599 = vrot.slane %v35, 2
    %v600 = vrot.slane %v36, 2
    %v601 = vsel %vm584, %v599, %v600
    %v602 = vrot.slane %v37, 2
    %v603 = vsel %vm584, %v600, %v602
    %v604 = vrot.slane %v38, 2
    %v605 = vsel %vm584, %v602, %v604
    %v606 = vrot.slane %v39, 2
    %v607 = vrot.slane %v40, 2
    %v608 = vsel %vm584, %v606, %v607
    %v609 = vrot.slane %v41, 2
    %v610 = vsel %vm584, %v607, %v609
    %v611 = vrot.slane %v42, 2
    %v612 = vsel %vm584, %v609, %v611
    %v613 = vrot.slane %v43, 2
    %v614 = vrot.slane %v44, 2
    %v615 = vsel %vm584, %v613, %v614
    %v616 = vrot.slane %v45, 2
    %v617 = vsel %vm584, %v614, %v616
    %v618 = vrot.slane %v46, 2
    %v619 = vsel %vm584, %v616, %v618
    %v620 = vrot.slane %v47, 2
    %v621 = vrot.slane %v48, 2
    %v622 = vsel %vm584, %v620, %v621
    %v623 = vrot.slane %v49, 2
    %v624 = vsel %vm584, %v621, %v623
    %v625 = vrot.slane %v50, 2
    %v626 = vsel %vm584, %v623, %v625
    %v627 = vrot.slane %v51, 2
    %v628 = vrot.slane %v52, 2
    %v629 = vsel %vm584, %v627, %v628
    %v630 = vrot.slane %v53, 2
    %v631 = vsel %vm584, %v628, %v630
    %v632 = vrot.slane %v54, 2
    %v633 = vsel %vm584, %v630, %v632
    %v634 = vrot.slane %v55, 2
    %v635 = vrot.slane %v56, 2
    %v636 = vsel %vm584, %v634, %v635
    %v637 = vrot.slane %v57, 2
    %v638 = vsel %vm584, %v635, %v637
    %v639 = vrot.slane %v58, 2
    %v640 = vsel %vm584, %v637, %v639
    %v641 = vrot.slane %v59, 2
    %v642 = vrot.slane %v60, 2
    %v643 = vsel %vm584, %v641, %v642
    %v644 = vrot.slane %v61, 2
    %v645 = vsel %vm584, %v642, %v644
    %v646 = vrot.slane %v62, 2
    %v647 = vsel %vm584, %v644, %v646
    %v648 = vrot.slane %v63, 2
    %v649 = vrot.slane %v64, 2
    %v650 = vsel %vm584, %v648, %v649
    %v651 = vrot.slane %v65, 2
    %v652 = vsel %vm584, %v649, %v651
    %v653 = vrot.slane %v66, 2
    %v654 = vsel %vm584, %v651, %v653
    %v655 = vrot.slane %v67, 2
    %v656 = vrot.slane %v68, 2
    %v657 = vsel %vm584, %v655, %v656
    %v658 = vrot.slane %v69, 2
    %v659 = vsel %vm584, %v656, %v658
    %v660 = vrot.slane %v70, 2
    %v661 = vsel %vm584, %v658, %v660
    %v662 = vrot.slane %v71, 2
    %v663 = vrot.slane %v72, 2
    %v664 = vsel %vm584, %v662, %v663
    %v665 = vrot.slane %v73, 2
    %v666 = vsel %vm584, %v663, %v665
    %v667 = vrot.slane %v74, 2
    %v668 = vsel %vm584, %v665, %v667
    %v669 = vrot.slane %v75, 2
    %v670 = vrot.slane %v76, 2
    %v671 = vsel %vm584, %v669, %v670
    %v672 = vrot.slane %v77, 2
    %v673 = vsel %vm584, %v670, %v672
    %v674 = vrot.slane %v78, 2
    %v675 = vsel %vm584, %v672, %v674
    %v676 = vrot.slane %v79, 2
    %v677 = vrot.slane %v80, 2
    %v678 = vsel %vm584, %v676, %v677
    %v679 = vrot.slane %v81, 2
    %v680 = vsel %vm584, %v677, %v679
    %v681 = vrot.slane %v82, 2
    %v682 = vsel %vm584, %v679, %v681
    %v683 = vrot.slane %v83, 2
    %v684 = vrot.slane %v84, 2
    %v685 = vsel %vm584, %v683, %v684
    %v686 = vrot.slane %v85, 2
    %v687 = vsel %vm584, %v684, %v686
    %v688 = vrot.slane %v86, 2
    %v689 = vsel %vm584, %v686, %v688
    %v690 = vrot.slane %v87, 2
    %v691 = vrot.slane %v88, 2
    %v692 = vsel %vm584, %v690, %v691
    %v693 = vrot.slane %v89, 2
    %v694 = vsel %vm584, %v691, %v693
    %v695 = vrot.slane %v90, 2
    %v696 = vsel %vm584, %v693, %v695
    %v697 = vrot.slane %v91, 2
    %v698 = vrot.slane %v92, 2
    %v699 = vsel %vm584, %v697, %v698
    %v700 = vrot.slane %v93, 2
    %v701 = vsel %vm584, %v698, %v700
    %v702 = vrot.slane %v94, 2
    %v703 = vsel %vm584, %v700, %v702
    %v704 = vrot.slane %v95, 2
    %v705 = vrot.slane %v96, 2
    %v706 = vsel %vm584, %v704, %v705
    %v707 = vrot.slane %v97, 2
    %v708 = vsel %vm584, %v705, %v707
    %v709 = vrot.slane %v98, 2
    %v710 = vsel %vm584, %v707, %v709
    %v711 = vrot.slane %v107, 2
    %v712 = vrot.slane %v108, 2
    %v713 = vsel %vm584, %v711, %v712
    %v714 = vrot.slane %v109, 2
    %v715 = vsel %vm584, %v712, %v714
    %v716 = vrot.slane %v110, 2
    %v717 = vsel %vm584, %v714, %v716
    %v718 = vrot.slane %v111, 2
    %v719 = vrot.slane %v112, 2
    %v720 = vsel %vm584, %v718, %v719
    %v721 = vrot.slane %v113, 2
    %v722 = vsel %vm584, %v719, %v721
    %v723 = vrot.slane %v114, 2
    %v724 = vsel %vm584, %v721, %v723
    %v725 = vrot.slane %v115, 2
    %v726 = vrot.slane %v116, 2
    %v727 = vsel %vm584, %v725, %v726
    %v728 = vrot.slane %v117, 2
    %v729 = vsel %vm584, %v726, %v728
    %v730 = vrot.slane %v118, 2
    %v731 = vsel %vm584, %v728, %v730
    %v732 = vrot.slane %v119, 2
    %v733 = vrot.slane %v120, 2
    %v734 = vsel %vm584, %v732, %v733
    %v735 = vrot.slane %v121, 2
    %v736 = vsel %vm584, %v733, %v735
    %v737 = vrot.slane %v122, 2
    %v738 = vsel %vm584, %v735, %v737
    %v739 = vrot.slane %v123, 2
    %v740 = vrot.slane %v124, 2
    %v741 = vsel %vm584, %v739, %v740
    %v742 = vrot.slane %v125, 2
    %v743 = vsel %vm584, %v740, %v742
    %v744 = vrot.slane %v126, 2
    %v745 = vsel %vm584, %v742, %v744
    %v746 = vrot.slane %v127, 2
    %v747 = vrot.slane %v128, 2
    %v748 = vsel %vm584, %v746, %v747
    %v749 = vrot.slane %v129, 2
    %v750 = vsel %vm584, %v747, %v749
    %v751 = vrot.slane %v130, 2
    %v752 = vsel %vm584, %v749, %v751
    %v753 = vrot.slane %v131, 2
    %v754 = vrot.slane %v132, 2
    %v755 = vsel %vm584, %v753, %v754
    %v756 = vrot.slane %v133, 2
    %v757 = vsel %vm584, %v754, %v756
    %v758 = vrot.slane %v134, 2
    %v759 = vsel %vm584, %v756, %v758
    %v760 = vrot.slane %v135, 2
    %v761 = vrot.slane %v136, 2
    %v762 = vsel %vm584, %v760, %v761
    %v763 = vrot.slane %v137, 2
    %v764 = vsel %vm584, %v761, %v763
    %v765 = vrot.slane %v138, 2
    %v766 = vsel %vm584, %v763, %v765
    %v767 = vrot.slane %v139, 2
    %v768 = vrot.slane %v140, 2
    %v769 = vsel %vm584, %v767, %v768
    %v770 = vrot.slane %v141, 2
    %v771 = vsel %vm584, %v768, %v770
    %v772 = vrot.slane %v142, 2
    %v773 = vsel %vm584, %v770, %v772
    %v774 = vrot.slane %v143, 2
    %v775 = vrot.slane %v144, 2
    %v776 = vsel %vm584, %v774, %v775
    %v777 = vrot.slane %v145, 2
    %v778 = vsel %vm584, %v775, %v777
    %v779 = vrot.slane %v146, 2
    %v780 = vsel %vm584, %v777, %v779
    %v781 = vrot.slane %v147, 2
    %v782 = vrot.slane %v148, 2
    %v783 = vsel %vm584, %v781, %v782
    %v784 = vrot.slane %v149, 2
    %v785 = vsel %vm584, %v782, %v784
    %v786 = vrot.slane %v150, 2
    %v787 = vsel %vm584, %v784, %v786
    %v788 = vrot.slane %v151, 2
    %v789 = vrot.slane %v152, 2
    %v790 = vsel %vm584, %v788, %v789
    %v791 = vrot.slane %v153, 2
    %v792 = vsel %vm584, %v789, %v791
    %v793 = vrot.slane %v154, 2
    %v794 = vsel %vm584, %v791, %v793
    %v795 = vrot.slane %v155, 2
    %v796 = vrot.slane %v156, 2
    %v797 = vsel %vm584, %v795, %v796
    %v798 = vrot.slane %v157, 2
    %v799 = vsel %vm584, %v796, %v798
    %v800 = vrot.slane %v158, 2
    %v801 = vsel %vm584, %v798, %v800
    %v802 = vrot.slane %v159, 2
    %v803 = vrot.slane %v160, 2
    %v804 = vsel %vm584, %v802, %v803
    %v805 = vrot.slane %v161, 2
    %v806 = vsel %vm584, %v803, %v805
    %v807 = vrot.slane %v162, 2
    %v808 = vsel %vm584, %v805, %v807
    %v809 = vrot.slane %v163, 2
    %v810 = vrot.slane %v164, 2
    %v811 = vsel %vm584, %v809, %v810
    %v812 = vrot.slane %v165, 2
    %v813 = vsel %vm584, %v810, %v812
    %v814 = vrot.slane %v166, 2
    %v815 = vsel %vm584, %v812, %v814
    %v816 = vrot.slane %v167, 2
    %v817 = vrot.slane %v168, 2
    %v818 = vsel %vm584, %v816, %v817
    %v819 = vrot.slane %v169, 2
    %v820 = vsel %vm584, %v817, %v819
    %v821 = vrot.slane %v170, 2
    %v822 = vsel %vm584, %v819, %v821
    %v823 = vrot.slane %v171, 2
    %v824 = vrot.slane %v172, 2
    %v825 = vsel %vm584, %v823, %v824
    %v826 = vrot.slane %v173, 2
    %v827 = vsel %vm584, %v824, %v826
    %v828 = vrot.slane %v174, 2
    %v829 = vsel %vm584, %v826, %v828
    %v830 = vrot.slane %v175, 2
    %v831 = vrot.slane %v176, 2
    %v832 = vsel %vm584, %v830, %v831
    %v833 = vrot.slane %v177, 2
    %v834 = vsel %vm584, %v831, %v833
    %v835 = vrot.slane %v178, 2
    %v836 = vsel %vm584, %v833, %v835
    %v845 = vrot.slane %v99, 1
    %v846 = vrot.slane %v100, 1
    %v847 = vsel %vm331, %v845, %v846
    %v848 = vrot.slane %v101, 1
    %v849 = vsel %vm331, %v846, %v848
    %v850 = vrot.slane %v102, 1
    %v851 = vsel %vm331, %v848, %v850
    %v852 = vrot.slane %v179, 1
    %v853 = vrot.slane %v180, 1
    %v854 = vsel %vm331, %v852, %v853
    %v855 = vrot.slane %v181, 1
    %v856 = vsel %vm331, %v853, %v855
    %v857 = vrot.slane %v182, 1
    %v858 = vsel %vm331, %v855, %v857
    %v859 = vrot.slane %v99, 2
    %v860 = vrot.slane %v100, 2
    %v861 = vsel %vm584, %v859, %v860
    %v862 = vrot.slane %v101, 2
    %v863 = vsel %vm584, %v860, %v862
    %v864 = vrot.slane %v102, 2
    %v865 = vsel %vm584, %v862, %v864
    %v866 = vrot.slane %v179, 2
    %v867 = vrot.slane %v180, 2
    %v868 = vsel %vm584, %v866, %v867
    %v869 = vrot.slane %v181, 2
    %v870 = vsel %vm584, %v867, %v869
    %v871 = vrot.slane %v182, 2
    %v872 = vsel %vm584, %v869, %v871
    %v881 = vrot.slane %v103, 1
    %v882 = vrot.slane %v104, 1
    %v883 = vsel %vm331, %v881, %v882
    %v884 = vrot.slane %v105, 1
    %v885 = vsel %vm331, %v882, %v884
    %v886 = vrot.slane %v106, 1
    %v887 = vsel %vm331, %v884, %v886
    %v888 = vrot.slane %v183, 1
    %v889 = vrot.slane %v184, 1
    %v890 = vsel %vm331, %v888, %v889
    %v891 = vrot.slane %v185, 1
    %v892 = vsel %vm331, %v889, %v891
    %v893 = vrot.slane %v186, 1
    %v894 = vsel %vm331, %v891, %v893
    %v895 = vrot.slane %v103, 2
    %v896 = vrot.slane %v104, 2
    %v897 = vsel %vm584, %v895, %v896
    %v898 = vrot.slane %v105, 2
    %v899 = vsel %vm584, %v896, %v898
    %v900 = vrot.slane %v106, 2
    %v901 = vsel %vm584, %v898, %v900
    %v902 = vrot.slane %v183, 2
    %v903 = vrot.slane %v184, 2
    %v904 = vsel %vm584, %v902, %v903
    %v905 = vrot.slane %v185, 2
    %v906 = vsel %vm584, %v903, %v905
    %v907 = vrot.slane %v186, 2
    %v908 = vsel %vm584, %v905, %v907
    %909 = vrot.lane.b32.xlu0 %v334, 4
    %v910 = vpop.permute.xlu0 %909
    %911 = vrot.lane.b32.xlu0 %v336, 4
    %v912 = vpop.permute.xlu0 %911
    %913 = vrot.lane.b32.xlu0 %v338, 4
    %v914 = vpop.permute.xlu0 %913
    %915 = vrot.lane.b32.xlu0 %v341, 4
    %v916 = vpop.permute.xlu0 %915
    %917 = vrot.lane.b32.xlu0 %v343, 4
    %v918 = vpop.permute.xlu0 %917
    %919 = vrot.lane.b32.xlu0 %v345, 4
    %v920 = vpop.permute.xlu0 %919
    %921 = vrot.lane.b32.xlu0 %v348, 4
    %v922 = vpop.permute.xlu0 %921
    %923 = vrot.lane.b32.xlu0 %v350, 4
    %v924 = vpop.permute.xlu0 %923
    %925 = vrot.lane.b32.xlu0 %v352, 4
    %v926 = vpop.permute.xlu0 %925
    %927 = vrot.lane.b32.xlu0 %v355, 4
    %v928 = vpop.permute.xlu0 %927
    %929 = vrot.lane.b32.xlu0 %v357, 4
    %v930 = vpop.permute.xlu0 %929
    %931 = vrot.lane.b32.xlu0 %v359, 4
    %v932 = vpop.permute.xlu0 %931
    %933 = vrot.lane.b32.xlu0 %v362, 4
    %v934 = vpop.permute.xlu0 %933
    %935 = vrot.lane.b32.xlu0 %v364, 4
    %v936 = vpop.permute.xlu0 %935
    %937 = vrot.lane.b32.xlu0 %v366, 4
    %v938 = vpop.permute.xlu0 %937
    %939 = vrot.lane.b32.xlu0 %v369, 4
    %v940 = vpop.permute.xlu0 %939
    %941 = vrot.lane.b32.xlu0 %v371, 4
    %v942 = vpop.permute.xlu0 %941
    %943 = vrot.lane.b32.xlu0 %v373, 4
    %v944 = vpop.permute.xlu0 %943
    %945 = vrot.lane.b32.xlu0 %v376, 4
    %v946 = vpop.permute.xlu0 %945
    %947 = vrot.lane.b32.xlu0 %v378, 4
    %v948 = vpop.permute.xlu0 %947
    %949 = vrot.lane.b32.xlu0 %v380, 4
    %v950 = vpop.permute.xlu0 %949
    %951 = vrot.lane.b32.xlu0 %v383, 4
    %v952 = vpop.permute.xlu0 %951
    %953 = vrot.lane.b32.xlu0 %v385, 4
    %v954 = vpop.permute.xlu0 %953
    %955 = vrot.lane.b32.xlu0 %v387, 4
    %v956 = vpop.permute.xlu0 %955
    %957 = vrot.lane.b32.xlu0 %v390, 4
    %v958 = vpop.permute.xlu0 %957
    %959 = vrot.lane.b32.xlu0 %v392, 4
    %v960 = vpop.permute.xlu0 %959
    %961 = vrot.lane.b32.xlu0 %v394, 4
    %v962 = vpop.permute.xlu0 %961
    %963 = vrot.lane.b32.xlu0 %v397, 4
    %v964 = vpop.permute.xlu0 %963
    %965 = vrot.lane.b32.xlu0 %v399, 4
    %v966 = vpop.permute.xlu0 %965
    %967 = vrot.lane.b32.xlu0 %v401, 4
    %v968 = vpop.permute.xlu0 %967
    %969 = vrot.lane.b32.xlu0 %v404, 4
    %v970 = vpop.permute.xlu0 %969
    %971 = vrot.lane.b32.xlu0 %v406, 4
    %v972 = vpop.permute.xlu0 %971
    %973 = vrot.lane.b32.xlu0 %v408, 4
    %v974 = vpop.permute.xlu0 %973
    %975 = vrot.lane.b32.xlu0 %v411, 4
    %v976 = vpop.permute.xlu0 %975
    %977 = vrot.lane.b32.xlu0 %v413, 4
    %v978 = vpop.permute.xlu0 %977
    %979 = vrot.lane.b32.xlu0 %v415, 4
    %v980 = vpop.permute.xlu0 %979
    %981 = vrot.lane.b32.xlu0 %v418, 4
    %v982 = vpop.permute.xlu0 %981
    %983 = vrot.lane.b32.xlu0 %v420, 4
    %v984 = vpop.permute.xlu0 %983
    %985 = vrot.lane.b32.xlu0 %v422, 4
    %v986 = vpop.permute.xlu0 %985
    %987 = vrot.lane.b32.xlu0 %v425, 4
    %v988 = vpop.permute.xlu0 %987
    %989 = vrot.lane.b32.xlu0 %v427, 4
    %v990 = vpop.permute.xlu0 %989
    %991 = vrot.lane.b32.xlu0 %v429, 4
    %v992 = vpop.permute.xlu0 %991
    %993 = vrot.lane.b32.xlu0 %v432, 4
    %v994 = vpop.permute.xlu0 %993
    %995 = vrot.lane.b32.xlu0 %v434, 4
    %v996 = vpop.permute.xlu0 %995
    %997 = vrot.lane.b32.xlu0 %v436, 4
    %v998 = vpop.permute.xlu0 %997
    %999 = vrot.lane.b32.xlu0 %v439, 4
    %v1000 = vpop.permute.xlu0 %999
    %1001 = vrot.lane.b32.xlu0 %v441, 4
    %v1002 = vpop.permute.xlu0 %1001
    %1003 = vrot.lane.b32.xlu0 %v443, 4
    %v1004 = vpop.permute.xlu0 %1003
    %1005 = vrot.lane.b32.xlu0 %v446, 4
    %v1006 = vpop.permute.xlu0 %1005
    %1007 = vrot.lane.b32.xlu0 %v448, 4
    %v1008 = vpop.permute.xlu0 %1007
    %1009 = vrot.lane.b32.xlu0 %v450, 4
    %v1010 = vpop.permute.xlu0 %1009
    %1011 = vrot.lane.b32.xlu0 %v453, 4
    %v1012 = vpop.permute.xlu0 %1011
    %1013 = vrot.lane.b32.xlu0 %v455, 4
    %v1014 = vpop.permute.xlu0 %1013
    %1015 = vrot.lane.b32.xlu0 %v457, 4
    %v1016 = vpop.permute.xlu0 %1015
    %1017 = vrot.lane.b32.xlu0 %v460, 4
    %v1018 = vpop.permute.xlu0 %1017
    %1019 = vrot.lane.b32.xlu0 %v462, 4
    %v1020 = vpop.permute.xlu0 %1019
    %1021 = vrot.lane.b32.xlu0 %v464, 4
    %v1022 = vpop.permute.xlu0 %1021
    %1023 = vrot.lane.b32.xlu0 %v467, 4
    %v1024 = vpop.permute.xlu0 %1023
    %1025 = vrot.lane.b32.xlu0 %v469, 4
    %v1026 = vpop.permute.xlu0 %1025
    %1027 = vrot.lane.b32.xlu0 %v471, 4
    %v1028 = vpop.permute.xlu0 %1027
    %1029 = vrot.lane.b32.xlu0 %v474, 4
    %v1030 = vpop.permute.xlu0 %1029
    %1031 = vrot.lane.b32.xlu0 %v476, 4
    %v1032 = vpop.permute.xlu0 %1031
    %1033 = vrot.lane.b32.xlu0 %v478, 4
    %v1034 = vpop.permute.xlu0 %1033
    %1035 = vrot.lane.b32.xlu0 %v481, 4
    %v1036 = vpop.permute.xlu0 %1035
    %1037 = vrot.lane.b32.xlu0 %v483, 4
    %v1038 = vpop.permute.xlu0 %1037
    %1039 = vrot.lane.b32.xlu0 %v485, 4
    %v1040 = vpop.permute.xlu0 %1039
    %1041 = vrot.lane.b32.xlu0 %v488, 4
    %v1042 = vpop.permute.xlu0 %1041
    %1043 = vrot.lane.b32.xlu0 %v490, 4
    %v1044 = vpop.permute.xlu0 %1043
    %1045 = vrot.lane.b32.xlu0 %v492, 4
    %v1046 = vpop.permute.xlu0 %1045
    %1047 = vrot.lane.b32.xlu0 %v495, 4
    %v1048 = vpop.permute.xlu0 %1047
    %1049 = vrot.lane.b32.xlu0 %v497, 4
    %v1050 = vpop.permute.xlu0 %1049
    %1051 = vrot.lane.b32.xlu0 %v499, 4
    %v1052 = vpop.permute.xlu0 %1051
    %1053 = vrot.lane.b32.xlu0 %v502, 4
    %v1054 = vpop.permute.xlu0 %1053
    %1055 = vrot.lane.b32.xlu0 %v504, 4
    %v1056 = vpop.permute.xlu0 %1055
    %1057 = vrot.lane.b32.xlu0 %v506, 4
    %v1058 = vpop.permute.xlu0 %1057
    %1059 = vrot.lane.b32.xlu0 %v509, 4
    %v1060 = vpop.permute.xlu0 %1059
    %1061 = vrot.lane.b32.xlu0 %v511, 4
    %v1062 = vpop.permute.xlu0 %1061
    %1063 = vrot.lane.b32.xlu0 %v513, 4
    %v1064 = vpop.permute.xlu0 %1063
    %1065 = vrot.lane.b32.xlu0 %v516, 4
    %v1066 = vpop.permute.xlu0 %1065
    %1067 = vrot.lane.b32.xlu0 %v518, 4
    %v1068 = vpop.permute.xlu0 %1067
    %1069 = vrot.lane.b32.xlu0 %v520, 4
    %v1070 = vpop.permute.xlu0 %1069
    %1071 = vrot.lane.b32.xlu0 %v523, 4
    %v1072 = vpop.permute.xlu0 %1071
    %1073 = vrot.lane.b32.xlu0 %v525, 4
    %v1074 = vpop.permute.xlu0 %1073
    %1075 = vrot.lane.b32.xlu0 %v527, 4
    %v1076 = vpop.permute.xlu0 %1075
    %1077 = vrot.lane.b32.xlu0 %v530, 4
    %v1078 = vpop.permute.xlu0 %1077
    %1079 = vrot.lane.b32.xlu0 %v532, 4
    %v1080 = vpop.permute.xlu0 %1079
    %1081 = vrot.lane.b32.xlu0 %v534, 4
    %v1082 = vpop.permute.xlu0 %1081
    %1083 = vrot.lane.b32.xlu0 %v537, 4
    %v1084 = vpop.permute.xlu0 %1083
    %1085 = vrot.lane.b32.xlu0 %v539, 4
    %v1086 = vpop.permute.xlu0 %1085
    %1087 = vrot.lane.b32.xlu0 %v541, 4
    %v1088 = vpop.permute.xlu0 %1087
    %1089 = vrot.lane.b32.xlu0 %v544, 4
    %v1090 = vpop.permute.xlu0 %1089
    %1091 = vrot.lane.b32.xlu0 %v546, 4
    %v1092 = vpop.permute.xlu0 %1091
    %1093 = vrot.lane.b32.xlu0 %v548, 4
    %v1094 = vpop.permute.xlu0 %1093
    %1095 = vrot.lane.b32.xlu0 %v551, 4
    %v1096 = vpop.permute.xlu0 %1095
    %1097 = vrot.lane.b32.xlu0 %v553, 4
    %v1098 = vpop.permute.xlu0 %1097
    %1099 = vrot.lane.b32.xlu0 %v555, 4
    %v1100 = vpop.permute.xlu0 %1099
    %1101 = vrot.lane.b32.xlu0 %v558, 4
    %v1102 = vpop.permute.xlu0 %1101
    %1103 = vrot.lane.b32.xlu0 %v560, 4
    %v1104 = vpop.permute.xlu0 %1103
    %1105 = vrot.lane.b32.xlu0 %v562, 4
    %v1106 = vpop.permute.xlu0 %1105
    %1107 = vrot.lane.b32.xlu0 %v565, 4
    %v1108 = vpop.permute.xlu0 %1107
    %1109 = vrot.lane.b32.xlu0 %v567, 4
    %v1110 = vpop.permute.xlu0 %1109
    %1111 = vrot.lane.b32.xlu0 %v569, 4
    %v1112 = vpop.permute.xlu0 %1111
    %1113 = vrot.lane.b32.xlu0 %v572, 4
    %v1114 = vpop.permute.xlu0 %1113
    %1115 = vrot.lane.b32.xlu0 %v574, 4
    %v1116 = vpop.permute.xlu0 %1115
    %1117 = vrot.lane.b32.xlu0 %v576, 4
    %v1118 = vpop.permute.xlu0 %1117
    %1119 = vrot.lane.b32.xlu0 %v579, 4
    %v1120 = vpop.permute.xlu0 %1119
    %1121 = vrot.lane.b32.xlu0 %v581, 4
    %v1122 = vpop.permute.xlu0 %1121
    %1123 = vrot.lane.b32.xlu0 %v583, 4
    %v1124 = vpop.permute.xlu0 %1123
    %1233 = vrot.lane.b32.xlu0 %v587, 8
    %v1234 = vpop.permute.xlu0 %1233
    %1235 = vrot.lane.b32.xlu0 %v589, 8
    %v1236 = vpop.permute.xlu0 %1235
    %1237 = vrot.lane.b32.xlu0 %v591, 8
    %v1238 = vpop.permute.xlu0 %1237
    %1239 = vrot.lane.b32.xlu0 %v594, 8
    %v1240 = vpop.permute.xlu0 %1239
    %1241 = vrot.lane.b32.xlu0 %v596, 8
    %v1242 = vpop.permute.xlu0 %1241
    %1243 = vrot.lane.b32.xlu0 %v598, 8
    %v1244 = vpop.permute.xlu0 %1243
    %1245 = vrot.lane.b32.xlu0 %v601, 8
    %v1246 = vpop.permute.xlu0 %1245
    %1247 = vrot.lane.b32.xlu0 %v603, 8
    %v1248 = vpop.permute.xlu0 %1247
    %1249 = vrot.lane.b32.xlu0 %v605, 8
    %v1250 = vpop.permute.xlu0 %1249
    %1251 = vrot.lane.b32.xlu0 %v608, 8
    %v1252 = vpop.permute.xlu0 %1251
    %1253 = vrot.lane.b32.xlu0 %v610, 8
    %v1254 = vpop.permute.xlu0 %1253
    %1255 = vrot.lane.b32.xlu0 %v612, 8
    %v1256 = vpop.permute.xlu0 %1255
    %1257 = vrot.lane.b32.xlu0 %v615, 8
    %v1258 = vpop.permute.xlu0 %1257
    %1259 = vrot.lane.b32.xlu0 %v617, 8
    %v1260 = vpop.permute.xlu0 %1259
    %1261 = vrot.lane.b32.xlu0 %v619, 8
    %v1262 = vpop.permute.xlu0 %1261
    %1263 = vrot.lane.b32.xlu0 %v622, 8
    %v1264 = vpop.permute.xlu0 %1263
    %1265 = vrot.lane.b32.xlu0 %v624, 8
    %v1266 = vpop.permute.xlu0 %1265
    %1267 = vrot.lane.b32.xlu0 %v626, 8
    %v1268 = vpop.permute.xlu0 %1267
    %1269 = vrot.lane.b32.xlu0 %v629, 8
    %v1270 = vpop.permute.xlu0 %1269
    %1271 = vrot.lane.b32.xlu0 %v631, 8
    %v1272 = vpop.permute.xlu0 %1271
    %1273 = vrot.lane.b32.xlu0 %v633, 8
    %v1274 = vpop.permute.xlu0 %1273
    %1275 = vrot.lane.b32.xlu0 %v636, 8
    %v1276 = vpop.permute.xlu0 %1275
    %1277 = vrot.lane.b32.xlu0 %v638, 8
    %v1278 = vpop.permute.xlu0 %1277
    %1279 = vrot.lane.b32.xlu0 %v640, 8
    %v1280 = vpop.permute.xlu0 %1279
    %1281 = vrot.lane.b32.xlu0 %v643, 8
    %v1282 = vpop.permute.xlu0 %1281
    %1283 = vrot.lane.b32.xlu0 %v645, 8
    %v1284 = vpop.permute.xlu0 %1283
    %1285 = vrot.lane.b32.xlu0 %v647, 8
    %v1286 = vpop.permute.xlu0 %1285
    %1287 = vrot.lane.b32.xlu0 %v650, 8
    %v1288 = vpop.permute.xlu0 %1287
    %1289 = vrot.lane.b32.xlu0 %v652, 8
    %v1290 = vpop.permute.xlu0 %1289
    %1291 = vrot.lane.b32.xlu0 %v654, 8
    %v1292 = vpop.permute.xlu0 %1291
    %1293 = vrot.lane.b32.xlu0 %v657, 8
    %v1294 = vpop.permute.xlu0 %1293
    %1295 = vrot.lane.b32.xlu0 %v659, 8
    %v1296 = vpop.permute.xlu0 %1295
    %1297 = vrot.lane.b32.xlu0 %v661, 8
    %v1298 = vpop.permute.xlu0 %1297
    %1299 = vrot.lane.b32.xlu0 %v664, 8
    %v1300 = vpop.permute.xlu0 %1299
    %1301 = vrot.lane.b32.xlu0 %v666, 8
    %v1302 = vpop.permute.xlu0 %1301
    %1303 = vrot.lane.b32.xlu0 %v668, 8
    %v1304 = vpop.permute.xlu0 %1303
    %1305 = vrot.lane.b32.xlu0 %v671, 8
    %v1306 = vpop.permute.xlu0 %1305
    %1307 = vrot.lane.b32.xlu0 %v673, 8
    %v1308 = vpop.permute.xlu0 %1307
    %1309 = vrot.lane.b32.xlu0 %v675, 8
    %v1310 = vpop.permute.xlu0 %1309
    %1311 = vrot.lane.b32.xlu0 %v678, 8
    %v1312 = vpop.permute.xlu0 %1311
    %1313 = vrot.lane.b32.xlu0 %v680, 8
    %v1314 = vpop.permute.xlu0 %1313
    %1315 = vrot.lane.b32.xlu0 %v682, 8
    %v1316 = vpop.permute.xlu0 %1315
    %1317 = vrot.lane.b32.xlu0 %v685, 8
    %v1318 = vpop.permute.xlu0 %1317
    %1319 = vrot.lane.b32.xlu0 %v687, 8
    %v1320 = vpop.permute.xlu0 %1319
    %1321 = vrot.lane.b32.xlu0 %v689, 8
    %v1322 = vpop.permute.xlu0 %1321
    %1323 = vrot.lane.b32.xlu0 %v692, 8
    %v1324 = vpop.permute.xlu0 %1323
    %1325 = vrot.lane.b32.xlu0 %v694, 8
    %v1326 = vpop.permute.xlu0 %1325
    %1327 = vrot.lane.b32.xlu0 %v696, 8
    %v1328 = vpop.permute.xlu0 %1327
    %1329 = vrot.lane.b32.xlu0 %v699, 8
    %v1330 = vpop.permute.xlu0 %1329
    %1331 = vrot.lane.b32.xlu0 %v701, 8
    %v1332 = vpop.permute.xlu0 %1331
    %1333 = vrot.lane.b32.xlu0 %v703, 8
    %v1334 = vpop.permute.xlu0 %1333
    %1335 = vrot.lane.b32.xlu0 %v706, 8
    %v1336 = vpop.permute.xlu0 %1335
    %1337 = vrot.lane.b32.xlu0 %v708, 8
    %v1338 = vpop.permute.xlu0 %1337
    %1339 = vrot.lane.b32.xlu0 %v710, 8
    %v1340 = vpop.permute.xlu0 %1339
    %1341 = vrot.lane.b32.xlu0 %v713, 8
    %v1342 = vpop.permute.xlu0 %1341
    %1343 = vrot.lane.b32.xlu0 %v715, 8
    %v1344 = vpop.permute.xlu0 %1343
    %1345 = vrot.lane.b32.xlu0 %v717, 8
    %v1346 = vpop.permute.xlu0 %1345
    %1347 = vrot.lane.b32.xlu0 %v720, 8
    %v1348 = vpop.permute.xlu0 %1347
    %1349 = vrot.lane.b32.xlu0 %v722, 8
    %v1350 = vpop.permute.xlu0 %1349
    %1351 = vrot.lane.b32.xlu0 %v724, 8
    %v1352 = vpop.permute.xlu0 %1351
    %1353 = vrot.lane.b32.xlu0 %v727, 8
    %v1354 = vpop.permute.xlu0 %1353
    %1355 = vrot.lane.b32.xlu0 %v729, 8
    %v1356 = vpop.permute.xlu0 %1355
    %1357 = vrot.lane.b32.xlu0 %v731, 8
    %v1358 = vpop.permute.xlu0 %1357
    %1359 = vrot.lane.b32.xlu0 %v734, 8
    %v1360 = vpop.permute.xlu0 %1359
    %1361 = vrot.lane.b32.xlu0 %v736, 8
    %v1362 = vpop.permute.xlu0 %1361
    %1363 = vrot.lane.b32.xlu0 %v738, 8
    %v1364 = vpop.permute.xlu0 %1363
    %1365 = vrot.lane.b32.xlu0 %v741, 8
    %v1366 = vpop.permute.xlu0 %1365
    %1367 = vrot.lane.b32.xlu0 %v743, 8
    %v1368 = vpop.permute.xlu0 %1367
    %1369 = vrot.lane.b32.xlu0 %v745, 8
    %v1370 = vpop.permute.xlu0 %1369
    %1371 = vrot.lane.b32.xlu0 %v748, 8
    %v1372 = vpop.permute.xlu0 %1371
    %1373 = vrot.lane.b32.xlu0 %v750, 8
    %v1374 = vpop.permute.xlu0 %1373
    %1375 = vrot.lane.b32.xlu0 %v752, 8
    %v1376 = vpop.permute.xlu0 %1375
    %1377 = vrot.lane.b32.xlu0 %v755, 8
    %v1378 = vpop.permute.xlu0 %1377
    %1379 = vrot.lane.b32.xlu0 %v757, 8
    %v1380 = vpop.permute.xlu0 %1379
    %1381 = vrot.lane.b32.xlu0 %v759, 8
    %v1382 = vpop.permute.xlu0 %1381
    %1383 = vrot.lane.b32.xlu0 %v762, 8
    %v1384 = vpop.permute.xlu0 %1383
    %1385 = vrot.lane.b32.xlu0 %v764, 8
    %v1386 = vpop.permute.xlu0 %1385
    %1387 = vrot.lane.b32.xlu0 %v766, 8
    %v1388 = vpop.permute.xlu0 %1387
    %1389 = vrot.lane.b32.xlu0 %v769, 8
    %v1390 = vpop.permute.xlu0 %1389
    %1391 = vrot.lane.b32.xlu0 %v771, 8
    %v1392 = vpop.permute.xlu0 %1391
    %1393 = vrot.lane.b32.xlu0 %v773, 8
    %v1394 = vpop.permute.xlu0 %1393
    %1395 = vrot.lane.b32.xlu0 %v776, 8
    %v1396 = vpop.permute.xlu0 %1395
    %1397 = vrot.lane.b32.xlu0 %v778, 8
    %v1398 = vpop.permute.xlu0 %1397
    %1399 = vrot.lane.b32.xlu0 %v780, 8
    %v1400 = vpop.permute.xlu0 %1399
    %1401 = vrot.lane.b32.xlu0 %v783, 8
    %v1402 = vpop.permute.xlu0 %1401
    %1403 = vrot.lane.b32.xlu0 %v785, 8
    %v1404 = vpop.permute.xlu0 %1403
    %1405 = vrot.lane.b32.xlu0 %v787, 8
    %v1406 = vpop.permute.xlu0 %1405
    %1407 = vrot.lane.b32.xlu0 %v790, 8
    %v1408 = vpop.permute.xlu0 %1407
    %1409 = vrot.lane.b32.xlu0 %v792, 8
    %v1410 = vpop.permute.xlu0 %1409
    %1411 = vrot.lane.b32.xlu0 %v794, 8
    %v1412 = vpop.permute.xlu0 %1411
    %1413 = vrot.lane.b32.xlu0 %v797, 8
    %v1414 = vpop.permute.xlu0 %1413
    %1415 = vrot.lane.b32.xlu0 %v799, 8
    %v1416 = vpop.permute.xlu0 %1415
    %1417 = vrot.lane.b32.xlu0 %v801, 8
    %v1418 = vpop.permute.xlu0 %1417
    %1419 = vrot.lane.b32.xlu0 %v804, 8
    %v1420 = vpop.permute.xlu0 %1419
    %1421 = vrot.lane.b32.xlu0 %v806, 8
    %v1422 = vpop.permute.xlu0 %1421
    %1423 = vrot.lane.b32.xlu0 %v808, 8
    %v1424 = vpop.permute.xlu0 %1423
    %1425 = vrot.lane.b32.xlu0 %v811, 8
    %v1426 = vpop.permute.xlu0 %1425
    %1427 = vrot.lane.b32.xlu0 %v813, 8
    %v1428 = vpop.permute.xlu0 %1427
    %1429 = vrot.lane.b32.xlu0 %v815, 8
    %v1430 = vpop.permute.xlu0 %1429
    %1431 = vrot.lane.b32.xlu0 %v818, 8
    %v1432 = vpop.permute.xlu0 %1431
    %1433 = vrot.lane.b32.xlu0 %v820, 8
    %v1434 = vpop.permute.xlu0 %1433
    %1435 = vrot.lane.b32.xlu0 %v822, 8
    %v1436 = vpop.permute.xlu0 %1435
    %1437 = vrot.lane.b32.xlu0 %v825, 8
    %v1438 = vpop.permute.xlu0 %1437
    %1439 = vrot.lane.b32.xlu0 %v827, 8
    %v1440 = vpop.permute.xlu0 %1439
    %1441 = vrot.lane.b32.xlu0 %v829, 8
    %v1442 = vpop.permute.xlu0 %1441
    %1443 = vrot.lane.b32.xlu0 %v832, 8
    %v1444 = vpop.permute.xlu0 %1443
    %1445 = vrot.lane.b32.xlu0 %v834, 8
    %v1446 = vpop.permute.xlu0 %1445
    %1447 = vrot.lane.b32.xlu0 %v836, 8
    %v1448 = vpop.permute.xlu0 %1447
    %1557 = vrot.lane.b32.xlu0 %v31, 12
    %v1558 = vpop.permute.xlu0 %1557
    %1559 = vrot.lane.b32.xlu0 %v32, 12
    %v1560 = vpop.permute.xlu0 %1559
    %1561 = vrot.lane.b32.xlu0 %v33, 12
    %v1562 = vpop.permute.xlu0 %1561
    %1563 = vrot.lane.b32.xlu0 %v35, 12
    %v1564 = vpop.permute.xlu0 %1563
    %1565 = vrot.lane.b32.xlu0 %v36, 12
    %v1566 = vpop.permute.xlu0 %1565
    %1567 = vrot.lane.b32.xlu0 %v37, 12
    %v1568 = vpop.permute.xlu0 %1567
    %1569 = vrot.lane.b32.xlu0 %v39, 12
    %v1570 = vpop.permute.xlu0 %1569
    %1571 = vrot.lane.b32.xlu0 %v40, 12
    %v1572 = vpop.permute.xlu0 %1571
    %1573 = vrot.lane.b32.xlu0 %v41, 12
    %v1574 = vpop.permute.xlu0 %1573
    %1575 = vrot.lane.b32.xlu0 %v43, 12
    %v1576 = vpop.permute.xlu0 %1575
    %1577 = vrot.lane.b32.xlu0 %v44, 12
    %v1578 = vpop.permute.xlu0 %1577
    %1579 = vrot.lane.b32.xlu0 %v45, 12
    %v1580 = vpop.permute.xlu0 %1579
    %1581 = vrot.lane.b32.xlu0 %v47, 12
    %v1582 = vpop.permute.xlu0 %1581
    %1583 = vrot.lane.b32.xlu0 %v48, 12
    %v1584 = vpop.permute.xlu0 %1583
    %1585 = vrot.lane.b32.xlu0 %v49, 12
    %v1586 = vpop.permute.xlu0 %1585
    %1587 = vrot.lane.b32.xlu0 %v51, 12
    %v1588 = vpop.permute.xlu0 %1587
    %1589 = vrot.lane.b32.xlu0 %v52, 12
    %v1590 = vpop.permute.xlu0 %1589
    %1591 = vrot.lane.b32.xlu0 %v53, 12
    %v1592 = vpop.permute.xlu0 %1591
    %1593 = vrot.lane.b32.xlu0 %v55, 12
    %v1594 = vpop.permute.xlu0 %1593
    %1595 = vrot.lane.b32.xlu0 %v56, 12
    %v1596 = vpop.permute.xlu0 %1595
    %1597 = vrot.lane.b32.xlu0 %v57, 12
    %v1598 = vpop.permute.xlu0 %1597
    %1599 = vrot.lane.b32.xlu0 %v59, 12
    %v1600 = vpop.permute.xlu0 %1599
    %1601 = vrot.lane.b32.xlu0 %v60, 12
    %v1602 = vpop.permute.xlu0 %1601
    %1603 = vrot.lane.b32.xlu0 %v61, 12
    %v1604 = vpop.permute.xlu0 %1603
    %1605 = vrot.lane.b32.xlu0 %v63, 12
    %v1606 = vpop.permute.xlu0 %1605
    %1607 = vrot.lane.b32.xlu0 %v64, 12
    %v1608 = vpop.permute.xlu0 %1607
    %1609 = vrot.lane.b32.xlu0 %v65, 12
    %v1610 = vpop.permute.xlu0 %1609
    %1611 = vrot.lane.b32.xlu0 %v67, 12
    %v1612 = vpop.permute.xlu0 %1611
    %1613 = vrot.lane.b32.xlu0 %v68, 12
    %v1614 = vpop.permute.xlu0 %1613
    %1615 = vrot.lane.b32.xlu0 %v69, 12
    %v1616 = vpop.permute.xlu0 %1615
    %1617 = vrot.lane.b32.xlu0 %v71, 12
    %v1618 = vpop.permute.xlu0 %1617
    %1619 = vrot.lane.b32.xlu0 %v72, 12
    %v1620 = vpop.permute.xlu0 %1619
    %1621 = vrot.lane.b32.xlu0 %v73, 12
    %v1622 = vpop.permute.xlu0 %1621
    %1623 = vrot.lane.b32.xlu0 %v75, 12
    %v1624 = vpop.permute.xlu0 %1623
    %1625 = vrot.lane.b32.xlu0 %v76, 12
    %v1626 = vpop.permute.xlu0 %1625
    %1627 = vrot.lane.b32.xlu0 %v77, 12
    %v1628 = vpop.permute.xlu0 %1627
    %1629 = vrot.lane.b32.xlu0 %v79, 12
    %v1630 = vpop.permute.xlu0 %1629
    %1631 = vrot.lane.b32.xlu0 %v80, 12
    %v1632 = vpop.permute.xlu0 %1631
    %1633 = vrot.lane.b32.xlu0 %v81, 12
    %v1634 = vpop.permute.xlu0 %1633
    %1635 = vrot.lane.b32.xlu0 %v83, 12
    %v1636 = vpop.permute.xlu0 %1635
    %1637 = vrot.lane.b32.xlu0 %v84, 12
    %v1638 = vpop.permute.xlu0 %1637
    %1639 = vrot.lane.b32.xlu0 %v85, 12
    %v1640 = vpop.permute.xlu0 %1639
    %1641 = vrot.lane.b32.xlu0 %v87, 12
    %v1642 = vpop.permute.xlu0 %1641
    %1643 = vrot.lane.b32.xlu0 %v88, 12
    %v1644 = vpop.permute.xlu0 %1643
    %1645 = vrot.lane.b32.xlu0 %v89, 12
    %v1646 = vpop.permute.xlu0 %1645
    %1647 = vrot.lane.b32.xlu0 %v91, 12
    %v1648 = vpop.permute.xlu0 %1647
    %1649 = vrot.lane.b32.xlu0 %v92, 12
    %v1650 = vpop.permute.xlu0 %1649
    %1651 = vrot.lane.b32.xlu0 %v93, 12
    %v1652 = vpop.permute.xlu0 %1651
    %1653 = vrot.lane.b32.xlu0 %v95, 12
    %v1654 = vpop.permute.xlu0 %1653
    %1655 = vrot.lane.b32.xlu0 %v96, 12
    %v1656 = vpop.permute.xlu0 %1655
    %1657 = vrot.lane.b32.xlu0 %v97, 12
    %v1658 = vpop.permute.xlu0 %1657
    %1659 = vrot.lane.b32.xlu0 %v99, 12
    %v1660 = vpop.permute.xlu0 %1659
    %1661 = vrot.lane.b32.xlu0 %v100, 12
    %v1662 = vpop.permute.xlu0 %1661
    %1663 = vrot.lane.b32.xlu0 %v101, 12
    %v1664 = vpop.permute.xlu0 %1663
    %1665 = vrot.lane.b32.xlu0 %v111, 12
    %v1666 = vpop.permute.xlu0 %1665
    %1667 = vrot.lane.b32.xlu0 %v112, 12
    %v1668 = vpop.permute.xlu0 %1667
    %1669 = vrot.lane.b32.xlu0 %v113, 12
    %v1670 = vpop.permute.xlu0 %1669
    %1671 = vrot.lane.b32.xlu0 %v115, 12
    %v1672 = vpop.permute.xlu0 %1671
    %1673 = vrot.lane.b32.xlu0 %v116, 12
    %v1674 = vpop.permute.xlu0 %1673
    %1675 = vrot.lane.b32.xlu0 %v117, 12
    %v1676 = vpop.permute.xlu0 %1675
    %1677 = vrot.lane.b32.xlu0 %v119, 12
    %v1678 = vpop.permute.xlu0 %1677
    %1679 = vrot.lane.b32.xlu0 %v120, 12
    %v1680 = vpop.permute.xlu0 %1679
    %1681 = vrot.lane.b32.xlu0 %v121, 12
    %v1682 = vpop.permute.xlu0 %1681
    %1683 = vrot.lane.b32.xlu0 %v123, 12
    %v1684 = vpop.permute.xlu0 %1683
    %1685 = vrot.lane.b32.xlu0 %v124, 12
    %v1686 = vpop.permute.xlu0 %1685
    %1687 = vrot.lane.b32.xlu0 %v125, 12
    %v1688 = vpop.permute.xlu0 %1687
    %1689 = vrot.lane.b32.xlu0 %v127, 12
    %v1690 = vpop.permute.xlu0 %1689
    %1691 = vrot.lane.b32.xlu0 %v128, 12
    %v1692 = vpop.permute.xlu0 %1691
    %1693 = vrot.lane.b32.xlu0 %v129, 12
    %v1694 = vpop.permute.xlu0 %1693
    %1695 = vrot.lane.b32.xlu0 %v131, 12
    %v1696 = vpop.permute.xlu0 %1695
    %1697 = vrot.lane.b32.xlu0 %v132, 12
    %v1698 = vpop.permute.xlu0 %1697
    %1699 = vrot.lane.b32.xlu0 %v133, 12
    %v1700 = vpop.permute.xlu0 %1699
    %1701 = vrot.lane.b32.xlu0 %v135, 12
    %v1702 = vpop.permute.xlu0 %1701
    %1703 = vrot.lane.b32.xlu0 %v136, 12
    %v1704 = vpop.permute.xlu0 %1703
    %1705 = vrot.lane.b32.xlu0 %v137, 12
    %v1706 = vpop.permute.xlu0 %1705
    %1707 = vrot.lane.b32.xlu0 %v139, 12
    %v1708 = vpop.permute.xlu0 %1707
    %1709 = vrot.lane.b32.xlu0 %v140, 12
    %v1710 = vpop.permute.xlu0 %1709
    %1711 = vrot.lane.b32.xlu0 %v141, 12
    %v1712 = vpop.permute.xlu0 %1711
    %1713 = vrot.lane.b32.xlu0 %v143, 12
    %v1714 = vpop.permute.xlu0 %1713
    %1715 = vrot.lane.b32.xlu0 %v144, 12
    %v1716 = vpop.permute.xlu0 %1715
    %1717 = vrot.lane.b32.xlu0 %v145, 12
    %v1718 = vpop.permute.xlu0 %1717
    %1719 = vrot.lane.b32.xlu0 %v147, 12
    %v1720 = vpop.permute.xlu0 %1719
    %1721 = vrot.lane.b32.xlu0 %v148, 12
    %v1722 = vpop.permute.xlu0 %1721
    %1723 = vrot.lane.b32.xlu0 %v149, 12
    %v1724 = vpop.permute.xlu0 %1723
    %1725 = vrot.lane.b32.xlu0 %v151, 12
    %v1726 = vpop.permute.xlu0 %1725
    %1727 = vrot.lane.b32.xlu0 %v152, 12
    %v1728 = vpop.permute.xlu0 %1727
    %1729 = vrot.lane.b32.xlu0 %v153, 12
    %v1730 = vpop.permute.xlu0 %1729
    %1731 = vrot.lane.b32.xlu0 %v155, 12
    %v1732 = vpop.permute.xlu0 %1731
    %1733 = vrot.lane.b32.xlu0 %v156, 12
    %v1734 = vpop.permute.xlu0 %1733
    %1735 = vrot.lane.b32.xlu0 %v157, 12
    %v1736 = vpop.permute.xlu0 %1735
    %1737 = vrot.lane.b32.xlu0 %v159, 12
    %v1738 = vpop.permute.xlu0 %1737
    %1739 = vrot.lane.b32.xlu0 %v160, 12
    %v1740 = vpop.permute.xlu0 %1739
    %1741 = vrot.lane.b32.xlu0 %v161, 12
    %v1742 = vpop.permute.xlu0 %1741
    %1743 = vrot.lane.b32.xlu0 %v163, 12
    %v1744 = vpop.permute.xlu0 %1743
    %1745 = vrot.lane.b32.xlu0 %v164, 12
    %v1746 = vpop.permute.xlu0 %1745
    %1747 = vrot.lane.b32.xlu0 %v165, 12
    %v1748 = vpop.permute.xlu0 %1747
    %1749 = vrot.lane.b32.xlu0 %v167, 12
    %v1750 = vpop.permute.xlu0 %1749
    %1751 = vrot.lane.b32.xlu0 %v168, 12
    %v1752 = vpop.permute.xlu0 %1751
    %1753 = vrot.lane.b32.xlu0 %v169, 12
    %v1754 = vpop.permute.xlu0 %1753
    %1755 = vrot.lane.b32.xlu0 %v171, 12
    %v1756 = vpop.permute.xlu0 %1755
    %1757 = vrot.lane.b32.xlu0 %v172, 12
    %v1758 = vpop.permute.xlu0 %1757
    %1759 = vrot.lane.b32.xlu0 %v173, 12
    %v1760 = vpop.permute.xlu0 %1759
    %1761 = vrot.lane.b32.xlu0 %v175, 12
    %v1762 = vpop.permute.xlu0 %1761
    %1763 = vrot.lane.b32.xlu0 %v176, 12
    %v1764 = vpop.permute.xlu0 %1763
    %1765 = vrot.lane.b32.xlu0 %v177, 12
    %v1766 = vpop.permute.xlu0 %1765
    %1767 = vrot.lane.b32.xlu0 %v179, 12
    %v1768 = vpop.permute.xlu0 %1767
    %1769 = vrot.lane.b32.xlu0 %v180, 12
    %v1770 = vpop.permute.xlu0 %1769
    %1771 = vrot.lane.b32.xlu0 %v181, 12
    %v1772 = vpop.permute.xlu0 %1771
    %1881 = vrot.lane.b32.xlu0 %v341, 16
    %v1882 = vpop.permute.xlu0 %1881
    %1883 = vrot.lane.b32.xlu0 %v343, 16
    %v1884 = vpop.permute.xlu0 %1883
    %1885 = vrot.lane.b32.xlu0 %v345, 16
    %v1886 = vpop.permute.xlu0 %1885
    %1887 = vrot.lane.b32.xlu0 %v348, 16
    %v1888 = vpop.permute.xlu0 %1887
    %1889 = vrot.lane.b32.xlu0 %v350, 16
    %v1890 = vpop.permute.xlu0 %1889
    %1891 = vrot.lane.b32.xlu0 %v352, 16
    %v1892 = vpop.permute.xlu0 %1891
    %1893 = vrot.lane.b32.xlu0 %v355, 16
    %v1894 = vpop.permute.xlu0 %1893
    %1895 = vrot.lane.b32.xlu0 %v357, 16
    %v1896 = vpop.permute.xlu0 %1895
    %1897 = vrot.lane.b32.xlu0 %v359, 16
    %v1898 = vpop.permute.xlu0 %1897
    %1899 = vrot.lane.b32.xlu0 %v362, 16
    %v1900 = vpop.permute.xlu0 %1899
    %1901 = vrot.lane.b32.xlu0 %v364, 16
    %v1902 = vpop.permute.xlu0 %1901
    %1903 = vrot.lane.b32.xlu0 %v366, 16
    %v1904 = vpop.permute.xlu0 %1903
    %1905 = vrot.lane.b32.xlu0 %v369, 16
    %v1906 = vpop.permute.xlu0 %1905
    %1907 = vrot.lane.b32.xlu0 %v371, 16
    %v1908 = vpop.permute.xlu0 %1907
    %1909 = vrot.lane.b32.xlu0 %v373, 16
    %v1910 = vpop.permute.xlu0 %1909
    %1911 = vrot.lane.b32.xlu0 %v376, 16
    %v1912 = vpop.permute.xlu0 %1911
    %1913 = vrot.lane.b32.xlu0 %v378, 16
    %v1914 = vpop.permute.xlu0 %1913
    %1915 = vrot.lane.b32.xlu0 %v380, 16
    %v1916 = vpop.permute.xlu0 %1915
    %1917 = vrot.lane.b32.xlu0 %v383, 16
    %v1918 = vpop.permute.xlu0 %1917
    %1919 = vrot.lane.b32.xlu0 %v385, 16
    %v1920 = vpop.permute.xlu0 %1919
    %1921 = vrot.lane.b32.xlu0 %v387, 16
    %v1922 = vpop.permute.xlu0 %1921
    %1923 = vrot.lane.b32.xlu0 %v390, 16
    %v1924 = vpop.permute.xlu0 %1923
    %1925 = vrot.lane.b32.xlu0 %v392, 16
    %v1926 = vpop.permute.xlu0 %1925
    %1927 = vrot.lane.b32.xlu0 %v394, 16
    %v1928 = vpop.permute.xlu0 %1927
    %1929 = vrot.lane.b32.xlu0 %v397, 16
    %v1930 = vpop.permute.xlu0 %1929
    %1931 = vrot.lane.b32.xlu0 %v399, 16
    %v1932 = vpop.permute.xlu0 %1931
    %1933 = vrot.lane.b32.xlu0 %v401, 16
    %v1934 = vpop.permute.xlu0 %1933
    %1935 = vrot.lane.b32.xlu0 %v404, 16
    %v1936 = vpop.permute.xlu0 %1935
    %1937 = vrot.lane.b32.xlu0 %v406, 16
    %v1938 = vpop.permute.xlu0 %1937
    %1939 = vrot.lane.b32.xlu0 %v408, 16
    %v1940 = vpop.permute.xlu0 %1939
    %1941 = vrot.lane.b32.xlu0 %v411, 16
    %v1942 = vpop.permute.xlu0 %1941
    %1943 = vrot.lane.b32.xlu0 %v413, 16
    %v1944 = vpop.permute.xlu0 %1943
    %1945 = vrot.lane.b32.xlu0 %v415, 16
    %v1946 = vpop.permute.xlu0 %1945
    %1947 = vrot.lane.b32.xlu0 %v418, 16
    %v1948 = vpop.permute.xlu0 %1947
    %1949 = vrot.lane.b32.xlu0 %v420, 16
    %v1950 = vpop.permute.xlu0 %1949
    %1951 = vrot.lane.b32.xlu0 %v422, 16
    %v1952 = vpop.permute.xlu0 %1951
    %1953 = vrot.lane.b32.xlu0 %v425, 16
    %v1954 = vpop.permute.xlu0 %1953
    %1955 = vrot.lane.b32.xlu0 %v427, 16
    %v1956 = vpop.permute.xlu0 %1955
    %1957 = vrot.lane.b32.xlu0 %v429, 16
    %v1958 = vpop.permute.xlu0 %1957
    %1959 = vrot.lane.b32.xlu0 %v432, 16
    %v1960 = vpop.permute.xlu0 %1959
    %1961 = vrot.lane.b32.xlu0 %v434, 16
    %v1962 = vpop.permute.xlu0 %1961
    %1963 = vrot.lane.b32.xlu0 %v436, 16
    %v1964 = vpop.permute.xlu0 %1963
    %1965 = vrot.lane.b32.xlu0 %v439, 16
    %v1966 = vpop.permute.xlu0 %1965
    %1967 = vrot.lane.b32.xlu0 %v441, 16
    %v1968 = vpop.permute.xlu0 %1967
    %1969 = vrot.lane.b32.xlu0 %v443, 16
    %v1970 = vpop.permute.xlu0 %1969
    %1971 = vrot.lane.b32.xlu0 %v446, 16
    %v1972 = vpop.permute.xlu0 %1971
    %1973 = vrot.lane.b32.xlu0 %v448, 16
    %v1974 = vpop.permute.xlu0 %1973
    %1975 = vrot.lane.b32.xlu0 %v450, 16
    %v1976 = vpop.permute.xlu0 %1975
    %1977 = vrot.lane.b32.xlu0 %v453, 16
    %v1978 = vpop.permute.xlu0 %1977
    %1979 = vrot.lane.b32.xlu0 %v455, 16
    %v1980 = vpop.permute.xlu0 %1979
    %1981 = vrot.lane.b32.xlu0 %v457, 16
    %v1982 = vpop.permute.xlu0 %1981
    %1983 = vrot.lane.b32.xlu0 %v847, 16
    %v1984 = vpop.permute.xlu0 %1983
    %1985 = vrot.lane.b32.xlu0 %v849, 16
    %v1986 = vpop.permute.xlu0 %1985
    %1987 = vrot.lane.b32.xlu0 %v851, 16
    %v1988 = vpop.permute.xlu0 %1987
    %1989 = vrot.lane.b32.xlu0 %v467, 16
    %v1990 = vpop.permute.xlu0 %1989
    %1991 = vrot.lane.b32.xlu0 %v469, 16
    %v1992 = vpop.permute.xlu0 %1991
    %1993 = vrot.lane.b32.xlu0 %v471, 16
    %v1994 = vpop.permute.xlu0 %1993
    %1995 = vrot.lane.b32.xlu0 %v474, 16
    %v1996 = vpop.permute.xlu0 %1995
    %1997 = vrot.lane.b32.xlu0 %v476, 16
    %v1998 = vpop.permute.xlu0 %1997
    %1999 = vrot.lane.b32.xlu0 %v478, 16
    %v2000 = vpop.permute.xlu0 %1999
    %2001 = vrot.lane.b32.xlu0 %v481, 16
    %v2002 = vpop.permute.xlu0 %2001
    %2003 = vrot.lane.b32.xlu0 %v483, 16
    %v2004 = vpop.permute.xlu0 %2003
    %2005 = vrot.lane.b32.xlu0 %v485, 16
    %v2006 = vpop.permute.xlu0 %2005
    %2007 = vrot.lane.b32.xlu0 %v488, 16
    %v2008 = vpop.permute.xlu0 %2007
    %2009 = vrot.lane.b32.xlu0 %v490, 16
    %v2010 = vpop.permute.xlu0 %2009
    %2011 = vrot.lane.b32.xlu0 %v492, 16
    %v2012 = vpop.permute.xlu0 %2011
    %2013 = vrot.lane.b32.xlu0 %v495, 16
    %v2014 = vpop.permute.xlu0 %2013
    %2015 = vrot.lane.b32.xlu0 %v497, 16
    %v2016 = vpop.permute.xlu0 %2015
    %2017 = vrot.lane.b32.xlu0 %v499, 16
    %v2018 = vpop.permute.xlu0 %2017
    %2019 = vrot.lane.b32.xlu0 %v502, 16
    %v2020 = vpop.permute.xlu0 %2019
    %2021 = vrot.lane.b32.xlu0 %v504, 16
    %v2022 = vpop.permute.xlu0 %2021
    %2023 = vrot.lane.b32.xlu0 %v506, 16
    %v2024 = vpop.permute.xlu0 %2023
    %2025 = vrot.lane.b32.xlu0 %v509, 16
    %v2026 = vpop.permute.xlu0 %2025
    %2027 = vrot.lane.b32.xlu0 %v511, 16
    %v2028 = vpop.permute.xlu0 %2027
    %2029 = vrot.lane.b32.xlu0 %v513, 16
    %v2030 = vpop.permute.xlu0 %2029
    %2031 = vrot.lane.b32.xlu0 %v516, 16
    %v2032 = vpop.permute.xlu0 %2031
    %2033 = vrot.lane.b32.xlu0 %v518, 16
    %v2034 = vpop.permute.xlu0 %2033
    %2035 = vrot.lane.b32.xlu0 %v520, 16
    %v2036 = vpop.permute.xlu0 %2035
    %2037 = vrot.lane.b32.xlu0 %v523, 16
    %v2038 = vpop.permute.xlu0 %2037
    %2039 = vrot.lane.b32.xlu0 %v525, 16
    %v2040 = vpop.permute.xlu0 %2039
    %2041 = vrot.lane.b32.xlu0 %v527, 16
    %v2042 = vpop.permute.xlu0 %2041
    %2043 = vrot.lane.b32.xlu0 %v530, 16
    %v2044 = vpop.permute.xlu0 %2043
    %2045 = vrot.lane.b32.xlu0 %v532, 16
    %v2046 = vpop.permute.xlu0 %2045
    %2047 = vrot.lane.b32.xlu0 %v534, 16
    %v2048 = vpop.permute.xlu0 %2047
    %2049 = vrot.lane.b32.xlu0 %v537, 16
    %v2050 = vpop.permute.xlu0 %2049
    %2051 = vrot.lane.b32.xlu0 %v539, 16
    %v2052 = vpop.permute.xlu0 %2051
    %2053 = vrot.lane.b32.xlu0 %v541, 16
    %v2054 = vpop.permute.xlu0 %2053
    %2055 = vrot.lane.b32.xlu0 %v544, 16
    %v2056 = vpop.permute.xlu0 %2055
    %2057 = vrot.lane.b32.xlu0 %v546, 16
    %v2058 = vpop.permute.xlu0 %2057
    %2059 = vrot.lane.b32.xlu0 %v548, 16
    %v2060 = vpop.permute.xlu0 %2059
    %2061 = vrot.lane.b32.xlu0 %v551, 16
    %v2062 = vpop.permute.xlu0 %2061
    %2063 = vrot.lane.b32.xlu0 %v553, 16
    %v2064 = vpop.permute.xlu0 %2063
    %2065 = vrot.lane.b32.xlu0 %v555, 16
    %v2066 = vpop.permute.xlu0 %2065
    %2067 = vrot.lane.b32.xlu0 %v558, 16
    %v2068 = vpop.permute.xlu0 %2067
    %2069 = vrot.lane.b32.xlu0 %v560, 16
    %v2070 = vpop.permute.xlu0 %2069
    %2071 = vrot.lane.b32.xlu0 %v562, 16
    %v2072 = vpop.permute.xlu0 %2071
    %2073 = vrot.lane.b32.xlu0 %v565, 16
    %v2074 = vpop.permute.xlu0 %2073
    %2075 = vrot.lane.b32.xlu0 %v567, 16
    %v2076 = vpop.permute.xlu0 %2075
    %2077 = vrot.lane.b32.xlu0 %v569, 16
    %v2078 = vpop.permute.xlu0 %2077
    %2079 = vrot.lane.b32.xlu0 %v572, 16
    %v2080 = vpop.permute.xlu0 %2079
    %2081 = vrot.lane.b32.xlu0 %v574, 16
    %v2082 = vpop.permute.xlu0 %2081
    %2083 = vrot.lane.b32.xlu0 %v576, 16
    %v2084 = vpop.permute.xlu0 %2083
    %2085 = vrot.lane.b32.xlu0 %v579, 16
    %v2086 = vpop.permute.xlu0 %2085
    %2087 = vrot.lane.b32.xlu0 %v581, 16
    %v2088 = vpop.permute.xlu0 %2087
    %2089 = vrot.lane.b32.xlu0 %v583, 16
    %v2090 = vpop.permute.xlu0 %2089
    %2091 = vrot.lane.b32.xlu0 %v854, 16
    %v2092 = vpop.permute.xlu0 %2091
    %2093 = vrot.lane.b32.xlu0 %v856, 16
    %v2094 = vpop.permute.xlu0 %2093
    %2095 = vrot.lane.b32.xlu0 %v858, 16
    %v2096 = vpop.permute.xlu0 %2095
    %2205 = vrot.lane.b32.xlu0 %v594, 20
    %v2206 = vpop.permute.xlu0 %2205
    %2207 = vrot.lane.b32.xlu0 %v596, 20
    %v2208 = vpop.permute.xlu0 %2207
    %2209 = vrot.lane.b32.xlu0 %v598, 20
    %v2210 = vpop.permute.xlu0 %2209
    %2211 = vrot.lane.b32.xlu0 %v601, 20
    %v2212 = vpop.permute.xlu0 %2211
    %2213 = vrot.lane.b32.xlu0 %v603, 20
    %v2214 = vpop.permute.xlu0 %2213
    %2215 = vrot.lane.b32.xlu0 %v605, 20
    %v2216 = vpop.permute.xlu0 %2215
    %2217 = vrot.lane.b32.xlu0 %v608, 20
    %v2218 = vpop.permute.xlu0 %2217
    %2219 = vrot.lane.b32.xlu0 %v610, 20
    %v2220 = vpop.permute.xlu0 %2219
    %2221 = vrot.lane.b32.xlu0 %v612, 20
    %v2222 = vpop.permute.xlu0 %2221
    %2223 = vrot.lane.b32.xlu0 %v615, 20
    %v2224 = vpop.permute.xlu0 %2223
    %2225 = vrot.lane.b32.xlu0 %v617, 20
    %v2226 = vpop.permute.xlu0 %2225
    %2227 = vrot.lane.b32.xlu0 %v619, 20
    %v2228 = vpop.permute.xlu0 %2227
    %2229 = vrot.lane.b32.xlu0 %v622, 20
    %v2230 = vpop.permute.xlu0 %2229
    %2231 = vrot.lane.b32.xlu0 %v624, 20
    %v2232 = vpop.permute.xlu0 %2231
    %2233 = vrot.lane.b32.xlu0 %v626, 20
    %v2234 = vpop.permute.xlu0 %2233
    %2235 = vrot.lane.b32.xlu0 %v629, 20
    %v2236 = vpop.permute.xlu0 %2235
    %2237 = vrot.lane.b32.xlu0 %v631, 20
    %v2238 = vpop.permute.xlu0 %2237
    %2239 = vrot.lane.b32.xlu0 %v633, 20
    %v2240 = vpop.permute.xlu0 %2239
    %2241 = vrot.lane.b32.xlu0 %v636, 20
    %v2242 = vpop.permute.xlu0 %2241
    %2243 = vrot.lane.b32.xlu0 %v638, 20
    %v2244 = vpop.permute.xlu0 %2243
    %2245 = vrot.lane.b32.xlu0 %v640, 20
    %v2246 = vpop.permute.xlu0 %2245
    %2247 = vrot.lane.b32.xlu0 %v643, 20
    %v2248 = vpop.permute.xlu0 %2247
    %2249 = vrot.lane.b32.xlu0 %v645, 20
    %v2250 = vpop.permute.xlu0 %2249
    %2251 = vrot.lane.b32.xlu0 %v647, 20
    %v2252 = vpop.permute.xlu0 %2251
    %2253 = vrot.lane.b32.xlu0 %v650, 20
    %v2254 = vpop.permute.xlu0 %2253
    %2255 = vrot.lane.b32.xlu0 %v652, 20
    %v2256 = vpop.permute.xlu0 %2255
    %2257 = vrot.lane.b32.xlu0 %v654, 20
    %v2258 = vpop.permute.xlu0 %2257
    %2259 = vrot.lane.b32.xlu0 %v657, 20
    %v2260 = vpop.permute.xlu0 %2259
    %2261 = vrot.lane.b32.xlu0 %v659, 20
    %v2262 = vpop.permute.xlu0 %2261
    %2263 = vrot.lane.b32.xlu0 %v661, 20
    %v2264 = vpop.permute.xlu0 %2263
    %2265 = vrot.lane.b32.xlu0 %v664, 20
    %v2266 = vpop.permute.xlu0 %2265
    %2267 = vrot.lane.b32.xlu0 %v666, 20
    %v2268 = vpop.permute.xlu0 %2267
    %2269 = vrot.lane.b32.xlu0 %v668, 20
    %v2270 = vpop.permute.xlu0 %2269
    %2271 = vrot.lane.b32.xlu0 %v671, 20
    %v2272 = vpop.permute.xlu0 %2271
    %2273 = vrot.lane.b32.xlu0 %v673, 20
    %v2274 = vpop.permute.xlu0 %2273
    %2275 = vrot.lane.b32.xlu0 %v675, 20
    %v2276 = vpop.permute.xlu0 %2275
    %2277 = vrot.lane.b32.xlu0 %v678, 20
    %v2278 = vpop.permute.xlu0 %2277
    %2279 = vrot.lane.b32.xlu0 %v680, 20
    %v2280 = vpop.permute.xlu0 %2279
    %2281 = vrot.lane.b32.xlu0 %v682, 20
    %v2282 = vpop.permute.xlu0 %2281
    %2283 = vrot.lane.b32.xlu0 %v685, 20
    %v2284 = vpop.permute.xlu0 %2283
    %2285 = vrot.lane.b32.xlu0 %v687, 20
    %v2286 = vpop.permute.xlu0 %2285
    %2287 = vrot.lane.b32.xlu0 %v689, 20
    %v2288 = vpop.permute.xlu0 %2287
    %2289 = vrot.lane.b32.xlu0 %v692, 20
    %v2290 = vpop.permute.xlu0 %2289
    %2291 = vrot.lane.b32.xlu0 %v694, 20
    %v2292 = vpop.permute.xlu0 %2291
    %2293 = vrot.lane.b32.xlu0 %v696, 20
    %v2294 = vpop.permute.xlu0 %2293
    %2295 = vrot.lane.b32.xlu0 %v699, 20
    %v2296 = vpop.permute.xlu0 %2295
    %2297 = vrot.lane.b32.xlu0 %v701, 20
    %v2298 = vpop.permute.xlu0 %2297
    %2299 = vrot.lane.b32.xlu0 %v703, 20
    %v2300 = vpop.permute.xlu0 %2299
    %2301 = vrot.lane.b32.xlu0 %v706, 20
    %v2302 = vpop.permute.xlu0 %2301
    %2303 = vrot.lane.b32.xlu0 %v708, 20
    %v2304 = vpop.permute.xlu0 %2303
    %2305 = vrot.lane.b32.xlu0 %v710, 20
    %v2306 = vpop.permute.xlu0 %2305
    %2307 = vrot.lane.b32.xlu0 %v861, 20
    %v2308 = vpop.permute.xlu0 %2307
    %2309 = vrot.lane.b32.xlu0 %v863, 20
    %v2310 = vpop.permute.xlu0 %2309
    %2311 = vrot.lane.b32.xlu0 %v865, 20
    %v2312 = vpop.permute.xlu0 %2311
    %2313 = vrot.lane.b32.xlu0 %v720, 20
    %v2314 = vpop.permute.xlu0 %2313
    %2315 = vrot.lane.b32.xlu0 %v722, 20
    %v2316 = vpop.permute.xlu0 %2315
    %2317 = vrot.lane.b32.xlu0 %v724, 20
    %v2318 = vpop.permute.xlu0 %2317
    %2319 = vrot.lane.b32.xlu0 %v727, 20
    %v2320 = vpop.permute.xlu0 %2319
    %2321 = vrot.lane.b32.xlu0 %v729, 20
    %v2322 = vpop.permute.xlu0 %2321
    %2323 = vrot.lane.b32.xlu0 %v731, 20
    %v2324 = vpop.permute.xlu0 %2323
    %2325 = vrot.lane.b32.xlu0 %v734, 20
    %v2326 = vpop.permute.xlu0 %2325
    %2327 = vrot.lane.b32.xlu0 %v736, 20
    %v2328 = vpop.permute.xlu0 %2327
    %2329 = vrot.lane.b32.xlu0 %v738, 20
    %v2330 = vpop.permute.xlu0 %2329
    %2331 = vrot.lane.b32.xlu0 %v741, 20
    %v2332 = vpop.permute.xlu0 %2331
    %2333 = vrot.lane.b32.xlu0 %v743, 20
    %v2334 = vpop.permute.xlu0 %2333
    %2335 = vrot.lane.b32.xlu0 %v745, 20
    %v2336 = vpop.permute.xlu0 %2335
    %2337 = vrot.lane.b32.xlu0 %v748, 20
    %v2338 = vpop.permute.xlu0 %2337
    %2339 = vrot.lane.b32.xlu0 %v750, 20
    %v2340 = vpop.permute.xlu0 %2339
    %2341 = vrot.lane.b32.xlu0 %v752, 20
    %v2342 = vpop.permute.xlu0 %2341
    %2343 = vrot.lane.b32.xlu0 %v755, 20
    %v2344 = vpop.permute.xlu0 %2343
    %2345 = vrot.lane.b32.xlu0 %v757, 20
    %v2346 = vpop.permute.xlu0 %2345
    %2347 = vrot.lane.b32.xlu0 %v759, 20
    %v2348 = vpop.permute.xlu0 %2347
    %2349 = vrot.lane.b32.xlu0 %v762, 20
    %v2350 = vpop.permute.xlu0 %2349
    %2351 = vrot.lane.b32.xlu0 %v764, 20
    %v2352 = vpop.permute.xlu0 %2351
    %2353 = vrot.lane.b32.xlu0 %v766, 20
    %v2354 = vpop.permute.xlu0 %2353
    %2355 = vrot.lane.b32.xlu0 %v769, 20
    %v2356 = vpop.permute.xlu0 %2355
    %2357 = vrot.lane.b32.xlu0 %v771, 20
    %v2358 = vpop.permute.xlu0 %2357
    %2359 = vrot.lane.b32.xlu0 %v773, 20
    %v2360 = vpop.permute.xlu0 %2359
    %2361 = vrot.lane.b32.xlu0 %v776, 20
    %v2362 = vpop.permute.xlu0 %2361
    %2363 = vrot.lane.b32.xlu0 %v778, 20
    %v2364 = vpop.permute.xlu0 %2363
    %2365 = vrot.lane.b32.xlu0 %v780, 20
    %v2366 = vpop.permute.xlu0 %2365
    %2367 = vrot.lane.b32.xlu0 %v783, 20
    %v2368 = vpop.permute.xlu0 %2367
    %2369 = vrot.lane.b32.xlu0 %v785, 20
    %v2370 = vpop.permute.xlu0 %2369
    %2371 = vrot.lane.b32.xlu0 %v787, 20
    %v2372 = vpop.permute.xlu0 %2371
    %2373 = vrot.lane.b32.xlu0 %v790, 20
    %v2374 = vpop.permute.xlu0 %2373
    %2375 = vrot.lane.b32.xlu0 %v792, 20
    %v2376 = vpop.permute.xlu0 %2375
    %2377 = vrot.lane.b32.xlu0 %v794, 20
    %v2378 = vpop.permute.xlu0 %2377
    %2379 = vrot.lane.b32.xlu0 %v797, 20
    %v2380 = vpop.permute.xlu0 %2379
    %2381 = vrot.lane.b32.xlu0 %v799, 20
    %v2382 = vpop.permute.xlu0 %2381
    %2383 = vrot.lane.b32.xlu0 %v801, 20
    %v2384 = vpop.permute.xlu0 %2383
    %2385 = vrot.lane.b32.xlu0 %v804, 20
    %v2386 = vpop.permute.xlu0 %2385
    %2387 = vrot.lane.b32.xlu0 %v806, 20
    %v2388 = vpop.permute.xlu0 %2387
    %2389 = vrot.lane.b32.xlu0 %v808, 20
    %v2390 = vpop.permute.xlu0 %2389
    %2391 = vrot.lane.b32.xlu0 %v811, 20
    %v2392 = vpop.permute.xlu0 %2391
    %2393 = vrot.lane.b32.xlu0 %v813, 20
    %v2394 = vpop.permute.xlu0 %2393
    %2395 = vrot.lane.b32.xlu0 %v815, 20
    %v2396 = vpop.permute.xlu0 %2395
    %2397 = vrot.lane.b32.xlu0 %v818, 20
    %v2398 = vpop.permute.xlu0 %2397
    %2399 = vrot.lane.b32.xlu0 %v820, 20
    %v2400 = vpop.permute.xlu0 %2399
    %2401 = vrot.lane.b32.xlu0 %v822, 20
    %v2402 = vpop.permute.xlu0 %2401
    %2403 = vrot.lane.b32.xlu0 %v825, 20
    %v2404 = vpop.permute.xlu0 %2403
    %2405 = vrot.lane.b32.xlu0 %v827, 20
    %v2406 = vpop.permute.xlu0 %2405
    %2407 = vrot.lane.b32.xlu0 %v829, 20
    %v2408 = vpop.permute.xlu0 %2407
    %2409 = vrot.lane.b32.xlu0 %v832, 20
    %v2410 = vpop.permute.xlu0 %2409
    %2411 = vrot.lane.b32.xlu0 %v834, 20
    %v2412 = vpop.permute.xlu0 %2411
    %2413 = vrot.lane.b32.xlu0 %v836, 20
    %v2414 = vpop.permute.xlu0 %2413
    %2415 = vrot.lane.b32.xlu0 %v868, 20
    %v2416 = vpop.permute.xlu0 %2415
    %2417 = vrot.lane.b32.xlu0 %v870, 20
    %v2418 = vpop.permute.xlu0 %2417
    %2419 = vrot.lane.b32.xlu0 %v872, 20
    %v2420 = vpop.permute.xlu0 %2419
    %2529 = vrot.lane.b32.xlu0 %v35, 24
    %v2530 = vpop.permute.xlu0 %2529
    %2531 = vrot.lane.b32.xlu0 %v36, 24
    %v2532 = vpop.permute.xlu0 %2531
    %2533 = vrot.lane.b32.xlu0 %v37, 24
    %v2534 = vpop.permute.xlu0 %2533
    %2535 = vrot.lane.b32.xlu0 %v39, 24
    %v2536 = vpop.permute.xlu0 %2535
    %2537 = vrot.lane.b32.xlu0 %v40, 24
    %v2538 = vpop.permute.xlu0 %2537
    %2539 = vrot.lane.b32.xlu0 %v41, 24
    %v2540 = vpop.permute.xlu0 %2539
    %2541 = vrot.lane.b32.xlu0 %v43, 24
    %v2542 = vpop.permute.xlu0 %2541
    %2543 = vrot.lane.b32.xlu0 %v44, 24
    %v2544 = vpop.permute.xlu0 %2543
    %2545 = vrot.lane.b32.xlu0 %v45, 24
    %v2546 = vpop.permute.xlu0 %2545
    %2547 = vrot.lane.b32.xlu0 %v47, 24
    %v2548 = vpop.permute.xlu0 %2547
    %2549 = vrot.lane.b32.xlu0 %v48, 24
    %v2550 = vpop.permute.xlu0 %2549
    %2551 = vrot.lane.b32.xlu0 %v49, 24
    %v2552 = vpop.permute.xlu0 %2551
    %2553 = vrot.lane.b32.xlu0 %v51, 24
    %v2554 = vpop.permute.xlu0 %2553
    %2555 = vrot.lane.b32.xlu0 %v52, 24
    %v2556 = vpop.permute.xlu0 %2555
    %2557 = vrot.lane.b32.xlu0 %v53, 24
    %v2558 = vpop.permute.xlu0 %2557
    %2559 = vrot.lane.b32.xlu0 %v55, 24
    %v2560 = vpop.permute.xlu0 %2559
    %2561 = vrot.lane.b32.xlu0 %v56, 24
    %v2562 = vpop.permute.xlu0 %2561
    %2563 = vrot.lane.b32.xlu0 %v57, 24
    %v2564 = vpop.permute.xlu0 %2563
    %2565 = vrot.lane.b32.xlu0 %v59, 24
    %v2566 = vpop.permute.xlu0 %2565
    %2567 = vrot.lane.b32.xlu0 %v60, 24
    %v2568 = vpop.permute.xlu0 %2567
    %2569 = vrot.lane.b32.xlu0 %v61, 24
    %v2570 = vpop.permute.xlu0 %2569
    %2571 = vrot.lane.b32.xlu0 %v63, 24
    %v2572 = vpop.permute.xlu0 %2571
    %2573 = vrot.lane.b32.xlu0 %v64, 24
    %v2574 = vpop.permute.xlu0 %2573
    %2575 = vrot.lane.b32.xlu0 %v65, 24
    %v2576 = vpop.permute.xlu0 %2575
    %2577 = vrot.lane.b32.xlu0 %v67, 24
    %v2578 = vpop.permute.xlu0 %2577
    %2579 = vrot.lane.b32.xlu0 %v68, 24
    %v2580 = vpop.permute.xlu0 %2579
    %2581 = vrot.lane.b32.xlu0 %v69, 24
    %v2582 = vpop.permute.xlu0 %2581
    %2583 = vrot.lane.b32.xlu0 %v71, 24
    %v2584 = vpop.permute.xlu0 %2583
    %2585 = vrot.lane.b32.xlu0 %v72, 24
    %v2586 = vpop.permute.xlu0 %2585
    %2587 = vrot.lane.b32.xlu0 %v73, 24
    %v2588 = vpop.permute.xlu0 %2587
    %2589 = vrot.lane.b32.xlu0 %v75, 24
    %v2590 = vpop.permute.xlu0 %2589
    %2591 = vrot.lane.b32.xlu0 %v76, 24
    %v2592 = vpop.permute.xlu0 %2591
    %2593 = vrot.lane.b32.xlu0 %v77, 24
    %v2594 = vpop.permute.xlu0 %2593
    %2595 = vrot.lane.b32.xlu0 %v79, 24
    %v2596 = vpop.permute.xlu0 %2595
    %2597 = vrot.lane.b32.xlu0 %v80, 24
    %v2598 = vpop.permute.xlu0 %2597
    %2599 = vrot.lane.b32.xlu0 %v81, 24
    %v2600 = vpop.permute.xlu0 %2599
    %2601 = vrot.lane.b32.xlu0 %v83, 24
    %v2602 = vpop.permute.xlu0 %2601
    %2603 = vrot.lane.b32.xlu0 %v84, 24
    %v2604 = vpop.permute.xlu0 %2603
    %2605 = vrot.lane.b32.xlu0 %v85, 24
    %v2606 = vpop.permute.xlu0 %2605
    %2607 = vrot.lane.b32.xlu0 %v87, 24
    %v2608 = vpop.permute.xlu0 %2607
    %2609 = vrot.lane.b32.xlu0 %v88, 24
    %v2610 = vpop.permute.xlu0 %2609
    %2611 = vrot.lane.b32.xlu0 %v89, 24
    %v2612 = vpop.permute.xlu0 %2611
    %2613 = vrot.lane.b32.xlu0 %v91, 24
    %v2614 = vpop.permute.xlu0 %2613
    %2615 = vrot.lane.b32.xlu0 %v92, 24
    %v2616 = vpop.permute.xlu0 %2615
    %2617 = vrot.lane.b32.xlu0 %v93, 24
    %v2618 = vpop.permute.xlu0 %2617
    %2619 = vrot.lane.b32.xlu0 %v95, 24
    %v2620 = vpop.permute.xlu0 %2619
    %2621 = vrot.lane.b32.xlu0 %v96, 24
    %v2622 = vpop.permute.xlu0 %2621
    %2623 = vrot.lane.b32.xlu0 %v97, 24
    %v2624 = vpop.permute.xlu0 %2623
    %2625 = vrot.lane.b32.xlu0 %v99, 24
    %v2626 = vpop.permute.xlu0 %2625
    %2627 = vrot.lane.b32.xlu0 %v100, 24
    %v2628 = vpop.permute.xlu0 %2627
    %2629 = vrot.lane.b32.xlu0 %v101, 24
    %v2630 = vpop.permute.xlu0 %2629
    %2631 = vrot.lane.b32.xlu0 %v103, 24
    %v2632 = vpop.permute.xlu0 %2631
    %2633 = vrot.lane.b32.xlu0 %v104, 24
    %v2634 = vpop.permute.xlu0 %2633
    %2635 = vrot.lane.b32.xlu0 %v105, 24
    %v2636 = vpop.permute.xlu0 %2635
    %2637 = vrot.lane.b32.xlu0 %v115, 24
    %v2638 = vpop.permute.xlu0 %2637
    %2639 = vrot.lane.b32.xlu0 %v116, 24
    %v2640 = vpop.permute.xlu0 %2639
    %2641 = vrot.lane.b32.xlu0 %v117, 24
    %v2642 = vpop.permute.xlu0 %2641
    %2643 = vrot.lane.b32.xlu0 %v119, 24
    %v2644 = vpop.permute.xlu0 %2643
    %2645 = vrot.lane.b32.xlu0 %v120, 24
    %v2646 = vpop.permute.xlu0 %2645
    %2647 = vrot.lane.b32.xlu0 %v121, 24
    %v2648 = vpop.permute.xlu0 %2647
    %2649 = vrot.lane.b32.xlu0 %v123, 24
    %v2650 = vpop.permute.xlu0 %2649
    %2651 = vrot.lane.b32.xlu0 %v124, 24
    %v2652 = vpop.permute.xlu0 %2651
    %2653 = vrot.lane.b32.xlu0 %v125, 24
    %v2654 = vpop.permute.xlu0 %2653
    %2655 = vrot.lane.b32.xlu0 %v127, 24
    %v2656 = vpop.permute.xlu0 %2655
    %2657 = vrot.lane.b32.xlu0 %v128, 24
    %v2658 = vpop.permute.xlu0 %2657
    %2659 = vrot.lane.b32.xlu0 %v129, 24
    %v2660 = vpop.permute.xlu0 %2659
    %2661 = vrot.lane.b32.xlu0 %v131, 24
    %v2662 = vpop.permute.xlu0 %2661
    %2663 = vrot.lane.b32.xlu0 %v132, 24
    %v2664 = vpop.permute.xlu0 %2663
    %2665 = vrot.lane.b32.xlu0 %v133, 24
    %v2666 = vpop.permute.xlu0 %2665
    %2667 = vrot.lane.b32.xlu0 %v135, 24
    %v2668 = vpop.permute.xlu0 %2667
    %2669 = vrot.lane.b32.xlu0 %v136, 24
    %v2670 = vpop.permute.xlu0 %2669
    %2671 = vrot.lane.b32.xlu0 %v137, 24
    %v2672 = vpop.permute.xlu0 %2671
    %2673 = vrot.lane.b32.xlu0 %v139, 24
    %v2674 = vpop.permute.xlu0 %2673
    %2675 = vrot.lane.b32.xlu0 %v140, 24
    %v2676 = vpop.permute.xlu0 %2675
    %2677 = vrot.lane.b32.xlu0 %v141, 24
    %v2678 = vpop.permute.xlu0 %2677
    %2679 = vrot.lane.b32.xlu0 %v143, 24
    %v2680 = vpop.permute.xlu0 %2679
    %2681 = vrot.lane.b32.xlu0 %v144, 24
    %v2682 = vpop.permute.xlu0 %2681
    %2683 = vrot.lane.b32.xlu0 %v145, 24
    %v2684 = vpop.permute.xlu0 %2683
    %2685 = vrot.lane.b32.xlu0 %v147, 24
    %v2686 = vpop.permute.xlu0 %2685
    %2687 = vrot.lane.b32.xlu0 %v148, 24
    %v2688 = vpop.permute.xlu0 %2687
    %2689 = vrot.lane.b32.xlu0 %v149, 24
    %v2690 = vpop.permute.xlu0 %2689
    %2691 = vrot.lane.b32.xlu0 %v151, 24
    %v2692 = vpop.permute.xlu0 %2691
    %2693 = vrot.lane.b32.xlu0 %v152, 24
    %v2694 = vpop.permute.xlu0 %2693
    %2695 = vrot.lane.b32.xlu0 %v153, 24
    %v2696 = vpop.permute.xlu0 %2695
    %2697 = vrot.lane.b32.xlu0 %v155, 24
    %v2698 = vpop.permute.xlu0 %2697
    %2699 = vrot.lane.b32.xlu0 %v156, 24
    %v2700 = vpop.permute.xlu0 %2699
    %2701 = vrot.lane.b32.xlu0 %v157, 24
    %v2702 = vpop.permute.xlu0 %2701
    %2703 = vrot.lane.b32.xlu0 %v159, 24
    %v2704 = vpop.permute.xlu0 %2703
    %2705 = vrot.lane.b32.xlu0 %v160, 24
    %v2706 = vpop.permute.xlu0 %2705
    %2707 = vrot.lane.b32.xlu0 %v161, 24
    %v2708 = vpop.permute.xlu0 %2707
    %2709 = vrot.lane.b32.xlu0 %v163, 24
    %v2710 = vpop.permute.xlu0 %2709
    %2711 = vrot.lane.b32.xlu0 %v164, 24
    %v2712 = vpop.permute.xlu0 %2711
    %2713 = vrot.lane.b32.xlu0 %v165, 24
    %v2714 = vpop.permute.xlu0 %2713
    %2715 = vrot.lane.b32.xlu0 %v167, 24
    %v2716 = vpop.permute.xlu0 %2715
    %2717 = vrot.lane.b32.xlu0 %v168, 24
    %v2718 = vpop.permute.xlu0 %2717
    %2719 = vrot.lane.b32.xlu0 %v169, 24
    %v2720 = vpop.permute.xlu0 %2719
    %2721 = vrot.lane.b32.xlu0 %v171, 24
    %v2722 = vpop.permute.xlu0 %2721
    %2723 = vrot.lane.b32.xlu0 %v172, 24
    %v2724 = vpop.permute.xlu0 %2723
    %2725 = vrot.lane.b32.xlu0 %v173, 24
    %v2726 = vpop.permute.xlu0 %2725
    %2727 = vrot.lane.b32.xlu0 %v175, 24
    %v2728 = vpop.permute.xlu0 %2727
    %2729 = vrot.lane.b32.xlu0 %v176, 24
    %v2730 = vpop.permute.xlu0 %2729
    %2731 = vrot.lane.b32.xlu0 %v177, 24
    %v2732 = vpop.permute.xlu0 %2731
    %2733 = vrot.lane.b32.xlu0 %v179, 24
    %v2734 = vpop.permute.xlu0 %2733
    %2735 = vrot.lane.b32.xlu0 %v180, 24
    %v2736 = vpop.permute.xlu0 %2735
    %2737 = vrot.lane.b32.xlu0 %v181, 24
    %v2738 = vpop.permute.xlu0 %2737
    %2739 = vrot.lane.b32.xlu0 %v183, 24
    %v2740 = vpop.permute.xlu0 %2739
    %2741 = vrot.lane.b32.xlu0 %v184, 24
    %v2742 = vpop.permute.xlu0 %2741
    %2743 = vrot.lane.b32.xlu0 %v185, 24
    %v2744 = vpop.permute.xlu0 %2743
    %2853 = vrot.lane.b32.xlu0 %v348, 28
    %v2854 = vpop.permute.xlu0 %2853
    %2855 = vrot.lane.b32.xlu0 %v350, 28
    %v2856 = vpop.permute.xlu0 %2855
    %2857 = vrot.lane.b32.xlu0 %v352, 28
    %v2858 = vpop.permute.xlu0 %2857
    %2859 = vrot.lane.b32.xlu0 %v355, 28
    %v2860 = vpop.permute.xlu0 %2859
    %2861 = vrot.lane.b32.xlu0 %v357, 28
    %v2862 = vpop.permute.xlu0 %2861
    %2863 = vrot.lane.b32.xlu0 %v359, 28
    %v2864 = vpop.permute.xlu0 %2863
    %2865 = vrot.lane.b32.xlu0 %v362, 28
    %v2866 = vpop.permute.xlu0 %2865
    %2867 = vrot.lane.b32.xlu0 %v364, 28
    %v2868 = vpop.permute.xlu0 %2867
    %2869 = vrot.lane.b32.xlu0 %v366, 28
    %v2870 = vpop.permute.xlu0 %2869
    %2871 = vrot.lane.b32.xlu0 %v369, 28
    %v2872 = vpop.permute.xlu0 %2871
    %2873 = vrot.lane.b32.xlu0 %v371, 28
    %v2874 = vpop.permute.xlu0 %2873
    %2875 = vrot.lane.b32.xlu0 %v373, 28
    %v2876 = vpop.permute.xlu0 %2875
    %2877 = vrot.lane.b32.xlu0 %v376, 28
    %v2878 = vpop.permute.xlu0 %2877
    %2879 = vrot.lane.b32.xlu0 %v378, 28
    %v2880 = vpop.permute.xlu0 %2879
    %2881 = vrot.lane.b32.xlu0 %v380, 28
    %v2882 = vpop.permute.xlu0 %2881
    %2883 = vrot.lane.b32.xlu0 %v383, 28
    %v2884 = vpop.permute.xlu0 %2883
    %2885 = vrot.lane.b32.xlu0 %v385, 28
    %v2886 = vpop.permute.xlu0 %2885
    %2887 = vrot.lane.b32.xlu0 %v387, 28
    %v2888 = vpop.permute.xlu0 %2887
    %2889 = vrot.lane.b32.xlu0 %v390, 28
    %v2890 = vpop.permute.xlu0 %2889
    %2891 = vrot.lane.b32.xlu0 %v392, 28
    %v2892 = vpop.permute.xlu0 %2891
    %2893 = vrot.lane.b32.xlu0 %v394, 28
    %v2894 = vpop.permute.xlu0 %2893
    %2895 = vrot.lane.b32.xlu0 %v397, 28
    %v2896 = vpop.permute.xlu0 %2895
    %2897 = vrot.lane.b32.xlu0 %v399, 28
    %v2898 = vpop.permute.xlu0 %2897
    %2899 = vrot.lane.b32.xlu0 %v401, 28
    %v2900 = vpop.permute.xlu0 %2899
    %2901 = vrot.lane.b32.xlu0 %v404, 28
    %v2902 = vpop.permute.xlu0 %2901
    %2903 = vrot.lane.b32.xlu0 %v406, 28
    %v2904 = vpop.permute.xlu0 %2903
    %2905 = vrot.lane.b32.xlu0 %v408, 28
    %v2906 = vpop.permute.xlu0 %2905
    %2907 = vrot.lane.b32.xlu0 %v411, 28
    %v2908 = vpop.permute.xlu0 %2907
    %2909 = vrot.lane.b32.xlu0 %v413, 28
    %v2910 = vpop.permute.xlu0 %2909
    %2911 = vrot.lane.b32.xlu0 %v415, 28
    %v2912 = vpop.permute.xlu0 %2911
    %2913 = vrot.lane.b32.xlu0 %v418, 28
    %v2914 = vpop.permute.xlu0 %2913
    %2915 = vrot.lane.b32.xlu0 %v420, 28
    %v2916 = vpop.permute.xlu0 %2915
    %2917 = vrot.lane.b32.xlu0 %v422, 28
    %v2918 = vpop.permute.xlu0 %2917
    %2919 = vrot.lane.b32.xlu0 %v425, 28
    %v2920 = vpop.permute.xlu0 %2919
    %2921 = vrot.lane.b32.xlu0 %v427, 28
    %v2922 = vpop.permute.xlu0 %2921
    %2923 = vrot.lane.b32.xlu0 %v429, 28
    %v2924 = vpop.permute.xlu0 %2923
    %2925 = vrot.lane.b32.xlu0 %v432, 28
    %v2926 = vpop.permute.xlu0 %2925
    %2927 = vrot.lane.b32.xlu0 %v434, 28
    %v2928 = vpop.permute.xlu0 %2927
    %2929 = vrot.lane.b32.xlu0 %v436, 28
    %v2930 = vpop.permute.xlu0 %2929
    %2931 = vrot.lane.b32.xlu0 %v439, 28
    %v2932 = vpop.permute.xlu0 %2931
    %2933 = vrot.lane.b32.xlu0 %v441, 28
    %v2934 = vpop.permute.xlu0 %2933
    %2935 = vrot.lane.b32.xlu0 %v443, 28
    %v2936 = vpop.permute.xlu0 %2935
    %2937 = vrot.lane.b32.xlu0 %v446, 28
    %v2938 = vpop.permute.xlu0 %2937
    %2939 = vrot.lane.b32.xlu0 %v448, 28
    %v2940 = vpop.permute.xlu0 %2939
    %2941 = vrot.lane.b32.xlu0 %v450, 28
    %v2942 = vpop.permute.xlu0 %2941
    %2943 = vrot.lane.b32.xlu0 %v453, 28
    %v2944 = vpop.permute.xlu0 %2943
    %2945 = vrot.lane.b32.xlu0 %v455, 28
    %v2946 = vpop.permute.xlu0 %2945
    %2947 = vrot.lane.b32.xlu0 %v457, 28
    %v2948 = vpop.permute.xlu0 %2947
    %2949 = vrot.lane.b32.xlu0 %v847, 28
    %v2950 = vpop.permute.xlu0 %2949
    %2951 = vrot.lane.b32.xlu0 %v849, 28
    %v2952 = vpop.permute.xlu0 %2951
    %2953 = vrot.lane.b32.xlu0 %v851, 28
    %v2954 = vpop.permute.xlu0 %2953
    %2955 = vrot.lane.b32.xlu0 %v883, 28
    %v2956 = vpop.permute.xlu0 %2955
    %2957 = vrot.lane.b32.xlu0 %v885, 28
    %v2958 = vpop.permute.xlu0 %2957
    %2959 = vrot.lane.b32.xlu0 %v887, 28
    %v2960 = vpop.permute.xlu0 %2959
    %2961 = vrot.lane.b32.xlu0 %v474, 28
    %v2962 = vpop.permute.xlu0 %2961
    %2963 = vrot.lane.b32.xlu0 %v476, 28
    %v2964 = vpop.permute.xlu0 %2963
    %2965 = vrot.lane.b32.xlu0 %v478, 28
    %v2966 = vpop.permute.xlu0 %2965
    %2967 = vrot.lane.b32.xlu0 %v481, 28
    %v2968 = vpop.permute.xlu0 %2967
    %2969 = vrot.lane.b32.xlu0 %v483, 28
    %v2970 = vpop.permute.xlu0 %2969
    %2971 = vrot.lane.b32.xlu0 %v485, 28
    %v2972 = vpop.permute.xlu0 %2971
    %2973 = vrot.lane.b32.xlu0 %v488, 28
    %v2974 = vpop.permute.xlu0 %2973
    %2975 = vrot.lane.b32.xlu0 %v490, 28
    %v2976 = vpop.permute.xlu0 %2975
    %2977 = vrot.lane.b32.xlu0 %v492, 28
    %v2978 = vpop.permute.xlu0 %2977
    %2979 = vrot.lane.b32.xlu0 %v495, 28
    %v2980 = vpop.permute.xlu0 %2979
    %2981 = vrot.lane.b32.xlu0 %v497, 28
    %v2982 = vpop.permute.xlu0 %2981
    %2983 = vrot.lane.b32.xlu0 %v499, 28
    %v2984 = vpop.permute.xlu0 %2983
    %2985 = vrot.lane.b32.xlu0 %v502, 28
    %v2986 = vpop.permute.xlu0 %2985
    %2987 = vrot.lane.b32.xlu0 %v504, 28
    %v2988 = vpop.permute.xlu0 %2987
    %2989 = vrot.lane.b32.xlu0 %v506, 28
    %v2990 = vpop.permute.xlu0 %2989
    %2991 = vrot.lane.b32.xlu0 %v509, 28
    %v2992 = vpop.permute.xlu0 %2991
    %2993 = vrot.lane.b32.xlu0 %v511, 28
    %v2994 = vpop.permute.xlu0 %2993
    %2995 = vrot.lane.b32.xlu0 %v513, 28
    %v2996 = vpop.permute.xlu0 %2995
    %2997 = vrot.lane.b32.xlu0 %v516, 28
    %v2998 = vpop.permute.xlu0 %2997
    %2999 = vrot.lane.b32.xlu0 %v518, 28
    %v3000 = vpop.permute.xlu0 %2999
    %3001 = vrot.lane.b32.xlu0 %v520, 28
    %v3002 = vpop.permute.xlu0 %3001
    %3003 = vrot.lane.b32.xlu0 %v523, 28
    %v3004 = vpop.permute.xlu0 %3003
    %3005 = vrot.lane.b32.xlu0 %v525, 28
    %v3006 = vpop.permute.xlu0 %3005
    %3007 = vrot.lane.b32.xlu0 %v527, 28
    %v3008 = vpop.permute.xlu0 %3007
    %3009 = vrot.lane.b32.xlu0 %v530, 28
    %v3010 = vpop.permute.xlu0 %3009
    %3011 = vrot.lane.b32.xlu0 %v532, 28
    %v3012 = vpop.permute.xlu0 %3011
    %3013 = vrot.lane.b32.xlu0 %v534, 28
    %v3014 = vpop.permute.xlu0 %3013
    %3015 = vrot.lane.b32.xlu0 %v537, 28
    %v3016 = vpop.permute.xlu0 %3015
    %3017 = vrot.lane.b32.xlu0 %v539, 28
    %v3018 = vpop.permute.xlu0 %3017
    %3019 = vrot.lane.b32.xlu0 %v541, 28
    %v3020 = vpop.permute.xlu0 %3019
    %3021 = vrot.lane.b32.xlu0 %v544, 28
    %v3022 = vpop.permute.xlu0 %3021
    %3023 = vrot.lane.b32.xlu0 %v546, 28
    %v3024 = vpop.permute.xlu0 %3023
    %3025 = vrot.lane.b32.xlu0 %v548, 28
    %v3026 = vpop.permute.xlu0 %3025
    %3027 = vrot.lane.b32.xlu0 %v551, 28
    %v3028 = vpop.permute.xlu0 %3027
    %3029 = vrot.lane.b32.xlu0 %v553, 28
    %v3030 = vpop.permute.xlu0 %3029
    %3031 = vrot.lane.b32.xlu0 %v555, 28
    %v3032 = vpop.permute.xlu0 %3031
    %3033 = vrot.lane.b32.xlu0 %v558, 28
    %v3034 = vpop.permute.xlu0 %3033
    %3035 = vrot.lane.b32.xlu0 %v560, 28
    %v3036 = vpop.permute.xlu0 %3035
    %3037 = vrot.lane.b32.xlu0 %v562, 28
    %v3038 = vpop.permute.xlu0 %3037
    %3039 = vrot.lane.b32.xlu0 %v565, 28
    %v3040 = vpop.permute.xlu0 %3039
    %3041 = vrot.lane.b32.xlu0 %v567, 28
    %v3042 = vpop.permute.xlu0 %3041
    %3043 = vrot.lane.b32.xlu0 %v569, 28
    %v3044 = vpop.permute.xlu0 %3043
    %3045 = vrot.lane.b32.xlu0 %v572, 28
    %v3046 = vpop.permute.xlu0 %3045
    %3047 = vrot.lane.b32.xlu0 %v574, 28
    %v3048 = vpop.permute.xlu0 %3047
    %3049 = vrot.lane.b32.xlu0 %v576, 28
    %v3050 = vpop.permute.xlu0 %3049
    %3051 = vrot.lane.b32.xlu0 %v579, 28
    %v3052 = vpop.permute.xlu0 %3051
    %3053 = vrot.lane.b32.xlu0 %v581, 28
    %v3054 = vpop.permute.xlu0 %3053
    %3055 = vrot.lane.b32.xlu0 %v583, 28
    %v3056 = vpop.permute.xlu0 %3055
    %3057 = vrot.lane.b32.xlu0 %v854, 28
    %v3058 = vpop.permute.xlu0 %3057
    %3059 = vrot.lane.b32.xlu0 %v856, 28
    %v3060 = vpop.permute.xlu0 %3059
    %3061 = vrot.lane.b32.xlu0 %v858, 28
    %v3062 = vpop.permute.xlu0 %3061
    %3063 = vrot.lane.b32.xlu0 %v890, 28
    %v3064 = vpop.permute.xlu0 %3063
    %3065 = vrot.lane.b32.xlu0 %v892, 28
    %v3066 = vpop.permute.xlu0 %3065
    %3067 = vrot.lane.b32.xlu0 %v894, 28
    %v3068 = vpop.permute.xlu0 %3067
    %3177 = vrot.lane.b32.xlu0 %v601, 32
    %v3178 = vpop.permute.xlu0 %3177
    %3179 = vrot.lane.b32.xlu0 %v603, 32
    %v3180 = vpop.permute.xlu0 %3179
    %3181 = vrot.lane.b32.xlu0 %v605, 32
    %v3182 = vpop.permute.xlu0 %3181
    %3183 = vrot.lane.b32.xlu0 %v608, 32
    %v3184 = vpop.permute.xlu0 %3183
    %3185 = vrot.lane.b32.xlu0 %v610, 32
    %v3186 = vpop.permute.xlu0 %3185
    %3187 = vrot.lane.b32.xlu0 %v612, 32
    %v3188 = vpop.permute.xlu0 %3187
    %3189 = vrot.lane.b32.xlu0 %v615, 32
    %v3190 = vpop.permute.xlu0 %3189
    %3191 = vrot.lane.b32.xlu0 %v617, 32
    %v3192 = vpop.permute.xlu0 %3191
    %3193 = vrot.lane.b32.xlu0 %v619, 32
    %v3194 = vpop.permute.xlu0 %3193
    %3195 = vrot.lane.b32.xlu0 %v622, 32
    %v3196 = vpop.permute.xlu0 %3195
    %3197 = vrot.lane.b32.xlu0 %v624, 32
    %v3198 = vpop.permute.xlu0 %3197
    %3199 = vrot.lane.b32.xlu0 %v626, 32
    %v3200 = vpop.permute.xlu0 %3199
    %3201 = vrot.lane.b32.xlu0 %v629, 32
    %v3202 = vpop.permute.xlu0 %3201
    %3203 = vrot.lane.b32.xlu0 %v631, 32
    %v3204 = vpop.permute.xlu0 %3203
    %3205 = vrot.lane.b32.xlu0 %v633, 32
    %v3206 = vpop.permute.xlu0 %3205
    %3207 = vrot.lane.b32.xlu0 %v636, 32
    %v3208 = vpop.permute.xlu0 %3207
    %3209 = vrot.lane.b32.xlu0 %v638, 32
    %v3210 = vpop.permute.xlu0 %3209
    %3211 = vrot.lane.b32.xlu0 %v640, 32
    %v3212 = vpop.permute.xlu0 %3211
    %3213 = vrot.lane.b32.xlu0 %v643, 32
    %v3214 = vpop.permute.xlu0 %3213
    %3215 = vrot.lane.b32.xlu0 %v645, 32
    %v3216 = vpop.permute.xlu0 %3215
    %3217 = vrot.lane.b32.xlu0 %v647, 32
    %v3218 = vpop.permute.xlu0 %3217
    %3219 = vrot.lane.b32.xlu0 %v650, 32
    %v3220 = vpop.permute.xlu0 %3219
    %3221 = vrot.lane.b32.xlu0 %v652, 32
    %v3222 = vpop.permute.xlu0 %3221
    %3223 = vrot.lane.b32.xlu0 %v654, 32
    %v3224 = vpop.permute.xlu0 %3223
    %3225 = vrot.lane.b32.xlu0 %v657, 32
    %v3226 = vpop.permute.xlu0 %3225
    %3227 = vrot.lane.b32.xlu0 %v659, 32
    %v3228 = vpop.permute.xlu0 %3227
    %3229 = vrot.lane.b32.xlu0 %v661, 32
    %v3230 = vpop.permute.xlu0 %3229
    %3231 = vrot.lane.b32.xlu0 %v664, 32
    %v3232 = vpop.permute.xlu0 %3231
    %3233 = vrot.lane.b32.xlu0 %v666, 32
    %v3234 = vpop.permute.xlu0 %3233
    %3235 = vrot.lane.b32.xlu0 %v668, 32
    %v3236 = vpop.permute.xlu0 %3235
    %3237 = vrot.lane.b32.xlu0 %v671, 32
    %v3238 = vpop.permute.xlu0 %3237
    %3239 = vrot.lane.b32.xlu0 %v673, 32
    %v3240 = vpop.permute.xlu0 %3239
    %3241 = vrot.lane.b32.xlu0 %v675, 32
    %v3242 = vpop.permute.xlu0 %3241
    %3243 = vrot.lane.b32.xlu0 %v678, 32
    %v3244 = vpop.permute.xlu0 %3243
    %3245 = vrot.lane.b32.xlu0 %v680, 32
    %v3246 = vpop.permute.xlu0 %3245
    %3247 = vrot.lane.b32.xlu0 %v682, 32
    %v3248 = vpop.permute.xlu0 %3247
    %3249 = vrot.lane.b32.xlu0 %v685, 32
    %v3250 = vpop.permute.xlu0 %3249
    %3251 = vrot.lane.b32.xlu0 %v687, 32
    %v3252 = vpop.permute.xlu0 %3251
    %3253 = vrot.lane.b32.xlu0 %v689, 32
    %v3254 = vpop.permute.xlu0 %3253
    %3255 = vrot.lane.b32.xlu0 %v692, 32
    %v3256 = vpop.permute.xlu0 %3255
    %3257 = vrot.lane.b32.xlu0 %v694, 32
    %v3258 = vpop.permute.xlu0 %3257
    %3259 = vrot.lane.b32.xlu0 %v696, 32
    %v3260 = vpop.permute.xlu0 %3259
    %3261 = vrot.lane.b32.xlu0 %v699, 32
    %v3262 = vpop.permute.xlu0 %3261
    %3263 = vrot.lane.b32.xlu0 %v701, 32
    %v3264 = vpop.permute.xlu0 %3263
    %3265 = vrot.lane.b32.xlu0 %v703, 32
    %v3266 = vpop.permute.xlu0 %3265
    %3267 = vrot.lane.b32.xlu0 %v706, 32
    %v3268 = vpop.permute.xlu0 %3267
    %3269 = vrot.lane.b32.xlu0 %v708, 32
    %v3270 = vpop.permute.xlu0 %3269
    %3271 = vrot.lane.b32.xlu0 %v710, 32
    %v3272 = vpop.permute.xlu0 %3271
    %3273 = vrot.lane.b32.xlu0 %v861, 32
    %v3274 = vpop.permute.xlu0 %3273
    %3275 = vrot.lane.b32.xlu0 %v863, 32
    %v3276 = vpop.permute.xlu0 %3275
    %3277 = vrot.lane.b32.xlu0 %v865, 32
    %v3278 = vpop.permute.xlu0 %3277
    %3279 = vrot.lane.b32.xlu0 %v897, 32
    %v3280 = vpop.permute.xlu0 %3279
    %3281 = vrot.lane.b32.xlu0 %v899, 32
    %v3282 = vpop.permute.xlu0 %3281
    %3283 = vrot.lane.b32.xlu0 %v901, 32
    %v3284 = vpop.permute.xlu0 %3283
    %3285 = vrot.lane.b32.xlu0 %v727, 32
    %v3286 = vpop.permute.xlu0 %3285
    %3287 = vrot.lane.b32.xlu0 %v729, 32
    %v3288 = vpop.permute.xlu0 %3287
    %3289 = vrot.lane.b32.xlu0 %v731, 32
    %v3290 = vpop.permute.xlu0 %3289
    %3291 = vrot.lane.b32.xlu0 %v734, 32
    %v3292 = vpop.permute.xlu0 %3291
    %3293 = vrot.lane.b32.xlu0 %v736, 32
    %v3294 = vpop.permute.xlu0 %3293
    %3295 = vrot.lane.b32.xlu0 %v738, 32
    %v3296 = vpop.permute.xlu0 %3295
    %3297 = vrot.lane.b32.xlu0 %v741, 32
    %v3298 = vpop.permute.xlu0 %3297
    %3299 = vrot.lane.b32.xlu0 %v743, 32
    %v3300 = vpop.permute.xlu0 %3299
    %3301 = vrot.lane.b32.xlu0 %v745, 32
    %v3302 = vpop.permute.xlu0 %3301
    %3303 = vrot.lane.b32.xlu0 %v748, 32
    %v3304 = vpop.permute.xlu0 %3303
    %3305 = vrot.lane.b32.xlu0 %v750, 32
    %v3306 = vpop.permute.xlu0 %3305
    %3307 = vrot.lane.b32.xlu0 %v752, 32
    %v3308 = vpop.permute.xlu0 %3307
    %3309 = vrot.lane.b32.xlu0 %v755, 32
    %v3310 = vpop.permute.xlu0 %3309
    %3311 = vrot.lane.b32.xlu0 %v757, 32
    %v3312 = vpop.permute.xlu0 %3311
    %3313 = vrot.lane.b32.xlu0 %v759, 32
    %v3314 = vpop.permute.xlu0 %3313
    %3315 = vrot.lane.b32.xlu0 %v762, 32
    %v3316 = vpop.permute.xlu0 %3315
    %3317 = vrot.lane.b32.xlu0 %v764, 32
    %v3318 = vpop.permute.xlu0 %3317
    %3319 = vrot.lane.b32.xlu0 %v766, 32
    %v3320 = vpop.permute.xlu0 %3319
    %3321 = vrot.lane.b32.xlu0 %v769, 32
    %v3322 = vpop.permute.xlu0 %3321
    %3323 = vrot.lane.b32.xlu0 %v771, 32
    %v3324 = vpop.permute.xlu0 %3323
    %3325 = vrot.lane.b32.xlu0 %v773, 32
    %v3326 = vpop.permute.xlu0 %3325
    %3327 = vrot.lane.b32.xlu0 %v776, 32
    %v3328 = vpop.permute.xlu0 %3327
    %3329 = vrot.lane.b32.xlu0 %v778, 32
    %v3330 = vpop.permute.xlu0 %3329
    %3331 = vrot.lane.b32.xlu0 %v780, 32
    %v3332 = vpop.permute.xlu0 %3331
    %3333 = vrot.lane.b32.xlu0 %v783, 32
    %v3334 = vpop.permute.xlu0 %3333
    %3335 = vrot.lane.b32.xlu0 %v785, 32
    %v3336 = vpop.permute.xlu0 %3335
    %3337 = vrot.lane.b32.xlu0 %v787, 32
    %v3338 = vpop.permute.xlu0 %3337
    %3339 = vrot.lane.b32.xlu0 %v790, 32
    %v3340 = vpop.permute.xlu0 %3339
    %3341 = vrot.lane.b32.xlu0 %v792, 32
    %v3342 = vpop.permute.xlu0 %3341
    %3343 = vrot.lane.b32.xlu0 %v794, 32
    %v3344 = vpop.permute.xlu0 %3343
    %3345 = vrot.lane.b32.xlu0 %v797, 32
    %v3346 = vpop.permute.xlu0 %3345
    %3347 = vrot.lane.b32.xlu0 %v799, 32
    %v3348 = vpop.permute.xlu0 %3347
    %3349 = vrot.lane.b32.xlu0 %v801, 32
    %v3350 = vpop.permute.xlu0 %3349
    %3351 = vrot.lane.b32.xlu0 %v804, 32
    %v3352 = vpop.permute.xlu0 %3351
    %3353 = vrot.lane.b32.xlu0 %v806, 32
    %v3354 = vpop.permute.xlu0 %3353
    %3355 = vrot.lane.b32.xlu0 %v808, 32
    %v3356 = vpop.permute.xlu0 %3355
    %3357 = vrot.lane.b32.xlu0 %v811, 32
    %v3358 = vpop.permute.xlu0 %3357
    %3359 = vrot.lane.b32.xlu0 %v813, 32
    %v3360 = vpop.permute.xlu0 %3359
    %3361 = vrot.lane.b32.xlu0 %v815, 32
    %v3362 = vpop.permute.xlu0 %3361
    %3363 = vrot.lane.b32.xlu0 %v818, 32
    %v3364 = vpop.permute.xlu0 %3363
    %3365 = vrot.lane.b32.xlu0 %v820, 32
    %v3366 = vpop.permute.xlu0 %3365
    %3367 = vrot.lane.b32.xlu0 %v822, 32
    %v3368 = vpop.permute.xlu0 %3367
    %3369 = vrot.lane.b32.xlu0 %v825, 32
    %v3370 = vpop.permute.xlu0 %3369
    %3371 = vrot.lane.b32.xlu0 %v827, 32
    %v3372 = vpop.permute.xlu0 %3371
    %3373 = vrot.lane.b32.xlu0 %v829, 32
    %v3374 = vpop.permute.xlu0 %3373
    %3375 = vrot.lane.b32.xlu0 %v832, 32
    %v3376 = vpop.permute.xlu0 %3375
    %3377 = vrot.lane.b32.xlu0 %v834, 32
    %v3378 = vpop.permute.xlu0 %3377
    %3379 = vrot.lane.b32.xlu0 %v836, 32
    %v3380 = vpop.permute.xlu0 %3379
    %3381 = vrot.lane.b32.xlu0 %v868, 32
    %v3382 = vpop.permute.xlu0 %3381
    %3383 = vrot.lane.b32.xlu0 %v870, 32
    %v3384 = vpop.permute.xlu0 %3383
    %3385 = vrot.lane.b32.xlu0 %v872, 32
    %v3386 = vpop.permute.xlu0 %3385
    %3387 = vrot.lane.b32.xlu0 %v904, 32
    %v3388 = vpop.permute.xlu0 %3387
    %3389 = vrot.lane.b32.xlu0 %v906, 32
    %v3390 = vpop.permute.xlu0 %3389
    %3391 = vrot.lane.b32.xlu0 %v908, 32
    %v3392 = vpop.permute.xlu0 %3391
    %vm3501 = vcmask 31744
    %v3502 = vsel %vm3501, %v27, %v910
    %v3503 = vsel %vm3501, %v28, %v912
    %v3504 = vsel %vm3501, %v29, %v914
    %v3505 = vsel %vm3501, %v31, %v916
    %v3506 = vsel %vm3501, %v32, %v918
    %v3507 = vsel %vm3501, %v33, %v920
    %v3508 = vsel %vm3501, %v35, %v922
    %v3509 = vsel %vm3501, %v36, %v924
    %v3510 = vsel %vm3501, %v37, %v926
    %v3511 = vsel %vm3501, %v39, %v928
    %v3512 = vsel %vm3501, %v40, %v930
    %v3513 = vsel %vm3501, %v41, %v932
    %v3514 = vsel %vm3501, %v43, %v934
    %v3515 = vsel %vm3501, %v44, %v936
    %v3516 = vsel %vm3501, %v45, %v938
    %v3517 = vsel %vm3501, %v47, %v940
    %v3518 = vsel %vm3501, %v48, %v942
    %v3519 = vsel %vm3501, %v49, %v944
    %v3520 = vsel %vm3501, %v51, %v946
    %v3521 = vsel %vm3501, %v52, %v948
    %v3522 = vsel %vm3501, %v53, %v950
    %v3523 = vsel %vm3501, %v55, %v952
    %v3524 = vsel %vm3501, %v56, %v954
    %v3525 = vsel %vm3501, %v57, %v956
    %v3526 = vsel %vm3501, %v59, %v958
    %v3527 = vsel %vm3501, %v60, %v960
    %v3528 = vsel %vm3501, %v61, %v962
    %v3529 = vsel %vm3501, %v63, %v964
    %v3530 = vsel %vm3501, %v64, %v966
    %v3531 = vsel %vm3501, %v65, %v968
    %v3532 = vsel %vm3501, %v67, %v970
    %v3533 = vsel %vm3501, %v68, %v972
    %v3534 = vsel %vm3501, %v69, %v974
    %v3535 = vsel %vm3501, %v71, %v976
    %v3536 = vsel %vm3501, %v72, %v978
    %v3537 = vsel %vm3501, %v73, %v980
    %v3538 = vsel %vm3501, %v75, %v982
    %v3539 = vsel %vm3501, %v76, %v984
    %v3540 = vsel %vm3501, %v77, %v986
    %v3541 = vsel %vm3501, %v79, %v988
    %v3542 = vsel %vm3501, %v80, %v990
    %v3543 = vsel %vm3501, %v81, %v992
    %v3544 = vsel %vm3501, %v83, %v994
    %v3545 = vsel %vm3501, %v84, %v996
    %v3546 = vsel %vm3501, %v85, %v998
    %v3547 = vsel %vm3501, %v87, %v1000
    %v3548 = vsel %vm3501, %v88, %v1002
    %v3549 = vsel %vm3501, %v89, %v1004
    %v3550 = vsel %vm3501, %v91, %v1006
    %v3551 = vsel %vm3501, %v92, %v1008
    %v3552 = vsel %vm3501, %v93, %v1010
    %v3553 = vsel %vm3501, %v95, %v1012
    %v3554 = vsel %vm3501, %v96, %v1014
    %v3555 = vsel %vm3501, %v97, %v1016
    %v3556 = vsel %vm3501, %v107, %v1018
    %v3557 = vsel %vm3501, %v108, %v1020
    %v3558 = vsel %vm3501, %v109, %v1022
    %v3559 = vsel %vm3501, %v111, %v1024
    %v3560 = vsel %vm3501, %v112, %v1026
    %v3561 = vsel %vm3501, %v113, %v1028
    %v3562 = vsel %vm3501, %v115, %v1030
    %v3563 = vsel %vm3501, %v116, %v1032
    %v3564 = vsel %vm3501, %v117, %v1034
    %v3565 = vsel %vm3501, %v119, %v1036
    %v3566 = vsel %vm3501, %v120, %v1038
    %v3567 = vsel %vm3501, %v121, %v1040
    %v3568 = vsel %vm3501, %v123, %v1042
    %v3569 = vsel %vm3501, %v124, %v1044
    %v3570 = vsel %vm3501, %v125, %v1046
    %v3571 = vsel %vm3501, %v127, %v1048
    %v3572 = vsel %vm3501, %v128, %v1050
    %v3573 = vsel %vm3501, %v129, %v1052
    %v3574 = vsel %vm3501, %v131, %v1054
    %v3575 = vsel %vm3501, %v132, %v1056
    %v3576 = vsel %vm3501, %v133, %v1058
    %v3577 = vsel %vm3501, %v135, %v1060
    %v3578 = vsel %vm3501, %v136, %v1062
    %v3579 = vsel %vm3501, %v137, %v1064
    %v3580 = vsel %vm3501, %v139, %v1066
    %v3581 = vsel %vm3501, %v140, %v1068
    %v3582 = vsel %vm3501, %v141, %v1070
    %v3583 = vsel %vm3501, %v143, %v1072
    %v3584 = vsel %vm3501, %v144, %v1074
    %v3585 = vsel %vm3501, %v145, %v1076
    %v3586 = vsel %vm3501, %v147, %v1078
    %v3587 = vsel %vm3501, %v148, %v1080
    %v3588 = vsel %vm3501, %v149, %v1082
    %v3589 = vsel %vm3501, %v151, %v1084
    %v3590 = vsel %vm3501, %v152, %v1086
    %v3591 = vsel %vm3501, %v153, %v1088
    %v3592 = vsel %vm3501, %v155, %v1090
    %v3593 = vsel %vm3501, %v156, %v1092
    %v3594 = vsel %vm3501, %v157, %v1094
    %v3595 = vsel %vm3501, %v159, %v1096
    %v3596 = vsel %vm3501, %v160, %v1098
    %v3597 = vsel %vm3501, %v161, %v1100
    %v3598 = vsel %vm3501, %v163, %v1102
    %v3599 = vsel %vm3501, %v164, %v1104
    %v3600 = vsel %vm3501, %v165, %v1106
    %v3601 = vsel %vm3501, %v167, %v1108
    %v3602 = vsel %vm3501, %v168, %v1110
    %v3603 = vsel %vm3501, %v169, %v1112
    %v3604 = vsel %vm3501, %v171, %v1114
    %v3605 = vsel %vm3501, %v172, %v1116
    %v3606 = vsel %vm3501, %v173, %v1118
    %v3607 = vsel %vm3501, %v175, %v1120
    %v3608 = vsel %vm3501, %v176, %v1122
    %v3609 = vsel %vm3501, %v177, %v1124
    %vm3610 = vcmask 64512
    %v3611 = vsel %vm3610, %v3502, %v1234
    %v3612 = vsel %vm3610, %v3503, %v1236
    %v3613 = vsel %vm3610, %v3504, %v1238
    %v3614 = vsel %vm3610, %v3505, %v1240
    %v3615 = vsel %vm3610, %v3506, %v1242
    %v3616 = vsel %vm3610, %v3507, %v1244
    %v3617 = vsel %vm3610, %v3508, %v1246
    %v3618 = vsel %vm3610, %v3509, %v1248
    %v3619 = vsel %vm3610, %v3510, %v1250
    %v3620 = vsel %vm3610, %v3511, %v1252
    %v3621 = vsel %vm3610, %v3512, %v1254
    %v3622 = vsel %vm3610, %v3513, %v1256
    %v3623 = vsel %vm3610, %v3514, %v1258
    %v3624 = vsel %vm3610, %v3515, %v1260
    %v3625 = vsel %vm3610, %v3516, %v1262
    %v3626 = vsel %vm3610, %v3517, %v1264
    %v3627 = vsel %vm3610, %v3518, %v1266
    %v3628 = vsel %vm3610, %v3519, %v1268
    %v3629 = vsel %vm3610, %v3520, %v1270
    %v3630 = vsel %vm3610, %v3521, %v1272
    %v3631 = vsel %vm3610, %v3522, %v1274
    %v3632 = vsel %vm3610, %v3523, %v1276
    %v3633 = vsel %vm3610, %v3524, %v1278
    %v3634 = vsel %vm3610, %v3525, %v1280
    %v3635 = vsel %vm3610, %v3526, %v1282
    %v3636 = vsel %vm3610, %v3527, %v1284
    %v3637 = vsel %vm3610, %v3528, %v1286
    %v3638 = vsel %vm3610, %v3529, %v1288
    %v3639 = vsel %vm3610, %v3530, %v1290
    %v3640 = vsel %vm3610, %v3531, %v1292
    %v3641 = vsel %vm3610, %v3532, %v1294
    %v3642 = vsel %vm3610, %v3533, %v1296
    %v3643 = vsel %vm3610, %v3534, %v1298
    %v3644 = vsel %vm3610, %v3535, %v1300
    %v3645 = vsel %vm3610, %v3536, %v1302
    %v3646 = vsel %vm3610, %v3537, %v1304
    %v3647 = vsel %vm3610, %v3538, %v1306
    %v3648 = vsel %vm3610, %v3539, %v1308
    %v3649 = vsel %vm3610, %v3540, %v1310
    %v3650 = vsel %vm3610, %v3541, %v1312
    %v3651 = vsel %vm3610, %v3542, %v1314
    %v3652 = vsel %vm3610, %v3543, %v1316
    %v3653 = vsel %vm3610, %v3544, %v1318
    %v3654 = vsel %vm3610, %v3545, %v1320
    %v3655 = vsel %vm3610, %v3546, %v1322
    %v3656 = vsel %vm3610, %v3547, %v1324
    %v3657 = vsel %vm3610, %v3548, %v1326
    %v3658 = vsel %vm3610, %v3549, %v1328
    %v3659 = vsel %vm3610, %v3550, %v1330
    %v3660 = vsel %vm3610, %v3551, %v1332
    %v3661 = vsel %vm3610, %v3552, %v1334
    %v3662 = vsel %vm3610, %v3553, %v1336
    %v3663 = vsel %vm3610, %v3554, %v1338
    %v3664 = vsel %vm3610, %v3555, %v1340
    %v3665 = vsel %vm3610, %v3556, %v1342
    %v3666 = vsel %vm3610, %v3557, %v1344
    %v3667 = vsel %vm3610, %v3558, %v1346
    %v3668 = vsel %vm3610, %v3559, %v1348
    %v3669 = vsel %vm3610, %v3560, %v1350
    %v3670 = vsel %vm3610, %v3561, %v1352
    %v3671 = vsel %vm3610, %v3562, %v1354
    %v3672 = vsel %vm3610, %v3563, %v1356
    %v3673 = vsel %vm3610, %v3564, %v1358
    %v3674 = vsel %vm3610, %v3565, %v1360
    %v3675 = vsel %vm3610, %v3566, %v1362
    %v3676 = vsel %vm3610, %v3567, %v1364
    %v3677 = vsel %vm3610, %v3568, %v1366
    %v3678 = vsel %vm3610, %v3569, %v1368
    %v3679 = vsel %vm3610, %v3570, %v1370
    %v3680 = vsel %vm3610, %v3571, %v1372
    %v3681 = vsel %vm3610, %v3572, %v1374
    %v3682 = vsel %vm3610, %v3573, %v1376
    %v3683 = vsel %vm3610, %v3574, %v1378
    %v3684 = vsel %vm3610, %v3575, %v1380
    %v3685 = vsel %vm3610, %v3576, %v1382
    %v3686 = vsel %vm3610, %v3577, %v1384
    %v3687 = vsel %vm3610, %v3578, %v1386
    %v3688 = vsel %vm3610, %v3579, %v1388
    %v3689 = vsel %vm3610, %v3580, %v1390
    %v3690 = vsel %vm3610, %v3581, %v1392
    %v3691 = vsel %vm3610, %v3582, %v1394
    %v3692 = vsel %vm3610, %v3583, %v1396
    %v3693 = vsel %vm3610, %v3584, %v1398
    %v3694 = vsel %vm3610, %v3585, %v1400
    %v3695 = vsel %vm3610, %v3586, %v1402
    %v3696 = vsel %vm3610, %v3587, %v1404
    %v3697 = vsel %vm3610, %v3588, %v1406
    %v3698 = vsel %vm3610, %v3589, %v1408
    %v3699 = vsel %vm3610, %v3590, %v1410
    %v3700 = vsel %vm3610, %v3591, %v1412
    %v3701 = vsel %vm3610, %v3592, %v1414
    %v3702 = vsel %vm3610, %v3593, %v1416
    %v3703 = vsel %vm3610, %v3594, %v1418
    %v3704 = vsel %vm3610, %v3595, %v1420
    %v3705 = vsel %vm3610, %v3596, %v1422
    %v3706 = vsel %vm3610, %v3597, %v1424
    %v3707 = vsel %vm3610, %v3598, %v1426
    %v3708 = vsel %vm3610, %v3599, %v1428
    %v3709 = vsel %vm3610, %v3600, %v1430
    %v3710 = vsel %vm3610, %v3601, %v1432
    %v3711 = vsel %vm3610, %v3602, %v1434
    %v3712 = vsel %vm3610, %v3603, %v1436
    %v3713 = vsel %vm3610, %v3604, %v1438
    %v3714 = vsel %vm3610, %v3605, %v1440
    %v3715 = vsel %vm3610, %v3606, %v1442
    %v3716 = vsel %vm3610, %v3607, %v1444
    %v3717 = vsel %vm3610, %v3608, %v1446
    %v3718 = vsel %vm3610, %v3609, %v1448
    %vm3719 = vcmask 97280
    %v3720 = vsel %vm3719, %v3611, %v1558
    %v3721 = vsel %vm3719, %v3612, %v1560
    %v3722 = vsel %vm3719, %v3613, %v1562
    %v3723 = vsel %vm3719, %v3614, %v1564
    %v3724 = vsel %vm3719, %v3615, %v1566
    %v3725 = vsel %vm3719, %v3616, %v1568
    %v3726 = vsel %vm3719, %v3617, %v1570
    %v3727 = vsel %vm3719, %v3618, %v1572
    %v3728 = vsel %vm3719, %v3619, %v1574
    %v3729 = vsel %vm3719, %v3620, %v1576
    %v3730 = vsel %vm3719, %v3621, %v1578
    %v3731 = vsel %vm3719, %v3622, %v1580
    %v3732 = vsel %vm3719, %v3623, %v1582
    %v3733 = vsel %vm3719, %v3624, %v1584
    %v3734 = vsel %vm3719, %v3625, %v1586
    %v3735 = vsel %vm3719, %v3626, %v1588
    %v3736 = vsel %vm3719, %v3627, %v1590
    %v3737 = vsel %vm3719, %v3628, %v1592
    %v3738 = vsel %vm3719, %v3629, %v1594
    %v3739 = vsel %vm3719, %v3630, %v1596
    %v3740 = vsel %vm3719, %v3631, %v1598
    %v3741 = vsel %vm3719, %v3632, %v1600
    %v3742 = vsel %vm3719, %v3633, %v1602
    %v3743 = vsel %vm3719, %v3634, %v1604
    %v3744 = vsel %vm3719, %v3635, %v1606
    %v3745 = vsel %vm3719, %v3636, %v1608
    %v3746 = vsel %vm3719, %v3637, %v1610
    %v3747 = vsel %vm3719, %v3638, %v1612
    %v3748 = vsel %vm3719, %v3639, %v1614
    %v3749 = vsel %vm3719, %v3640, %v1616
    %v3750 = vsel %vm3719, %v3641, %v1618
    %v3751 = vsel %vm3719, %v3642, %v1620
    %v3752 = vsel %vm3719, %v3643, %v1622
    %v3753 = vsel %vm3719, %v3644, %v1624
    %v3754 = vsel %vm3719, %v3645, %v1626
    %v3755 = vsel %vm3719, %v3646, %v1628
    %v3756 = vsel %vm3719, %v3647, %v1630
    %v3757 = vsel %vm3719, %v3648, %v1632
    %v3758 = vsel %vm3719, %v3649, %v1634
    %v3759 = vsel %vm3719, %v3650, %v1636
    %v3760 = vsel %vm3719, %v3651, %v1638
    %v3761 = vsel %vm3719, %v3652, %v1640
    %v3762 = vsel %vm3719, %v3653, %v1642
    %v3763 = vsel %vm3719, %v3654, %v1644
    %v3764 = vsel %vm3719, %v3655, %v1646
    %v3765 = vsel %vm3719, %v3656, %v1648
    %v3766 = vsel %vm3719, %v3657, %v1650
    %v3767 = vsel %vm3719, %v3658, %v1652
    %v3768 = vsel %vm3719, %v3659, %v1654
    %v3769 = vsel %vm3719, %v3660, %v1656
    %v3770 = vsel %vm3719, %v3661, %v1658
    %v3771 = vsel %vm3719, %v3662, %v1660
    %v3772 = vsel %vm3719, %v3663, %v1662
    %v3773 = vsel %vm3719, %v3664, %v1664
    %v3774 = vsel %vm3719, %v3665, %v1666
    %v3775 = vsel %vm3719, %v3666, %v1668
    %v3776 = vsel %vm3719, %v3667, %v1670
    %v3777 = vsel %vm3719, %v3668, %v1672
    %v3778 = vsel %vm3719, %v3669, %v1674
    %v3779 = vsel %vm3719, %v3670, %v1676
    %v3780 = vsel %vm3719, %v3671, %v1678
    %v3781 = vsel %vm3719, %v3672, %v1680
    %v3782 = vsel %vm3719, %v3673, %v1682
    %v3783 = vsel %vm3719, %v3674, %v1684
    %v3784 = vsel %vm3719, %v3675, %v1686
    %v3785 = vsel %vm3719, %v3676, %v1688
    %v3786 = vsel %vm3719, %v3677, %v1690
    %v3787 = vsel %vm3719, %v3678, %v1692
    %v3788 = vsel %vm3719, %v3679, %v1694
    %v3789 = vsel %vm3719, %v3680, %v1696
    %v3790 = vsel %vm3719, %v3681, %v1698
    %v3791 = vsel %vm3719, %v3682, %v1700
    %v3792 = vsel %vm3719, %v3683, %v1702
    %v3793 = vsel %vm3719, %v3684, %v1704
    %v3794 = vsel %vm3719, %v3685, %v1706
    %v3795 = vsel %vm3719, %v3686, %v1708
    %v3796 = vsel %vm3719, %v3687, %v1710
    %v3797 = vsel %vm3719, %v3688, %v1712
    %v3798 = vsel %vm3719, %v3689, %v1714
    %v3799 = vsel %vm3719, %v3690, %v1716
    %v3800 = vsel %vm3719, %v3691, %v1718
    %v3801 = vsel %vm3719, %v3692, %v1720
    %v3802 = vsel %vm3719, %v3693, %v1722
    %v3803 = vsel %vm3719, %v3694, %v1724
    %v3804 = vsel %vm3719, %v3695, %v1726
    %v3805 = vsel %vm3719, %v3696, %v1728
    %v3806 = vsel %vm3719, %v3697, %v1730
    %v3807 = vsel %vm3719, %v3698, %v1732
    %v3808 = vsel %vm3719, %v3699, %v1734
    %v3809 = vsel %vm3719, %v3700, %v1736
    %v3810 = vsel %vm3719, %v3701, %v1738
    %v3811 = vsel %vm3719, %v3702, %v1740
    %v3812 = vsel %vm3719, %v3703, %v1742
    %v3813 = vsel %vm3719, %v3704, %v1744
    %v3814 = vsel %vm3719, %v3705, %v1746
    %v3815 = vsel %vm3719, %v3706, %v1748
    %v3816 = vsel %vm3719, %v3707, %v1750
    %v3817 = vsel %vm3719, %v3708, %v1752
    %v3818 = vsel %vm3719, %v3709, %v1754
    %v3819 = vsel %vm3719, %v3710, %v1756
    %v3820 = vsel %vm3719, %v3711, %v1758
    %v3821 = vsel %vm3719, %v3712, %v1760
    %v3822 = vsel %vm3719, %v3713, %v1762
    %v3823 = vsel %vm3719, %v3714, %v1764
    %v3824 = vsel %vm3719, %v3715, %v1766
    %v3825 = vsel %vm3719, %v3716, %v1768
    %v3826 = vsel %vm3719, %v3717, %v1770
    %v3827 = vsel %vm3719, %v3718, %v1772
    %vm3828 = vcmask 130048
    %v3829 = vsel %vm3828, %v3720, %v1882
    %v3830 = vsel %vm3828, %v3721, %v1884
    %v3831 = vsel %vm3828, %v3722, %v1886
    %v3832 = vsel %vm3828, %v3723, %v1888
    %v3833 = vsel %vm3828, %v3724, %v1890
    %v3834 = vsel %vm3828, %v3725, %v1892
    %v3835 = vsel %vm3828, %v3726, %v1894
    %v3836 = vsel %vm3828, %v3727, %v1896
    %v3837 = vsel %vm3828, %v3728, %v1898
    %v3838 = vsel %vm3828, %v3729, %v1900
    %v3839 = vsel %vm3828, %v3730, %v1902
    %v3840 = vsel %vm3828, %v3731, %v1904
    %v3841 = vsel %vm3828, %v3732, %v1906
    %v3842 = vsel %vm3828, %v3733, %v1908
    %v3843 = vsel %vm3828, %v3734, %v1910
    %v3844 = vsel %vm3828, %v3735, %v1912
    %v3845 = vsel %vm3828, %v3736, %v1914
    %v3846 = vsel %vm3828, %v3737, %v1916
    %v3847 = vsel %vm3828, %v3738, %v1918
    %v3848 = vsel %vm3828, %v3739, %v1920
    %v3849 = vsel %vm3828, %v3740, %v1922
    %v3850 = vsel %vm3828, %v3741, %v1924
    %v3851 = vsel %vm3828, %v3742, %v1926
    %v3852 = vsel %vm3828, %v3743, %v1928
    %v3853 = vsel %vm3828, %v3744, %v1930
    %v3854 = vsel %vm3828, %v3745, %v1932
    %v3855 = vsel %vm3828, %v3746, %v1934
    %v3856 = vsel %vm3828, %v3747, %v1936
    %v3857 = vsel %vm3828, %v3748, %v1938
    %v3858 = vsel %vm3828, %v3749, %v1940
    %v3859 = vsel %vm3828, %v3750, %v1942
    %v3860 = vsel %vm3828, %v3751, %v1944
    %v3861 = vsel %vm3828, %v3752, %v1946
    %v3862 = vsel %vm3828, %v3753, %v1948
    %v3863 = vsel %vm3828, %v3754, %v1950
    %v3864 = vsel %vm3828, %v3755, %v1952
    %v3865 = vsel %vm3828, %v3756, %v1954
    %v3866 = vsel %vm3828, %v3757, %v1956
    %v3867 = vsel %vm3828, %v3758, %v1958
    %v3868 = vsel %vm3828, %v3759, %v1960
    %v3869 = vsel %vm3828, %v3760, %v1962
    %v3870 = vsel %vm3828, %v3761, %v1964
    %v3871 = vsel %vm3828, %v3762, %v1966
    %v3872 = vsel %vm3828, %v3763, %v1968
    %v3873 = vsel %vm3828, %v3764, %v1970
    %v3874 = vsel %vm3828, %v3765, %v1972
    %v3875 = vsel %vm3828, %v3766, %v1974
    %v3876 = vsel %vm3828, %v3767, %v1976
    %v3877 = vsel %vm3828, %v3768, %v1978
    %v3878 = vsel %vm3828, %v3769, %v1980
    %v3879 = vsel %vm3828, %v3770, %v1982
    %v3880 = vsel %vm3828, %v3771, %v1984
    %v3881 = vsel %vm3828, %v3772, %v1986
    %v3882 = vsel %vm3828, %v3773, %v1988
    %v3883 = vsel %vm3828, %v3774, %v1990
    %v3884 = vsel %vm3828, %v3775, %v1992
    %v3885 = vsel %vm3828, %v3776, %v1994
    %v3886 = vsel %vm3828, %v3777, %v1996
    %v3887 = vsel %vm3828, %v3778, %v1998
    %v3888 = vsel %vm3828, %v3779, %v2000
    %v3889 = vsel %vm3828, %v3780, %v2002
    %v3890 = vsel %vm3828, %v3781, %v2004
    %v3891 = vsel %vm3828, %v3782, %v2006
    %v3892 = vsel %vm3828, %v3783, %v2008
    %v3893 = vsel %vm3828, %v3784, %v2010
    %v3894 = vsel %vm3828, %v3785, %v2012
    %v3895 = vsel %vm3828, %v3786, %v2014
    %v3896 = vsel %vm3828, %v3787, %v2016
    %v3897 = vsel %vm3828, %v3788, %v2018
    %v3898 = vsel %vm3828, %v3789, %v2020
    %v3899 = vsel %vm3828, %v3790, %v2022
    %v3900 = vsel %vm3828, %v3791, %v2024
    %v3901 = vsel %vm3828, %v3792, %v2026
    %v3902 = vsel %vm3828, %v3793, %v2028
    %v3903 = vsel %vm3828, %v3794, %v2030
    %v3904 = vsel %vm3828, %v3795, %v2032
    %v3905 = vsel %vm3828, %v3796, %v2034
    %v3906 = vsel %vm3828, %v3797, %v2036
    %v3907 = vsel %vm3828, %v3798, %v2038
    %v3908 = vsel %vm3828, %v3799, %v2040
    %v3909 = vsel %vm3828, %v3800, %v2042
    %v3910 = vsel %vm3828, %v3801, %v2044
    %v3911 = vsel %vm3828, %v3802, %v2046
    %v3912 = vsel %vm3828, %v3803, %v2048
    %v3913 = vsel %vm3828, %v3804, %v2050
    %v3914 = vsel %vm3828, %v3805, %v2052
    %v3915 = vsel %vm3828, %v3806, %v2054
    %v3916 = vsel %vm3828, %v3807, %v2056
    %v3917 = vsel %vm3828, %v3808, %v2058
    %v3918 = vsel %vm3828, %v3809, %v2060
    %v3919 = vsel %vm3828, %v3810, %v2062
    %v3920 = vsel %vm3828, %v3811, %v2064
    %v3921 = vsel %vm3828, %v3812, %v2066
    %v3922 = vsel %vm3828, %v3813, %v2068
    %v3923 = vsel %vm3828, %v3814, %v2070
    %v3924 = vsel %vm3828, %v3815, %v2072
    %v3925 = vsel %vm3828, %v3816, %v2074
    %v3926 = vsel %vm3828, %v3817, %v2076
    %v3927 = vsel %vm3828, %v3818, %v2078
    %v3928 = vsel %vm3828, %v3819, %v2080
    %v3929 = vsel %vm3828, %v3820, %v2082
    %v3930 = vsel %vm3828, %v3821, %v2084
    %v3931 = vsel %vm3828, %v3822, %v2086
    %v3932 = vsel %vm3828, %v3823, %v2088
    %v3933 = vsel %vm3828, %v3824, %v2090
    %v3934 = vsel %vm3828, %v3825, %v2092
    %v3935 = vsel %vm3828, %v3826, %v2094
    %v3936 = vsel %vm3828, %v3827, %v2096
    %vm3937 = vcmask 162816
    %v3938 = vsel %vm3937, %v3829, %v2206
    %v3939 = vsel %vm3937, %v3830, %v2208
    %v3940 = vsel %vm3937, %v3831, %v2210
    %v3941 = vsel %vm3937, %v3832, %v2212
    %v3942 = vsel %vm3937, %v3833, %v2214
    %v3943 = vsel %vm3937, %v3834, %v2216
    %v3944 = vsel %vm3937, %v3835, %v2218
    %v3945 = vsel %vm3937, %v3836, %v2220
    %v3946 = vsel %vm3937, %v3837, %v2222
    %v3947 = vsel %vm3937, %v3838, %v2224
    %v3948 = vsel %vm3937, %v3839, %v2226
    %v3949 = vsel %vm3937, %v3840, %v2228
    %v3950 = vsel %vm3937, %v3841, %v2230
    %v3951 = vsel %vm3937, %v3842, %v2232
    %v3952 = vsel %vm3937, %v3843, %v2234
    %v3953 = vsel %vm3937, %v3844, %v2236
    %v3954 = vsel %vm3937, %v3845, %v2238
    %v3955 = vsel %vm3937, %v3846, %v2240
    %v3956 = vsel %vm3937, %v3847, %v2242
    %v3957 = vsel %vm3937, %v3848, %v2244
    %v3958 = vsel %vm3937, %v3849, %v2246
    %v3959 = vsel %vm3937, %v3850, %v2248
    %v3960 = vsel %vm3937, %v3851, %v2250
    %v3961 = vsel %vm3937, %v3852, %v2252
    %v3962 = vsel %vm3937, %v3853, %v2254
    %v3963 = vsel %vm3937, %v3854, %v2256
    %v3964 = vsel %vm3937, %v3855, %v2258
    %v3965 = vsel %vm3937, %v3856, %v2260
    %v3966 = vsel %vm3937, %v3857, %v2262
    %v3967 = vsel %vm3937, %v3858, %v2264
    %v3968 = vsel %vm3937, %v3859, %v2266
    %v3969 = vsel %vm3937, %v3860, %v2268
    %v3970 = vsel %vm3937, %v3861, %v2270
    %v3971 = vsel %vm3937, %v3862, %v2272
    %v3972 = vsel %vm3937, %v3863, %v2274
    %v3973 = vsel %vm3937, %v3864, %v2276
    %v3974 = vsel %vm3937, %v3865, %v2278
    %v3975 = vsel %vm3937, %v3866, %v2280
    %v3976 = vsel %vm3937, %v3867, %v2282
    %v3977 = vsel %vm3937, %v3868, %v2284
    %v3978 = vsel %vm3937, %v3869, %v2286
    %v3979 = vsel %vm3937, %v3870, %v2288
    %v3980 = vsel %vm3937, %v3871, %v2290
    %v3981 = vsel %vm3937, %v3872, %v2292
    %v3982 = vsel %vm3937, %v3873, %v2294
    %v3983 = vsel %vm3937, %v3874, %v2296
    %v3984 = vsel %vm3937, %v3875, %v2298
    %v3985 = vsel %vm3937, %v3876, %v2300
    %v3986 = vsel %vm3937, %v3877, %v2302
    %v3987 = vsel %vm3937, %v3878, %v2304
    %v3988 = vsel %vm3937, %v3879, %v2306
    %v3989 = vsel %vm3937, %v3880, %v2308
    %v3990 = vsel %vm3937, %v3881, %v2310
    %v3991 = vsel %vm3937, %v3882, %v2312
    %v3992 = vsel %vm3937, %v3883, %v2314
    %v3993 = vsel %vm3937, %v3884, %v2316
    %v3994 = vsel %vm3937, %v3885, %v2318
    %v3995 = vsel %vm3937, %v3886, %v2320
    %v3996 = vsel %vm3937, %v3887, %v2322
    %v3997 = vsel %vm3937, %v3888, %v2324
    %v3998 = vsel %vm3937, %v3889, %v2326
    %v3999 = vsel %vm3937, %v3890, %v2328
    %v4000 = vsel %vm3937, %v3891, %v2330
    %v4001 = vsel %vm3937, %v3892, %v2332
    %v4002 = vsel %vm3937, %v3893, %v2334
    %v4003 = vsel %vm3937, %v3894, %v2336
    %v4004 = vsel %vm3937, %v3895, %v2338
    %v4005 = vsel %vm3937, %v3896, %v2340
    %v4006 = vsel %vm3937, %v3897, %v2342
    %v4007 = vsel %vm3937, %v3898, %v2344
    %v4008 = vsel %vm3937, %v3899, %v2346
    %v4009 = vsel %vm3937, %v3900, %v2348
    %v4010 = vsel %vm3937, %v3901, %v2350
    %v4011 = vsel %vm3937, %v3902, %v2352
    %v4012 = vsel %vm3937, %v3903, %v2354
    %v4013 = vsel %vm3937, %v3904, %v2356
    %v4014 = vsel %vm3937, %v3905, %v2358
    %v4015 = vsel %vm3937, %v3906, %v2360
    %v4016 = vsel %vm3937, %v3907, %v2362
    %v4017 = vsel %vm3937, %v3908, %v2364
    %v4018 = vsel %vm3937, %v3909, %v2366
    %v4019 = vsel %vm3937, %v3910, %v2368
    %v4020 = vsel %vm3937, %v3911, %v2370
    %v4021 = vsel %vm3937, %v3912, %v2372
    %v4022 = vsel %vm3937, %v3913, %v2374
    %v4023 = vsel %vm3937, %v3914, %v2376
    %v4024 = vsel %vm3937, %v3915, %v2378
    %v4025 = vsel %vm3937, %v3916, %v2380
    %v4026 = vsel %vm3937, %v3917, %v2382
    %v4027 = vsel %vm3937, %v3918, %v2384
    %v4028 = vsel %vm3937, %v3919, %v2386
    %v4029 = vsel %vm3937, %v3920, %v2388
    %v4030 = vsel %vm3937, %v3921, %v2390
    %v4031 = vsel %vm3937, %v3922, %v2392
    %v4032 = vsel %vm3937, %v3923, %v2394
    %v4033 = vsel %vm3937, %v3924, %v2396
    %v4034 = vsel %vm3937, %v3925, %v2398
    %v4035 = vsel %vm3937, %v3926, %v2400
    %v4036 = vsel %vm3937, %v3927, %v2402
    %v4037 = vsel %vm3937, %v3928, %v2404
    %v4038 = vsel %vm3937, %v3929, %v2406
    %v4039 = vsel %vm3937, %v3930, %v2408
    %v4040 = vsel %vm3937, %v3931, %v2410
    %v4041 = vsel %vm3937, %v3932, %v2412
    %v4042 = vsel %vm3937, %v3933, %v2414
    %v4043 = vsel %vm3937, %v3934, %v2416
    %v4044 = vsel %vm3937, %v3935, %v2418
    %v4045 = vsel %vm3937, %v3936, %v2420
    %vm4046 = vcmask 195584
    %v4047 = vsel %vm4046, %v3938, %v2530
    %v4048 = vsel %vm4046, %v3939, %v2532
    %v4049 = vsel %vm4046, %v3940, %v2534
    %v4050 = vsel %vm4046, %v3941, %v2536
    %v4051 = vsel %vm4046, %v3942, %v2538
    %v4052 = vsel %vm4046, %v3943, %v2540
    %v4053 = vsel %vm4046, %v3944, %v2542
    %v4054 = vsel %vm4046, %v3945, %v2544
    %v4055 = vsel %vm4046, %v3946, %v2546
    %v4056 = vsel %vm4046, %v3947, %v2548
    %v4057 = vsel %vm4046, %v3948, %v2550
    %v4058 = vsel %vm4046, %v3949, %v2552
    %v4059 = vsel %vm4046, %v3950, %v2554
    %v4060 = vsel %vm4046, %v3951, %v2556
    %v4061 = vsel %vm4046, %v3952, %v2558
    %v4062 = vsel %vm4046, %v3953, %v2560
    %v4063 = vsel %vm4046, %v3954, %v2562
    %v4064 = vsel %vm4046, %v3955, %v2564
    %v4065 = vsel %vm4046, %v3956, %v2566
    %v4066 = vsel %vm4046, %v3957, %v2568
    %v4067 = vsel %vm4046, %v3958, %v2570
    %v4068 = vsel %vm4046, %v3959, %v2572
    %v4069 = vsel %vm4046, %v3960, %v2574
    %v4070 = vsel %vm4046, %v3961, %v2576
    %v4071 = vsel %vm4046, %v3962, %v2578
    %v4072 = vsel %vm4046, %v3963, %v2580
    %v4073 = vsel %vm4046, %v3964, %v2582
    %v4074 = vsel %vm4046, %v3965, %v2584
    %v4075 = vsel %vm4046, %v3966, %v2586
    %v4076 = vsel %vm4046, %v3967, %v2588
    %v4077 = vsel %vm4046, %v3968, %v2590
    %v4078 = vsel %vm4046, %v3969, %v2592
    %v4079 = vsel %vm4046, %v3970, %v2594
    %v4080 = vsel %vm4046, %v3971, %v2596
    %v4081 = vsel %vm4046, %v3972, %v2598
    %v4082 = vsel %vm4046, %v3973, %v2600
    %v4083 = vsel %vm4046, %v3974, %v2602
    %v4084 = vsel %vm4046, %v3975, %v2604
    %v4085 = vsel %vm4046, %v3976, %v2606
    %v4086 = vsel %vm4046, %v3977, %v2608
    %v4087 = vsel %vm4046, %v3978, %v2610
    %v4088 = vsel %vm4046, %v3979, %v2612
    %v4089 = vsel %vm4046, %v3980, %v2614
    %v4090 = vsel %vm4046, %v3981, %v2616
    %v4091 = vsel %vm4046, %v3982, %v2618
    %v4092 = vsel %vm4046, %v3983, %v2620
    %v4093 = vsel %vm4046, %v3984, %v2622
    %v4094 = vsel %vm4046, %v3985, %v2624
    %v4095 = vsel %vm4046, %v3986, %v2626
    %v4096 = vsel %vm4046, %v3987, %v2628
    %v4097 = vsel %vm4046, %v3988, %v2630
    %v4098 = vsel %vm4046, %v3989, %v2632
    %v4099 = vsel %vm4046, %v3990, %v2634
    %v4100 = vsel %vm4046, %v3991, %v2636
    %v4101 = vsel %vm4046, %v3992, %v2638
    %v4102 = vsel %vm4046, %v3993, %v2640
    %v4103 = vsel %vm4046, %v3994, %v2642
    %v4104 = vsel %vm4046, %v3995, %v2644
    %v4105 = vsel %vm4046, %v3996, %v2646
    %v4106 = vsel %vm4046, %v3997, %v2648
    %v4107 = vsel %vm4046, %v3998, %v2650
    %v4108 = vsel %vm4046, %v3999, %v2652
    %v4109 = vsel %vm4046, %v4000, %v2654
    %v4110 = vsel %vm4046, %v4001, %v2656
    %v4111 = vsel %vm4046, %v4002, %v2658
    %v4112 = vsel %vm4046, %v4003, %v2660
    %v4113 = vsel %vm4046, %v4004, %v2662
    %v4114 = vsel %vm4046, %v4005, %v2664
    %v4115 = vsel %vm4046, %v4006, %v2666
    %v4116 = vsel %vm4046, %v4007, %v2668
    %v4117 = vsel %vm4046, %v4008, %v2670
    %v4118 = vsel %vm4046, %v4009, %v2672
    %v4119 = vsel %vm4046, %v4010, %v2674
    %v4120 = vsel %vm4046, %v4011, %v2676
    %v4121 = vsel %vm4046, %v4012, %v2678
    %v4122 = vsel %vm4046, %v4013, %v2680
    %v4123 = vsel %vm4046, %v4014, %v2682
    %v4124 = vsel %vm4046, %v4015, %v2684
    %v4125 = vsel %vm4046, %v4016, %v2686
    %v4126 = vsel %vm4046, %v4017, %v2688
    %v4127 = vsel %vm4046, %v4018, %v2690
    %v4128 = vsel %vm4046, %v4019, %v2692
    %v4129 = vsel %vm4046, %v4020, %v2694
    %v4130 = vsel %vm4046, %v4021, %v2696
    %v4131 = vsel %vm4046, %v4022, %v2698
    %v4132 = vsel %vm4046, %v4023, %v2700
    %v4133 = vsel %vm4046, %v4024, %v2702
    %v4134 = vsel %vm4046, %v4025, %v2704
    %v4135 = vsel %vm4046, %v4026, %v2706
    %v4136 = vsel %vm4046, %v4027, %v2708
    %v4137 = vsel %vm4046, %v4028, %v2710
    %v4138 = vsel %vm4046, %v4029, %v2712
    %v4139 = vsel %vm4046, %v4030, %v2714
    %v4140 = vsel %vm4046, %v4031, %v2716
    %v4141 = vsel %vm4046, %v4032, %v2718
    %v4142 = vsel %vm4046, %v4033, %v2720
    %v4143 = vsel %vm4046, %v4034, %v2722
    %v4144 = vsel %vm4046, %v4035, %v2724
    %v4145 = vsel %vm4046, %v4036, %v2726
    %v4146 = vsel %vm4046, %v4037, %v2728
    %v4147 = vsel %vm4046, %v4038, %v2730
    %v4148 = vsel %vm4046, %v4039, %v2732
    %v4149 = vsel %vm4046, %v4040, %v2734
    %v4150 = vsel %vm4046, %v4041, %v2736
    %v4151 = vsel %vm4046, %v4042, %v2738
    %v4152 = vsel %vm4046, %v4043, %v2740
    %v4153 = vsel %vm4046, %v4044, %v2742
    %v4154 = vsel %vm4046, %v4045, %v2744
    %vm4155 = vcmask 228352
    %v4156 = vsel %vm4155, %v4047, %v2854
    %v4157 = vsel %vm4155, %v4048, %v2856
    %v4158 = vsel %vm4155, %v4049, %v2858
    %v4159 = vsel %vm4155, %v4050, %v2860
    %v4160 = vsel %vm4155, %v4051, %v2862
    %v4161 = vsel %vm4155, %v4052, %v2864
    %v4162 = vsel %vm4155, %v4053, %v2866
    %v4163 = vsel %vm4155, %v4054, %v2868
    %v4164 = vsel %vm4155, %v4055, %v2870
    %v4165 = vsel %vm4155, %v4056, %v2872
    %v4166 = vsel %vm4155, %v4057, %v2874
    %v4167 = vsel %vm4155, %v4058, %v2876
    %v4168 = vsel %vm4155, %v4059, %v2878
    %v4169 = vsel %vm4155, %v4060, %v2880
    %v4170 = vsel %vm4155, %v4061, %v2882
    %v4171 = vsel %vm4155, %v4062, %v2884
    %v4172 = vsel %vm4155, %v4063, %v2886
    %v4173 = vsel %vm4155, %v4064, %v2888
    %v4174 = vsel %vm4155, %v4065, %v2890
    %v4175 = vsel %vm4155, %v4066, %v2892
    %v4176 = vsel %vm4155, %v4067, %v2894
    %v4177 = vsel %vm4155, %v4068, %v2896
    %v4178 = vsel %vm4155, %v4069, %v2898
    %v4179 = vsel %vm4155, %v4070, %v2900
    %v4180 = vsel %vm4155, %v4071, %v2902
    %v4181 = vsel %vm4155, %v4072, %v2904
    %v4182 = vsel %vm4155, %v4073, %v2906
    %v4183 = vsel %vm4155, %v4074, %v2908
    %v4184 = vsel %vm4155, %v4075, %v2910
    %v4185 = vsel %vm4155, %v4076, %v2912
    %v4186 = vsel %vm4155, %v4077, %v2914
    %v4187 = vsel %vm4155, %v4078, %v2916
    %v4188 = vsel %vm4155, %v4079, %v2918
    %v4189 = vsel %vm4155, %v4080, %v2920
    %v4190 = vsel %vm4155, %v4081, %v2922
    %v4191 = vsel %vm4155, %v4082, %v2924
    %v4192 = vsel %vm4155, %v4083, %v2926
    %v4193 = vsel %vm4155, %v4084, %v2928
    %v4194 = vsel %vm4155, %v4085, %v2930
    %v4195 = vsel %vm4155, %v4086, %v2932
    %v4196 = vsel %vm4155, %v4087, %v2934
    %v4197 = vsel %vm4155, %v4088, %v2936
    %v4198 = vsel %vm4155, %v4089, %v2938
    %v4199 = vsel %vm4155, %v4090, %v2940
    %v4200 = vsel %vm4155, %v4091, %v2942
    %v4201 = vsel %vm4155, %v4092, %v2944
    %v4202 = vsel %vm4155, %v4093, %v2946
    %v4203 = vsel %vm4155, %v4094, %v2948
    %v4204 = vsel %vm4155, %v4095, %v2950
    %v4205 = vsel %vm4155, %v4096, %v2952
    %v4206 = vsel %vm4155, %v4097, %v2954
    %v4207 = vsel %vm4155, %v4098, %v2956
    %v4208 = vsel %vm4155, %v4099, %v2958
    %v4209 = vsel %vm4155, %v4100, %v2960
    %v4210 = vsel %vm4155, %v4101, %v2962
    %v4211 = vsel %vm4155, %v4102, %v2964
    %v4212 = vsel %vm4155, %v4103, %v2966
    %v4213 = vsel %vm4155, %v4104, %v2968
    %v4214 = vsel %vm4155, %v4105, %v2970
    %v4215 = vsel %vm4155, %v4106, %v2972
    %v4216 = vsel %vm4155, %v4107, %v2974
    %v4217 = vsel %vm4155, %v4108, %v2976
    %v4218 = vsel %vm4155, %v4109, %v2978
    %v4219 = vsel %vm4155, %v4110, %v2980
    %v4220 = vsel %vm4155, %v4111, %v2982
    %v4221 = vsel %vm4155, %v4112, %v2984
    %v4222 = vsel %vm4155, %v4113, %v2986
    %v4223 = vsel %vm4155, %v4114, %v2988
    %v4224 = vsel %vm4155, %v4115, %v2990
    %v4225 = vsel %vm4155, %v4116, %v2992
    %v4226 = vsel %vm4155, %v4117, %v2994
    %v4227 = vsel %vm4155, %v4118, %v2996
    %v4228 = vsel %vm4155, %v4119, %v2998
    %v4229 = vsel %vm4155, %v4120, %v3000
    %v4230 = vsel %vm4155, %v4121, %v3002
    %v4231 = vsel %vm4155, %v4122, %v3004
    %v4232 = vsel %vm4155, %v4123, %v3006
    %v4233 = vsel %vm4155, %v4124, %v3008
    %v4234 = vsel %vm4155, %v4125, %v3010
    %v4235 = vsel %vm4155, %v4126, %v3012
    %v4236 = vsel %vm4155, %v4127, %v3014
    %v4237 = vsel %vm4155, %v4128, %v3016
    %v4238 = vsel %vm4155, %v4129, %v3018
    %v4239 = vsel %vm4155, %v4130, %v3020
    %v4240 = vsel %vm4155, %v4131, %v3022
    %v4241 = vsel %vm4155, %v4132, %v3024
    %v4242 = vsel %vm4155, %v4133, %v3026
    %v4243 = vsel %vm4155, %v4134, %v3028
    %v4244 = vsel %vm4155, %v4135, %v3030
    %v4245 = vsel %vm4155, %v4136, %v3032
    %v4246 = vsel %vm4155, %v4137, %v3034
    %v4247 = vsel %vm4155, %v4138, %v3036
    %v4248 = vsel %vm4155, %v4139, %v3038
    %v4249 = vsel %vm4155, %v4140, %v3040
    %v4250 = vsel %vm4155, %v4141, %v3042
    %v4251 = vsel %vm4155, %v4142, %v3044
    %v4252 = vsel %vm4155, %v4143, %v3046
    %v4253 = vsel %vm4155, %v4144, %v3048
    %v4254 = vsel %vm4155, %v4145, %v3050
    %v4255 = vsel %vm4155, %v4146, %v3052
    %v4256 = vsel %vm4155, %v4147, %v3054
    %v4257 = vsel %vm4155, %v4148, %v3056
    %v4258 = vsel %vm4155, %v4149, %v3058
    %v4259 = vsel %vm4155, %v4150, %v3060
    %v4260 = vsel %vm4155, %v4151, %v3062
    %v4261 = vsel %vm4155, %v4152, %v3064
    %v4262 = vsel %vm4155, %v4153, %v3066
    %v4263 = vsel %vm4155, %v4154, %v3068
    %vm4264 = vcmask 261120
    %v4265 = vsel %vm4264, %v4156, %v3178
    %v4266 = vsel %vm4264, %v4157, %v3180
    %v4267 = vsel %vm4264, %v4158, %v3182
    %v4268 = vsel %vm4264, %v4159, %v3184
    %v4269 = vsel %vm4264, %v4160, %v3186
    %v4270 = vsel %vm4264, %v4161, %v3188
    %v4271 = vsel %vm4264, %v4162, %v3190
    %v4272 = vsel %vm4264, %v4163, %v3192
    %v4273 = vsel %vm4264, %v4164, %v3194
    %v4274 = vsel %vm4264, %v4165, %v3196
    %v4275 = vsel %vm4264, %v4166, %v3198
    %v4276 = vsel %vm4264, %v4167, %v3200
    %v4277 = vsel %vm4264, %v4168, %v3202
    %v4278 = vsel %vm4264, %v4169, %v3204
    %v4279 = vsel %vm4264, %v4170, %v3206
    %v4280 = vsel %vm4264, %v4171, %v3208
    %v4281 = vsel %vm4264, %v4172, %v3210
    %v4282 = vsel %vm4264, %v4173, %v3212
    %v4283 = vsel %vm4264, %v4174, %v3214
    %v4284 = vsel %vm4264, %v4175, %v3216
    %v4285 = vsel %vm4264, %v4176, %v3218
    %v4286 = vsel %vm4264, %v4177, %v3220
    %v4287 = vsel %vm4264, %v4178, %v3222
    %v4288 = vsel %vm4264, %v4179, %v3224
    %v4289 = vsel %vm4264, %v4180, %v3226
    %v4290 = vsel %vm4264, %v4181, %v3228
    %v4291 = vsel %vm4264, %v4182, %v3230
    %v4292 = vsel %vm4264, %v4183, %v3232
    %v4293 = vsel %vm4264, %v4184, %v3234
    %v4294 = vsel %vm4264, %v4185, %v3236
    %v4295 = vsel %vm4264, %v4186, %v3238
    %v4296 = vsel %vm4264, %v4187, %v3240
    %v4297 = vsel %vm4264, %v4188, %v3242
    %v4298 = vsel %vm4264, %v4189, %v3244
    %v4299 = vsel %vm4264, %v4190, %v3246
    %v4300 = vsel %vm4264, %v4191, %v3248
    %v4301 = vsel %vm4264, %v4192, %v3250
    %v4302 = vsel %vm4264, %v4193, %v3252
    %v4303 = vsel %vm4264, %v4194, %v3254
    %v4304 = vsel %vm4264, %v4195, %v3256
    %v4305 = vsel %vm4264, %v4196, %v3258
    %v4306 = vsel %vm4264, %v4197, %v3260
    %v4307 = vsel %vm4264, %v4198, %v3262
    %v4308 = vsel %vm4264, %v4199, %v3264
    %v4309 = vsel %vm4264, %v4200, %v3266
    %v4310 = vsel %vm4264, %v4201, %v3268
    %v4311 = vsel %vm4264, %v4202, %v3270
    %v4312 = vsel %vm4264, %v4203, %v3272
    %v4313 = vsel %vm4264, %v4204, %v3274
    %v4314 = vsel %vm4264, %v4205, %v3276
    %v4315 = vsel %vm4264, %v4206, %v3278
    %v4316 = vsel %vm4264, %v4207, %v3280
    %v4317 = vsel %vm4264, %v4208, %v3282
    %v4318 = vsel %vm4264, %v4209, %v3284
    %v4319 = vsel %vm4264, %v4210, %v3286
    %v4320 = vsel %vm4264, %v4211, %v3288
    %v4321 = vsel %vm4264, %v4212, %v3290
    %v4322 = vsel %vm4264, %v4213, %v3292
    %v4323 = vsel %vm4264, %v4214, %v3294
    %v4324 = vsel %vm4264, %v4215, %v3296
    %v4325 = vsel %vm4264, %v4216, %v3298
    %v4326 = vsel %vm4264, %v4217, %v3300
    %v4327 = vsel %vm4264, %v4218, %v3302
    %v4328 = vsel %vm4264, %v4219, %v3304
    %v4329 = vsel %vm4264, %v4220, %v3306
    %v4330 = vsel %vm4264, %v4221, %v3308
    %v4331 = vsel %vm4264, %v4222, %v3310
    %v4332 = vsel %vm4264, %v4223, %v3312
    %v4333 = vsel %vm4264, %v4224, %v3314
    %v4334 = vsel %vm4264, %v4225, %v3316
    %v4335 = vsel %vm4264, %v4226, %v3318
    %v4336 = vsel %vm4264, %v4227, %v3320
    %v4337 = vsel %vm4264, %v4228, %v3322
    %v4338 = vsel %vm4264, %v4229, %v3324
    %v4339 = vsel %vm4264, %v4230, %v3326
    %v4340 = vsel %vm4264, %v4231, %v3328
    %v4341 = vsel %vm4264, %v4232, %v3330
    %v4342 = vsel %vm4264, %v4233, %v3332
    %v4343 = vsel %vm4264, %v4234, %v3334
    %v4344 = vsel %vm4264, %v4235, %v3336
    %v4345 = vsel %vm4264, %v4236, %v3338
    %v4346 = vsel %vm4264, %v4237, %v3340
    %v4347 = vsel %vm4264, %v4238, %v3342
    %v4348 = vsel %vm4264, %v4239, %v3344
    %v4349 = vsel %vm4264, %v4240, %v3346
    %v4350 = vsel %vm4264, %v4241, %v3348
    %v4351 = vsel %vm4264, %v4242, %v3350
    %v4352 = vsel %vm4264, %v4243, %v3352
    %v4353 = vsel %vm4264, %v4244, %v3354
    %v4354 = vsel %vm4264, %v4245, %v3356
    %v4355 = vsel %vm4264, %v4246, %v3358
    %v4356 = vsel %vm4264, %v4247, %v3360
    %v4357 = vsel %vm4264, %v4248, %v3362
    %v4358 = vsel %vm4264, %v4249, %v3364
    %v4359 = vsel %vm4264, %v4250, %v3366
    %v4360 = vsel %vm4264, %v4251, %v3368
    %v4361 = vsel %vm4264, %v4252, %v3370
    %v4362 = vsel %vm4264, %v4253, %v3372
    %v4363 = vsel %vm4264, %v4254, %v3374
    %v4364 = vsel %vm4264, %v4255, %v3376
    %v4365 = vsel %vm4264, %v4256, %v3378
    %v4366 = vsel %vm4264, %v4257, %v3380
    %v4367 = vsel %vm4264, %v4258, %v3382
    %v4368 = vsel %vm4264, %v4259, %v3384
    %v4369 = vsel %vm4264, %v4260, %v3386
    %v4370 = vsel %vm4264, %v4261, %v3388
    %v4371 = vsel %vm4264, %v4262, %v3390
    %v4372 = vsel %vm4264, %v4263, %v3392
    %v4373 = vld [vmem:[%s1] sm:$0xff]
    %v4374 = vld [vmem:[%s1 + $0x8] sm:$0xff]
    %v4375 = vld [vmem:[%s1 + $0x10] sm:$0xff]
    %v4376 = vld [vmem:[%s1 + $0x18] sm:$0xff]
    %v4377 = vld [vmem:[%s1 + $0x20] sm:$0xf]
    %vm4378 = vcmask 293888
    %v4380 = vsel %vm4378, %v4265, 0
    %v4383 = vsel %vm4378, %v4266, 0
    %v4386 = vsel %vm4378, %v4267, 0
    %v4389 = vsel %vm4378, %v4268, 0
    %v4392 = vsel %vm4378, %v4269, 0
    %v4395 = vsel %vm4378, %v4270, 0
    %v4398 = vsel %vm4378, %v4271, 0
    %v4401 = vsel %vm4378, %v4272, 0
    %v4404 = vsel %vm4378, %v4273, 0
    %v4407 = vsel %vm4378, %v4274, 0
    %v4410 = vsel %vm4378, %v4275, 0
    %v4413 = vsel %vm4378, %v4276, 0
    %v4416 = vsel %vm4378, %v4277, 0
    %v4419 = vsel %vm4378, %v4278, 0
    %v4422 = vsel %vm4378, %v4279, 0
    %v4425 = vsel %vm4378, %v4280, 0
    %v4428 = vsel %vm4378, %v4281, 0
    %v4431 = vsel %vm4378, %v4282, 0
    %v4434 = vsel %vm4378, %v4283, 0
    %v4437 = vsel %vm4378, %v4284, 0
    %v4440 = vsel %vm4378, %v4285, 0
    %v4443 = vsel %vm4378, %v4286, 0
    %v4446 = vsel %vm4378, %v4287, 0
    %v4449 = vsel %vm4378, %v4288, 0
    %v4452 = vsel %vm4378, %v4289, 0
    %v4455 = vsel %vm4378, %v4290, 0
    %v4458 = vsel %vm4378, %v4291, 0
    %v4461 = vsel %vm4378, %v4292, 0
    %v4464 = vsel %vm4378, %v4293, 0
    %v4467 = vsel %vm4378, %v4294, 0
    %v4470 = vsel %vm4378, %v4295, 0
    %v4473 = vsel %vm4378, %v4296, 0
    %v4476 = vsel %vm4378, %v4297, 0
    %v4479 = vsel %vm4378, %v4298, 0
    %v4482 = vsel %vm4378, %v4299, 0
    %v4485 = vsel %vm4378, %v4300, 0
    %v4488 = vsel %vm4378, %v4301, 0
    %v4491 = vsel %vm4378, %v4302, 0
    %v4494 = vsel %vm4378, %v4303, 0
    %v4497 = vsel %vm4378, %v4304, 0
    %v4500 = vsel %vm4378, %v4305, 0
    %v4503 = vsel %vm4378, %v4306, 0
    %v4506 = vsel %vm4378, %v4307, 0
    %v4509 = vsel %vm4378, %v4308, 0
    %v4512 = vsel %vm4378, %v4309, 0
    %v4515 = vsel %vm4378, %v4310, 0
    %v4518 = vsel %vm4378, %v4311, 0
    %v4521 = vsel %vm4378, %v4312, 0
    %v4524 = vsel %vm4378, %v4313, 0
    %v4527 = vsel %vm4378, %v4314, 0
    %v4530 = vsel %vm4378, %v4315, 0
    %v4533 = vsel %vm4378, %v4316, 0
    %v4536 = vsel %vm4378, %v4317, 0
    %v4539 = vsel %vm4378, %v4318, 0
    %v4542 = vsel %vm4378, %v4319, 0
    %v4545 = vsel %vm4378, %v4320, 0
    %v4548 = vsel %vm4378, %v4321, 0
    %v4551 = vsel %vm4378, %v4322, 0
    %v4554 = vsel %vm4378, %v4323, 0
    %v4557 = vsel %vm4378, %v4324, 0
    %v4560 = vsel %vm4378, %v4325, 0
    %v4563 = vsel %vm4378, %v4326, 0
    %v4566 = vsel %vm4378, %v4327, 0
    %v4569 = vsel %vm4378, %v4328, 0
    %v4572 = vsel %vm4378, %v4329, 0
    %v4575 = vsel %vm4378, %v4330, 0
    %v4578 = vsel %vm4378, %v4331, 0
    %v4581 = vsel %vm4378, %v4332, 0
    %v4584 = vsel %vm4378, %v4333, 0
    %v4587 = vsel %vm4378, %v4334, 0
    %v4590 = vsel %vm4378, %v4335, 0
    %v4593 = vsel %vm4378, %v4336, 0
    %v4596 = vsel %vm4378, %v4337, 0
    %v4599 = vsel %vm4378, %v4338, 0
    %v4602 = vsel %vm4378, %v4339, 0
    %v4605 = vsel %vm4378, %v4340, 0
    %v4608 = vsel %vm4378, %v4341, 0
    %v4611 = vsel %vm4378, %v4342, 0
    %v4614 = vsel %vm4378, %v4343, 0
    %v4617 = vsel %vm4378, %v4344, 0
    %v4620 = vsel %vm4378, %v4345, 0
    %v4623 = vsel %vm4378, %v4346, 0
    %v4626 = vsel %vm4378, %v4347, 0
    %v4629 = vsel %vm4378, %v4348, 0
    %v4632 = vsel %vm4378, %v4349, 0
    %v4635 = vsel %vm4378, %v4350, 0
    %v4638 = vsel %vm4378, %v4351, 0
    %v4641 = vsel %vm4378, %v4352, 0
    %v4644 = vsel %vm4378, %v4353, 0
    %v4647 = vsel %vm4378, %v4354, 0
    %v4650 = vsel %vm4378, %v4355, 0
    %v4653 = vsel %vm4378, %v4356, 0
    %v4656 = vsel %vm4378, %v4357, 0
    %v4659 = vsel %vm4378, %v4358, 0
    %v4662 = vsel %vm4378, %v4359, 0
    %v4665 = vsel %vm4378, %v4360, 0
    %v4668 = vsel %vm4378, %v4361, 0
    %v4671 = vsel %vm4378, %v4362, 0
    %v4674 = vsel %vm4378, %v4363, 0
    %v4677 = vsel %vm4378, %v4364, 0
    %v4680 = vsel %vm4378, %v4365, 0
    %v4683 = vsel %vm4378, %v4366, 0
    %v4686 = vsel %vm4378, %v4367, 0
    %v4689 = vsel %vm4378, %v4368, 0
    %v4692 = vsel %vm4378, %v4369, 0
    %v4695 = vsel %vm4378, %v4370, 0
    %v4698 = vsel %vm4378, %v4371, 0
    %v4701 = vsel %vm4378, %v4372, 0
    %vm4703 = vcmask 1043456
    %v4705 = vsel %vm4703, %v4377, 0
    %4707 = vmatpush.msra.mxu0 0.0
    %4708 = vmatpush.msra.mxu0 0.0
    %4709 = vmatpush.msra.mxu0 0.0
    %4710 = vmatpush.msra.mxu0 0.0
    %4711 = vmatpush.msra.mxu0 0.0
    %4712 = vmatpush.msra.mxu0 0.0
    %4713 = vmatpush.msra.mxu0 0.0
    %4714 = vmatpush.msra.mxu0 0.0
    %4715 = vmatpush.msra.mxu0 0.0
    %4716 = vmatpush.msra.mxu0 0.0
    %4717 = vmatpush.msra.mxu0 0.0
    %4718 = vmatpush.msra.mxu0 %v4705
    %4719 = vmatpush.msra.mxu0 %v4376
    %4720 = vmatpush.msra.mxu0 %v4375
    %4721 = vmatpush.msra.mxu0 %v4374
    %4722 = vmatpush.msra.mxu0 %v4373
    %4723 = vmatmul.f32.gmra.mxu0 %v4380
    %v4724 = vpop.f32.mrf.mxu0
    %v4725 = vadd.f32 0.0, %v4724
    %4726 = vmatmul.f32.gmra.mxu0 %v4383
    %v4727 = vpop.f32.mrf.mxu0
    %v4728 = vadd.f32 0.0, %v4727
    %4729 = vmatmul.f32.gmra.mxu0 %v4386
    %v4730 = vpop.f32.mrf.mxu0
    %v4731 = vadd.f32 0.0, %v4730
    %4732 = vmatmul.f32.gmra.mxu0 %v4389
    %v4733 = vpop.f32.mrf.mxu0
    %v4734 = vadd.f32 0.0, %v4733
    %4735 = vmatmul.f32.gmra.mxu0 %v4392
    %v4736 = vpop.f32.mrf.mxu0
    %v4737 = vadd.f32 0.0, %v4736
    %4738 = vmatmul.f32.gmra.mxu0 %v4395
    %v4739 = vpop.f32.mrf.mxu0
    %v4740 = vadd.f32 0.0, %v4739
    %4741 = vmatmul.f32.gmra.mxu0 %v4398
    %v4742 = vpop.f32.mrf.mxu0
    %v4743 = vadd.f32 0.0, %v4742
    %4744 = vmatmul.f32.gmra.mxu0 %v4401
    %v4745 = vpop.f32.mrf.mxu0
    %v4746 = vadd.f32 0.0, %v4745
    %4747 = vmatmul.f32.gmra.mxu0 %v4404
    %v4748 = vpop.f32.mrf.mxu0
    %v4749 = vadd.f32 0.0, %v4748
    %4750 = vmatmul.f32.gmra.mxu0 %v4407
    %v4751 = vpop.f32.mrf.mxu0
    %v4752 = vadd.f32 0.0, %v4751
    %4753 = vmatmul.f32.gmra.mxu0 %v4410
    %v4754 = vpop.f32.mrf.mxu0
    %v4755 = vadd.f32 0.0, %v4754
    %4756 = vmatmul.f32.gmra.mxu0 %v4413
    %v4757 = vpop.f32.mrf.mxu0
    %v4758 = vadd.f32 0.0, %v4757
    %4759 = vmatmul.f32.gmra.mxu0 %v4416
    %v4760 = vpop.f32.mrf.mxu0
    %v4761 = vadd.f32 0.0, %v4760
    %4762 = vmatmul.f32.gmra.mxu0 %v4419
    %v4763 = vpop.f32.mrf.mxu0
    %v4764 = vadd.f32 0.0, %v4763
    %4765 = vmatmul.f32.gmra.mxu0 %v4422
    %v4766 = vpop.f32.mrf.mxu0
    %v4767 = vadd.f32 0.0, %v4766
    %4768 = vmatmul.f32.gmra.mxu0 %v4425
    %v4769 = vpop.f32.mrf.mxu0
    %v4770 = vadd.f32 0.0, %v4769
    %4771 = vmatmul.f32.gmra.mxu0 %v4428
    %v4772 = vpop.f32.mrf.mxu0
    %v4773 = vadd.f32 0.0, %v4772
    %4774 = vmatmul.f32.gmra.mxu0 %v4431
    %v4775 = vpop.f32.mrf.mxu0
    %v4776 = vadd.f32 0.0, %v4775
    %4777 = vmatmul.f32.gmra.mxu0 %v4434
    %v4778 = vpop.f32.mrf.mxu0
    %v4779 = vadd.f32 0.0, %v4778
    %4780 = vmatmul.f32.gmra.mxu0 %v4437
    %v4781 = vpop.f32.mrf.mxu0
    %v4782 = vadd.f32 0.0, %v4781
    %4783 = vmatmul.f32.gmra.mxu0 %v4440
    %v4784 = vpop.f32.mrf.mxu0
    %v4785 = vadd.f32 0.0, %v4784
    %4786 = vmatmul.f32.gmra.mxu0 %v4443
    %v4787 = vpop.f32.mrf.mxu0
    %v4788 = vadd.f32 0.0, %v4787
    %4789 = vmatmul.f32.gmra.mxu0 %v4446
    %v4790 = vpop.f32.mrf.mxu0
    %v4791 = vadd.f32 0.0, %v4790
    %4792 = vmatmul.f32.gmra.mxu0 %v4449
    %v4793 = vpop.f32.mrf.mxu0
    %v4794 = vadd.f32 0.0, %v4793
    %4795 = vmatmul.f32.gmra.mxu0 %v4452
    %v4796 = vpop.f32.mrf.mxu0
    %v4797 = vadd.f32 0.0, %v4796
    %4798 = vmatmul.f32.gmra.mxu0 %v4455
    %v4799 = vpop.f32.mrf.mxu0
    %v4800 = vadd.f32 0.0, %v4799
    %4801 = vmatmul.f32.gmra.mxu0 %v4458
    %v4802 = vpop.f32.mrf.mxu0
    %v4803 = vadd.f32 0.0, %v4802
    %4804 = vmatmul.f32.gmra.mxu0 %v4461
    %v4805 = vpop.f32.mrf.mxu0
    %v4806 = vadd.f32 0.0, %v4805
    %4807 = vmatmul.f32.gmra.mxu0 %v4464
    %v4808 = vpop.f32.mrf.mxu0
    %v4809 = vadd.f32 0.0, %v4808
    %4810 = vmatmul.f32.gmra.mxu0 %v4467
    %v4811 = vpop.f32.mrf.mxu0
    %v4812 = vadd.f32 0.0, %v4811
    %4813 = vmatmul.f32.gmra.mxu0 %v4470
    %v4814 = vpop.f32.mrf.mxu0
    %v4815 = vadd.f32 0.0, %v4814
    %4816 = vmatmul.f32.gmra.mxu0 %v4473
    %v4817 = vpop.f32.mrf.mxu0
    %v4818 = vadd.f32 0.0, %v4817
    %4819 = vmatmul.f32.gmra.mxu0 %v4476
    %v4820 = vpop.f32.mrf.mxu0
    %v4821 = vadd.f32 0.0, %v4820
    %4822 = vmatmul.f32.gmra.mxu0 %v4479
    %v4823 = vpop.f32.mrf.mxu0
    %v4824 = vadd.f32 0.0, %v4823
    %4825 = vmatmul.f32.gmra.mxu0 %v4482
    %v4826 = vpop.f32.mrf.mxu0
    %v4827 = vadd.f32 0.0, %v4826
    %4828 = vmatmul.f32.gmra.mxu0 %v4485
    %v4829 = vpop.f32.mrf.mxu0
    %v4830 = vadd.f32 0.0, %v4829
    %4831 = vmatmul.f32.gmra.mxu0 %v4488
    %v4832 = vpop.f32.mrf.mxu0
    %v4833 = vadd.f32 0.0, %v4832
    %4834 = vmatmul.f32.gmra.mxu0 %v4491
    %v4835 = vpop.f32.mrf.mxu0
    %v4836 = vadd.f32 0.0, %v4835
    %4837 = vmatmul.f32.gmra.mxu0 %v4494
    %v4838 = vpop.f32.mrf.mxu0
    %v4839 = vadd.f32 0.0, %v4838
    %4840 = vmatmul.f32.gmra.mxu0 %v4497
    %v4841 = vpop.f32.mrf.mxu0
    %v4842 = vadd.f32 0.0, %v4841
    %4843 = vmatmul.f32.gmra.mxu0 %v4500
    %v4844 = vpop.f32.mrf.mxu0
    %v4845 = vadd.f32 0.0, %v4844
    %4846 = vmatmul.f32.gmra.mxu0 %v4503
    %v4847 = vpop.f32.mrf.mxu0
    %v4848 = vadd.f32 0.0, %v4847
    %4849 = vmatmul.f32.gmra.mxu0 %v4506
    %v4850 = vpop.f32.mrf.mxu0
    %v4851 = vadd.f32 0.0, %v4850
    %4852 = vmatmul.f32.gmra.mxu0 %v4509
    %v4853 = vpop.f32.mrf.mxu0
    %v4854 = vadd.f32 0.0, %v4853
    %4855 = vmatmul.f32.gmra.mxu0 %v4512
    %v4856 = vpop.f32.mrf.mxu0
    %v4857 = vadd.f32 0.0, %v4856
    %4858 = vmatmul.f32.gmra.mxu0 %v4515
    %v4859 = vpop.f32.mrf.mxu0
    %v4860 = vadd.f32 0.0, %v4859
    %4861 = vmatmul.f32.gmra.mxu0 %v4518
    %v4862 = vpop.f32.mrf.mxu0
    %v4863 = vadd.f32 0.0, %v4862
    %4864 = vmatmul.f32.gmra.mxu0 %v4521
    %v4865 = vpop.f32.mrf.mxu0
    %v4866 = vadd.f32 0.0, %v4865
    %4867 = vmatmul.f32.gmra.mxu0 %v4524
    %v4868 = vpop.f32.mrf.mxu0
    %v4869 = vadd.f32 0.0, %v4868
    %4870 = vmatmul.f32.gmra.mxu0 %v4527
    %v4871 = vpop.f32.mrf.mxu0
    %v4872 = vadd.f32 0.0, %v4871
    %4873 = vmatmul.f32.gmra.mxu0 %v4530
    %v4874 = vpop.f32.mrf.mxu0
    %v4875 = vadd.f32 0.0, %v4874
    %4876 = vmatmul.f32.gmra.mxu0 %v4533
    %v4877 = vpop.f32.mrf.mxu0
    %v4878 = vadd.f32 0.0, %v4877
    %4879 = vmatmul.f32.gmra.mxu0 %v4536
    %v4880 = vpop.f32.mrf.mxu0
    %v4881 = vadd.f32 0.0, %v4880
    %4882 = vmatmul.f32.gmra.mxu0 %v4539
    %v4883 = vpop.f32.mrf.mxu0
    %v4884 = vadd.f32 0.0, %v4883
    %4885 = vmatmul.f32.gmra.mxu0 %v4542
    %v4886 = vpop.f32.mrf.mxu0
    %v4887 = vadd.f32 0.0, %v4886
    %4888 = vmatmul.f32.gmra.mxu0 %v4545
    %v4889 = vpop.f32.mrf.mxu0
    %v4890 = vadd.f32 0.0, %v4889
    %4891 = vmatmul.f32.gmra.mxu0 %v4548
    %v4892 = vpop.f32.mrf.mxu0
    %v4893 = vadd.f32 0.0, %v4892
    %4894 = vmatmul.f32.gmra.mxu0 %v4551
    %v4895 = vpop.f32.mrf.mxu0
    %v4896 = vadd.f32 0.0, %v4895
    %4897 = vmatmul.f32.gmra.mxu0 %v4554
    %v4898 = vpop.f32.mrf.mxu0
    %v4899 = vadd.f32 0.0, %v4898
    %4900 = vmatmul.f32.gmra.mxu0 %v4557
    %v4901 = vpop.f32.mrf.mxu0
    %v4902 = vadd.f32 0.0, %v4901
    %4903 = vmatmul.f32.gmra.mxu0 %v4560
    %v4904 = vpop.f32.mrf.mxu0
    %v4905 = vadd.f32 0.0, %v4904
    %4906 = vmatmul.f32.gmra.mxu0 %v4563
    %v4907 = vpop.f32.mrf.mxu0
    %v4908 = vadd.f32 0.0, %v4907
    %4909 = vmatmul.f32.gmra.mxu0 %v4566
    %v4910 = vpop.f32.mrf.mxu0
    %v4911 = vadd.f32 0.0, %v4910
    %4912 = vmatmul.f32.gmra.mxu0 %v4569
    %v4913 = vpop.f32.mrf.mxu0
    %v4914 = vadd.f32 0.0, %v4913
    %4915 = vmatmul.f32.gmra.mxu0 %v4572
    %v4916 = vpop.f32.mrf.mxu0
    %v4917 = vadd.f32 0.0, %v4916
    %4918 = vmatmul.f32.gmra.mxu0 %v4575
    %v4919 = vpop.f32.mrf.mxu0
    %v4920 = vadd.f32 0.0, %v4919
    %4921 = vmatmul.f32.gmra.mxu0 %v4578
    %v4922 = vpop.f32.mrf.mxu0
    %v4923 = vadd.f32 0.0, %v4922
    %4924 = vmatmul.f32.gmra.mxu0 %v4581
    %v4925 = vpop.f32.mrf.mxu0
    %v4926 = vadd.f32 0.0, %v4925
    %4927 = vmatmul.f32.gmra.mxu0 %v4584
    %v4928 = vpop.f32.mrf.mxu0
    %v4929 = vadd.f32 0.0, %v4928
    %4930 = vmatmul.f32.gmra.mxu0 %v4587
    %v4931 = vpop.f32.mrf.mxu0
    %v4932 = vadd.f32 0.0, %v4931
    %4933 = vmatmul.f32.gmra.mxu0 %v4590
    %v4934 = vpop.f32.mrf.mxu0
    %v4935 = vadd.f32 0.0, %v4934
    %4936 = vmatmul.f32.gmra.mxu0 %v4593
    %v4937 = vpop.f32.mrf.mxu0
    %v4938 = vadd.f32 0.0, %v4937
    %4939 = vmatmul.f32.gmra.mxu0 %v4596
    %v4940 = vpop.f32.mrf.mxu0
    %v4941 = vadd.f32 0.0, %v4940
    %4942 = vmatmul.f32.gmra.mxu0 %v4599
    %v4943 = vpop.f32.mrf.mxu0
    %v4944 = vadd.f32 0.0, %v4943
    %4945 = vmatmul.f32.gmra.mxu0 %v4602
    %v4946 = vpop.f32.mrf.mxu0
    %v4947 = vadd.f32 0.0, %v4946
    %4948 = vmatmul.f32.gmra.mxu0 %v4605
    %v4949 = vpop.f32.mrf.mxu0
    %v4950 = vadd.f32 0.0, %v4949
    %4951 = vmatmul.f32.gmra.mxu0 %v4608
    %v4952 = vpop.f32.mrf.mxu0
    %v4953 = vadd.f32 0.0, %v4952
    %4954 = vmatmul.f32.gmra.mxu0 %v4611
    %v4955 = vpop.f32.mrf.mxu0
    %v4956 = vadd.f32 0.0, %v4955
    %4957 = vmatmul.f32.gmra.mxu0 %v4614
    %v4958 = vpop.f32.mrf.mxu0
    %v4959 = vadd.f32 0.0, %v4958
    %4960 = vmatmul.f32.gmra.mxu0 %v4617
    %v4961 = vpop.f32.mrf.mxu0
    %v4962 = vadd.f32 0.0, %v4961
    %4963 = vmatmul.f32.gmra.mxu0 %v4620
    %v4964 = vpop.f32.mrf.mxu0
    %v4965 = vadd.f32 0.0, %v4964
    %4966 = vmatmul.f32.gmra.mxu0 %v4623
    %v4967 = vpop.f32.mrf.mxu0
    %v4968 = vadd.f32 0.0, %v4967
    %4969 = vmatmul.f32.gmra.mxu0 %v4626
    %v4970 = vpop.f32.mrf.mxu0
    %v4971 = vadd.f32 0.0, %v4970
    %4972 = vmatmul.f32.gmra.mxu0 %v4629
    %v4973 = vpop.f32.mrf.mxu0
    %v4974 = vadd.f32 0.0, %v4973
    %4975 = vmatmul.f32.gmra.mxu0 %v4632
    %v4976 = vpop.f32.mrf.mxu0
    %v4977 = vadd.f32 0.0, %v4976
    %4978 = vmatmul.f32.gmra.mxu0 %v4635
    %v4979 = vpop.f32.mrf.mxu0
    %v4980 = vadd.f32 0.0, %v4979
    %4981 = vmatmul.f32.gmra.mxu0 %v4638
    %v4982 = vpop.f32.mrf.mxu0
    %v4983 = vadd.f32 0.0, %v4982
    %4984 = vmatmul.f32.gmra.mxu0 %v4641
    %v4985 = vpop.f32.mrf.mxu0
    %v4986 = vadd.f32 0.0, %v4985
    %4987 = vmatmul.f32.gmra.mxu0 %v4644
    %v4988 = vpop.f32.mrf.mxu0
    %v4989 = vadd.f32 0.0, %v4988
    %4990 = vmatmul.f32.gmra.mxu0 %v4647
    %v4991 = vpop.f32.mrf.mxu0
    %v4992 = vadd.f32 0.0, %v4991
    %4993 = vmatmul.f32.gmra.mxu0 %v4650
    %v4994 = vpop.f32.mrf.mxu0
    %v4995 = vadd.f32 0.0, %v4994
    %4996 = vmatmul.f32.gmra.mxu0 %v4653
    %v4997 = vpop.f32.mrf.mxu0
    %v4998 = vadd.f32 0.0, %v4997
    %4999 = vmatmul.f32.gmra.mxu0 %v4656
    %v5000 = vpop.f32.mrf.mxu0
    %v5001 = vadd.f32 0.0, %v5000
    %5002 = vmatmul.f32.gmra.mxu0 %v4659
    %v5003 = vpop.f32.mrf.mxu0
    %v5004 = vadd.f32 0.0, %v5003
    %5005 = vmatmul.f32.gmra.mxu0 %v4662
    %v5006 = vpop.f32.mrf.mxu0
    %v5007 = vadd.f32 0.0, %v5006
    %5008 = vmatmul.f32.gmra.mxu0 %v4665
    %v5009 = vpop.f32.mrf.mxu0
    %v5010 = vadd.f32 0.0, %v5009
    %5011 = vmatmul.f32.gmra.mxu0 %v4668
    %v5012 = vpop.f32.mrf.mxu0
    %v5013 = vadd.f32 0.0, %v5012
    %5014 = vmatmul.f32.gmra.mxu0 %v4671
    %v5015 = vpop.f32.mrf.mxu0
    %v5016 = vadd.f32 0.0, %v5015
    %5017 = vmatmul.f32.gmra.mxu0 %v4674
    %v5018 = vpop.f32.mrf.mxu0
    %v5019 = vadd.f32 0.0, %v5018
    %5020 = vmatmul.f32.gmra.mxu0 %v4677
    %v5021 = vpop.f32.mrf.mxu0
    %v5022 = vadd.f32 0.0, %v5021
    %5023 = vmatmul.f32.gmra.mxu0 %v4680
    %v5024 = vpop.f32.mrf.mxu0
    %v5025 = vadd.f32 0.0, %v5024
    %5026 = vmatmul.f32.gmra.mxu0 %v4683
    %v5027 = vpop.f32.mrf.mxu0
    %v5028 = vadd.f32 0.0, %v5027
    %5029 = vmatmul.f32.gmra.mxu0 %v4686
    %v5030 = vpop.f32.mrf.mxu0
    %v5031 = vadd.f32 0.0, %v5030
    %5032 = vmatmul.f32.gmra.mxu0 %v4689
    %v5033 = vpop.f32.mrf.mxu0
    %v5034 = vadd.f32 0.0, %v5033
    %5035 = vmatmul.f32.gmra.mxu0 %v4692
    %v5036 = vpop.f32.mrf.mxu0
    %v5037 = vadd.f32 0.0, %v5036
    %5038 = vmatmul.f32.gmra.mxu0 %v4695
    %v5039 = vpop.f32.mrf.mxu0
    %v5040 = vadd.f32 0.0, %v5039
    %5041 = vmatmul.f32.gmra.mxu0 %v4698
    %v5042 = vpop.f32.mrf.mxu0
    %v5043 = vadd.f32 0.0, %v5042
    %5044 = vmatmul.f32.gmra.mxu0 %v4701
    %v5045 = vpop.f32.mrf.mxu0
    %v5046 = vadd.f32 0.0, %v5045
    %5047 = vdwg.mxu0
    %v5048 = vlaneseq
    %v5049 = vshrl.u32 %v5048, 7
    %v5050 = vadd.s32 %v5049, 8
    %v5051 = vadd.s32 %v5049, 16
    %vm5052 = vcmp.ge.s32.totalorder %v5049, 1
    %vm5053 = vcmp.ge.s32.totalorder %v5050, 1
    %vm5054 = vcmp.ge.s32.totalorder %v5051, 1
    %vm5055 = vcmp.le.s32.totalorder %v5049, 16
    %vm5056 = vcmp.le.s32.totalorder %v5050, 16
    %vm5057 = vcmp.le.s32.totalorder %v5051, 16
    %vm5058 = vmand %vm5052, %vm5055
    %vm5059 = vmand %vm5053, %vm5056
    %vm5060 = vmand %vm5054, %vm5057
    %v5061 = vsel %vm5058, %v4734, 0.0
    %v5062 = vsel %vm5059, %v4737, 0.0
    %v5063 = vsel %vm5060, %v4740, 0.0
    %v5064 = vsel %vm5058, %v4743, 0.0
    %v5065 = vsel %vm5059, %v4746, 0.0
    %v5066 = vsel %vm5060, %v4749, 0.0
    %v5067 = vsel %vm5058, %v4752, 0.0
    %v5068 = vsel %vm5059, %v4755, 0.0
    %v5069 = vsel %vm5060, %v4758, 0.0
    %v5070 = vsel %vm5058, %v4761, 0.0
    %v5071 = vsel %vm5059, %v4764, 0.0
    %v5072 = vsel %vm5060, %v4767, 0.0
    %v5073 = vsel %vm5058, %v4770, 0.0
    %v5074 = vsel %vm5059, %v4773, 0.0
    %v5075 = vsel %vm5060, %v4776, 0.0
    %v5076 = vsel %vm5058, %v4779, 0.0
    %v5077 = vsel %vm5059, %v4782, 0.0
    %v5078 = vsel %vm5060, %v4785, 0.0
    %v5079 = vsel %vm5058, %v4788, 0.0
    %v5080 = vsel %vm5059, %v4791, 0.0
    %v5081 = vsel %vm5060, %v4794, 0.0
    %v5082 = vsel %vm5058, %v4797, 0.0
    %v5083 = vsel %vm5059, %v4800, 0.0
    %v5084 = vsel %vm5060, %v4803, 0.0
    %v5085 = vsel %vm5058, %v4806, 0.0
    %v5086 = vsel %vm5059, %v4809, 0.0
    %v5087 = vsel %vm5060, %v4812, 0.0
    %v5088 = vsel %vm5058, %v4815, 0.0
    %v5089 = vsel %vm5059, %v4818, 0.0
    %v5090 = vsel %vm5060, %v4821, 0.0
    %v5091 = vsel %vm5058, %v4824, 0.0
    %v5092 = vsel %vm5059, %v4827, 0.0
    %v5093 = vsel %vm5060, %v4830, 0.0
    %v5094 = vsel %vm5058, %v4833, 0.0
    %v5095 = vsel %vm5059, %v4836, 0.0
    %v5096 = vsel %vm5060, %v4839, 0.0
    %v5097 = vsel %vm5058, %v4842, 0.0
    %v5098 = vsel %vm5059, %v4845, 0.0
    %v5099 = vsel %vm5060, %v4848, 0.0
    %v5100 = vsel %vm5058, %v4851, 0.0
    %v5101 = vsel %vm5059, %v4854, 0.0
    %v5102 = vsel %vm5060, %v4857, 0.0
    %v5103 = vsel %vm5058, %v4860, 0.0
    %v5104 = vsel %vm5059, %v4863, 0.0
    %v5105 = vsel %vm5060, %v4866, 0.0
    %v5106 = vsel %vm5058, %v4869, 0.0
    %v5107 = vsel %vm5059, %v4872, 0.0
    %v5108 = vsel %vm5060, %v4875, 0.0
    %v5109 = vsel %vm5058, %v4896, 0.0
    %v5110 = vsel %vm5059, %v4899, 0.0
    %v5111 = vsel %vm5060, %v4902, 0.0
    %v5112 = vsel %vm5058, %v4905, 0.0
    %v5113 = vsel %vm5059, %v4908, 0.0
    %v5114 = vsel %vm5060, %v4911, 0.0
    %v5115 = vsel %vm5058, %v4914, 0.0
    %v5116 = vsel %vm5059, %v4917, 0.0
    %v5117 = vsel %vm5060, %v4920, 0.0
    %v5118 = vsel %vm5058, %v4923, 0.0
    %v5119 = vsel %vm5059, %v4926, 0.0
    %v5120 = vsel %vm5060, %v4929, 0.0
    %v5121 = vsel %vm5058, %v4932, 0.0
    %v5122 = vsel %vm5059, %v4935, 0.0
    %v5123 = vsel %vm5060, %v4938, 0.0
    %v5124 = vsel %vm5058, %v4941, 0.0
    %v5125 = vsel %vm5059, %v4944, 0.0
    %v5126 = vsel %vm5060, %v4947, 0.0
    %v5127 = vsel %vm5058, %v4950, 0.0
    %v5128 = vsel %vm5059, %v4953, 0.0
    %v5129 = vsel %vm5060, %v4956, 0.0
    %v5130 = vsel %vm5058, %v4959, 0.0
    %v5131 = vsel %vm5059, %v4962, 0.0
    %v5132 = vsel %vm5060, %v4965, 0.0
    %v5133 = vsel %vm5058, %v4968, 0.0
    %v5134 = vsel %vm5059, %v4971, 0.0
    %v5135 = vsel %vm5060, %v4974, 0.0
    %v5136 = vsel %vm5058, %v4977, 0.0
    %v5137 = vsel %vm5059, %v4980, 0.0
    %v5138 = vsel %vm5060, %v4983, 0.0
    %v5139 = vsel %vm5058, %v4986, 0.0
    %v5140 = vsel %vm5059, %v4989, 0.0
    %v5141 = vsel %vm5060, %v4992, 0.0
    %v5142 = vsel %vm5058, %v4995, 0.0
    %v5143 = vsel %vm5059, %v4998, 0.0
    %v5144 = vsel %vm5060, %v5001, 0.0
    %v5145 = vsel %vm5058, %v5004, 0.0
    %v5146 = vsel %vm5059, %v5007, 0.0
    %v5147 = vsel %vm5060, %v5010, 0.0
    %v5148 = vsel %vm5058, %v5013, 0.0
    %v5149 = vsel %vm5059, %v5016, 0.0
    %v5150 = vsel %vm5060, %v5019, 0.0
    %v5151 = vsel %vm5058, %v5022, 0.0
    %v5152 = vsel %vm5059, %v5025, 0.0
    %v5153 = vsel %vm5060, %v5028, 0.0
    %v5154 = vsel %vm5058, %v5031, 0.0
    %v5155 = vsel %vm5059, %v5034, 0.0
    %v5156 = vsel %vm5060, %v5037, 0.0
    %v5157 = vsel %vm3610, %v5061, 0.0
    %v5158 = vadd.f32 %v5157, 0.0
    %v5159 = vsel %vm3610, %v5062, 0.0
    %v5160 = vadd.f32 %v5158, %v5159
    %v5161 = vsel %vm3610, %v5063, 0.0
    %v5162 = vadd.f32 %v5160, %v5161
    %v5163 = vsel %vm3610, %v5064, 0.0
    %v5164 = vadd.f32 %v5162, %v5163
    %v5165 = vsel %vm3610, %v5065, 0.0
    %v5166 = vadd.f32 %v5164, %v5165
    %v5167 = vsel %vm3610, %v5066, 0.0
    %v5168 = vadd.f32 %v5166, %v5167
    %v5169 = vsel %vm3610, %v5067, 0.0
    %v5170 = vadd.f32 %v5168, %v5169
    %v5171 = vsel %vm3610, %v5068, 0.0
    %v5172 = vadd.f32 %v5170, %v5171
    %v5173 = vsel %vm3610, %v5069, 0.0
    %v5174 = vadd.f32 %v5172, %v5173
    %v5175 = vsel %vm3610, %v5070, 0.0
    %v5176 = vadd.f32 %v5174, %v5175
    %v5177 = vsel %vm3610, %v5071, 0.0
    %v5178 = vadd.f32 %v5176, %v5177
    %v5179 = vsel %vm3610, %v5072, 0.0
    %v5180 = vadd.f32 %v5178, %v5179
    %v5181 = vsel %vm3610, %v5073, 0.0
    %v5182 = vadd.f32 %v5180, %v5181
    %v5183 = vsel %vm3610, %v5074, 0.0
    %v5184 = vadd.f32 %v5182, %v5183
    %v5185 = vsel %vm3610, %v5075, 0.0
    %v5186 = vadd.f32 %v5184, %v5185
    %v5187 = vsel %vm3610, %v5076, 0.0
    %v5188 = vadd.f32 %v5186, %v5187
    %v5189 = vsel %vm3610, %v5077, 0.0
    %v5190 = vadd.f32 %v5188, %v5189
    %v5191 = vsel %vm3610, %v5078, 0.0
    %v5192 = vadd.f32 %v5190, %v5191
    %v5193 = vsel %vm3610, %v5079, 0.0
    %v5194 = vadd.f32 %v5192, %v5193
    %v5195 = vsel %vm3610, %v5080, 0.0
    %v5196 = vadd.f32 %v5194, %v5195
    %v5197 = vsel %vm3610, %v5081, 0.0
    %v5198 = vadd.f32 %v5196, %v5197
    %v5199 = vsel %vm3610, %v5082, 0.0
    %v5200 = vadd.f32 %v5198, %v5199
    %v5201 = vsel %vm3610, %v5083, 0.0
    %v5202 = vadd.f32 %v5200, %v5201
    %v5203 = vsel %vm3610, %v5084, 0.0
    %v5204 = vadd.f32 %v5202, %v5203
    %v5205 = vsel %vm3610, %v5085, 0.0
    %v5206 = vadd.f32 %v5204, %v5205
    %v5207 = vsel %vm3610, %v5086, 0.0
    %v5208 = vadd.f32 %v5206, %v5207
    %v5209 = vsel %vm3610, %v5087, 0.0
    %v5210 = vadd.f32 %v5208, %v5209
    %v5211 = vsel %vm3610, %v5088, 0.0
    %v5212 = vadd.f32 %v5210, %v5211
    %v5213 = vsel %vm3610, %v5089, 0.0
    %v5214 = vadd.f32 %v5212, %v5213
    %v5215 = vsel %vm3610, %v5090, 0.0
    %v5216 = vadd.f32 %v5214, %v5215
    %v5217 = vsel %vm3610, %v5091, 0.0
    %v5218 = vadd.f32 %v5216, %v5217
    %v5219 = vsel %vm3610, %v5092, 0.0
    %v5220 = vadd.f32 %v5218, %v5219
    %v5221 = vsel %vm3610, %v5093, 0.0
    %v5222 = vadd.f32 %v5220, %v5221
    %v5223 = vsel %vm3610, %v5094, 0.0
    %v5224 = vadd.f32 %v5222, %v5223
    %v5225 = vsel %vm3610, %v5095, 0.0
    %v5226 = vadd.f32 %v5224, %v5225
    %v5227 = vsel %vm3610, %v5096, 0.0
    %v5228 = vadd.f32 %v5226, %v5227
    %v5229 = vsel %vm3610, %v5097, 0.0
    %v5230 = vadd.f32 %v5228, %v5229
    %v5231 = vsel %vm3610, %v5098, 0.0
    %v5232 = vadd.f32 %v5230, %v5231
    %v5233 = vsel %vm3610, %v5099, 0.0
    %v5234 = vadd.f32 %v5232, %v5233
    %v5235 = vsel %vm3610, %v5100, 0.0
    %v5236 = vadd.f32 %v5234, %v5235
    %v5237 = vsel %vm3610, %v5101, 0.0
    %v5238 = vadd.f32 %v5236, %v5237
    %v5239 = vsel %vm3610, %v5102, 0.0
    %v5240 = vadd.f32 %v5238, %v5239
    %v5241 = vsel %vm3610, %v5103, 0.0
    %v5242 = vadd.f32 %v5240, %v5241
    %v5243 = vsel %vm3610, %v5104, 0.0
    %v5244 = vadd.f32 %v5242, %v5243
    %v5245 = vsel %vm3610, %v5105, 0.0
    %v5246 = vadd.f32 %v5244, %v5245
    %v5247 = vsel %vm3610, %v5106, 0.0
    %v5248 = vadd.f32 %v5246, %v5247
    %v5249 = vsel %vm3610, %v5107, 0.0
    %v5250 = vadd.f32 %v5248, %v5249
    %v5251 = vsel %vm3610, %v5108, 0.0
    %v5252 = vadd.f32 %v5250, %v5251
    %v5253 = vadd.f32 %v5252, 0.0
    %v5254 = vadd.f32 %v5253, 0.0
    %v5255 = vadd.f32 %v5254, 0.0
    %v5256 = vadd.f32 %v5255, 0.0
    %v5257 = vadd.f32 %v5256, 0.0
    %v5258 = vadd.f32 %v5257, 0.0
    %v5259 = vsel %vm3610, %v5109, 0.0
    %v5260 = vadd.f32 %v5258, %v5259
    %v5261 = vsel %vm3610, %v5110, 0.0
    %v5262 = vadd.f32 %v5260, %v5261
    %v5263 = vsel %vm3610, %v5111, 0.0
    %v5264 = vadd.f32 %v5262, %v5263
    %v5265 = vsel %vm3610, %v5112, 0.0
    %v5266 = vadd.f32 %v5264, %v5265
    %v5267 = vsel %vm3610, %v5113, 0.0
    %v5268 = vadd.f32 %v5266, %v5267
    %v5269 = vsel %vm3610, %v5114, 0.0
    %v5270 = vadd.f32 %v5268, %v5269
    %v5271 = vsel %vm3610, %v5115, 0.0
    %v5272 = vadd.f32 %v5270, %v5271
    %v5273 = vsel %vm3610, %v5116, 0.0
    %v5274 = vadd.f32 %v5272, %v5273
    %v5275 = vsel %vm3610, %v5117, 0.0
    %v5276 = vadd.f32 %v5274, %v5275
    %v5277 = vsel %vm3610, %v5118, 0.0
    %v5278 = vadd.f32 %v5276, %v5277
    %v5279 = vsel %vm3610, %v5119, 0.0
    %v5280 = vadd.f32 %v5278, %v5279
    %v5281 = vsel %vm3610, %v5120, 0.0
    %v5282 = vadd.f32 %v5280, %v5281
    %v5283 = vsel %vm3610, %v5121, 0.0
    %v5284 = vadd.f32 %v5282, %v5283
    %v5285 = vsel %vm3610, %v5122, 0.0
    %v5286 = vadd.f32 %v5284, %v5285
    %v5287 = vsel %vm3610, %v5123, 0.0
    %v5288 = vadd.f32 %v5286, %v5287
    %v5289 = vsel %vm3610, %v5124, 0.0
    %v5290 = vadd.f32 %v5288, %v5289
    %v5291 = vsel %vm3610, %v5125, 0.0
    %v5292 = vadd.f32 %v5290, %v5291
    %v5293 = vsel %vm3610, %v5126, 0.0
    %v5294 = vadd.f32 %v5292, %v5293
    %v5295 = vsel %vm3610, %v5127, 0.0
    %v5296 = vadd.f32 %v5294, %v5295
    %v5297 = vsel %vm3610, %v5128, 0.0
    %v5298 = vadd.f32 %v5296, %v5297
    %v5299 = vsel %vm3610, %v5129, 0.0
    %v5300 = vadd.f32 %v5298, %v5299
    %v5301 = vsel %vm3610, %v5130, 0.0
    %v5302 = vadd.f32 %v5300, %v5301
    %v5303 = vsel %vm3610, %v5131, 0.0
    %v5304 = vadd.f32 %v5302, %v5303
    %v5305 = vsel %vm3610, %v5132, 0.0
    %v5306 = vadd.f32 %v5304, %v5305
    %v5307 = vsel %vm3610, %v5133, 0.0
    %v5308 = vadd.f32 %v5306, %v5307
    %v5309 = vsel %vm3610, %v5134, 0.0
    %v5310 = vadd.f32 %v5308, %v5309
    %v5311 = vsel %vm3610, %v5135, 0.0
    %v5312 = vadd.f32 %v5310, %v5311
    %v5313 = vsel %vm3610, %v5136, 0.0
    %v5314 = vadd.f32 %v5312, %v5313
    %v5315 = vsel %vm3610, %v5137, 0.0
    %v5316 = vadd.f32 %v5314, %v5315
    %v5317 = vsel %vm3610, %v5138, 0.0
    %v5318 = vadd.f32 %v5316, %v5317
    %v5319 = vsel %vm3610, %v5139, 0.0
    %v5320 = vadd.f32 %v5318, %v5319
    %v5321 = vsel %vm3610, %v5140, 0.0
    %v5322 = vadd.f32 %v5320, %v5321
    %v5323 = vsel %vm3610, %v5141, 0.0
    %v5324 = vadd.f32 %v5322, %v5323
    %v5325 = vsel %vm3610, %v5142, 0.0
    %v5326 = vadd.f32 %v5324, %v5325
    %v5327 = vsel %vm3610, %v5143, 0.0
    %v5328 = vadd.f32 %v5326, %v5327
    %v5329 = vsel %vm3610, %v5144, 0.0
    %v5330 = vadd.f32 %v5328, %v5329
    %v5331 = vsel %vm3610, %v5145, 0.0
    %v5332 = vadd.f32 %v5330, %v5331
    %v5333 = vsel %vm3610, %v5146, 0.0
    %v5334 = vadd.f32 %v5332, %v5333
    %v5335 = vsel %vm3610, %v5147, 0.0
    %v5336 = vadd.f32 %v5334, %v5335
    %v5337 = vsel %vm3610, %v5148, 0.0
    %v5338 = vadd.f32 %v5336, %v5337
    %v5339 = vsel %vm3610, %v5149, 0.0
    %v5340 = vadd.f32 %v5338, %v5339
    %v5341 = vsel %vm3610, %v5150, 0.0
    %v5342 = vadd.f32 %v5340, %v5341
    %v5343 = vsel %vm3610, %v5151, 0.0
    %v5344 = vadd.f32 %v5342, %v5343
    %v5345 = vsel %vm3610, %v5152, 0.0
    %v5346 = vadd.f32 %v5344, %v5345
    %v5347 = vsel %vm3610, %v5153, 0.0
    %v5348 = vadd.f32 %v5346, %v5347
    %v5349 = vsel %vm3610, %v5154, 0.0
    %v5350 = vadd.f32 %v5348, %v5349
    %v5351 = vsel %vm3610, %v5155, 0.0
    %v5352 = vadd.f32 %v5350, %v5351
    %v5353 = vsel %vm3610, %v5156, 0.0
    %v5354 = vadd.f32 %v5352, %v5353
    %v5355 = vadd.f32 %v5354, 0.0
    %v5356 = vadd.f32 %v5355, 0.0
    %v5357 = vadd.f32 %v5356, 0.0
    %v5358 = vrot.slane %v5357, 4
    %v5359 = vadd.f32 %v5357, %v5358
    %v5360 = vrot.slane %v5359, 2
    %v5361 = vadd.f32 %v5359, %v5360
    %v5362 = vrot.slane %v5361, 1
    %v5363 = vadd.f32 %v5361, %v5362
    %v5364 = vmul.f32 %v4725, 0.0
    %v5365 = vmul.f32 %v4728, 0.0
    %v5366 = vmul.f32 %v4731, 0.0
    %v5367 = vmul.f32 %v5061, %v4734
    %v5368 = vmul.f32 %v5062, %v4737
    %v5369 = vmul.f32 %v5063, %v4740
    %v5370 = vmul.f32 %v5064, %v4743
    %v5371 = vmul.f32 %v5065, %v4746
    %v5372 = vmul.f32 %v5066, %v4749
    %v5373 = vmul.f32 %v5067, %v4752
    %v5374 = vmul.f32 %v5068, %v4755
    %v5375 = vmul.f32 %v5069, %v4758
    %v5376 = vmul.f32 %v5070, %v4761
    %v5377 = vmul.f32 %v5071, %v4764
    %v5378 = vmul.f32 %v5072, %v4767
    %v5379 = vmul.f32 %v5073, %v4770
    %v5380 = vmul.f32 %v5074, %v4773
    %v5381 = vmul.f32 %v5075, %v4776
    %v5382 = vmul.f32 %v5076, %v4779
    %v5383 = vmul.f32 %v5077, %v4782
    %v5384 = vmul.f32 %v5078, %v4785
    %v5385 = vmul.f32 %v5079, %v4788
    %v5386 = vmul.f32 %v5080, %v4791
    %v5387 = vmul.f32 %v5081, %v4794
    %v5388 = vmul.f32 %v5082, %v4797
    %v5389 = vmul.f32 %v5083, %v4800
    %v5390 = vmul.f32 %v5084, %v4803
    %v5391 = vmul.f32 %v5085, %v4806
    %v5392 = vmul.f32 %v5086, %v4809
    %v5393 = vmul.f32 %v5087, %v4812
    %v5394 = vmul.f32 %v5088, %v4815
    %v5395 = vmul.f32 %v5089, %v4818
    %v5396 = vmul.f32 %v5090, %v4821
    %v5397 = vmul.f32 %v5091, %v4824
    %v5398 = vmul.f32 %v5092, %v4827
    %v5399 = vmul.f32 %v5093, %v4830
    %v5400 = vmul.f32 %v5094, %v4833
    %v5401 = vmul.f32 %v5095, %v4836
    %v5402 = vmul.f32 %v5096, %v4839
    %v5403 = vmul.f32 %v5097, %v4842
    %v5404 = vmul.f32 %v5098, %v4845
    %v5405 = vmul.f32 %v5099, %v4848
    %v5406 = vmul.f32 %v5100, %v4851
    %v5407 = vmul.f32 %v5101, %v4854
    %v5408 = vmul.f32 %v5102, %v4857
    %v5409 = vmul.f32 %v5103, %v4860
    %v5410 = vmul.f32 %v5104, %v4863
    %v5411 = vmul.f32 %v5105, %v4866
    %v5412 = vmul.f32 %v5106, %v4869
    %v5413 = vmul.f32 %v5107, %v4872
    %v5414 = vmul.f32 %v5108, %v4875
    %v5415 = vmul.f32 %v4878, 0.0
    %v5416 = vmul.f32 %v4881, 0.0
    %v5417 = vmul.f32 %v4884, 0.0
    %v5418 = vmul.f32 %v4887, 0.0
    %v5419 = vmul.f32 %v4890, 0.0
    %v5420 = vmul.f32 %v4893, 0.0
    %v5421 = vmul.f32 %v5109, %v4896
    %v5422 = vmul.f32 %v5110, %v4899
    %v5423 = vmul.f32 %v5111, %v4902
    %v5424 = vmul.f32 %v5112, %v4905
    %v5425 = vmul.f32 %v5113, %v4908
    %v5426 = vmul.f32 %v5114, %v4911
    %v5427 = vmul.f32 %v5115, %v4914
    %v5428 = vmul.f32 %v5116, %v4917
    %v5429 = vmul.f32 %v5117, %v4920
    %v5430 = vmul.f32 %v5118, %v4923
    %v5431 = vmul.f32 %v5119, %v4926
    %v5432 = vmul.f32 %v5120, %v4929
    %v5433 = vmul.f32 %v5121, %v4932
    %v5434 = vmul.f32 %v5122, %v4935
    %v5435 = vmul.f32 %v5123, %v4938
    %v5436 = vmul.f32 %v5124, %v4941
    %v5437 = vmul.f32 %v5125, %v4944
    %v5438 = vmul.f32 %v5126, %v4947
    %v5439 = vmul.f32 %v5127, %v4950
    %v5440 = vmul.f32 %v5128, %v4953
    %v5441 = vmul.f32 %v5129, %v4956
    %v5442 = vmul.f32 %v5130, %v4959
    %v5443 = vmul.f32 %v5131, %v4962
    %v5444 = vmul.f32 %v5132, %v4965
    %v5445 = vmul.f32 %v5133, %v4968
    %v5446 = vmul.f32 %v5134, %v4971
    %v5447 = vmul.f32 %v5135, %v4974
    %v5448 = vmul.f32 %v5136, %v4977
    %v5449 = vmul.f32 %v5137, %v4980
    %v5450 = vmul.f32 %v5138, %v4983
    %v5451 = vmul.f32 %v5139, %v4986
    %v5452 = vmul.f32 %v5140, %v4989
    %v5453 = vmul.f32 %v5141, %v4992
    %v5454 = vmul.f32 %v5142, %v4995
    %v5455 = vmul.f32 %v5143, %v4998
    %v5456 = vmul.f32 %v5144, %v5001
    %v5457 = vmul.f32 %v5145, %v5004
    %v5458 = vmul.f32 %v5146, %v5007
    %v5459 = vmul.f32 %v5147, %v5010
    %v5460 = vmul.f32 %v5148, %v5013
    %v5461 = vmul.f32 %v5149, %v5016
    %v5462 = vmul.f32 %v5150, %v5019
    %v5463 = vmul.f32 %v5151, %v5022
    %v5464 = vmul.f32 %v5152, %v5025
    %v5465 = vmul.f32 %v5153, %v5028
    %v5466 = vmul.f32 %v5154, %v5031
    %v5467 = vmul.f32 %v5155, %v5034
    %v5468 = vmul.f32 %v5156, %v5037
    %v5469 = vmul.f32 %v5040, 0.0
    %v5470 = vmul.f32 %v5043, 0.0
    %v5471 = vmul.f32 %v5046, 0.0
    %v5472 = vsel %vm3610, %v5364, 0.0
    %v5473 = vsel %vm3610, %v5365, 0.0
    %v5474 = vadd.f32 %v5472, %v5473
    %v5475 = vsel %vm3610, %v5366, 0.0
    %v5476 = vadd.f32 %v5474, %v5475
    %v5477 = vsel %vm3610, %v5367, 0.0
    %v5478 = vadd.f32 %v5476, %v5477
    %v5479 = vsel %vm3610, %v5368, 0.0
    %v5480 = vadd.f32 %v5478, %v5479
    %v5481 = vsel %vm3610, %v5369, 0.0
    %v5482 = vadd.f32 %v5480, %v5481
    %v5483 = vsel %vm3610, %v5370, 0.0
    %v5484 = vadd.f32 %v5482, %v5483
    %v5485 = vsel %vm3610, %v5371, 0.0
    %v5486 = vadd.f32 %v5484, %v5485
    %v5487 = vsel %vm3610, %v5372, 0.0
    %v5488 = vadd.f32 %v5486, %v5487
    %v5489 = vsel %vm3610, %v5373, 0.0
    %v5490 = vadd.f32 %v5488, %v5489
    %v5491 = vsel %vm3610, %v5374, 0.0
    %v5492 = vadd.f32 %v5490, %v5491
    %v5493 = vsel %vm3610, %v5375, 0.0
    %v5494 = vadd.f32 %v5492, %v5493
    %v5495 = vsel %vm3610, %v5376, 0.0
    %v5496 = vadd.f32 %v5494, %v5495
    %v5497 = vsel %vm3610, %v5377, 0.0
    %v5498 = vadd.f32 %v5496, %v5497
    %v5499 = vsel %vm3610, %v5378, 0.0
    %v5500 = vadd.f32 %v5498, %v5499
    %v5501 = vsel %vm3610, %v5379, 0.0
    %v5502 = vadd.f32 %v5500, %v5501
    %v5503 = vsel %vm3610, %v5380, 0.0
    %v5504 = vadd.f32 %v5502, %v5503
    %v5505 = vsel %vm3610, %v5381, 0.0
    %v5506 = vadd.f32 %v5504, %v5505
    %v5507 = vsel %vm3610, %v5382, 0.0
    %v5508 = vadd.f32 %v5506, %v5507
    %v5509 = vsel %vm3610, %v5383, 0.0
    %v5510 = vadd.f32 %v5508, %v5509
    %v5511 = vsel %vm3610, %v5384, 0.0
    %v5512 = vadd.f32 %v5510, %v5511
    %v5513 = vsel %vm3610, %v5385, 0.0
    %v5514 = vadd.f32 %v5512, %v5513
    %v5515 = vsel %vm3610, %v5386, 0.0
    %v5516 = vadd.f32 %v5514, %v5515
    %v5517 = vsel %vm3610, %v5387, 0.0
    %v5518 = vadd.f32 %v5516, %v5517
    %v5519 = vsel %vm3610, %v5388, 0.0
    %v5520 = vadd.f32 %v5518, %v5519
    %v5521 = vsel %vm3610, %v5389, 0.0
    %v5522 = vadd.f32 %v5520, %v5521
    %v5523 = vsel %vm3610, %v5390, 0.0
    %v5524 = vadd.f32 %v5522, %v5523
    %v5525 = vsel %vm3610, %v5391, 0.0
    %v5526 = vadd.f32 %v5524, %v5525
    %v5527 = vsel %vm3610, %v5392, 0.0
    %v5528 = vadd.f32 %v5526, %v5527
    %v5529 = vsel %vm3610, %v5393, 0.0
    %v5530 = vadd.f32 %v5528, %v5529
    %v5531 = vsel %vm3610, %v5394, 0.0
    %v5532 = vadd.f32 %v5530, %v5531
    %v5533 = vsel %vm3610, %v5395, 0.0
    %v5534 = vadd.f32 %v5532, %v5533
    %v5535 = vsel %vm3610, %v5396, 0.0
    %v5536 = vadd.f32 %v5534, %v5535
    %v5537 = vsel %vm3610, %v5397, 0.0
    %v5538 = vadd.f32 %v5536, %v5537
    %v5539 = vsel %vm3610, %v5398, 0.0
    %v5540 = vadd.f32 %v5538, %v5539
    %v5541 = vsel %vm3610, %v5399, 0.0
    %v5542 = vadd.f32 %v5540, %v5541
    %v5543 = vsel %vm3610, %v5400, 0.0
    %v5544 = vadd.f32 %v5542, %v5543
    %v5545 = vsel %vm3610, %v5401, 0.0
    %v5546 = vadd.f32 %v5544, %v5545
    %v5547 = vsel %vm3610, %v5402, 0.0
    %v5548 = vadd.f32 %v5546, %v5547
    %v5549 = vsel %vm3610, %v5403, 0.0
    %v5550 = vadd.f32 %v5548, %v5549
    %v5551 = vsel %vm3610, %v5404, 0.0
    %v5552 = vadd.f32 %v5550, %v5551
    %v5553 = vsel %vm3610, %v5405, 0.0
    %v5554 = vadd.f32 %v5552, %v5553
    %v5555 = vsel %vm3610, %v5406, 0.0
    %v5556 = vadd.f32 %v5554, %v5555
    %v5557 = vsel %vm3610, %v5407, 0.0
    %v5558 = vadd.f32 %v5556, %v5557
    %v5559 = vsel %vm3610, %v5408, 0.0
    %v5560 = vadd.f32 %v5558, %v5559
    %v5561 = vsel %vm3610, %v5409, 0.0
    %v5562 = vadd.f32 %v5560, %v5561
    %v5563 = vsel %vm3610, %v5410, 0.0
    %v5564 = vadd.f32 %v5562, %v5563
    %v5565 = vsel %vm3610, %v5411, 0.0
    %v5566 = vadd.f32 %v5564, %v5565
    %v5567 = vsel %vm3610, %v5412, 0.0
    %v5568 = vadd.f32 %v5566, %v5567
    %v5569 = vsel %vm3610, %v5413, 0.0
    %v5570 = vadd.f32 %v5568, %v5569
    %v5571 = vsel %vm3610, %v5414, 0.0
    %v5572 = vadd.f32 %v5570, %v5571
    %v5573 = vsel %vm3610, %v5415, 0.0
    %v5574 = vadd.f32 %v5572, %v5573
    %v5575 = vsel %vm3610, %v5416, 0.0
    %v5576 = vadd.f32 %v5574, %v5575
    %v5577 = vsel %vm3610, %v5417, 0.0
    %v5578 = vadd.f32 %v5576, %v5577
    %v5579 = vsel %vm3610, %v5418, 0.0
    %v5580 = vadd.f32 %v5578, %v5579
    %v5581 = vsel %vm3610, %v5419, 0.0
    %v5582 = vadd.f32 %v5580, %v5581
    %v5583 = vsel %vm3610, %v5420, 0.0
    %v5584 = vadd.f32 %v5582, %v5583
    %v5585 = vsel %vm3610, %v5421, 0.0
    %v5586 = vadd.f32 %v5584, %v5585
    %v5587 = vsel %vm3610, %v5422, 0.0
    %v5588 = vadd.f32 %v5586, %v5587
    %v5589 = vsel %vm3610, %v5423, 0.0
    %v5590 = vadd.f32 %v5588, %v5589
    %v5591 = vsel %vm3610, %v5424, 0.0
    %v5592 = vadd.f32 %v5590, %v5591
    %v5593 = vsel %vm3610, %v5425, 0.0
    %v5594 = vadd.f32 %v5592, %v5593
    %v5595 = vsel %vm3610, %v5426, 0.0
    %v5596 = vadd.f32 %v5594, %v5595
    %v5597 = vsel %vm3610, %v5427, 0.0
    %v5598 = vadd.f32 %v5596, %v5597
    %v5599 = vsel %vm3610, %v5428, 0.0
    %v5600 = vadd.f32 %v5598, %v5599
    %v5601 = vsel %vm3610, %v5429, 0.0
    %v5602 = vadd.f32 %v5600, %v5601
    %v5603 = vsel %vm3610, %v5430, 0.0
    %v5604 = vadd.f32 %v5602, %v5603
    %v5605 = vsel %vm3610, %v5431, 0.0
    %v5606 = vadd.f32 %v5604, %v5605
    %v5607 = vsel %vm3610, %v5432, 0.0
    %v5608 = vadd.f32 %v5606, %v5607
    %v5609 = vsel %vm3610, %v5433, 0.0
    %v5610 = vadd.f32 %v5608, %v5609
    %v5611 = vsel %vm3610, %v5434, 0.0
    %v5612 = vadd.f32 %v5610, %v5611
    %v5613 = vsel %vm3610, %v5435, 0.0
    %v5614 = vadd.f32 %v5612, %v5613
    %v5615 = vsel %vm3610, %v5436, 0.0
    %v5616 = vadd.f32 %v5614, %v5615
    %v5617 = vsel %vm3610, %v5437, 0.0
    %v5618 = vadd.f32 %v5616, %v5617
    %v5619 = vsel %vm3610, %v5438, 0.0
    %v5620 = vadd.f32 %v5618, %v5619
    %v5621 = vsel %vm3610, %v5439, 0.0
    %v5622 = vadd.f32 %v5620, %v5621
    %v5623 = vsel %vm3610, %v5440, 0.0
    %v5624 = vadd.f32 %v5622, %v5623
    %v5625 = vsel %vm3610, %v5441, 0.0
    %v5626 = vadd.f32 %v5624, %v5625
    %v5627 = vsel %vm3610, %v5442, 0.0
    %v5628 = vadd.f32 %v5626, %v5627
    %v5629 = vsel %vm3610, %v5443, 0.0
    %v5630 = vadd.f32 %v5628, %v5629
    %v5631 = vsel %vm3610, %v5444, 0.0
    %v5632 = vadd.f32 %v5630, %v5631
    %v5633 = vsel %vm3610, %v5445, 0.0
    %v5634 = vadd.f32 %v5632, %v5633
    %v5635 = vsel %vm3610, %v5446, 0.0
    %v5636 = vadd.f32 %v5634, %v5635
    %v5637 = vsel %vm3610, %v5447, 0.0
    %v5638 = vadd.f32 %v5636, %v5637
    %v5639 = vsel %vm3610, %v5448, 0.0
    %v5640 = vadd.f32 %v5638, %v5639
    %v5641 = vsel %vm3610, %v5449, 0.0
    %v5642 = vadd.f32 %v5640, %v5641
    %v5643 = vsel %vm3610, %v5450, 0.0
    %v5644 = vadd.f32 %v5642, %v5643
    %v5645 = vsel %vm3610, %v5451, 0.0
    %v5646 = vadd.f32 %v5644, %v5645
    %v5647 = vsel %vm3610, %v5452, 0.0
    %v5648 = vadd.f32 %v5646, %v5647
    %v5649 = vsel %vm3610, %v5453, 0.0
    %v5650 = vadd.f32 %v5648, %v5649
    %v5651 = vsel %vm3610, %v5454, 0.0
    %v5652 = vadd.f32 %v5650, %v5651
    %v5653 = vsel %vm3610, %v5455, 0.0
    %v5654 = vadd.f32 %v5652, %v5653
    %v5655 = vsel %vm3610, %v5456, 0.0
    %v5656 = vadd.f32 %v5654, %v5655
    %v5657 = vsel %vm3610, %v5457, 0.0
    %v5658 = vadd.f32 %v5656, %v5657
    %v5659 = vsel %vm3610, %v5458, 0.0
    %v5660 = vadd.f32 %v5658, %v5659
    %v5661 = vsel %vm3610, %v5459, 0.0
    %v5662 = vadd.f32 %v5660, %v5661
    %v5663 = vsel %vm3610, %v5460, 0.0
    %v5664 = vadd.f32 %v5662, %v5663
    %v5665 = vsel %vm3610, %v5461, 0.0
    %v5666 = vadd.f32 %v5664, %v5665
    %v5667 = vsel %vm3610, %v5462, 0.0
    %v5668 = vadd.f32 %v5666, %v5667
    %v5669 = vsel %vm3610, %v5463, 0.0
    %v5670 = vadd.f32 %v5668, %v5669
    %v5671 = vsel %vm3610, %v5464, 0.0
    %v5672 = vadd.f32 %v5670, %v5671
    %v5673 = vsel %vm3610, %v5465, 0.0
    %v5674 = vadd.f32 %v5672, %v5673
    %v5675 = vsel %vm3610, %v5466, 0.0
    %v5676 = vadd.f32 %v5674, %v5675
    %v5677 = vsel %vm3610, %v5467, 0.0
    %v5678 = vadd.f32 %v5676, %v5677
    %v5679 = vsel %vm3610, %v5468, 0.0
    %v5680 = vadd.f32 %v5678, %v5679
    %v5681 = vsel %vm3610, %v5469, 0.0
    %v5682 = vadd.f32 %v5680, %v5681
    %v5683 = vsel %vm3610, %v5470, 0.0
    %v5684 = vadd.f32 %v5682, %v5683
    %v5685 = vsel %vm3610, %v5471, 0.0
    %v5686 = vadd.f32 %v5684, %v5685
    %v5687 = vrot.slane %v5686, 4
    %v5688 = vadd.f32 %v5686, %v5687
    %v5689 = vrot.slane %v5688, 2
    %v5690 = vadd.f32 %v5688, %v5689
    %v5691 = vrot.slane %v5690, 1
    %v5692 = vadd.f32 %v5690, %v5691
    %v5693 = vmul.f32 %v5363, 0.001953125
    %v5694 = vmul.f32 %v5692, 0.001953125
    %v5695 = vmul.f32 %v5693, %v5693
    %v5696 = vsub.f32 %v5694, %v5695
    %v5697 = vmax.f32 %v5696, 0.0
    %v5698 = vld [vmem:[%s2] sm:$0x1]
    %v5699 = vadd.f32 %v5697, 1e-05
    %v5700 = vrsqrt.pop %v5699
    %v5701 = vmul.f32 %v5700, %v5699
    %v5702 = vmul.f32 %v5701, %v5700
    %v5703 = vmul.f32 0.5, %v5702
    %v5704 = vsub.f32 1.5, %v5703
    %v5705 = vmul.f32 %v5700, %v5704
    %vm5706 = vweird.f32 %v5699
    %vm5707 = vweird.f32 %v5700
    %vm5708 = vmor %vm5706, %vm5707
    %v5709 = vsel %vm5708, %v5700, %v5705
    %v5710 = vmul.f32 %v5698, %v5709
    %v5711 = vld [vmem:[%s3] sm:$0x1]
    %v5712 = vmul.f32 %v5693, %v5710
    %v5713 = vsub.f32 %v5711, %v5712
    %v5715 = vperm.slane %v5710, 0
    %v5717 = vmul.f32 %v4734, %v5715
    %v5718 = vmul.f32 %v4737, %v5715
    %v5719 = vmul.f32 %v4740, %v5715
    %v5720 = vmul.f32 %v4743, %v5715
    %v5721 = vmul.f32 %v4746, %v5715
    %v5722 = vmul.f32 %v4749, %v5715
    %v5723 = vmul.f32 %v4752, %v5715
    %v5724 = vmul.f32 %v4755, %v5715
    %v5725 = vmul.f32 %v4758, %v5715
    %v5726 = vmul.f32 %v4761, %v5715
    %v5727 = vmul.f32 %v4764, %v5715
    %v5728 = vmul.f32 %v4767, %v5715
    %v5729 = vmul.f32 %v4770, %v5715
    %v5730 = vmul.f32 %v4773, %v5715
    %v5731 = vmul.f32 %v4776, %v5715
    %v5732 = vmul.f32 %v4779, %v5715
    %v5733 = vmul.f32 %v4782, %v5715
    %v5734 = vmul.f32 %v4785, %v5715
    %v5735 = vmul.f32 %v4788, %v5715
    %v5736 = vmul.f32 %v4791, %v5715
    %v5737 = vmul.f32 %v4794, %v5715
    %v5738 = vmul.f32 %v4797, %v5715
    %v5739 = vmul.f32 %v4800, %v5715
    %v5740 = vmul.f32 %v4803, %v5715
    %v5741 = vmul.f32 %v4806, %v5715
    %v5742 = vmul.f32 %v4809, %v5715
    %v5743 = vmul.f32 %v4812, %v5715
    %v5744 = vmul.f32 %v4815, %v5715
    %v5745 = vmul.f32 %v4818, %v5715
    %v5746 = vmul.f32 %v4821, %v5715
    %v5747 = vmul.f32 %v4824, %v5715
    %v5748 = vmul.f32 %v4827, %v5715
    %v5749 = vmul.f32 %v4830, %v5715
    %v5750 = vmul.f32 %v4833, %v5715
    %v5751 = vmul.f32 %v4836, %v5715
    %v5752 = vmul.f32 %v4839, %v5715
    %v5753 = vmul.f32 %v4842, %v5715
    %v5754 = vmul.f32 %v4845, %v5715
    %v5755 = vmul.f32 %v4848, %v5715
    %v5756 = vmul.f32 %v4851, %v5715
    %v5757 = vmul.f32 %v4854, %v5715
    %v5758 = vmul.f32 %v4857, %v5715
    %v5759 = vmul.f32 %v4860, %v5715
    %v5760 = vmul.f32 %v4863, %v5715
    %v5761 = vmul.f32 %v4866, %v5715
    %v5762 = vmul.f32 %v4869, %v5715
    %v5763 = vmul.f32 %v4872, %v5715
    %v5764 = vmul.f32 %v4875, %v5715
    %v5765 = vmul.f32 %v4896, %v5715
    %v5766 = vmul.f32 %v4899, %v5715
    %v5767 = vmul.f32 %v4902, %v5715
    %v5768 = vmul.f32 %v4905, %v5715
    %v5769 = vmul.f32 %v4908, %v5715
    %v5770 = vmul.f32 %v4911, %v5715
    %v5771 = vmul.f32 %v4914, %v5715
    %v5772 = vmul.f32 %v4917, %v5715
    %v5773 = vmul.f32 %v4920, %v5715
    %v5774 = vmul.f32 %v4923, %v5715
    %v5775 = vmul.f32 %v4926, %v5715
    %v5776 = vmul.f32 %v4929, %v5715
    %v5777 = vmul.f32 %v4932, %v5715
    %v5778 = vmul.f32 %v4935, %v5715
    %v5779 = vmul.f32 %v4938, %v5715
    %v5780 = vmul.f32 %v4941, %v5715
    %v5781 = vmul.f32 %v4944, %v5715
    %v5782 = vmul.f32 %v4947, %v5715
    %v5783 = vmul.f32 %v4950, %v5715
    %v5784 = vmul.f32 %v4953, %v5715
    %v5785 = vmul.f32 %v4956, %v5715
    %v5786 = vmul.f32 %v4959, %v5715
    %v5787 = vmul.f32 %v4962, %v5715
    %v5788 = vmul.f32 %v4965, %v5715
    %v5789 = vmul.f32 %v4968, %v5715
    %v5790 = vmul.f32 %v4971, %v5715
    %v5791 = vmul.f32 %v4974, %v5715
    %v5792 = vmul.f32 %v4977, %v5715
    %v5793 = vmul.f32 %v4980, %v5715
    %v5794 = vmul.f32 %v4983, %v5715
    %v5795 = vmul.f32 %v4986, %v5715
    %v5796 = vmul.f32 %v4989, %v5715
    %v5797 = vmul.f32 %v4992, %v5715
    %v5798 = vmul.f32 %v4995, %v5715
    %v5799 = vmul.f32 %v4998, %v5715
    %v5800 = vmul.f32 %v5001, %v5715
    %v5801 = vmul.f32 %v5004, %v5715
    %v5802 = vmul.f32 %v5007, %v5715
    %v5803 = vmul.f32 %v5010, %v5715
    %v5804 = vmul.f32 %v5013, %v5715
    %v5805 = vmul.f32 %v5016, %v5715
    %v5806 = vmul.f32 %v5019, %v5715
    %v5807 = vmul.f32 %v5022, %v5715
    %v5808 = vmul.f32 %v5025, %v5715
    %v5809 = vmul.f32 %v5028, %v5715
    %v5810 = vmul.f32 %v5031, %v5715
    %v5811 = vmul.f32 %v5034, %v5715
    %v5812 = vmul.f32 %v5037, %v5715
    %v5814 = vperm.slane %v5713, 0
    %v5816 = vadd.f32 %v5717, %v5814
    %v5817 = vadd.f32 %v5718, %v5814
    %v5818 = vadd.f32 %v5719, %v5814
    %v5819 = vadd.f32 %v5720, %v5814
    %v5820 = vadd.f32 %v5721, %v5814
    %v5821 = vadd.f32 %v5722, %v5814
    %v5822 = vadd.f32 %v5723, %v5814
    %v5823 = vadd.f32 %v5724, %v5814
    %v5824 = vadd.f32 %v5725, %v5814
    %v5825 = vadd.f32 %v5726, %v5814
    %v5826 = vadd.f32 %v5727, %v5814
    %v5827 = vadd.f32 %v5728, %v5814
    %v5828 = vadd.f32 %v5729, %v5814
    %v5829 = vadd.f32 %v5730, %v5814
    %v5830 = vadd.f32 %v5731, %v5814
    %v5831 = vadd.f32 %v5732, %v5814
    %v5832 = vadd.f32 %v5733, %v5814
    %v5833 = vadd.f32 %v5734, %v5814
    %v5834 = vadd.f32 %v5735, %v5814
    %v5835 = vadd.f32 %v5736, %v5814
    %v5836 = vadd.f32 %v5737, %v5814
    %v5837 = vadd.f32 %v5738, %v5814
    %v5838 = vadd.f32 %v5739, %v5814
    %v5839 = vadd.f32 %v5740, %v5814
    %v5840 = vadd.f32 %v5741, %v5814
    %v5841 = vadd.f32 %v5742, %v5814
    %v5842 = vadd.f32 %v5743, %v5814
    %v5843 = vadd.f32 %v5744, %v5814
    %v5844 = vadd.f32 %v5745, %v5814
    %v5845 = vadd.f32 %v5746, %v5814
    %v5846 = vadd.f32 %v5747, %v5814
    %v5847 = vadd.f32 %v5748, %v5814
    %v5848 = vadd.f32 %v5749, %v5814
    %v5849 = vadd.f32 %v5750, %v5814
    %v5850 = vadd.f32 %v5751, %v5814
    %v5851 = vadd.f32 %v5752, %v5814
    %v5852 = vadd.f32 %v5753, %v5814
    %v5853 = vadd.f32 %v5754, %v5814
    %v5854 = vadd.f32 %v5755, %v5814
    %v5855 = vadd.f32 %v5756, %v5814
    %v5856 = vadd.f32 %v5757, %v5814
    %v5857 = vadd.f32 %v5758, %v5814
    %v5858 = vadd.f32 %v5759, %v5814
    %v5859 = vadd.f32 %v5760, %v5814
    %v5860 = vadd.f32 %v5761, %v5814
    %v5861 = vadd.f32 %v5762, %v5814
    %v5862 = vadd.f32 %v5763, %v5814
    %v5863 = vadd.f32 %v5764, %v5814
    %v5864 = vadd.f32 %v5765, %v5814
    %v5865 = vadd.f32 %v5766, %v5814
    %v5866 = vadd.f32 %v5767, %v5814
    %v5867 = vadd.f32 %v5768, %v5814
    %v5868 = vadd.f32 %v5769, %v5814
    %v5869 = vadd.f32 %v5770, %v5814
    %v5870 = vadd.f32 %v5771, %v5814
    %v5871 = vadd.f32 %v5772, %v5814
    %v5872 = vadd.f32 %v5773, %v5814
    %v5873 = vadd.f32 %v5774, %v5814
    %v5874 = vadd.f32 %v5775, %v5814
    %v5875 = vadd.f32 %v5776, %v5814
    %v5876 = vadd.f32 %v5777, %v5814
    %v5877 = vadd.f32 %v5778, %v5814
    %v5878 = vadd.f32 %v5779, %v5814
    %v5879 = vadd.f32 %v5780, %v5814
    %v5880 = vadd.f32 %v5781, %v5814
    %v5881 = vadd.f32 %v5782, %v5814
    %v5882 = vadd.f32 %v5783, %v5814
    %v5883 = vadd.f32 %v5784, %v5814
    %v5884 = vadd.f32 %v5785, %v5814
    %v5885 = vadd.f32 %v5786, %v5814
    %v5886 = vadd.f32 %v5787, %v5814
    %v5887 = vadd.f32 %v5788, %v5814
    %v5888 = vadd.f32 %v5789, %v5814
    %v5889 = vadd.f32 %v5790, %v5814
    %v5890 = vadd.f32 %v5791, %v5814
    %v5891 = vadd.f32 %v5792, %v5814
    %v5892 = vadd.f32 %v5793, %v5814
    %v5893 = vadd.f32 %v5794, %v5814
    %v5894 = vadd.f32 %v5795, %v5814
    %v5895 = vadd.f32 %v5796, %v5814
    %v5896 = vadd.f32 %v5797, %v5814
    %v5897 = vadd.f32 %v5798, %v5814
    %v5898 = vadd.f32 %v5799, %v5814
    %v5899 = vadd.f32 %v5800, %v5814
    %v5900 = vadd.f32 %v5801, %v5814
    %v5901 = vadd.f32 %v5802, %v5814
    %v5902 = vadd.f32 %v5803, %v5814
    %v5903 = vadd.f32 %v5804, %v5814
    %v5904 = vadd.f32 %v5805, %v5814
    %v5905 = vadd.f32 %v5806, %v5814
    %v5906 = vadd.f32 %v5807, %v5814
    %v5907 = vadd.f32 %v5808, %v5814
    %v5908 = vadd.f32 %v5809, %v5814
    %v5909 = vadd.f32 %v5810, %v5814
    %v5910 = vadd.f32 %v5811, %v5814
    %v5911 = vadd.f32 %v5812, %v5814
    %v5912 = vmax.f32 %v5816, 0.0
    %v5913 = vmax.f32 %v5817, 0.0
    %v5914 = vmax.f32 %v5818, 0.0
    %v5915 = vmax.f32 %v5819, 0.0
    %v5916 = vmax.f32 %v5820, 0.0
    %v5917 = vmax.f32 %v5821, 0.0
    %v5918 = vmax.f32 %v5822, 0.0
    %v5919 = vmax.f32 %v5823, 0.0
    %v5920 = vmax.f32 %v5824, 0.0
    %v5921 = vmax.f32 %v5825, 0.0
    %v5922 = vmax.f32 %v5826, 0.0
    %v5923 = vmax.f32 %v5827, 0.0
    %v5924 = vmax.f32 %v5828, 0.0
    %v5925 = vmax.f32 %v5829, 0.0
    %v5926 = vmax.f32 %v5830, 0.0
    %v5927 = vmax.f32 %v5831, 0.0
    %v5928 = vmax.f32 %v5832, 0.0
    %v5929 = vmax.f32 %v5833, 0.0
    %v5930 = vmax.f32 %v5834, 0.0
    %v5931 = vmax.f32 %v5835, 0.0
    %v5932 = vmax.f32 %v5836, 0.0
    %v5933 = vmax.f32 %v5837, 0.0
    %v5934 = vmax.f32 %v5838, 0.0
    %v5935 = vmax.f32 %v5839, 0.0
    %v5936 = vmax.f32 %v5840, 0.0
    %v5937 = vmax.f32 %v5841, 0.0
    %v5938 = vmax.f32 %v5842, 0.0
    %v5939 = vmax.f32 %v5843, 0.0
    %v5940 = vmax.f32 %v5844, 0.0
    %v5941 = vmax.f32 %v5845, 0.0
    %v5942 = vmax.f32 %v5846, 0.0
    %v5943 = vmax.f32 %v5847, 0.0
    %v5944 = vmax.f32 %v5848, 0.0
    %v5945 = vmax.f32 %v5849, 0.0
    %v5946 = vmax.f32 %v5850, 0.0
    %v5947 = vmax.f32 %v5851, 0.0
    %v5948 = vmax.f32 %v5852, 0.0
    %v5949 = vmax.f32 %v5853, 0.0
    %v5950 = vmax.f32 %v5854, 0.0
    %v5951 = vmax.f32 %v5855, 0.0
    %v5952 = vmax.f32 %v5856, 0.0
    %v5953 = vmax.f32 %v5857, 0.0
    %v5954 = vmax.f32 %v5858, 0.0
    %v5955 = vmax.f32 %v5859, 0.0
    %v5956 = vmax.f32 %v5860, 0.0
    %v5957 = vmax.f32 %v5861, 0.0
    %v5958 = vmax.f32 %v5862, 0.0
    %v5959 = vmax.f32 %v5863, 0.0
    %v5960 = vmax.f32 %v5864, 0.0
    %v5961 = vmax.f32 %v5865, 0.0
    %v5962 = vmax.f32 %v5866, 0.0
    %v5963 = vmax.f32 %v5867, 0.0
    %v5964 = vmax.f32 %v5868, 0.0
    %v5965 = vmax.f32 %v5869, 0.0
    %v5966 = vmax.f32 %v5870, 0.0
    %v5967 = vmax.f32 %v5871, 0.0
    %v5968 = vmax.f32 %v5872, 0.0
    %v5969 = vmax.f32 %v5873, 0.0
    %v5970 = vmax.f32 %v5874, 0.0
    %v5971 = vmax.f32 %v5875, 0.0
    %v5972 = vmax.f32 %v5876, 0.0
    %v5973 = vmax.f32 %v5877, 0.0
    %v5974 = vmax.f32 %v5878, 0.0
    %v5975 = vmax.f32 %v5879, 0.0
    %v5976 = vmax.f32 %v5880, 0.0
    %v5977 = vmax.f32 %v5881, 0.0
    %v5978 = vmax.f32 %v5882, 0.0
    %v5979 = vmax.f32 %v5883, 0.0
    %v5980 = vmax.f32 %v5884, 0.0
    %v5981 = vmax.f32 %v5885, 0.0
    %v5982 = vmax.f32 %v5886, 0.0
    %v5983 = vmax.f32 %v5887, 0.0
    %v5984 = vmax.f32 %v5888, 0.0
    %v5985 = vmax.f32 %v5889, 0.0
    %v5986 = vmax.f32 %v5890, 0.0
    %v5987 = vmax.f32 %v5891, 0.0
    %v5988 = vmax.f32 %v5892, 0.0
    %v5989 = vmax.f32 %v5893, 0.0
    %v5990 = vmax.f32 %v5894, 0.0
    %v5991 = vmax.f32 %v5895, 0.0
    %v5992 = vmax.f32 %v5896, 0.0
    %v5993 = vmax.f32 %v5897, 0.0
    %v5994 = vmax.f32 %v5898, 0.0
    %v5995 = vmax.f32 %v5899, 0.0
    %v5996 = vmax.f32 %v5900, 0.0
    %v5997 = vmax.f32 %v5901, 0.0
    %v5998 = vmax.f32 %v5902, 0.0
    %v5999 = vmax.f32 %v5903, 0.0
    %v6000 = vmax.f32 %v5904, 0.0
    %v6001 = vmax.f32 %v5905, 0.0
    %v6002 = vmax.f32 %v5906, 0.0
    %v6003 = vmax.f32 %v5907, 0.0
    %v6004 = vmax.f32 %v5908, 0.0
    %v6005 = vmax.f32 %v5909, 0.0
    %v6006 = vmax.f32 %v5910, 0.0
    %v6007 = vmax.f32 %v5911, 0.0
    %v6008 = vsel %vm5058, %v5912, 0.0
    %v6009 = vsel %vm5059, %v5913, 0.0
    %v6010 = vsel %vm5060, %v5914, 0.0
    %v6011 = vsel %vm5058, %v5915, 0.0
    %v6012 = vsel %vm5059, %v5916, 0.0
    %v6013 = vsel %vm5060, %v5917, 0.0
    %v6014 = vsel %vm5058, %v5918, 0.0
    %v6015 = vsel %vm5059, %v5919, 0.0
    %v6016 = vsel %vm5060, %v5920, 0.0
    %v6017 = vsel %vm5058, %v5921, 0.0
    %v6018 = vsel %vm5059, %v5922, 0.0
    %v6019 = vsel %vm5060, %v5923, 0.0
    %v6020 = vsel %vm5058, %v5924, 0.0
    %v6021 = vsel %vm5059, %v5925, 0.0
    %v6022 = vsel %vm5060, %v5926, 0.0
    %v6023 = vsel %vm5058, %v5927, 0.0
    %v6024 = vsel %vm5059, %v5928, 0.0
    %v6025 = vsel %vm5060, %v5929, 0.0
    %v6026 = vsel %vm5058, %v5930, 0.0
    %v6027 = vsel %vm5059, %v5931, 0.0
    %v6028 = vsel %vm5060, %v5932, 0.0
    %v6029 = vsel %vm5058, %v5933, 0.0
    %v6030 = vsel %vm5059, %v5934, 0.0
    %v6031 = vsel %vm5060, %v5935, 0.0
    %v6032 = vsel %vm5058, %v5936, 0.0
    %v6033 = vsel %vm5059, %v5937, 0.0
    %v6034 = vsel %vm5060, %v5938, 0.0
    %v6035 = vsel %vm5058, %v5939, 0.0
    %v6036 = vsel %vm5059, %v5940, 0.0
    %v6037 = vsel %vm5060, %v5941, 0.0
    %v6038 = vsel %vm5058, %v5942, 0.0
    %v6039 = vsel %vm5059, %v5943, 0.0
    %v6040 = vsel %vm5060, %v5944, 0.0
    %v6041 = vsel %vm5058, %v5945, 0.0
    %v6042 = vsel %vm5059, %v5946, 0.0
    %v6043 = vsel %vm5060, %v5947, 0.0
    %v6044 = vsel %vm5058, %v5948, 0.0
    %v6045 = vsel %vm5059, %v5949, 0.0
    %v6046 = vsel %vm5060, %v5950, 0.0
    %v6047 = vsel %vm5058, %v5951, 0.0
    %v6048 = vsel %vm5059, %v5952, 0.0
    %v6049 = vsel %vm5060, %v5953, 0.0
    %v6050 = vsel %vm5058, %v5954, 0.0
    %v6051 = vsel %vm5059, %v5955, 0.0
    %v6052 = vsel %vm5060, %v5956, 0.0
    %v6053 = vsel %vm5058, %v5957, 0.0
    %v6054 = vsel %vm5059, %v5958, 0.0
    %v6055 = vsel %vm5060, %v5959, 0.0
    %v6056 = vsel %vm5058, %v5960, 0.0
    %v6057 = vsel %vm5059, %v5961, 0.0
    %v6058 = vsel %vm5060, %v5962, 0.0
    %v6059 = vsel %vm5058, %v5963, 0.0
    %v6060 = vsel %vm5059, %v5964, 0.0
    %v6061 = vsel %vm5060, %v5965, 0.0
    %v6062 = vsel %vm5058, %v5966, 0.0
    %v6063 = vsel %vm5059, %v5967, 0.0
    %v6064 = vsel %vm5060, %v5968, 0.0
    %v6065 = vsel %vm5058, %v5969, 0.0
    %v6066 = vsel %vm5059, %v5970, 0.0
    %v6067 = vsel %vm5060, %v5971, 0.0
    %v6068 = vsel %vm5058, %v5972, 0.0
    %v6069 = vsel %vm5059, %v5973, 0.0
    %v6070 = vsel %vm5060, %v5974, 0.0
    %v6071 = vsel %vm5058, %v5975, 0.0
    %v6072 = vsel %vm5059, %v5976, 0.0
    %v6073 = vsel %vm5060, %v5977, 0.0
    %v6074 = vsel %vm5058, %v5978, 0.0
    %v6075 = vsel %vm5059, %v5979, 0.0
    %v6076 = vsel %vm5060, %v5980, 0.0
    %v6077 = vsel %vm5058, %v5981, 0.0
    %v6078 = vsel %vm5059, %v5982, 0.0
    %v6079 = vsel %vm5060, %v5983, 0.0
    %v6080 = vsel %vm5058, %v5984, 0.0
    %v6081 = vsel %vm5059, %v5985, 0.0
    %v6082 = vsel %vm5060, %v5986, 0.0
    %v6083 = vsel %vm5058, %v5987, 0.0
    %v6084 = vsel %vm5059, %v5988, 0.0
    %v6085 = vsel %vm5060, %v5989, 0.0
    %v6086 = vsel %vm5058, %v5990, 0.0
    %v6087 = vsel %vm5059, %v5991, 0.0
    %v6088 = vsel %vm5060, %v5992, 0.0
    %v6089 = vsel %vm5058, %v5993, 0.0
    %v6090 = vsel %vm5059, %v5994, 0.0
    %v6091 = vsel %vm5060, %v5995, 0.0
    %v6092 = vsel %vm5058, %v5996, 0.0
    %v6093 = vsel %vm5059, %v5997, 0.0
    %v6094 = vsel %vm5060, %v5998, 0.0
    %v6095 = vsel %vm5058, %v5999, 0.0
    %v6096 = vsel %vm5059, %v6000, 0.0
    %v6097 = vsel %vm5060, %v6001, 0.0
    %v6098 = vsel %vm5058, %v6002, 0.0
    %v6099 = vsel %vm5059, %v6003, 0.0
    %v6100 = vsel %vm5060, %v6004, 0.0
    %v6101 = vsel %vm5058, %v6005, 0.0
    %v6102 = vsel %vm5059, %v6006, 0.0
    %v6103 = vsel %vm5060, %v6007, 0.0
    %v6195 = vrot.slane 0.0, 1
    %v6196 = vsel %vm331, %v6195, %v6195
    %v6197 = vrot.slane %v6008, 1
    %v6198 = vrot.slane %v6009, 1
    %v6199 = vsel %vm331, %v6197, %v6198
    %v6200 = vrot.slane %v6010, 1
    %v6201 = vsel %vm331, %v6198, %v6200
    %v6202 = vrot.slane %v6011, 1
    %v6203 = vrot.slane %v6012, 1
    %v6204 = vsel %vm331, %v6202, %v6203
    %v6205 = vrot.slane %v6013, 1
    %v6206 = vsel %vm331, %v6203, %v6205
    %v6207 = vrot.slane %v6014, 1
    %v6208 = vrot.slane %v6015, 1
    %v6209 = vsel %vm331, %v6207, %v6208
    %v6210 = vrot.slane %v6016, 1
    %v6211 = vsel %vm331, %v6208, %v6210
    %v6212 = vrot.slane %v6017, 1
    %v6213 = vrot.slane %v6018, 1
    %v6214 = vsel %vm331, %v6212, %v6213
    %v6215 = vrot.slane %v6019, 1
    %v6216 = vsel %vm331, %v6213, %v6215
    %v6217 = vrot.slane %v6020, 1
    %v6218 = vrot.slane %v6021, 1
    %v6219 = vsel %vm331, %v6217, %v6218
    %v6220 = vrot.slane %v6022, 1
    %v6221 = vsel %vm331, %v6218, %v6220
    %v6222 = vrot.slane %v6023, 1
    %v6223 = vrot.slane %v6024, 1
    %v6224 = vsel %vm331, %v6222, %v6223
    %v6225 = vrot.slane %v6025, 1
    %v6226 = vsel %vm331, %v6223, %v6225
    %v6227 = vrot.slane %v6026, 1
    %v6228 = vrot.slane %v6027, 1
    %v6229 = vsel %vm331, %v6227, %v6228
    %v6230 = vrot.slane %v6028, 1
    %v6231 = vsel %vm331, %v6228, %v6230
    %v6232 = vrot.slane %v6029, 1
    %v6233 = vrot.slane %v6030, 1
    %v6234 = vsel %vm331, %v6232, %v6233
    %v6235 = vrot.slane %v6031, 1
    %v6236 = vsel %vm331, %v6233, %v6235
    %v6237 = vrot.slane %v6032, 1
    %v6238 = vrot.slane %v6033, 1
    %v6239 = vsel %vm331, %v6237, %v6238
    %v6240 = vrot.slane %v6034, 1
    %v6241 = vsel %vm331, %v6238, %v6240
    %v6242 = vrot.slane %v6035, 1
    %v6243 = vrot.slane %v6036, 1
    %v6244 = vsel %vm331, %v6242, %v6243
    %v6245 = vrot.slane %v6037, 1
    %v6246 = vsel %vm331, %v6243, %v6245
    %v6247 = vrot.slane %v6038, 1
    %v6248 = vrot.slane %v6039, 1
    %v6249 = vsel %vm331, %v6247, %v6248
    %v6250 = vrot.slane %v6040, 1
    %v6251 = vsel %vm331, %v6248, %v6250
    %v6252 = vrot.slane %v6041, 1
    %v6253 = vrot.slane %v6042, 1
    %v6254 = vsel %vm331, %v6252, %v6253
    %v6255 = vrot.slane %v6043, 1
    %v6256 = vsel %vm331, %v6253, %v6255
    %v6257 = vrot.slane %v6044, 1
    %v6258 = vrot.slane %v6045, 1
    %v6259 = vsel %vm331, %v6257, %v6258
    %v6260 = vrot.slane %v6046, 1
    %v6261 = vsel %vm331, %v6258, %v6260
    %v6262 = vrot.slane %v6047, 1
    %v6263 = vrot.slane %v6048, 1
    %v6264 = vsel %vm331, %v6262, %v6263
    %v6265 = vrot.slane %v6049, 1
    %v6266 = vsel %vm331, %v6263, %v6265
    %v6267 = vrot.slane %v6050, 1
    %v6268 = vrot.slane %v6051, 1
    %v6269 = vsel %vm331, %v6267, %v6268
    %v6270 = vrot.slane %v6052, 1
    %v6271 = vsel %vm331, %v6268, %v6270
    %v6272 = vrot.slane %v6056, 1
    %v6273 = vrot.slane %v6057, 1
    %v6274 = vsel %vm331, %v6272, %v6273
    %v6275 = vrot.slane %v6058, 1
    %v6276 = vsel %vm331, %v6273, %v6275
    %v6277 = vrot.slane %v6059, 1
    %v6278 = vrot.slane %v6060, 1
    %v6279 = vsel %vm331, %v6277, %v6278
    %v6280 = vrot.slane %v6061, 1
    %v6281 = vsel %vm331, %v6278, %v6280
    %v6282 = vrot.slane %v6062, 1
    %v6283 = vrot.slane %v6063, 1
    %v6284 = vsel %vm331, %v6282, %v6283
    %v6285 = vrot.slane %v6064, 1
    %v6286 = vsel %vm331, %v6283, %v6285
    %v6287 = vrot.slane %v6065, 1
    %v6288 = vrot.slane %v6066, 1
    %v6289 = vsel %vm331, %v6287, %v6288
    %v6290 = vrot.slane %v6067, 1
    %v6291 = vsel %vm331, %v6288, %v6290
    %v6292 = vrot.slane %v6068, 1
    %v6293 = vrot.slane %v6069, 1
    %v6294 = vsel %vm331, %v6292, %v6293
    %v6295 = vrot.slane %v6070, 1
    %v6296 = vsel %vm331, %v6293, %v6295
    %v6297 = vrot.slane %v6071, 1
    %v6298 = vrot.slane %v6072, 1
    %v6299 = vsel %vm331, %v6297, %v6298
    %v6300 = vrot.slane %v6073, 1
    %v6301 = vsel %vm331, %v6298, %v6300
    %v6302 = vrot.slane %v6074, 1
    %v6303 = vrot.slane %v6075, 1
    %v6304 = vsel %vm331, %v6302, %v6303
    %v6305 = vrot.slane %v6076, 1
    %v6306 = vsel %vm331, %v6303, %v6305
    %v6307 = vrot.slane %v6077, 1
    %v6308 = vrot.slane %v6078, 1
    %v6309 = vsel %vm331, %v6307, %v6308
    %v6310 = vrot.slane %v6079, 1
    %v6311 = vsel %vm331, %v6308, %v6310
    %v6312 = vrot.slane %v6080, 1
    %v6313 = vrot.slane %v6081, 1
    %v6314 = vsel %vm331, %v6312, %v6313
    %v6315 = vrot.slane %v6082, 1
    %v6316 = vsel %vm331, %v6313, %v6315
    %v6317 = vrot.slane %v6083, 1
    %v6318 = vrot.slane %v6084, 1
    %v6319 = vsel %vm331, %v6317, %v6318
    %v6320 = vrot.slane %v6085, 1
    %v6321 = vsel %vm331, %v6318, %v6320
    %v6322 = vrot.slane %v6086, 1
    %v6323 = vrot.slane %v6087, 1
    %v6324 = vsel %vm331, %v6322, %v6323
    %v6325 = vrot.slane %v6088, 1
    %v6326 = vsel %vm331, %v6323, %v6325
    %v6327 = vrot.slane %v6089, 1
    %v6328 = vrot.slane %v6090, 1
    %v6329 = vsel %vm331, %v6327, %v6328
    %v6330 = vrot.slane %v6091, 1
    %v6331 = vsel %vm331, %v6328, %v6330
    %v6332 = vrot.slane %v6092, 1
    %v6333 = vrot.slane %v6093, 1
    %v6334 = vsel %vm331, %v6332, %v6333
    %v6335 = vrot.slane %v6094, 1
    %v6336 = vsel %vm331, %v6333, %v6335
    %v6337 = vrot.slane %v6095, 1
    %v6338 = vrot.slane %v6096, 1
    %v6339 = vsel %vm331, %v6337, %v6338
    %v6340 = vrot.slane %v6097, 1
    %v6341 = vsel %vm331, %v6338, %v6340
    %v6342 = vrot.slane %v6098, 1
    %v6343 = vrot.slane %v6099, 1
    %v6344 = vsel %vm331, %v6342, %v6343
    %v6345 = vrot.slane %v6100, 1
    %v6346 = vsel %vm331, %v6343, %v6345
    %v6347 = vrot.slane 0.0, 2
    %v6348 = vsel %vm584, %v6347, %v6347
    %v6349 = vrot.slane %v6008, 2
    %v6350 = vrot.slane %v6009, 2
    %v6351 = vsel %vm584, %v6349, %v6350
    %v6352 = vrot.slane %v6010, 2
    %v6353 = vsel %vm584, %v6350, %v6352
    %v6354 = vrot.slane %v6011, 2
    %v6355 = vrot.slane %v6012, 2
    %v6356 = vsel %vm584, %v6354, %v6355
    %v6357 = vrot.slane %v6013, 2
    %v6358 = vsel %vm584, %v6355, %v6357
    %v6359 = vrot.slane %v6014, 2
    %v6360 = vrot.slane %v6015, 2
    %v6361 = vsel %vm584, %v6359, %v6360
    %v6362 = vrot.slane %v6016, 2
    %v6363 = vsel %vm584, %v6360, %v6362
    %v6364 = vrot.slane %v6017, 2
    %v6365 = vrot.slane %v6018, 2
    %v6366 = vsel %vm584, %v6364, %v6365
    %v6367 = vrot.slane %v6019, 2
    %v6368 = vsel %vm584, %v6365, %v6367
    %v6369 = vrot.slane %v6020, 2
    %v6370 = vrot.slane %v6021, 2
    %v6371 = vsel %vm584, %v6369, %v6370
    %v6372 = vrot.slane %v6022, 2
    %v6373 = vsel %vm584, %v6370, %v6372
    %v6374 = vrot.slane %v6023, 2
    %v6375 = vrot.slane %v6024, 2
    %v6376 = vsel %vm584, %v6374, %v6375
    %v6377 = vrot.slane %v6025, 2
    %v6378 = vsel %vm584, %v6375, %v6377
    %v6379 = vrot.slane %v6026, 2
    %v6380 = vrot.slane %v6027, 2
    %v6381 = vsel %vm584, %v6379, %v6380
    %v6382 = vrot.slane %v6028, 2
    %v6383 = vsel %vm584, %v6380, %v6382
    %v6384 = vrot.slane %v6029, 2
    %v6385 = vrot.slane %v6030, 2
    %v6386 = vsel %vm584, %v6384, %v6385
    %v6387 = vrot.slane %v6031, 2
    %v6388 = vsel %vm584, %v6385, %v6387
    %v6389 = vrot.slane %v6032, 2
    %v6390 = vrot.slane %v6033, 2
    %v6391 = vsel %vm584, %v6389, %v6390
    %v6392 = vrot.slane %v6034, 2
    %v6393 = vsel %vm584, %v6390, %v6392
    %v6394 = vrot.slane %v6035, 2
    %v6395 = vrot.slane %v6036, 2
    %v6396 = vsel %vm584, %v6394, %v6395
    %v6397 = vrot.slane %v6037, 2
    %v6398 = vsel %vm584, %v6395, %v6397
    %v6399 = vrot.slane %v6038, 2
    %v6400 = vrot.slane %v6039, 2
    %v6401 = vsel %vm584, %v6399, %v6400
    %v6402 = vrot.slane %v6040, 2
    %v6403 = vsel %vm584, %v6400, %v6402
    %v6404 = vrot.slane %v6041, 2
    %v6405 = vrot.slane %v6042, 2
    %v6406 = vsel %vm584, %v6404, %v6405
    %v6407 = vrot.slane %v6043, 2
    %v6408 = vsel %vm584, %v6405, %v6407
    %v6409 = vrot.slane %v6044, 2
    %v6410 = vrot.slane %v6045, 2
    %v6411 = vsel %vm584, %v6409, %v6410
    %v6412 = vrot.slane %v6046, 2
    %v6413 = vsel %vm584, %v6410, %v6412
    %v6414 = vrot.slane %v6047, 2
    %v6415 = vrot.slane %v6048, 2
    %v6416 = vsel %vm584, %v6414, %v6415
    %v6417 = vrot.slane %v6049, 2
    %v6418 = vsel %vm584, %v6415, %v6417
    %v6419 = vrot.slane %v6050, 2
    %v6420 = vrot.slane %v6051, 2
    %v6421 = vsel %vm584, %v6419, %v6420
    %v6422 = vrot.slane %v6052, 2
    %v6423 = vsel %vm584, %v6420, %v6422
    %v6424 = vrot.slane %v6056, 2
    %v6425 = vrot.slane %v6057, 2
    %v6426 = vsel %vm584, %v6424, %v6425
    %v6427 = vrot.slane %v6058, 2
    %v6428 = vsel %vm584, %v6425, %v6427
    %v6429 = vrot.slane %v6059, 2
    %v6430 = vrot.slane %v6060, 2
    %v6431 = vsel %vm584, %v6429, %v6430
    %v6432 = vrot.slane %v6061, 2
    %v6433 = vsel %vm584, %v6430, %v6432
    %v6434 = vrot.slane %v6062, 2
    %v6435 = vrot.slane %v6063, 2
    %v6436 = vsel %vm584, %v6434, %v6435
    %v6437 = vrot.slane %v6064, 2
    %v6438 = vsel %vm584, %v6435, %v6437
    %v6439 = vrot.slane %v6065, 2
    %v6440 = vrot.slane %v6066, 2
    %v6441 = vsel %vm584, %v6439, %v6440
    %v6442 = vrot.slane %v6067, 2
    %v6443 = vsel %vm584, %v6440, %v6442
    %v6444 = vrot.slane %v6068, 2
    %v6445 = vrot.slane %v6069, 2
    %v6446 = vsel %vm584, %v6444, %v6445
    %v6447 = vrot.slane %v6070, 2
    %v6448 = vsel %vm584, %v6445, %v6447
    %v6449 = vrot.slane %v6071, 2
    %v6450 = vrot.slane %v6072, 2
    %v6451 = vsel %vm584, %v6449, %v6450
    %v6452 = vrot.slane %v6073, 2
    %v6453 = vsel %vm584, %v6450, %v6452
    %v6454 = vrot.slane %v6074, 2
    %v6455 = vrot.slane %v6075, 2
    %v6456 = vsel %vm584, %v6454, %v6455
    %v6457 = vrot.slane %v6076, 2
    %v6458 = vsel %vm584, %v6455, %v6457
    %v6459 = vrot.slane %v6077, 2
    %v6460 = vrot.slane %v6078, 2
    %v6461 = vsel %vm584, %v6459, %v6460
    %v6462 = vrot.slane %v6079, 2
    %v6463 = vsel %vm584, %v6460, %v6462
    %v6464 = vrot.slane %v6080, 2
    %v6465 = vrot.slane %v6081, 2
    %v6466 = vsel %vm584, %v6464, %v6465
    %v6467 = vrot.slane %v6082, 2
    %v6468 = vsel %vm584, %v6465, %v6467
    %v6469 = vrot.slane %v6083, 2
    %v6470 = vrot.slane %v6084, 2
    %v6471 = vsel %vm584, %v6469, %v6470
    %v6472 = vrot.slane %v6085, 2
    %v6473 = vsel %vm584, %v6470, %v6472
    %v6474 = vrot.slane %v6086, 2
    %v6475 = vrot.slane %v6087, 2
    %v6476 = vsel %vm584, %v6474, %v6475
    %v6477 = vrot.slane %v6088, 2
    %v6478 = vsel %vm584, %v6475, %v6477
    %v6479 = vrot.slane %v6089, 2
    %v6480 = vrot.slane %v6090, 2
    %v6481 = vsel %vm584, %v6479, %v6480
    %v6482 = vrot.slane %v6091, 2
    %v6483 = vsel %vm584, %v6480, %v6482
    %v6484 = vrot.slane %v6092, 2
    %v6485 = vrot.slane %v6093, 2
    %v6486 = vsel %vm584, %v6484, %v6485
    %v6487 = vrot.slane %v6094, 2
    %v6488 = vsel %vm584, %v6485, %v6487
    %v6489 = vrot.slane %v6095, 2
    %v6490 = vrot.slane %v6096, 2
    %v6491 = vsel %vm584, %v6489, %v6490
    %v6492 = vrot.slane %v6097, 2
    %v6493 = vsel %vm584, %v6490, %v6492
    %v6494 = vrot.slane %v6098, 2
    %v6495 = vrot.slane %v6099, 2
    %v6496 = vsel %vm584, %v6494, %v6495
    %v6497 = vrot.slane %v6100, 2
    %v6498 = vsel %vm584, %v6495, %v6497
    %v6505 = vrot.slane %v6053, 1
    %v6506 = vrot.slane %v6054, 1
    %v6507 = vsel %vm331, %v6505, %v6506
    %v6508 = vrot.slane %v6055, 1
    %v6509 = vsel %vm331, %v6506, %v6508
    %v6510 = vrot.slane %v6101, 1
    %v6511 = vrot.slane %v6102, 1
    %v6512 = vsel %vm331, %v6510, %v6511
    %v6513 = vrot.slane %v6103, 1
    %v6514 = vsel %vm331, %v6511, %v6513
    %v6515 = vrot.slane %v6053, 2
    %v6516 = vrot.slane %v6054, 2
    %v6517 = vsel %vm584, %v6515, %v6516
    %v6518 = vrot.slane %v6055, 2
    %v6519 = vsel %vm584, %v6516, %v6518
    %v6520 = vrot.slane %v6101, 2
    %v6521 = vrot.slane %v6102, 2
    %v6522 = vsel %vm584, %v6520, %v6521
    %v6523 = vrot.slane %v6103, 2
    %v6524 = vsel %vm584, %v6521, %v6523
    %6525 = vrot.lane.b32.xlu0 %v6196, 8
    %v6526 = vpop.permute.xlu0 %6525
    %6527 = vrot.lane.b32.xlu0 %v6199, 8
    %v6528 = vpop.permute.xlu0 %6527
    %6529 = vrot.lane.b32.xlu0 %v6201, 8
    %v6530 = vpop.permute.xlu0 %6529
    %6531 = vrot.lane.b32.xlu0 %v6204, 8
    %v6532 = vpop.permute.xlu0 %6531
    %6533 = vrot.lane.b32.xlu0 %v6206, 8
    %v6534 = vpop.permute.xlu0 %6533
    %6535 = vrot.lane.b32.xlu0 %v6209, 8
    %v6536 = vpop.permute.xlu0 %6535
    %6537 = vrot.lane.b32.xlu0 %v6211, 8
    %v6538 = vpop.permute.xlu0 %6537
    %6539 = vrot.lane.b32.xlu0 %v6214, 8
    %v6540 = vpop.permute.xlu0 %6539
    %6541 = vrot.lane.b32.xlu0 %v6216, 8
    %v6542 = vpop.permute.xlu0 %6541
    %6543 = vrot.lane.b32.xlu0 %v6219, 8
    %v6544 = vpop.permute.xlu0 %6543
    %6545 = vrot.lane.b32.xlu0 %v6221, 8
    %v6546 = vpop.permute.xlu0 %6545
    %6547 = vrot.lane.b32.xlu0 %v6224, 8
    %v6548 = vpop.permute.xlu0 %6547
    %6549 = vrot.lane.b32.xlu0 %v6226, 8
    %v6550 = vpop.permute.xlu0 %6549
    %6551 = vrot.lane.b32.xlu0 %v6229, 8
    %v6552 = vpop.permute.xlu0 %6551
    %6553 = vrot.lane.b32.xlu0 %v6231, 8
    %v6554 = vpop.permute.xlu0 %6553
    %6555 = vrot.lane.b32.xlu0 %v6234, 8
    %v6556 = vpop.permute.xlu0 %6555
    %6557 = vrot.lane.b32.xlu0 %v6236, 8
    %v6558 = vpop.permute.xlu0 %6557
    %6559 = vrot.lane.b32.xlu0 %v6239, 8
    %v6560 = vpop.permute.xlu0 %6559
    %6561 = vrot.lane.b32.xlu0 %v6241, 8
    %v6562 = vpop.permute.xlu0 %6561
    %6563 = vrot.lane.b32.xlu0 %v6244, 8
    %v6564 = vpop.permute.xlu0 %6563
    %6565 = vrot.lane.b32.xlu0 %v6246, 8
    %v6566 = vpop.permute.xlu0 %6565
    %6567 = vrot.lane.b32.xlu0 %v6249, 8
    %v6568 = vpop.permute.xlu0 %6567
    %6569 = vrot.lane.b32.xlu0 %v6251, 8
    %v6570 = vpop.permute.xlu0 %6569
    %6571 = vrot.lane.b32.xlu0 %v6254, 8
    %v6572 = vpop.permute.xlu0 %6571
    %6573 = vrot.lane.b32.xlu0 %v6256, 8
    %v6574 = vpop.permute.xlu0 %6573
    %6575 = vrot.lane.b32.xlu0 %v6259, 8
    %v6576 = vpop.permute.xlu0 %6575
    %6577 = vrot.lane.b32.xlu0 %v6261, 8
    %v6578 = vpop.permute.xlu0 %6577
    %6579 = vrot.lane.b32.xlu0 %v6264, 8
    %v6580 = vpop.permute.xlu0 %6579
    %6581 = vrot.lane.b32.xlu0 %v6266, 8
    %v6582 = vpop.permute.xlu0 %6581
    %6583 = vrot.lane.b32.xlu0 %v6269, 8
    %v6584 = vpop.permute.xlu0 %6583
    %6585 = vrot.lane.b32.xlu0 %v6271, 8
    %v6586 = vpop.permute.xlu0 %6585
    %6587 = vrot.lane.b32.xlu0 %v6274, 8
    %v6588 = vpop.permute.xlu0 %6587
    %6589 = vrot.lane.b32.xlu0 %v6276, 8
    %v6590 = vpop.permute.xlu0 %6589
    %6591 = vrot.lane.b32.xlu0 %v6279, 8
    %v6592 = vpop.permute.xlu0 %6591
    %6593 = vrot.lane.b32.xlu0 %v6281, 8
    %v6594 = vpop.permute.xlu0 %6593
    %6595 = vrot.lane.b32.xlu0 %v6284, 8
    %v6596 = vpop.permute.xlu0 %6595
    %6597 = vrot.lane.b32.xlu0 %v6286, 8
    %v6598 = vpop.permute.xlu0 %6597
    %6599 = vrot.lane.b32.xlu0 %v6289, 8
    %v6600 = vpop.permute.xlu0 %6599
    %6601 = vrot.lane.b32.xlu0 %v6291, 8
    %v6602 = vpop.permute.xlu0 %6601
    %6603 = vrot.lane.b32.xlu0 %v6294, 8
    %v6604 = vpop.permute.xlu0 %6603
    %6605 = vrot.lane.b32.xlu0 %v6296, 8
    %v6606 = vpop.permute.xlu0 %6605
    %6607 = vrot.lane.b32.xlu0 %v6299, 8
    %v6608 = vpop.permute.xlu0 %6607
    %6609 = vrot.lane.b32.xlu0 %v6301, 8
    %v6610 = vpop.permute.xlu0 %6609
    %6611 = vrot.lane.b32.xlu0 %v6304, 8
    %v6612 = vpop.permute.xlu0 %6611
    %6613 = vrot.lane.b32.xlu0 %v6306, 8
    %v6614 = vpop.permute.xlu0 %6613
    %6615 = vrot.lane.b32.xlu0 %v6309, 8
    %v6616 = vpop.permute.xlu0 %6615
    %6617 = vrot.lane.b32.xlu0 %v6311, 8
    %v6618 = vpop.permute.xlu0 %6617
    %6619 = vrot.lane.b32.xlu0 %v6314, 8
    %v6620 = vpop.permute.xlu0 %6619
    %6621 = vrot.lane.b32.xlu0 %v6316, 8
    %v6622 = vpop.permute.xlu0 %6621
    %6623 = vrot.lane.b32.xlu0 %v6319, 8
    %v6624 = vpop.permute.xlu0 %6623
    %6625 = vrot.lane.b32.xlu0 %v6321, 8
    %v6626 = vpop.permute.xlu0 %6625
    %6627 = vrot.lane.b32.xlu0 %v6324, 8
    %v6628 = vpop.permute.xlu0 %6627
    %6629 = vrot.lane.b32.xlu0 %v6326, 8
    %v6630 = vpop.permute.xlu0 %6629
    %6631 = vrot.lane.b32.xlu0 %v6329, 8
    %v6632 = vpop.permute.xlu0 %6631
    %6633 = vrot.lane.b32.xlu0 %v6331, 8
    %v6634 = vpop.permute.xlu0 %6633
    %6635 = vrot.lane.b32.xlu0 %v6334, 8
    %v6636 = vpop.permute.xlu0 %6635
    %6637 = vrot.lane.b32.xlu0 %v6336, 8
    %v6638 = vpop.permute.xlu0 %6637
    %6639 = vrot.lane.b32.xlu0 %v6339, 8
    %v6640 = vpop.permute.xlu0 %6639
    %6641 = vrot.lane.b32.xlu0 %v6341, 8
    %v6642 = vpop.permute.xlu0 %6641
    %6643 = vrot.lane.b32.xlu0 %v6344, 8
    %v6644 = vpop.permute.xlu0 %6643
    %6645 = vrot.lane.b32.xlu0 %v6346, 8
    %v6646 = vpop.permute.xlu0 %6645
    %6708 = vrot.lane.b32.xlu0 %v6348, 16
    %v6709 = vpop.permute.xlu0 %6708
    %6710 = vrot.lane.b32.xlu0 %v6351, 16
    %v6711 = vpop.permute.xlu0 %6710
    %6712 = vrot.lane.b32.xlu0 %v6353, 16
    %v6713 = vpop.permute.xlu0 %6712
    %6714 = vrot.lane.b32.xlu0 %v6356, 16
    %v6715 = vpop.permute.xlu0 %6714
    %6716 = vrot.lane.b32.xlu0 %v6358, 16
    %v6717 = vpop.permute.xlu0 %6716
    %6718 = vrot.lane.b32.xlu0 %v6361, 16
    %v6719 = vpop.permute.xlu0 %6718
    %6720 = vrot.lane.b32.xlu0 %v6363, 16
    %v6721 = vpop.permute.xlu0 %6720
    %6722 = vrot.lane.b32.xlu0 %v6366, 16
    %v6723 = vpop.permute.xlu0 %6722
    %6724 = vrot.lane.b32.xlu0 %v6368, 16
    %v6725 = vpop.permute.xlu0 %6724
    %6726 = vrot.lane.b32.xlu0 %v6371, 16
    %v6727 = vpop.permute.xlu0 %6726
    %6728 = vrot.lane.b32.xlu0 %v6373, 16
    %v6729 = vpop.permute.xlu0 %6728
    %6730 = vrot.lane.b32.xlu0 %v6376, 16
    %v6731 = vpop.permute.xlu0 %6730
    %6732 = vrot.lane.b32.xlu0 %v6378, 16
    %v6733 = vpop.permute.xlu0 %6732
    %6734 = vrot.lane.b32.xlu0 %v6381, 16
    %v6735 = vpop.permute.xlu0 %6734
    %6736 = vrot.lane.b32.xlu0 %v6383, 16
    %v6737 = vpop.permute.xlu0 %6736
    %6738 = vrot.lane.b32.xlu0 %v6386, 16
    %v6739 = vpop.permute.xlu0 %6738
    %6740 = vrot.lane.b32.xlu0 %v6388, 16
    %v6741 = vpop.permute.xlu0 %6740
    %6742 = vrot.lane.b32.xlu0 %v6391, 16
    %v6743 = vpop.permute.xlu0 %6742
    %6744 = vrot.lane.b32.xlu0 %v6393, 16
    %v6745 = vpop.permute.xlu0 %6744
    %6746 = vrot.lane.b32.xlu0 %v6396, 16
    %v6747 = vpop.permute.xlu0 %6746
    %6748 = vrot.lane.b32.xlu0 %v6398, 16
    %v6749 = vpop.permute.xlu0 %6748
    %6750 = vrot.lane.b32.xlu0 %v6401, 16
    %v6751 = vpop.permute.xlu0 %6750
    %6752 = vrot.lane.b32.xlu0 %v6403, 16
    %v6753 = vpop.permute.xlu0 %6752
    %6754 = vrot.lane.b32.xlu0 %v6406, 16
    %v6755 = vpop.permute.xlu0 %6754
    %6756 = vrot.lane.b32.xlu0 %v6408, 16
    %v6757 = vpop.permute.xlu0 %6756
    %6758 = vrot.lane.b32.xlu0 %v6411, 16
    %v6759 = vpop.permute.xlu0 %6758
    %6760 = vrot.lane.b32.xlu0 %v6413, 16
    %v6761 = vpop.permute.xlu0 %6760
    %6762 = vrot.lane.b32.xlu0 %v6416, 16
    %v6763 = vpop.permute.xlu0 %6762
    %6764 = vrot.lane.b32.xlu0 %v6418, 16
    %v6765 = vpop.permute.xlu0 %6764
    %6766 = vrot.lane.b32.xlu0 %v6421, 16
    %v6767 = vpop.permute.xlu0 %6766
    %6768 = vrot.lane.b32.xlu0 %v6423, 16
    %v6769 = vpop.permute.xlu0 %6768
    %6770 = vrot.lane.b32.xlu0 %v6426, 16
    %v6771 = vpop.permute.xlu0 %6770
    %6772 = vrot.lane.b32.xlu0 %v6428, 16
    %v6773 = vpop.permute.xlu0 %6772
    %6774 = vrot.lane.b32.xlu0 %v6431, 16
    %v6775 = vpop.permute.xlu0 %6774
    %6776 = vrot.lane.b32.xlu0 %v6433, 16
    %v6777 = vpop.permute.xlu0 %6776
    %6778 = vrot.lane.b32.xlu0 %v6436, 16
    %v6779 = vpop.permute.xlu0 %6778
    %6780 = vrot.lane.b32.xlu0 %v6438, 16
    %v6781 = vpop.permute.xlu0 %6780
    %6782 = vrot.lane.b32.xlu0 %v6441, 16
    %v6783 = vpop.permute.xlu0 %6782
    %6784 = vrot.lane.b32.xlu0 %v6443, 16
    %v6785 = vpop.permute.xlu0 %6784
    %6786 = vrot.lane.b32.xlu0 %v6446, 16
    %v6787 = vpop.permute.xlu0 %6786
    %6788 = vrot.lane.b32.xlu0 %v6448, 16
    %v6789 = vpop.permute.xlu0 %6788
    %6790 = vrot.lane.b32.xlu0 %v6451, 16
    %v6791 = vpop.permute.xlu0 %6790
    %6792 = vrot.lane.b32.xlu0 %v6453, 16
    %v6793 = vpop.permute.xlu0 %6792
    %6794 = vrot.lane.b32.xlu0 %v6456, 16
    %v6795 = vpop.permute.xlu0 %6794
    %6796 = vrot.lane.b32.xlu0 %v6458, 16
    %v6797 = vpop.permute.xlu0 %6796
    %6798 = vrot.lane.b32.xlu0 %v6461, 16
    %v6799 = vpop.permute.xlu0 %6798
    %6800 = vrot.lane.b32.xlu0 %v6463, 16
    %v6801 = vpop.permute.xlu0 %6800
    %6802 = vrot.lane.b32.xlu0 %v6466, 16
    %v6803 = vpop.permute.xlu0 %6802
    %6804 = vrot.lane.b32.xlu0 %v6468, 16
    %v6805 = vpop.permute.xlu0 %6804
    %6806 = vrot.lane.b32.xlu0 %v6471, 16
    %v6807 = vpop.permute.xlu0 %6806
    %6808 = vrot.lane.b32.xlu0 %v6473, 16
    %v6809 = vpop.permute.xlu0 %6808
    %6810 = vrot.lane.b32.xlu0 %v6476, 16
    %v6811 = vpop.permute.xlu0 %6810
    %6812 = vrot.lane.b32.xlu0 %v6478, 16
    %v6813 = vpop.permute.xlu0 %6812
    %6814 = vrot.lane.b32.xlu0 %v6481, 16
    %v6815 = vpop.permute.xlu0 %6814
    %6816 = vrot.lane.b32.xlu0 %v6483, 16
    %v6817 = vpop.permute.xlu0 %6816
    %6818 = vrot.lane.b32.xlu0 %v6486, 16
    %v6819 = vpop.permute.xlu0 %6818
    %6820 = vrot.lane.b32.xlu0 %v6488, 16
    %v6821 = vpop.permute.xlu0 %6820
    %6822 = vrot.lane.b32.xlu0 %v6491, 16
    %v6823 = vpop.permute.xlu0 %6822
    %6824 = vrot.lane.b32.xlu0 %v6493, 16
    %v6825 = vpop.permute.xlu0 %6824
    %6826 = vrot.lane.b32.xlu0 %v6496, 16
    %v6827 = vpop.permute.xlu0 %6826
    %6828 = vrot.lane.b32.xlu0 %v6498, 16
    %v6829 = vpop.permute.xlu0 %6828
    %6891 = vrot.lane.b32.xlu0 %v6008, 24
    %v6892 = vpop.permute.xlu0 %6891
    %6893 = vrot.lane.b32.xlu0 %v6009, 24
    %v6894 = vpop.permute.xlu0 %6893
    %6895 = vrot.lane.b32.xlu0 %v6011, 24
    %v6896 = vpop.permute.xlu0 %6895
    %6897 = vrot.lane.b32.xlu0 %v6012, 24
    %v6898 = vpop.permute.xlu0 %6897
    %6899 = vrot.lane.b32.xlu0 %v6014, 24
    %v6900 = vpop.permute.xlu0 %6899
    %6901 = vrot.lane.b32.xlu0 %v6015, 24
    %v6902 = vpop.permute.xlu0 %6901
    %6903 = vrot.lane.b32.xlu0 %v6017, 24
    %v6904 = vpop.permute.xlu0 %6903
    %6905 = vrot.lane.b32.xlu0 %v6018, 24
    %v6906 = vpop.permute.xlu0 %6905
    %6907 = vrot.lane.b32.xlu0 %v6020, 24
    %v6908 = vpop.permute.xlu0 %6907
    %6909 = vrot.lane.b32.xlu0 %v6021, 24
    %v6910 = vpop.permute.xlu0 %6909
    %6911 = vrot.lane.b32.xlu0 %v6023, 24
    %v6912 = vpop.permute.xlu0 %6911
    %6913 = vrot.lane.b32.xlu0 %v6024, 24
    %v6914 = vpop.permute.xlu0 %6913
    %6915 = vrot.lane.b32.xlu0 %v6026, 24
    %v6916 = vpop.permute.xlu0 %6915
    %6917 = vrot.lane.b32.xlu0 %v6027, 24
    %v6918 = vpop.permute.xlu0 %6917
    %6919 = vrot.lane.b32.xlu0 %v6029, 24
    %v6920 = vpop.permute.xlu0 %6919
    %6921 = vrot.lane.b32.xlu0 %v6030, 24
    %v6922 = vpop.permute.xlu0 %6921
    %6923 = vrot.lane.b32.xlu0 %v6032, 24
    %v6924 = vpop.permute.xlu0 %6923
    %6925 = vrot.lane.b32.xlu0 %v6033, 24
    %v6926 = vpop.permute.xlu0 %6925
    %6927 = vrot.lane.b32.xlu0 %v6035, 24
    %v6928 = vpop.permute.xlu0 %6927
    %6929 = vrot.lane.b32.xlu0 %v6036, 24
    %v6930 = vpop.permute.xlu0 %6929
    %6931 = vrot.lane.b32.xlu0 %v6038, 24
    %v6932 = vpop.permute.xlu0 %6931
    %6933 = vrot.lane.b32.xlu0 %v6039, 24
    %v6934 = vpop.permute.xlu0 %6933
    %6935 = vrot.lane.b32.xlu0 %v6041, 24
    %v6936 = vpop.permute.xlu0 %6935
    %6937 = vrot.lane.b32.xlu0 %v6042, 24
    %v6938 = vpop.permute.xlu0 %6937
    %6939 = vrot.lane.b32.xlu0 %v6044, 24
    %v6940 = vpop.permute.xlu0 %6939
    %6941 = vrot.lane.b32.xlu0 %v6045, 24
    %v6942 = vpop.permute.xlu0 %6941
    %6943 = vrot.lane.b32.xlu0 %v6047, 24
    %v6944 = vpop.permute.xlu0 %6943
    %6945 = vrot.lane.b32.xlu0 %v6048, 24
    %v6946 = vpop.permute.xlu0 %6945
    %6947 = vrot.lane.b32.xlu0 %v6050, 24
    %v6948 = vpop.permute.xlu0 %6947
    %6949 = vrot.lane.b32.xlu0 %v6051, 24
    %v6950 = vpop.permute.xlu0 %6949
    %6951 = vrot.lane.b32.xlu0 %v6053, 24
    %v6952 = vpop.permute.xlu0 %6951
    %6953 = vrot.lane.b32.xlu0 %v6054, 24
    %v6954 = vpop.permute.xlu0 %6953
    %6955 = vrot.lane.b32.xlu0 %v6056, 24
    %v6956 = vpop.permute.xlu0 %6955
    %6957 = vrot.lane.b32.xlu0 %v6057, 24
    %v6958 = vpop.permute.xlu0 %6957
    %6959 = vrot.lane.b32.xlu0 %v6059, 24
    %v6960 = vpop.permute.xlu0 %6959
    %6961 = vrot.lane.b32.xlu0 %v6060, 24
    %v6962 = vpop.permute.xlu0 %6961
    %6963 = vrot.lane.b32.xlu0 %v6062, 24
    %v6964 = vpop.permute.xlu0 %6963
    %6965 = vrot.lane.b32.xlu0 %v6063, 24
    %v6966 = vpop.permute.xlu0 %6965
    %6967 = vrot.lane.b32.xlu0 %v6065, 24
    %v6968 = vpop.permute.xlu0 %6967
    %6969 = vrot.lane.b32.xlu0 %v6066, 24
    %v6970 = vpop.permute.xlu0 %6969
    %6971 = vrot.lane.b32.xlu0 %v6068, 24
    %v6972 = vpop.permute.xlu0 %6971
    %6973 = vrot.lane.b32.xlu0 %v6069, 24
    %v6974 = vpop.permute.xlu0 %6973
    %6975 = vrot.lane.b32.xlu0 %v6071, 24
    %v6976 = vpop.permute.xlu0 %6975
    %6977 = vrot.lane.b32.xlu0 %v6072, 24
    %v6978 = vpop.permute.xlu0 %6977
    %6979 = vrot.lane.b32.xlu0 %v6074, 24
    %v6980 = vpop.permute.xlu0 %6979
    %6981 = vrot.lane.b32.xlu0 %v6075, 24
    %v6982 = vpop.permute.xlu0 %6981
    %6983 = vrot.lane.b32.xlu0 %v6077, 24
    %v6984 = vpop.permute.xlu0 %6983
    %6985 = vrot.lane.b32.xlu0 %v6078, 24
    %v6986 = vpop.permute.xlu0 %6985
    %6987 = vrot.lane.b32.xlu0 %v6080, 24
    %v6988 = vpop.permute.xlu0 %6987
    %6989 = vrot.lane.b32.xlu0 %v6081, 24
    %v6990 = vpop.permute.xlu0 %6989
    %6991 = vrot.lane.b32.xlu0 %v6083, 24
    %v6992 = vpop.permute.xlu0 %6991
    %6993 = vrot.lane.b32.xlu0 %v6084, 24
    %v6994 = vpop.permute.xlu0 %6993
    %6995 = vrot.lane.b32.xlu0 %v6086, 24
    %v6996 = vpop.permute.xlu0 %6995
    %6997 = vrot.lane.b32.xlu0 %v6087, 24
    %v6998 = vpop.permute.xlu0 %6997
    %6999 = vrot.lane.b32.xlu0 %v6089, 24
    %v7000 = vpop.permute.xlu0 %6999
    %7001 = vrot.lane.b32.xlu0 %v6090, 24
    %v7002 = vpop.permute.xlu0 %7001
    %7003 = vrot.lane.b32.xlu0 %v6092, 24
    %v7004 = vpop.permute.xlu0 %7003
    %7005 = vrot.lane.b32.xlu0 %v6093, 24
    %v7006 = vpop.permute.xlu0 %7005
    %7007 = vrot.lane.b32.xlu0 %v6095, 24
    %v7008 = vpop.permute.xlu0 %7007
    %7009 = vrot.lane.b32.xlu0 %v6096, 24
    %v7010 = vpop.permute.xlu0 %7009
    %7011 = vrot.lane.b32.xlu0 %v6098, 24
    %v7012 = vpop.permute.xlu0 %7011
    %7013 = vrot.lane.b32.xlu0 %v6099, 24
    %v7014 = vpop.permute.xlu0 %7013
    %7015 = vrot.lane.b32.xlu0 %v6101, 24
    %v7016 = vpop.permute.xlu0 %7015
    %7017 = vrot.lane.b32.xlu0 %v6102, 24
    %v7018 = vpop.permute.xlu0 %7017
    %7083 = vrot.lane.b32.xlu0 %v6199, 32
    %v7084 = vpop.permute.xlu0 %7083
    %7085 = vrot.lane.b32.xlu0 %v6201, 32
    %v7086 = vpop.permute.xlu0 %7085
    %7087 = vrot.lane.b32.xlu0 %v6204, 32
    %v7088 = vpop.permute.xlu0 %7087
    %7089 = vrot.lane.b32.xlu0 %v6206, 32
    %v7090 = vpop.permute.xlu0 %7089
    %7091 = vrot.lane.b32.xlu0 %v6209, 32
    %v7092 = vpop.permute.xlu0 %7091
    %7093 = vrot.lane.b32.xlu0 %v6211, 32
    %v7094 = vpop.permute.xlu0 %7093
    %7095 = vrot.lane.b32.xlu0 %v6214, 32
    %v7096 = vpop.permute.xlu0 %7095
    %7097 = vrot.lane.b32.xlu0 %v6216, 32
    %v7098 = vpop.permute.xlu0 %7097
    %7099 = vrot.lane.b32.xlu0 %v6219, 32
    %v7100 = vpop.permute.xlu0 %7099
    %7101 = vrot.lane.b32.xlu0 %v6221, 32
    %v7102 = vpop.permute.xlu0 %7101
    %7103 = vrot.lane.b32.xlu0 %v6224, 32
    %v7104 = vpop.permute.xlu0 %7103
    %7105 = vrot.lane.b32.xlu0 %v6226, 32
    %v7106 = vpop.permute.xlu0 %7105
    %7107 = vrot.lane.b32.xlu0 %v6229, 32
    %v7108 = vpop.permute.xlu0 %7107
    %7109 = vrot.lane.b32.xlu0 %v6231, 32
    %v7110 = vpop.permute.xlu0 %7109
    %7111 = vrot.lane.b32.xlu0 %v6234, 32
    %v7112 = vpop.permute.xlu0 %7111
    %7113 = vrot.lane.b32.xlu0 %v6236, 32
    %v7114 = vpop.permute.xlu0 %7113
    %7115 = vrot.lane.b32.xlu0 %v6239, 32
    %v7116 = vpop.permute.xlu0 %7115
    %7117 = vrot.lane.b32.xlu0 %v6241, 32
    %v7118 = vpop.permute.xlu0 %7117
    %7119 = vrot.lane.b32.xlu0 %v6244, 32
    %v7120 = vpop.permute.xlu0 %7119
    %7121 = vrot.lane.b32.xlu0 %v6246, 32
    %v7122 = vpop.permute.xlu0 %7121
    %7123 = vrot.lane.b32.xlu0 %v6249, 32
    %v7124 = vpop.permute.xlu0 %7123
    %7125 = vrot.lane.b32.xlu0 %v6251, 32
    %v7126 = vpop.permute.xlu0 %7125
    %7127 = vrot.lane.b32.xlu0 %v6254, 32
    %v7128 = vpop.permute.xlu0 %7127
    %7129 = vrot.lane.b32.xlu0 %v6256, 32
    %v7130 = vpop.permute.xlu0 %7129
    %7131 = vrot.lane.b32.xlu0 %v6259, 32
    %v7132 = vpop.permute.xlu0 %7131
    %7133 = vrot.lane.b32.xlu0 %v6261, 32
    %v7134 = vpop.permute.xlu0 %7133
    %7135 = vrot.lane.b32.xlu0 %v6264, 32
    %v7136 = vpop.permute.xlu0 %7135
    %7137 = vrot.lane.b32.xlu0 %v6266, 32
    %v7138 = vpop.permute.xlu0 %7137
    %7139 = vrot.lane.b32.xlu0 %v6269, 32
    %v7140 = vpop.permute.xlu0 %7139
    %7141 = vrot.lane.b32.xlu0 %v6271, 32
    %v7142 = vpop.permute.xlu0 %7141
    %7143 = vrot.lane.b32.xlu0 %v6507, 32
    %v7144 = vpop.permute.xlu0 %7143
    %7145 = vrot.lane.b32.xlu0 %v6509, 32
    %v7146 = vpop.permute.xlu0 %7145
    %7147 = vrot.lane.b32.xlu0 %v6274, 32
    %v7148 = vpop.permute.xlu0 %7147
    %7149 = vrot.lane.b32.xlu0 %v6276, 32
    %v7150 = vpop.permute.xlu0 %7149
    %7151 = vrot.lane.b32.xlu0 %v6279, 32
    %v7152 = vpop.permute.xlu0 %7151
    %7153 = vrot.lane.b32.xlu0 %v6281, 32
    %v7154 = vpop.permute.xlu0 %7153
    %7155 = vrot.lane.b32.xlu0 %v6284, 32
    %v7156 = vpop.permute.xlu0 %7155
    %7157 = vrot.lane.b32.xlu0 %v6286, 32
    %v7158 = vpop.permute.xlu0 %7157
    %7159 = vrot.lane.b32.xlu0 %v6289, 32
    %v7160 = vpop.permute.xlu0 %7159
    %7161 = vrot.lane.b32.xlu0 %v6291, 32
    %v7162 = vpop.permute.xlu0 %7161
    %7163 = vrot.lane.b32.xlu0 %v6294, 32
    %v7164 = vpop.permute.xlu0 %7163
    %7165 = vrot.lane.b32.xlu0 %v6296, 32
    %v7166 = vpop.permute.xlu0 %7165
    %7167 = vrot.lane.b32.xlu0 %v6299, 32
    %v7168 = vpop.permute.xlu0 %7167
    %7169 = vrot.lane.b32.xlu0 %v6301, 32
    %v7170 = vpop.permute.xlu0 %7169
    %7171 = vrot.lane.b32.xlu0 %v6304, 32
    %v7172 = vpop.permute.xlu0 %7171
    %7173 = vrot.lane.b32.xlu0 %v6306, 32
    %v7174 = vpop.permute.xlu0 %7173
    %7175 = vrot.lane.b32.xlu0 %v6309, 32
    %v7176 = vpop.permute.xlu0 %7175
    %7177 = vrot.lane.b32.xlu0 %v6311, 32
    %v7178 = vpop.permute.xlu0 %7177
    %7179 = vrot.lane.b32.xlu0 %v6314, 32
    %v7180 = vpop.permute.xlu0 %7179
    %7181 = vrot.lane.b32.xlu0 %v6316, 32
    %v7182 = vpop.permute.xlu0 %7181
    %7183 = vrot.lane.b32.xlu0 %v6319, 32
    %v7184 = vpop.permute.xlu0 %7183
    %7185 = vrot.lane.b32.xlu0 %v6321, 32
    %v7186 = vpop.permute.xlu0 %7185
    %7187 = vrot.lane.b32.xlu0 %v6324, 32
    %v7188 = vpop.permute.xlu0 %7187
    %7189 = vrot.lane.b32.xlu0 %v6326, 32
    %v7190 = vpop.permute.xlu0 %7189
    %7191 = vrot.lane.b32.xlu0 %v6329, 32
    %v7192 = vpop.permute.xlu0 %7191
    %7193 = vrot.lane.b32.xlu0 %v6331, 32
    %v7194 = vpop.permute.xlu0 %7193
    %7195 = vrot.lane.b32.xlu0 %v6334, 32
    %v7196 = vpop.permute.xlu0 %7195
    %7197 = vrot.lane.b32.xlu0 %v6336, 32
    %v7198 = vpop.permute.xlu0 %7197
    %7199 = vrot.lane.b32.xlu0 %v6339, 32
    %v7200 = vpop.permute.xlu0 %7199
    %7201 = vrot.lane.b32.xlu0 %v6341, 32
    %v7202 = vpop.permute.xlu0 %7201
    %7203 = vrot.lane.b32.xlu0 %v6344, 32
    %v7204 = vpop.permute.xlu0 %7203
    %7205 = vrot.lane.b32.xlu0 %v6346, 32
    %v7206 = vpop.permute.xlu0 %7205
    %7207 = vrot.lane.b32.xlu0 %v6512, 32
    %v7208 = vpop.permute.xlu0 %7207
    %7209 = vrot.lane.b32.xlu0 %v6514, 32
    %v7210 = vpop.permute.xlu0 %7209
    %7275 = vrot.lane.b32.xlu0 %v6351, 40
    %v7276 = vpop.permute.xlu0 %7275
    %7277 = vrot.lane.b32.xlu0 %v6353, 40
    %v7278 = vpop.permute.xlu0 %7277
    %7279 = vrot.lane.b32.xlu0 %v6356, 40
    %v7280 = vpop.permute.xlu0 %7279
    %7281 = vrot.lane.b32.xlu0 %v6358, 40
    %v7282 = vpop.permute.xlu0 %7281
    %7283 = vrot.lane.b32.xlu0 %v6361, 40
    %v7284 = vpop.permute.xlu0 %7283
    %7285 = vrot.lane.b32.xlu0 %v6363, 40
    %v7286 = vpop.permute.xlu0 %7285
    %7287 = vrot.lane.b32.xlu0 %v6366, 40
    %v7288 = vpop.permute.xlu0 %7287
    %7289 = vrot.lane.b32.xlu0 %v6368, 40
    %v7290 = vpop.permute.xlu0 %7289
    %7291 = vrot.lane.b32.xlu0 %v6371, 40
    %v7292 = vpop.permute.xlu0 %7291
    %7293 = vrot.lane.b32.xlu0 %v6373, 40
    %v7294 = vpop.permute.xlu0 %7293
    %7295 = vrot.lane.b32.xlu0 %v6376, 40
    %v7296 = vpop.permute.xlu0 %7295
    %7297 = vrot.lane.b32.xlu0 %v6378, 40
    %v7298 = vpop.permute.xlu0 %7297
    %7299 = vrot.lane.b32.xlu0 %v6381, 40
    %v7300 = vpop.permute.xlu0 %7299
    %7301 = vrot.lane.b32.xlu0 %v6383, 40
    %v7302 = vpop.permute.xlu0 %7301
    %7303 = vrot.lane.b32.xlu0 %v6386, 40
    %v7304 = vpop.permute.xlu0 %7303
    %7305 = vrot.lane.b32.xlu0 %v6388, 40
    %v7306 = vpop.permute.xlu0 %7305
    %7307 = vrot.lane.b32.xlu0 %v6391, 40
    %v7308 = vpop.permute.xlu0 %7307
    %7309 = vrot.lane.b32.xlu0 %v6393, 40
    %v7310 = vpop.permute.xlu0 %7309
    %7311 = vrot.lane.b32.xlu0 %v6396, 40
    %v7312 = vpop.permute.xlu0 %7311
    %7313 = vrot.lane.b32.xlu0 %v6398, 40
    %v7314 = vpop.permute.xlu0 %7313
    %7315 = vrot.lane.b32.xlu0 %v6401, 40
    %v7316 = vpop.permute.xlu0 %7315
    %7317 = vrot.lane.b32.xlu0 %v6403, 40
    %v7318 = vpop.permute.xlu0 %7317
    %7319 = vrot.lane.b32.xlu0 %v6406, 40
    %v7320 = vpop.permute.xlu0 %7319
    %7321 = vrot.lane.b32.xlu0 %v6408, 40
    %v7322 = vpop.permute.xlu0 %7321
    %7323 = vrot.lane.b32.xlu0 %v6411, 40
    %v7324 = vpop.permute.xlu0 %7323
    %7325 = vrot.lane.b32.xlu0 %v6413, 40
    %v7326 = vpop.permute.xlu0 %7325
    %7327 = vrot.lane.b32.xlu0 %v6416, 40
    %v7328 = vpop.permute.xlu0 %7327
    %7329 = vrot.lane.b32.xlu0 %v6418, 40
    %v7330 = vpop.permute.xlu0 %7329
    %7331 = vrot.lane.b32.xlu0 %v6421, 40
    %v7332 = vpop.permute.xlu0 %7331
    %7333 = vrot.lane.b32.xlu0 %v6423, 40
    %v7334 = vpop.permute.xlu0 %7333
    %7335 = vrot.lane.b32.xlu0 %v6517, 40
    %v7336 = vpop.permute.xlu0 %7335
    %7337 = vrot.lane.b32.xlu0 %v6519, 40
    %v7338 = vpop.permute.xlu0 %7337
    %7339 = vrot.lane.b32.xlu0 %v6426, 40
    %v7340 = vpop.permute.xlu0 %7339
    %7341 = vrot.lane.b32.xlu0 %v6428, 40
    %v7342 = vpop.permute.xlu0 %7341
    %7343 = vrot.lane.b32.xlu0 %v6431, 40
    %v7344 = vpop.permute.xlu0 %7343
    %7345 = vrot.lane.b32.xlu0 %v6433, 40
    %v7346 = vpop.permute.xlu0 %7345
    %7347 = vrot.lane.b32.xlu0 %v6436, 40
    %v7348 = vpop.permute.xlu0 %7347
    %7349 = vrot.lane.b32.xlu0 %v6438, 40
    %v7350 = vpop.permute.xlu0 %7349
    %7351 = vrot.lane.b32.xlu0 %v6441, 40
    %v7352 = vpop.permute.xlu0 %7351
    %7353 = vrot.lane.b32.xlu0 %v6443, 40
    %v7354 = vpop.permute.xlu0 %7353
    %7355 = vrot.lane.b32.xlu0 %v6446, 40
    %v7356 = vpop.permute.xlu0 %7355
    %7357 = vrot.lane.b32.xlu0 %v6448, 40
    %v7358 = vpop.permute.xlu0 %7357
    %7359 = vrot.lane.b32.xlu0 %v6451, 40
    %v7360 = vpop.permute.xlu0 %7359
    %7361 = vrot.lane.b32.xlu0 %v6453, 40
    %v7362 = vpop.permute.xlu0 %7361
    %7363 = vrot.lane.b32.xlu0 %v6456, 40
    %v7364 = vpop.permute.xlu0 %7363
    %7365 = vrot.lane.b32.xlu0 %v6458, 40
    %v7366 = vpop.permute.xlu0 %7365
    %7367 = vrot.lane.b32.xlu0 %v6461, 40
    %v7368 = vpop.permute.xlu0 %7367
    %7369 = vrot.lane.b32.xlu0 %v6463, 40
    %v7370 = vpop.permute.xlu0 %7369
    %7371 = vrot.lane.b32.xlu0 %v6466, 40
    %v7372 = vpop.permute.xlu0 %7371
    %7373 = vrot.lane.b32.xlu0 %v6468, 40
    %v7374 = vpop.permute.xlu0 %7373
    %7375 = vrot.lane.b32.xlu0 %v6471, 40
    %v7376 = vpop.permute.xlu0 %7375
    %7377 = vrot.lane.b32.xlu0 %v6473, 40
    %v7378 = vpop.permute.xlu0 %7377
    %7379 = vrot.lane.b32.xlu0 %v6476, 40
    %v7380 = vpop.permute.xlu0 %7379
    %7381 = vrot.lane.b32.xlu0 %v6478, 40
    %v7382 = vpop.permute.xlu0 %7381
    %7383 = vrot.lane.b32.xlu0 %v6481, 40
    %v7384 = vpop.permute.xlu0 %7383
    %7385 = vrot.lane.b32.xlu0 %v6483, 40
    %v7386 = vpop.permute.xlu0 %7385
    %7387 = vrot.lane.b32.xlu0 %v6486, 40
    %v7388 = vpop.permute.xlu0 %7387
    %7389 = vrot.lane.b32.xlu0 %v6488, 40
    %v7390 = vpop.permute.xlu0 %7389
    %7391 = vrot.lane.b32.xlu0 %v6491, 40
    %v7392 = vpop.permute.xlu0 %7391
    %7393 = vrot.lane.b32.xlu0 %v6493, 40
    %v7394 = vpop.permute.xlu0 %7393
    %7395 = vrot.lane.b32.xlu0 %v6496, 40
    %v7396 = vpop.permute.xlu0 %7395
    %7397 = vrot.lane.b32.xlu0 %v6498, 40
    %v7398 = vpop.permute.xlu0 %7397
    %7399 = vrot.lane.b32.xlu0 %v6522, 40
    %v7400 = vpop.permute.xlu0 %7399
    %7401 = vrot.lane.b32.xlu0 %v6524, 40
    %v7402 = vpop.permute.xlu0 %7401
    %7467 = vrot.lane.b32.xlu0 %v6011, 48
    %v7468 = vpop.permute.xlu0 %7467
    %7469 = vrot.lane.b32.xlu0 %v6012, 48
    %v7470 = vpop.permute.xlu0 %7469
    %7471 = vrot.lane.b32.xlu0 %v6014, 48
    %v7472 = vpop.permute.xlu0 %7471
    %7473 = vrot.lane.b32.xlu0 %v6015, 48
    %v7474 = vpop.permute.xlu0 %7473
    %7475 = vrot.lane.b32.xlu0 %v6017, 48
    %v7476 = vpop.permute.xlu0 %7475
    %7477 = vrot.lane.b32.xlu0 %v6018, 48
    %v7478 = vpop.permute.xlu0 %7477
    %7479 = vrot.lane.b32.xlu0 %v6020, 48
    %v7480 = vpop.permute.xlu0 %7479
    %7481 = vrot.lane.b32.xlu0 %v6021, 48
    %v7482 = vpop.permute.xlu0 %7481
    %7483 = vrot.lane.b32.xlu0 %v6023, 48
    %v7484 = vpop.permute.xlu0 %7483
    %7485 = vrot.lane.b32.xlu0 %v6024, 48
    %v7486 = vpop.permute.xlu0 %7485
    %7487 = vrot.lane.b32.xlu0 %v6026, 48
    %v7488 = vpop.permute.xlu0 %7487
    %7489 = vrot.lane.b32.xlu0 %v6027, 48
    %v7490 = vpop.permute.xlu0 %7489
    %7491 = vrot.lane.b32.xlu0 %v6029, 48
    %v7492 = vpop.permute.xlu0 %7491
    %7493 = vrot.lane.b32.xlu0 %v6030, 48
    %v7494 = vpop.permute.xlu0 %7493
    %7495 = vrot.lane.b32.xlu0 %v6032, 48
    %v7496 = vpop.permute.xlu0 %7495
    %7497 = vrot.lane.b32.xlu0 %v6033, 48
    %v7498 = vpop.permute.xlu0 %7497
    %7499 = vrot.lane.b32.xlu0 %v6035, 48
    %v7500 = vpop.permute.xlu0 %7499
    %7501 = vrot.lane.b32.xlu0 %v6036, 48
    %v7502 = vpop.permute.xlu0 %7501
    %7503 = vrot.lane.b32.xlu0 %v6038, 48
    %v7504 = vpop.permute.xlu0 %7503
    %7505 = vrot.lane.b32.xlu0 %v6039, 48
    %v7506 = vpop.permute.xlu0 %7505
    %7507 = vrot.lane.b32.xlu0 %v6041, 48
    %v7508 = vpop.permute.xlu0 %7507
    %7509 = vrot.lane.b32.xlu0 %v6042, 48
    %v7510 = vpop.permute.xlu0 %7509
    %7511 = vrot.lane.b32.xlu0 %v6044, 48
    %v7512 = vpop.permute.xlu0 %7511
    %7513 = vrot.lane.b32.xlu0 %v6045, 48
    %v7514 = vpop.permute.xlu0 %7513
    %7515 = vrot.lane.b32.xlu0 %v6047, 48
    %v7516 = vpop.permute.xlu0 %7515
    %7517 = vrot.lane.b32.xlu0 %v6048, 48
    %v7518 = vpop.permute.xlu0 %7517
    %7519 = vrot.lane.b32.xlu0 %v6050, 48
    %v7520 = vpop.permute.xlu0 %7519
    %7521 = vrot.lane.b32.xlu0 %v6051, 48
    %v7522 = vpop.permute.xlu0 %7521
    %7523 = vrot.lane.b32.xlu0 %v6053, 48
    %v7524 = vpop.permute.xlu0 %7523
    %7525 = vrot.lane.b32.xlu0 %v6054, 48
    %v7526 = vpop.permute.xlu0 %7525
    %7527 = vrot.lane.b32.xlu0 0.0, 48
    %v7528 = vpop.permute.xlu0 %7527
    %7529 = vrot.lane.b32.xlu0 %v6059, 48
    %v7530 = vpop.permute.xlu0 %7529
    %7531 = vrot.lane.b32.xlu0 %v6060, 48
    %v7532 = vpop.permute.xlu0 %7531
    %7533 = vrot.lane.b32.xlu0 %v6062, 48
    %v7534 = vpop.permute.xlu0 %7533
    %7535 = vrot.lane.b32.xlu0 %v6063, 48
    %v7536 = vpop.permute.xlu0 %7535
    %7537 = vrot.lane.b32.xlu0 %v6065, 48
    %v7538 = vpop.permute.xlu0 %7537
    %7539 = vrot.lane.b32.xlu0 %v6066, 48
    %v7540 = vpop.permute.xlu0 %7539
    %7541 = vrot.lane.b32.xlu0 %v6068, 48
    %v7542 = vpop.permute.xlu0 %7541
    %7543 = vrot.lane.b32.xlu0 %v6069, 48
    %v7544 = vpop.permute.xlu0 %7543
    %7545 = vrot.lane.b32.xlu0 %v6071, 48
    %v7546 = vpop.permute.xlu0 %7545
    %7547 = vrot.lane.b32.xlu0 %v6072, 48
    %v7548 = vpop.permute.xlu0 %7547
    %7549 = vrot.lane.b32.xlu0 %v6074, 48
    %v7550 = vpop.permute.xlu0 %7549
    %7551 = vrot.lane.b32.xlu0 %v6075, 48
    %v7552 = vpop.permute.xlu0 %7551
    %7553 = vrot.lane.b32.xlu0 %v6077, 48
    %v7554 = vpop.permute.xlu0 %7553
    %7555 = vrot.lane.b32.xlu0 %v6078, 48
    %v7556 = vpop.permute.xlu0 %7555
    %7557 = vrot.lane.b32.xlu0 %v6080, 48
    %v7558 = vpop.permute.xlu0 %7557
    %7559 = vrot.lane.b32.xlu0 %v6081, 48
    %v7560 = vpop.permute.xlu0 %7559
    %7561 = vrot.lane.b32.xlu0 %v6083, 48
    %v7562 = vpop.permute.xlu0 %7561
    %7563 = vrot.lane.b32.xlu0 %v6084, 48
    %v7564 = vpop.permute.xlu0 %7563
    %7565 = vrot.lane.b32.xlu0 %v6086, 48
    %v7566 = vpop.permute.xlu0 %7565
    %7567 = vrot.lane.b32.xlu0 %v6087, 48
    %v7568 = vpop.permute.xlu0 %7567
    %7569 = vrot.lane.b32.xlu0 %v6089, 48
    %v7570 = vpop.permute.xlu0 %7569
    %7571 = vrot.lane.b32.xlu0 %v6090, 48
    %v7572 = vpop.permute.xlu0 %7571
    %7573 = vrot.lane.b32.xlu0 %v6092, 48
    %v7574 = vpop.permute.xlu0 %7573
    %7575 = vrot.lane.b32.xlu0 %v6093, 48
    %v7576 = vpop.permute.xlu0 %7575
    %7577 = vrot.lane.b32.xlu0 %v6095, 48
    %v7578 = vpop.permute.xlu0 %7577
    %7579 = vrot.lane.b32.xlu0 %v6096, 48
    %v7580 = vpop.permute.xlu0 %7579
    %7581 = vrot.lane.b32.xlu0 %v6098, 48
    %v7582 = vpop.permute.xlu0 %7581
    %7583 = vrot.lane.b32.xlu0 %v6099, 48
    %v7584 = vpop.permute.xlu0 %7583
    %7585 = vrot.lane.b32.xlu0 %v6101, 48
    %v7586 = vpop.permute.xlu0 %7585
    %7587 = vrot.lane.b32.xlu0 %v6102, 48
    %v7588 = vpop.permute.xlu0 %7587
    %7650 = vrot.lane.b32.xlu0 %v6204, 56
    %v7651 = vpop.permute.xlu0 %7650
    %7652 = vrot.lane.b32.xlu0 %v6206, 56
    %v7653 = vpop.permute.xlu0 %7652
    %7654 = vrot.lane.b32.xlu0 %v6209, 56
    %v7655 = vpop.permute.xlu0 %7654
    %7656 = vrot.lane.b32.xlu0 %v6211, 56
    %v7657 = vpop.permute.xlu0 %7656
    %7658 = vrot.lane.b32.xlu0 %v6214, 56
    %v7659 = vpop.permute.xlu0 %7658
    %7660 = vrot.lane.b32.xlu0 %v6216, 56
    %v7661 = vpop.permute.xlu0 %7660
    %7662 = vrot.lane.b32.xlu0 %v6219, 56
    %v7663 = vpop.permute.xlu0 %7662
    %7664 = vrot.lane.b32.xlu0 %v6221, 56
    %v7665 = vpop.permute.xlu0 %7664
    %7666 = vrot.lane.b32.xlu0 %v6224, 56
    %v7667 = vpop.permute.xlu0 %7666
    %7668 = vrot.lane.b32.xlu0 %v6226, 56
    %v7669 = vpop.permute.xlu0 %7668
    %7670 = vrot.lane.b32.xlu0 %v6229, 56
    %v7671 = vpop.permute.xlu0 %7670
    %7672 = vrot.lane.b32.xlu0 %v6231, 56
    %v7673 = vpop.permute.xlu0 %7672
    %7674 = vrot.lane.b32.xlu0 %v6234, 56
    %v7675 = vpop.permute.xlu0 %7674
    %7676 = vrot.lane.b32.xlu0 %v6236, 56
    %v7677 = vpop.permute.xlu0 %7676
    %7678 = vrot.lane.b32.xlu0 %v6239, 56
    %v7679 = vpop.permute.xlu0 %7678
    %7680 = vrot.lane.b32.xlu0 %v6241, 56
    %v7681 = vpop.permute.xlu0 %7680
    %7682 = vrot.lane.b32.xlu0 %v6244, 56
    %v7683 = vpop.permute.xlu0 %7682
    %7684 = vrot.lane.b32.xlu0 %v6246, 56
    %v7685 = vpop.permute.xlu0 %7684
    %7686 = vrot.lane.b32.xlu0 %v6249, 56
    %v7687 = vpop.permute.xlu0 %7686
    %7688 = vrot.lane.b32.xlu0 %v6251, 56
    %v7689 = vpop.permute.xlu0 %7688
    %7690 = vrot.lane.b32.xlu0 %v6254, 56
    %v7691 = vpop.permute.xlu0 %7690
    %7692 = vrot.lane.b32.xlu0 %v6256, 56
    %v7693 = vpop.permute.xlu0 %7692
    %7694 = vrot.lane.b32.xlu0 %v6259, 56
    %v7695 = vpop.permute.xlu0 %7694
    %7696 = vrot.lane.b32.xlu0 %v6261, 56
    %v7697 = vpop.permute.xlu0 %7696
    %7698 = vrot.lane.b32.xlu0 %v6264, 56
    %v7699 = vpop.permute.xlu0 %7698
    %7700 = vrot.lane.b32.xlu0 %v6266, 56
    %v7701 = vpop.permute.xlu0 %7700
    %7702 = vrot.lane.b32.xlu0 %v6269, 56
    %v7703 = vpop.permute.xlu0 %7702
    %7704 = vrot.lane.b32.xlu0 %v6271, 56
    %v7705 = vpop.permute.xlu0 %7704
    %7706 = vrot.lane.b32.xlu0 %v6507, 56
    %v7707 = vpop.permute.xlu0 %7706
    %7708 = vrot.lane.b32.xlu0 %v6509, 56
    %v7709 = vpop.permute.xlu0 %7708
    %7710 = vrot.lane.b32.xlu0 %v6196, 56
    %v7711 = vpop.permute.xlu0 %7710
    %7712 = vrot.lane.b32.xlu0 %v6279, 56
    %v7713 = vpop.permute.xlu0 %7712
    %7714 = vrot.lane.b32.xlu0 %v6281, 56
    %v7715 = vpop.permute.xlu0 %7714
    %7716 = vrot.lane.b32.xlu0 %v6284, 56
    %v7717 = vpop.permute.xlu0 %7716
    %7718 = vrot.lane.b32.xlu0 %v6286, 56
    %v7719 = vpop.permute.xlu0 %7718
    %7720 = vrot.lane.b32.xlu0 %v6289, 56
    %v7721 = vpop.permute.xlu0 %7720
    %7722 = vrot.lane.b32.xlu0 %v6291, 56
    %v7723 = vpop.permute.xlu0 %7722
    %7724 = vrot.lane.b32.xlu0 %v6294, 56
    %v7725 = vpop.permute.xlu0 %7724
    %7726 = vrot.lane.b32.xlu0 %v6296, 56
    %v7727 = vpop.permute.xlu0 %7726
    %7728 = vrot.lane.b32.xlu0 %v6299, 56
    %v7729 = vpop.permute.xlu0 %7728
    %7730 = vrot.lane.b32.xlu0 %v6301, 56
    %v7731 = vpop.permute.xlu0 %7730
    %7732 = vrot.lane.b32.xlu0 %v6304, 56
    %v7733 = vpop.permute.xlu0 %7732
    %7734 = vrot.lane.b32.xlu0 %v6306, 56
    %v7735 = vpop.permute.xlu0 %7734
    %7736 = vrot.lane.b32.xlu0 %v6309, 56
    %v7737 = vpop.permute.xlu0 %7736
    %7738 = vrot.lane.b32.xlu0 %v6311, 56
    %v7739 = vpop.permute.xlu0 %7738
    %7740 = vrot.lane.b32.xlu0 %v6314, 56
    %v7741 = vpop.permute.xlu0 %7740
    %7742 = vrot.lane.b32.xlu0 %v6316, 56
    %v7743 = vpop.permute.xlu0 %7742
    %7744 = vrot.lane.b32.xlu0 %v6319, 56
    %v7745 = vpop.permute.xlu0 %7744
    %7746 = vrot.lane.b32.xlu0 %v6321, 56
    %v7747 = vpop.permute.xlu0 %7746
    %7748 = vrot.lane.b32.xlu0 %v6324, 56
    %v7749 = vpop.permute.xlu0 %7748
    %7750 = vrot.lane.b32.xlu0 %v6326, 56
    %v7751 = vpop.permute.xlu0 %7750
    %7752 = vrot.lane.b32.xlu0 %v6329, 56
    %v7753 = vpop.permute.xlu0 %7752
    %7754 = vrot.lane.b32.xlu0 %v6331, 56
    %v7755 = vpop.permute.xlu0 %7754
    %7756 = vrot.lane.b32.xlu0 %v6334, 56
    %v7757 = vpop.permute.xlu0 %7756
    %7758 = vrot.lane.b32.xlu0 %v6336, 56
    %v7759 = vpop.permute.xlu0 %7758
    %7760 = vrot.lane.b32.xlu0 %v6339, 56
    %v7761 = vpop.permute.xlu0 %7760
    %7762 = vrot.lane.b32.xlu0 %v6341, 56
    %v7763 = vpop.permute.xlu0 %7762
    %7764 = vrot.lane.b32.xlu0 %v6344, 56
    %v7765 = vpop.permute.xlu0 %7764
    %7766 = vrot.lane.b32.xlu0 %v6346, 56
    %v7767 = vpop.permute.xlu0 %7766
    %7768 = vrot.lane.b32.xlu0 %v6512, 56
    %v7769 = vpop.permute.xlu0 %7768
    %7770 = vrot.lane.b32.xlu0 %v6514, 56
    %v7771 = vpop.permute.xlu0 %7770
    %7833 = vrot.lane.b32.xlu0 %v6356, 64
    %v7834 = vpop.permute.xlu0 %7833
    %7835 = vrot.lane.b32.xlu0 %v6358, 64
    %v7836 = vpop.permute.xlu0 %7835
    %7837 = vrot.lane.b32.xlu0 %v6361, 64
    %v7838 = vpop.permute.xlu0 %7837
    %7839 = vrot.lane.b32.xlu0 %v6363, 64
    %v7840 = vpop.permute.xlu0 %7839
    %7841 = vrot.lane.b32.xlu0 %v6366, 64
    %v7842 = vpop.permute.xlu0 %7841
    %7843 = vrot.lane.b32.xlu0 %v6368, 64
    %v7844 = vpop.permute.xlu0 %7843
    %7845 = vrot.lane.b32.xlu0 %v6371, 64
    %v7846 = vpop.permute.xlu0 %7845
    %7847 = vrot.lane.b32.xlu0 %v6373, 64
    %v7848 = vpop.permute.xlu0 %7847
    %7849 = vrot.lane.b32.xlu0 %v6376, 64
    %v7850 = vpop.permute.xlu0 %7849
    %7851 = vrot.lane.b32.xlu0 %v6378, 64
    %v7852 = vpop.permute.xlu0 %7851
    %7853 = vrot.lane.b32.xlu0 %v6381, 64
    %v7854 = vpop.permute.xlu0 %7853
    %7855 = vrot.lane.b32.xlu0 %v6383, 64
    %v7856 = vpop.permute.xlu0 %7855
    %7857 = vrot.lane.b32.xlu0 %v6386, 64
    %v7858 = vpop.permute.xlu0 %7857
    %7859 = vrot.lane.b32.xlu0 %v6388, 64
    %v7860 = vpop.permute.xlu0 %7859
    %7861 = vrot.lane.b32.xlu0 %v6391, 64
    %v7862 = vpop.permute.xlu0 %7861
    %7863 = vrot.lane.b32.xlu0 %v6393, 64
    %v7864 = vpop.permute.xlu0 %7863
    %7865 = vrot.lane.b32.xlu0 %v6396, 64
    %v7866 = vpop.permute.xlu0 %7865
    %7867 = vrot.lane.b32.xlu0 %v6398, 64
    %v7868 = vpop.permute.xlu0 %7867
    %7869 = vrot.lane.b32.xlu0 %v6401, 64
    %v7870 = vpop.permute.xlu0 %7869
    %7871 = vrot.lane.b32.xlu0 %v6403, 64
    %v7872 = vpop.permute.xlu0 %7871
    %7873 = vrot.lane.b32.xlu0 %v6406, 64
    %v7874 = vpop.permute.xlu0 %7873
    %7875 = vrot.lane.b32.xlu0 %v6408, 64
    %v7876 = vpop.permute.xlu0 %7875
    %7877 = vrot.lane.b32.xlu0 %v6411, 64
    %v7878 = vpop.permute.xlu0 %7877
    %7879 = vrot.lane.b32.xlu0 %v6413, 64
    %v7880 = vpop.permute.xlu0 %7879
    %7881 = vrot.lane.b32.xlu0 %v6416, 64
    %v7882 = vpop.permute.xlu0 %7881
    %7883 = vrot.lane.b32.xlu0 %v6418, 64
    %v7884 = vpop.permute.xlu0 %7883
    %7885 = vrot.lane.b32.xlu0 %v6421, 64
    %v7886 = vpop.permute.xlu0 %7885
    %7887 = vrot.lane.b32.xlu0 %v6423, 64
    %v7888 = vpop.permute.xlu0 %7887
    %7889 = vrot.lane.b32.xlu0 %v6517, 64
    %v7890 = vpop.permute.xlu0 %7889
    %7891 = vrot.lane.b32.xlu0 %v6519, 64
    %v7892 = vpop.permute.xlu0 %7891
    %7893 = vrot.lane.b32.xlu0 %v6348, 64
    %v7894 = vpop.permute.xlu0 %7893
    %7895 = vrot.lane.b32.xlu0 %v6431, 64
    %v7896 = vpop.permute.xlu0 %7895
    %7897 = vrot.lane.b32.xlu0 %v6433, 64
    %v7898 = vpop.permute.xlu0 %7897
    %7899 = vrot.lane.b32.xlu0 %v6436, 64
    %v7900 = vpop.permute.xlu0 %7899
    %7901 = vrot.lane.b32.xlu0 %v6438, 64
    %v7902 = vpop.permute.xlu0 %7901
    %7903 = vrot.lane.b32.xlu0 %v6441, 64
    %v7904 = vpop.permute.xlu0 %7903
    %7905 = vrot.lane.b32.xlu0 %v6443, 64
    %v7906 = vpop.permute.xlu0 %7905
    %7907 = vrot.lane.b32.xlu0 %v6446, 64
    %v7908 = vpop.permute.xlu0 %7907
    %7909 = vrot.lane.b32.xlu0 %v6448, 64
    %v7910 = vpop.permute.xlu0 %7909
    %7911 = vrot.lane.b32.xlu0 %v6451, 64
    %v7912 = vpop.permute.xlu0 %7911
    %7913 = vrot.lane.b32.xlu0 %v6453, 64
    %v7914 = vpop.permute.xlu0 %7913
    %7915 = vrot.lane.b32.xlu0 %v6456, 64
    %v7916 = vpop.permute.xlu0 %7915
    %7917 = vrot.lane.b32.xlu0 %v6458, 64
    %v7918 = vpop.permute.xlu0 %7917
    %7919 = vrot.lane.b32.xlu0 %v6461, 64
    %v7920 = vpop.permute.xlu0 %7919
    %7921 = vrot.lane.b32.xlu0 %v6463, 64
    %v7922 = vpop.permute.xlu0 %7921
    %7923 = vrot.lane.b32.xlu0 %v6466, 64
    %v7924 = vpop.permute.xlu0 %7923
    %7925 = vrot.lane.b32.xlu0 %v6468, 64
    %v7926 = vpop.permute.xlu0 %7925
    %7927 = vrot.lane.b32.xlu0 %v6471, 64
    %v7928 = vpop.permute.xlu0 %7927
    %7929 = vrot.lane.b32.xlu0 %v6473, 64
    %v7930 = vpop.permute.xlu0 %7929
    %7931 = vrot.lane.b32.xlu0 %v6476, 64
    %v7932 = vpop.permute.xlu0 %7931
    %7933 = vrot.lane.b32.xlu0 %v6478, 64
    %v7934 = vpop.permute.xlu0 %7933
    %7935 = vrot.lane.b32.xlu0 %v6481, 64
    %v7936 = vpop.permute.xlu0 %7935
    %7937 = vrot.lane.b32.xlu0 %v6483, 64
    %v7938 = vpop.permute.xlu0 %7937
    %7939 = vrot.lane.b32.xlu0 %v6486, 64
    %v7940 = vpop.permute.xlu0 %7939
    %7941 = vrot.lane.b32.xlu0 %v6488, 64
    %v7942 = vpop.permute.xlu0 %7941
    %7943 = vrot.lane.b32.xlu0 %v6491, 64
    %v7944 = vpop.permute.xlu0 %7943
    %7945 = vrot.lane.b32.xlu0 %v6493, 64
    %v7946 = vpop.permute.xlu0 %7945
    %7947 = vrot.lane.b32.xlu0 %v6496, 64
    %v7948 = vpop.permute.xlu0 %7947
    %7949 = vrot.lane.b32.xlu0 %v6498, 64
    %v7950 = vpop.permute.xlu0 %7949
    %7951 = vrot.lane.b32.xlu0 %v6522, 64
    %v7952 = vpop.permute.xlu0 %7951
    %7953 = vrot.lane.b32.xlu0 %v6524, 64
    %v7954 = vpop.permute.xlu0 %7953
    %v8016 = vsel %vm3610, 0.0, %v6526
    %v8017 = vsel %vm3610, %v6008, %v6528
    %v8018 = vsel %vm3610, %v6009, %v6530
    %v8019 = vsel %vm3610, %v6011, %v6532
    %v8020 = vsel %vm3610, %v6012, %v6534
    %v8021 = vsel %vm3610, %v6014, %v6536
    %v8022 = vsel %vm3610, %v6015, %v6538
    %v8023 = vsel %vm3610, %v6017, %v6540
    %v8024 = vsel %vm3610, %v6018, %v6542
    %v8025 = vsel %vm3610, %v6020, %v6544
    %v8026 = vsel %vm3610, %v6021, %v6546
    %v8027 = vsel %vm3610, %v6023, %v6548
    %v8028 = vsel %vm3610, %v6024, %v6550
    %v8029 = vsel %vm3610, %v6026, %v6552
    %v8030 = vsel %vm3610, %v6027, %v6554
    %v8031 = vsel %vm3610, %v6029, %v6556
    %v8032 = vsel %vm3610, %v6030, %v6558
    %v8033 = vsel %vm3610, %v6032, %v6560
    %v8034 = vsel %vm3610, %v6033, %v6562
    %v8035 = vsel %vm3610, %v6035, %v6564
    %v8036 = vsel %vm3610, %v6036, %v6566
    %v8037 = vsel %vm3610, %v6038, %v6568
    %v8038 = vsel %vm3610, %v6039, %v6570
    %v8039 = vsel %vm3610, %v6041, %v6572
    %v8040 = vsel %vm3610, %v6042, %v6574
    %v8041 = vsel %vm3610, %v6044, %v6576
    %v8042 = vsel %vm3610, %v6045, %v6578
    %v8043 = vsel %vm3610, %v6047, %v6580
    %v8044 = vsel %vm3610, %v6048, %v6582
    %v8045 = vsel %vm3610, %v6050, %v6584
    %v8046 = vsel %vm3610, %v6051, %v6586
    %v8047 = vsel %vm3610, %v6056, %v6588
    %v8048 = vsel %vm3610, %v6057, %v6590
    %v8049 = vsel %vm3610, %v6059, %v6592
    %v8050 = vsel %vm3610, %v6060, %v6594
    %v8051 = vsel %vm3610, %v6062, %v6596
    %v8052 = vsel %vm3610, %v6063, %v6598
    %v8053 = vsel %vm3610, %v6065, %v6600
    %v8054 = vsel %vm3610, %v6066, %v6602
    %v8055 = vsel %vm3610, %v6068, %v6604
    %v8056 = vsel %vm3610, %v6069, %v6606
    %v8057 = vsel %vm3610, %v6071, %v6608
    %v8058 = vsel %vm3610, %v6072, %v6610
    %v8059 = vsel %vm3610, %v6074, %v6612
    %v8060 = vsel %vm3610, %v6075, %v6614
    %v8061 = vsel %vm3610, %v6077, %v6616
    %v8062 = vsel %vm3610, %v6078, %v6618
    %v8063 = vsel %vm3610, %v6080, %v6620
    %v8064 = vsel %vm3610, %v6081, %v6622
    %v8065 = vsel %vm3610, %v6083, %v6624
    %v8066 = vsel %vm3610, %v6084, %v6626
    %v8067 = vsel %vm3610, %v6086, %v6628
    %v8068 = vsel %vm3610, %v6087, %v6630
    %v8069 = vsel %vm3610, %v6089, %v6632
    %v8070 = vsel %vm3610, %v6090, %v6634
    %v8071 = vsel %vm3610, %v6092, %v6636
    %v8072 = vsel %vm3610, %v6093, %v6638
    %v8073 = vsel %vm3610, %v6095, %v6640
    %v8074 = vsel %vm3610, %v6096, %v6642
    %v8075 = vsel %vm3610, %v6098, %v6644
    %v8076 = vsel %vm3610, %v6099, %v6646
    %v8077 = vsel %vm3828, %v8016, %v6709
    %v8078 = vsel %vm3828, %v8017, %v6711
    %v8079 = vsel %vm3828, %v8018, %v6713
    %v8080 = vsel %vm3828, %v8019, %v6715
    %v8081 = vsel %vm3828, %v8020, %v6717
    %v8082 = vsel %vm3828, %v8021, %v6719
    %v8083 = vsel %vm3828, %v8022, %v6721
    %v8084 = vsel %vm3828, %v8023, %v6723
    %v8085 = vsel %vm3828, %v8024, %v6725
    %v8086 = vsel %vm3828, %v8025, %v6727
    %v8087 = vsel %vm3828, %v8026, %v6729
    %v8088 = vsel %vm3828, %v8027, %v6731
    %v8089 = vsel %vm3828, %v8028, %v6733
    %v8090 = vsel %vm3828, %v8029, %v6735
    %v8091 = vsel %vm3828, %v8030, %v6737
    %v8092 = vsel %vm3828, %v8031, %v6739
    %v8093 = vsel %vm3828, %v8032, %v6741
    %v8094 = vsel %vm3828, %v8033, %v6743
    %v8095 = vsel %vm3828, %v8034, %v6745
    %v8096 = vsel %vm3828, %v8035, %v6747
    %v8097 = vsel %vm3828, %v8036, %v6749
    %v8098 = vsel %vm3828, %v8037, %v6751
    %v8099 = vsel %vm3828, %v8038, %v6753
    %v8100 = vsel %vm3828, %v8039, %v6755
    %v8101 = vsel %vm3828, %v8040, %v6757
    %v8102 = vsel %vm3828, %v8041, %v6759
    %v8103 = vsel %vm3828, %v8042, %v6761
    %v8104 = vsel %vm3828, %v8043, %v6763
    %v8105 = vsel %vm3828, %v8044, %v6765
    %v8106 = vsel %vm3828, %v8045, %v6767
    %v8107 = vsel %vm3828, %v8046, %v6769
    %v8108 = vsel %vm3828, %v8047, %v6771
    %v8109 = vsel %vm3828, %v8048, %v6773
    %v8110 = vsel %vm3828, %v8049, %v6775
    %v8111 = vsel %vm3828, %v8050, %v6777
    %v8112 = vsel %vm3828, %v8051, %v6779
    %v8113 = vsel %vm3828, %v8052, %v6781
    %v8114 = vsel %vm3828, %v8053, %v6783
    %v8115 = vsel %vm3828, %v8054, %v6785
    %v8116 = vsel %vm3828, %v8055, %v6787
    %v8117 = vsel %vm3828, %v8056, %v6789
    %v8118 = vsel %vm3828, %v8057, %v6791
    %v8119 = vsel %vm3828, %v8058, %v6793
    %v8120 = vsel %vm3828, %v8059, %v6795
    %v8121 = vsel %vm3828, %v8060, %v6797
    %v8122 = vsel %vm3828, %v8061, %v6799
    %v8123 = vsel %vm3828, %v8062, %v6801
    %v8124 = vsel %vm3828, %v8063, %v6803
    %v8125 = vsel %vm3828, %v8064, %v6805
    %v8126 = vsel %vm3828, %v8065, %v6807
    %v8127 = vsel %vm3828, %v8066, %v6809
    %v8128 = vsel %vm3828, %v8067, %v6811
    %v8129 = vsel %vm3828, %v8068, %v6813
    %v8130 = vsel %vm3828, %v8069, %v6815
    %v8131 = vsel %vm3828, %v8070, %v6817
    %v8132 = vsel %vm3828, %v8071, %v6819
    %v8133 = vsel %vm3828, %v8072, %v6821
    %v8134 = vsel %vm3828, %v8073, %v6823
    %v8135 = vsel %vm3828, %v8074, %v6825
    %v8136 = vsel %vm3828, %v8075, %v6827
    %v8137 = vsel %vm3828, %v8076, %v6829
    %v8138 = vsel %vm4046, %v8077, %v6892
    %v8139 = vsel %vm4046, %v8077, %v6894
    %v8140 = vsel %vm4046, %v8078, %v6896
    %v8141 = vsel %vm4046, %v8079, %v6898
    %v8142 = vsel %vm4046, %v8080, %v6900
    %v8143 = vsel %vm4046, %v8081, %v6902
    %v8144 = vsel %vm4046, %v8082, %v6904
    %v8145 = vsel %vm4046, %v8083, %v6906
    %v8146 = vsel %vm4046, %v8084, %v6908
    %v8147 = vsel %vm4046, %v8085, %v6910
    %v8148 = vsel %vm4046, %v8086, %v6912
    %v8149 = vsel %vm4046, %v8087, %v6914
    %v8150 = vsel %vm4046, %v8088, %v6916
    %v8151 = vsel %vm4046, %v8089, %v6918
    %v8152 = vsel %vm4046, %v8090, %v6920
    %v8153 = vsel %vm4046, %v8091, %v6922
    %v8154 = vsel %vm4046, %v8092, %v6924
    %v8155 = vsel %vm4046, %v8093, %v6926
    %v8156 = vsel %vm4046, %v8094, %v6928
    %v8157 = vsel %vm4046, %v8095, %v6930
    %v8158 = vsel %vm4046, %v8096, %v6932
    %v8159 = vsel %vm4046, %v8097, %v6934
    %v8160 = vsel %vm4046, %v8098, %v6936
    %v8161 = vsel %vm4046, %v8099, %v6938
    %v8162 = vsel %vm4046, %v8100, %v6940
    %v8163 = vsel %vm4046, %v8101, %v6942
    %v8164 = vsel %vm4046, %v8102, %v6944
    %v8165 = vsel %vm4046, %v8103, %v6946
    %v8166 = vsel %vm4046, %v8104, %v6948
    %v8167 = vsel %vm4046, %v8105, %v6950
    %v8168 = vsel %vm4046, %v8106, %v6952
    %v8169 = vsel %vm4046, %v8107, %v6954
    %v8170 = vsel %vm4046, %v8077, %v6956
    %v8171 = vsel %vm4046, %v8077, %v6958
    %v8172 = vsel %vm4046, %v8108, %v6960
    %v8173 = vsel %vm4046, %v8109, %v6962
    %v8174 = vsel %vm4046, %v8110, %v6964
    %v8175 = vsel %vm4046, %v8111, %v6966
    %v8176 = vsel %vm4046, %v8112, %v6968
    %v8177 = vsel %vm4046, %v8113, %v6970
    %v8178 = vsel %vm4046, %v8114, %v6972
    %v8179 = vsel %vm4046, %v8115, %v6974
    %v8180 = vsel %vm4046, %v8116, %v6976
    %v8181 = vsel %vm4046, %v8117, %v6978
    %v8182 = vsel %vm4046, %v8118, %v6980
    %v8183 = vsel %vm4046, %v8119, %v6982
    %v8184 = vsel %vm4046, %v8120, %v6984
    %v8185 = vsel %vm4046, %v8121, %v6986
    %v8186 = vsel %vm4046, %v8122, %v6988
    %v8187 = vsel %vm4046, %v8123, %v6990
    %v8188 = vsel %vm4046, %v8124, %v6992
    %v8189 = vsel %vm4046, %v8125, %v6994
    %v8190 = vsel %vm4046, %v8126, %v6996
    %v8191 = vsel %vm4046, %v8127, %v6998
    %v8192 = vsel %vm4046, %v8128, %v7000
    %v8193 = vsel %vm4046, %v8129, %v7002
    %v8194 = vsel %vm4046, %v8130, %v7004
    %v8195 = vsel %vm4046, %v8131, %v7006
    %v8196 = vsel %vm4046, %v8132, %v7008
    %v8197 = vsel %vm4046, %v8133, %v7010
    %v8198 = vsel %vm4046, %v8134, %v7012
    %v8199 = vsel %vm4046, %v8135, %v7014
    %v8200 = vsel %vm4046, %v8136, %v7016
    %v8201 = vsel %vm4046, %v8137, %v7018
    %v8202 = vsel %vm4264, %v8138, %v7084
    %v8203 = vsel %vm4264, %v8139, %v7086
    %v8204 = vsel %vm4264, %v8140, %v7088
    %v8205 = vsel %vm4264, %v8141, %v7090
    %v8206 = vsel %vm4264, %v8142, %v7092
    %v8207 = vsel %vm4264, %v8143, %v7094
    %v8208 = vsel %vm4264, %v8144, %v7096
    %v8209 = vsel %vm4264, %v8145, %v7098
    %v8210 = vsel %vm4264, %v8146, %v7100
    %v8211 = vsel %vm4264, %v8147, %v7102
    %v8212 = vsel %vm4264, %v8148, %v7104
    %v8213 = vsel %vm4264, %v8149, %v7106
    %v8214 = vsel %vm4264, %v8150, %v7108
    %v8215 = vsel %vm4264, %v8151, %v7110
    %v8216 = vsel %vm4264, %v8152, %v7112
    %v8217 = vsel %vm4264, %v8153, %v7114
    %v8218 = vsel %vm4264, %v8154, %v7116
    %v8219 = vsel %vm4264, %v8155, %v7118
    %v8220 = vsel %vm4264, %v8156, %v7120
    %v8221 = vsel %vm4264, %v8157, %v7122
    %v8222 = vsel %vm4264, %v8158, %v7124
    %v8223 = vsel %vm4264, %v8159, %v7126
    %v8224 = vsel %vm4264, %v8160, %v7128
    %v8225 = vsel %vm4264, %v8161, %v7130
    %v8226 = vsel %vm4264, %v8162, %v7132
    %v8227 = vsel %vm4264, %v8163, %v7134
    %v8228 = vsel %vm4264, %v8164, %v7136
    %v8229 = vsel %vm4264, %v8165, %v7138
    %v8230 = vsel %vm4264, %v8166, %v7140
    %v8231 = vsel %vm4264, %v8167, %v7142
    %v8232 = vsel %vm4264, %v8168, %v7144
    %v8233 = vsel %vm4264, %v8169, %v7146
    %v8234 = vsel %vm4264, %v8170, %v7148
    %v8235 = vsel %vm4264, %v8171, %v7150
    %v8236 = vsel %vm4264, %v8172, %v7152
    %v8237 = vsel %vm4264, %v8173, %v7154
    %v8238 = vsel %vm4264, %v8174, %v7156
    %v8239 = vsel %vm4264, %v8175, %v7158
    %v8240 = vsel %vm4264, %v8176, %v7160
    %v8241 = vsel %vm4264, %v8177, %v7162
    %v8242 = vsel %vm4264, %v8178, %v7164
    %v8243 = vsel %vm4264, %v8179, %v7166
    %v8244 = vsel %vm4264, %v8180, %v7168
    %v8245 = vsel %vm4264, %v8181, %v7170
    %v8246 = vsel %vm4264, %v8182, %v7172
    %v8247 = vsel %vm4264, %v8183, %v7174
    %v8248 = vsel %vm4264, %v8184, %v7176
    %v8249 = vsel %vm4264, %v8185, %v7178
    %v8250 = vsel %vm4264, %v8186, %v7180
    %v8251 = vsel %vm4264, %v8187, %v7182
    %v8252 = vsel %vm4264, %v8188, %v7184
    %v8253 = vsel %vm4264, %v8189, %v7186
    %v8254 = vsel %vm4264, %v8190, %v7188
    %v8255 = vsel %vm4264, %v8191, %v7190
    %v8256 = vsel %vm4264, %v8192, %v7192
    %v8257 = vsel %vm4264, %v8193, %v7194
    %v8258 = vsel %vm4264, %v8194, %v7196
    %v8259 = vsel %vm4264, %v8195, %v7198
    %v8260 = vsel %vm4264, %v8196, %v7200
    %v8261 = vsel %vm4264, %v8197, %v7202
    %v8262 = vsel %vm4264, %v8198, %v7204
    %v8263 = vsel %vm4264, %v8199, %v7206
    %v8264 = vsel %vm4264, %v8200, %v7208
    %v8265 = vsel %vm4264, %v8201, %v7210
    %vm8266 = vcmask 326656
    %v8267 = vsel %vm8266, %v8202, %v7276
    %v8268 = vsel %vm8266, %v8203, %v7278
    %v8269 = vsel %vm8266, %v8204, %v7280
    %v8270 = vsel %vm8266, %v8205, %v7282
    %v8271 = vsel %vm8266, %v8206, %v7284
    %v8272 = vsel %vm8266, %v8207, %v7286
    %v8273 = vsel %vm8266, %v8208, %v7288
    %v8274 = vsel %vm8266, %v8209, %v7290
    %v8275 = vsel %vm8266, %v8210, %v7292
    %v8276 = vsel %vm8266, %v8211, %v7294
    %v8277 = vsel %vm8266, %v8212, %v7296
    %v8278 = vsel %vm8266, %v8213, %v7298
    %v8279 = vsel %vm8266, %v8214, %v7300
    %v8280 = vsel %vm8266, %v8215, %v7302
    %v8281 = vsel %vm8266, %v8216, %v7304
    %v8282 = vsel %vm8266, %v8217, %v7306
    %v8283 = vsel %vm8266, %v8218, %v7308
    %v8284 = vsel %vm8266, %v8219, %v7310
    %v8285 = vsel %vm8266, %v8220, %v7312
    %v8286 = vsel %vm8266, %v8221, %v7314
    %v8287 = vsel %vm8266, %v8222, %v7316
    %v8288 = vsel %vm8266, %v8223, %v7318
    %v8289 = vsel %vm8266, %v8224, %v7320
    %v8290 = vsel %vm8266, %v8225, %v7322
    %v8291 = vsel %vm8266, %v8226, %v7324
    %v8292 = vsel %vm8266, %v8227, %v7326
    %v8293 = vsel %vm8266, %v8228, %v7328
    %v8294 = vsel %vm8266, %v8229, %v7330
    %v8295 = vsel %vm8266, %v8230, %v7332
    %v8296 = vsel %vm8266, %v8231, %v7334
    %v8297 = vsel %vm8266, %v8232, %v7336
    %v8298 = vsel %vm8266, %v8233, %v7338
    %v8299 = vsel %vm8266, %v8234, %v7340
    %v8300 = vsel %vm8266, %v8235, %v7342
    %v8301 = vsel %vm8266, %v8236, %v7344
    %v8302 = vsel %vm8266, %v8237, %v7346
    %v8303 = vsel %vm8266, %v8238, %v7348
    %v8304 = vsel %vm8266, %v8239, %v7350
    %v8305 = vsel %vm8266, %v8240, %v7352
    %v8306 = vsel %vm8266, %v8241, %v7354
    %v8307 = vsel %vm8266, %v8242, %v7356
    %v8308 = vsel %vm8266, %v8243, %v7358
    %v8309 = vsel %vm8266, %v8244, %v7360
    %v8310 = vsel %vm8266, %v8245, %v7362
    %v8311 = vsel %vm8266, %v8246, %v7364
    %v8312 = vsel %vm8266, %v8247, %v7366
    %v8313 = vsel %vm8266, %v8248, %v7368
    %v8314 = vsel %vm8266, %v8249, %v7370
    %v8315 = vsel %vm8266, %v8250, %v7372
    %v8316 = vsel %vm8266, %v8251, %v7374
    %v8317 = vsel %vm8266, %v8252, %v7376
    %v8318 = vsel %vm8266, %v8253, %v7378
    %v8319 = vsel %vm8266, %v8254, %v7380
    %v8320 = vsel %vm8266, %v8255, %v7382
    %v8321 = vsel %vm8266, %v8256, %v7384
    %v8322 = vsel %vm8266, %v8257, %v7386
    %v8323 = vsel %vm8266, %v8258, %v7388
    %v8324 = vsel %vm8266, %v8259, %v7390
    %v8325 = vsel %vm8266, %v8260, %v7392
    %v8326 = vsel %vm8266, %v8261, %v7394
    %v8327 = vsel %vm8266, %v8262, %v7396
    %v8328 = vsel %vm8266, %v8263, %v7398
    %v8329 = vsel %vm8266, %v8264, %v7400
    %v8330 = vsel %vm8266, %v8265, %v7402
    %vm8331 = vcmask 392192
    %v8332 = vsel %vm8331, %v8267, %v7468
    %v8333 = vsel %vm8331, %v8268, %v7470
    %v8334 = vsel %vm8331, %v8269, %v7472
    %v8335 = vsel %vm8331, %v8270, %v7474
    %v8336 = vsel %vm8331, %v8271, %v7476
    %v8337 = vsel %vm8331, %v8272, %v7478
    %v8338 = vsel %vm8331, %v8273, %v7480
    %v8339 = vsel %vm8331, %v8274, %v7482
    %v8340 = vsel %vm8331, %v8275, %v7484
    %v8341 = vsel %vm8331, %v8276, %v7486
    %v8342 = vsel %vm8331, %v8277, %v7488
    %v8343 = vsel %vm8331, %v8278, %v7490
    %v8344 = vsel %vm8331, %v8279, %v7492
    %v8345 = vsel %vm8331, %v8280, %v7494
    %v8346 = vsel %vm8331, %v8281, %v7496
    %v8347 = vsel %vm8331, %v8282, %v7498
    %v8348 = vsel %vm8331, %v8283, %v7500
    %v8349 = vsel %vm8331, %v8284, %v7502
    %v8350 = vsel %vm8331, %v8285, %v7504
    %v8351 = vsel %vm8331, %v8286, %v7506
    %v8352 = vsel %vm8331, %v8287, %v7508
    %v8353 = vsel %vm8331, %v8288, %v7510
    %v8354 = vsel %vm8331, %v8289, %v7512
    %v8355 = vsel %vm8331, %v8290, %v7514
    %v8356 = vsel %vm8331, %v8291, %v7516
    %v8357 = vsel %vm8331, %v8292, %v7518
    %v8358 = vsel %vm8331, %v8293, %v7520
    %v8359 = vsel %vm8331, %v8294, %v7522
    %v8360 = vsel %vm8331, %v8295, %v7524
    %v8361 = vsel %vm8331, %v8296, %v7526
    %v8362 = vsel %vm8331, %v8297, %v7528
    %v8363 = vsel %vm8331, %v8298, %v7528
    %v8364 = vsel %vm8331, %v8299, %v7530
    %v8365 = vsel %vm8331, %v8300, %v7532
    %v8366 = vsel %vm8331, %v8301, %v7534
    %v8367 = vsel %vm8331, %v8302, %v7536
    %v8368 = vsel %vm8331, %v8303, %v7538
    %v8369 = vsel %vm8331, %v8304, %v7540
    %v8370 = vsel %vm8331, %v8305, %v7542
    %v8371 = vsel %vm8331, %v8306, %v7544
    %v8372 = vsel %vm8331, %v8307, %v7546
    %v8373 = vsel %vm8331, %v8308, %v7548
    %v8374 = vsel %vm8331, %v8309, %v7550
    %v8375 = vsel %vm8331, %v8310, %v7552
    %v8376 = vsel %vm8331, %v8311, %v7554
    %v8377 = vsel %vm8331, %v8312, %v7556
    %v8378 = vsel %vm8331, %v8313, %v7558
    %v8379 = vsel %vm8331, %v8314, %v7560
    %v8380 = vsel %vm8331, %v8315, %v7562
    %v8381 = vsel %vm8331, %v8316, %v7564
    %v8382 = vsel %vm8331, %v8317, %v7566
    %v8383 = vsel %vm8331, %v8318, %v7568
    %v8384 = vsel %vm8331, %v8319, %v7570
    %v8385 = vsel %vm8331, %v8320, %v7572
    %v8386 = vsel %vm8331, %v8321, %v7574
    %v8387 = vsel %vm8331, %v8322, %v7576
    %v8388 = vsel %vm8331, %v8323, %v7578
    %v8389 = vsel %vm8331, %v8324, %v7580
    %v8390 = vsel %vm8331, %v8325, %v7582
    %v8391 = vsel %vm8331, %v8326, %v7584
    %v8392 = vsel %vm8331, %v8327, %v7586
    %v8393 = vsel %vm8331, %v8328, %v7588
    %v8394 = vsel %vm8331, %v8329, %v7528
    %v8395 = vsel %vm8331, %v8330, %v7528
    %vm8396 = vcmask 457728
    %v8397 = vsel %vm8396, %v8332, %v7651
    %v8398 = vsel %vm8396, %v8333, %v7653
    %v8399 = vsel %vm8396, %v8334, %v7655
    %v8400 = vsel %vm8396, %v8335, %v7657
    %v8401 = vsel %vm8396, %v8336, %v7659
    %v8402 = vsel %vm8396, %v8337, %v7661
    %v8403 = vsel %vm8396, %v8338, %v7663
    %v8404 = vsel %vm8396, %v8339, %v7665
    %v8405 = vsel %vm8396, %v8340, %v7667
    %v8406 = vsel %vm8396, %v8341, %v7669
    %v8407 = vsel %vm8396, %v8342, %v7671
    %v8408 = vsel %vm8396, %v8343, %v7673
    %v8409 = vsel %vm8396, %v8344, %v7675
    %v8410 = vsel %vm8396, %v8345, %v7677
    %v8411 = vsel %vm8396, %v8346, %v7679
    %v8412 = vsel %vm8396, %v8347, %v7681
    %v8413 = vsel %vm8396, %v8348, %v7683
    %v8414 = vsel %vm8396, %v8349, %v7685
    %v8415 = vsel %vm8396, %v8350, %v7687
    %v8416 = vsel %vm8396, %v8351, %v7689
    %v8417 = vsel %vm8396, %v8352, %v7691
    %v8418 = vsel %vm8396, %v8353, %v7693
    %v8419 = vsel %vm8396, %v8354, %v7695
    %v8420 = vsel %vm8396, %v8355, %v7697
    %v8421 = vsel %vm8396, %v8356, %v7699
    %v8422 = vsel %vm8396, %v8357, %v7701
    %v8423 = vsel %vm8396, %v8358, %v7703
    %v8424 = vsel %vm8396, %v8359, %v7705
    %v8425 = vsel %vm8396, %v8360, %v7707
    %v8426 = vsel %vm8396, %v8361, %v7709
    %v8427 = vsel %vm8396, %v8362, %v7711
    %v8428 = vsel %vm8396, %v8363, %v7711
    %v8429 = vsel %vm8396, %v8364, %v7713
    %v8430 = vsel %vm8396, %v8365, %v7715
    %v8431 = vsel %vm8396, %v8366, %v7717
    %v8432 = vsel %vm8396, %v8367, %v7719
    %v8433 = vsel %vm8396, %v8368, %v7721
    %v8434 = vsel %vm8396, %v8369, %v7723
    %v8435 = vsel %vm8396, %v8370, %v7725
    %v8436 = vsel %vm8396, %v8371, %v7727
    %v8437 = vsel %vm8396, %v8372, %v7729
    %v8438 = vsel %vm8396, %v8373, %v7731
    %v8439 = vsel %vm8396, %v8374, %v7733
    %v8440 = vsel %vm8396, %v8375, %v7735
    %v8441 = vsel %vm8396, %v8376, %v7737
    %v8442 = vsel %vm8396, %v8377, %v7739
    %v8443 = vsel %vm8396, %v8378, %v7741
    %v8444 = vsel %vm8396, %v8379, %v7743
    %v8445 = vsel %vm8396, %v8380, %v7745
    %v8446 = vsel %vm8396, %v8381, %v7747
    %v8447 = vsel %vm8396, %v8382, %v7749
    %v8448 = vsel %vm8396, %v8383, %v7751
    %v8449 = vsel %vm8396, %v8384, %v7753
    %v8450 = vsel %vm8396, %v8385, %v7755
    %v8451 = vsel %vm8396, %v8386, %v7757
    %v8452 = vsel %vm8396, %v8387, %v7759
    %v8453 = vsel %vm8396, %v8388, %v7761
    %v8454 = vsel %vm8396, %v8389, %v7763
    %v8455 = vsel %vm8396, %v8390, %v7765
    %v8456 = vsel %vm8396, %v8391, %v7767
    %v8457 = vsel %vm8396, %v8392, %v7769
    %v8458 = vsel %vm8396, %v8393, %v7771
    %v8459 = vsel %vm8396, %v8394, %v7711
    %v8460 = vsel %vm8396, %v8395, %v7711
    %vm8461 = vcmask 523264
    %v8462 = vsel %vm8461, %v8397, %v7834
    %v8463 = vsel %vm8461, %v8398, %v7836
    %v8464 = vsel %vm8461, %v8399, %v7838
    %v8465 = vsel %vm8461, %v8400, %v7840
    %v8466 = vsel %vm8461, %v8401, %v7842
    %v8467 = vsel %vm8461, %v8402, %v7844
    %v8468 = vsel %vm8461, %v8403, %v7846
    %v8469 = vsel %vm8461, %v8404, %v7848
    %v8470 = vsel %vm8461, %v8405, %v7850
    %v8471 = vsel %vm8461, %v8406, %v7852
    %v8472 = vsel %vm8461, %v8407, %v7854
    %v8473 = vsel %vm8461, %v8408, %v7856
    %v8474 = vsel %vm8461, %v8409, %v7858
    %v8475 = vsel %vm8461, %v8410, %v7860
    %v8476 = vsel %vm8461, %v8411, %v7862
    %v8477 = vsel %vm8461, %v8412, %v7864
    %v8478 = vsel %vm8461, %v8413, %v7866
    %v8479 = vsel %vm8461, %v8414, %v7868
    %v8480 = vsel %vm8461, %v8415, %v7870
    %v8481 = vsel %vm8461, %v8416, %v7872
    %v8482 = vsel %vm8461, %v8417, %v7874
    %v8483 = vsel %vm8461, %v8418, %v7876
    %v8484 = vsel %vm8461, %v8419, %v7878
    %v8485 = vsel %vm8461, %v8420, %v7880
    %v8486 = vsel %vm8461, %v8421, %v7882
    %v8487 = vsel %vm8461, %v8422, %v7884
    %v8488 = vsel %vm8461, %v8423, %v7886
    %v8489 = vsel %vm8461, %v8424, %v7888
    %v8490 = vsel %vm8461, %v8425, %v7890
    %v8491 = vsel %vm8461, %v8426, %v7892
    %v8492 = vsel %vm8461, %v8427, %v7894
    %v8493 = vsel %vm8461, %v8428, %v7894
    %v8494 = vsel %vm8461, %v8429, %v7896
    %v8495 = vsel %vm8461, %v8430, %v7898
    %v8496 = vsel %vm8461, %v8431, %v7900
    %v8497 = vsel %vm8461, %v8432, %v7902
    %v8498 = vsel %vm8461, %v8433, %v7904
    %v8499 = vsel %vm8461, %v8434, %v7906
    %v8500 = vsel %vm8461, %v8435, %v7908
    %v8501 = vsel %vm8461, %v8436, %v7910
    %v8502 = vsel %vm8461, %v8437, %v7912
    %v8503 = vsel %vm8461, %v8438, %v7914
    %v8504 = vsel %vm8461, %v8439, %v7916
    %v8505 = vsel %vm8461, %v8440, %v7918
    %v8506 = vsel %vm8461, %v8441, %v7920
    %v8507 = vsel %vm8461, %v8442, %v7922
    %v8508 = vsel %vm8461, %v8443, %v7924
    %v8509 = vsel %vm8461, %v8444, %v7926
    %v8510 = vsel %vm8461, %v8445, %v7928
    %v8511 = vsel %vm8461, %v8446, %v7930
    %v8512 = vsel %vm8461, %v8447, %v7932
    %v8513 = vsel %vm8461, %v8448, %v7934
    %v8514 = vsel %vm8461, %v8449, %v7936
    %v8515 = vsel %vm8461, %v8450, %v7938
    %v8516 = vsel %vm8461, %v8451, %v7940
    %v8517 = vsel %vm8461, %v8452, %v7942
    %v8518 = vsel %vm8461, %v8453, %v7944
    %v8519 = vsel %vm8461, %v8454, %v7946
    %v8520 = vsel %vm8461, %v8455, %v7948
    %v8521 = vsel %vm8461, %v8456, %v7950
    %v8522 = vsel %vm8461, %v8457, %v7952
    %v8523 = vsel %vm8461, %v8458, %v7954
    %v8524 = vsel %vm8461, %v8459, %v7894
    %v8525 = vsel %vm8461, %v8460, %v7894
    %v8526 = vld [vmem:[%s4] sm:$0xff]
    %v8527 = vld [vmem:[%s4 + $0x8] sm:$0xff]
    %v8528 = vld [vmem:[%s4 + $0x10] sm:$0xff]
    %v8529 = vld [vmem:[%s4 + $0x18] sm:$0xff]
    %v8530 = vld [vmem:[%s4 + $0x20] sm:$0xff]
    %v8531 = vld [vmem:[%s4 + $0x28] sm:$0xff]
    %v8532 = vld [vmem:[%s4 + $0x30] sm:$0xff]
    %v8533 = vld [vmem:[%s4 + $0x38] sm:$0xff]
    %v8534 = vld [vmem:[%s4 + $0x40] sm:$0xff]
    %vm8535 = vcmask 588800
    %v8537 = vsel %vm8535, %v8462, 0
    %v8540 = vsel %vm8535, %v8463, 0
    %v8543 = vsel %vm8535, %v8464, 0
    %v8546 = vsel %vm8535, %v8465, 0
    %v8549 = vsel %vm8535, %v8466, 0
    %v8552 = vsel %vm8535, %v8467, 0
    %v8555 = vsel %vm8535, %v8468, 0
    %v8558 = vsel %vm8535, %v8469, 0
    %v8561 = vsel %vm8535, %v8470, 0
    %v8564 = vsel %vm8535, %v8471, 0
    %v8567 = vsel %vm8535, %v8472, 0
    %v8570 = vsel %vm8535, %v8473, 0
    %v8573 = vsel %vm8535, %v8474, 0
    %v8576 = vsel %vm8535, %v8475, 0
    %v8579 = vsel %vm8535, %v8476, 0
    %v8582 = vsel %vm8535, %v8477, 0
    %v8585 = vsel %vm8535, %v8478, 0
    %v8588 = vsel %vm8535, %v8479, 0
    %v8591 = vsel %vm8535, %v8480, 0
    %v8594 = vsel %vm8535, %v8481, 0
    %v8597 = vsel %vm8535, %v8482, 0
    %v8600 = vsel %vm8535, %v8483, 0
    %v8603 = vsel %vm8535, %v8484, 0
    %v8606 = vsel %vm8535, %v8485, 0
    %v8609 = vsel %vm8535, %v8486, 0
    %v8612 = vsel %vm8535, %v8487, 0
    %v8615 = vsel %vm8535, %v8488, 0
    %v8618 = vsel %vm8535, %v8489, 0
    %v8621 = vsel %vm8535, %v8490, 0
    %v8624 = vsel %vm8535, %v8491, 0
    %v8627 = vsel %vm8535, %v8492, 0
    %v8630 = vsel %vm8535, %v8493, 0
    %v8633 = vsel %vm8535, %v8494, 0
    %v8636 = vsel %vm8535, %v8495, 0
    %v8639 = vsel %vm8535, %v8496, 0
    %v8642 = vsel %vm8535, %v8497, 0
    %v8645 = vsel %vm8535, %v8498, 0
    %v8648 = vsel %vm8535, %v8499, 0
    %v8651 = vsel %vm8535, %v8500, 0
    %v8654 = vsel %vm8535, %v8501, 0
    %v8657 = vsel %vm8535, %v8502, 0
    %v8660 = vsel %vm8535, %v8503, 0
    %v8663 = vsel %vm8535, %v8504, 0
    %v8666 = vsel %vm8535, %v8505, 0
    %v8669 = vsel %vm8535, %v8506, 0
    %v8672 = vsel %vm8535, %v8507, 0
    %v8675 = vsel %vm8535, %v8508, 0
    %v8678 = vsel %vm8535, %v8509, 0
    %v8681 = vsel %vm8535, %v8510, 0
    %v8684 = vsel %vm8535, %v8511, 0
    %v8687 = vsel %vm8535, %v8512, 0
    %v8690 = vsel %vm8535, %v8513, 0
    %v8693 = vsel %vm8535, %v8514, 0
    %v8696 = vsel %vm8535, %v8515, 0
    %v8699 = vsel %vm8535, %v8516, 0
    %v8702 = vsel %vm8535, %v8517, 0
    %v8705 = vsel %vm8535, %v8518, 0
    %v8708 = vsel %vm8535, %v8519, 0
    %v8711 = vsel %vm8535, %v8520, 0
    %v8714 = vsel %vm8535, %v8521, 0
    %v8717 = vsel %vm8535, %v8522, 0
    %v8720 = vsel %vm8535, %v8523, 0
    %v8723 = vsel %vm8535, %v8524, 0
    %v8726 = vsel %vm8535, %v8525, 0
    %8728 = vmatpush.msra.mxu0 0.0
    %8729 = vmatpush.msra.mxu0 0.0
    %8730 = vmatpush.msra.mxu0 0.0
    %8731 = vmatpush.msra.mxu0 0.0
    %8732 = vmatpush.msra.mxu0 0.0
    %8733 = vmatpush.msra.mxu0 0.0
    %8734 = vmatpush.msra.mxu0 0.0
    %8735 = vmatpush.msra.mxu0 %v8534
    %8736 = vmatpush.msra.mxu0 %v8533
    %8737 = vmatpush.msra.mxu0 %v8532
    %8738 = vmatpush.msra.mxu0 %v8531
    %8739 = vmatpush.msra.mxu0 %v8530
    %8740 = vmatpush.msra.mxu0 %v8529
    %8741 = vmatpush.msra.mxu0 %v8528
    %8742 = vmatpush.msra.mxu0 %v8527
    %8743 = vmatpush.msra.mxu0 %v8526
    %8744 = vmatmul.f32.gmra.mxu0 %v8537
    %v8745 = vpop.f32.mrf.mxu0
    %v8746 = vadd.f32 0.0, %v8745
    %8747 = vmatmul.f32.gmra.mxu0 %v8540
    %v8748 = vpop.f32.mrf.mxu0
    %v8749 = vadd.f32 0.0, %v8748
    %8750 = vmatmul.f32.gmra.mxu0 %v8543
    %v8751 = vpop.f32.mrf.mxu0
    %v8752 = vadd.f32 0.0, %v8751
    %8753 = vmatmul.f32.gmra.mxu0 %v8546
    %v8754 = vpop.f32.mrf.mxu0
    %v8755 = vadd.f32 0.0, %v8754
    %8756 = vmatmul.f32.gmra.mxu0 %v8549
    %v8757 = vpop.f32.mrf.mxu0
    %v8758 = vadd.f32 0.0, %v8757
    %8759 = vmatmul.f32.gmra.mxu0 %v8552
    %v8760 = vpop.f32.mrf.mxu0
    %v8761 = vadd.f32 0.0, %v8760
    %8762 = vmatmul.f32.gmra.mxu0 %v8555
    %v8763 = vpop.f32.mrf.mxu0
    %v8764 = vadd.f32 0.0, %v8763
    %8765 = vmatmul.f32.gmra.mxu0 %v8558
    %v8766 = vpop.f32.mrf.mxu0
    %v8767 = vadd.f32 0.0, %v8766
    %8768 = vmatmul.f32.gmra.mxu0 %v8561
    %v8769 = vpop.f32.mrf.mxu0
    %v8770 = vadd.f32 0.0, %v8769
    %8771 = vmatmul.f32.gmra.mxu0 %v8564
    %v8772 = vpop.f32.mrf.mxu0
    %v8773 = vadd.f32 0.0, %v8772
    %8774 = vmatmul.f32.gmra.mxu0 %v8567
    %v8775 = vpop.f32.mrf.mxu0
    %v8776 = vadd.f32 0.0, %v8775
    %8777 = vmatmul.f32.gmra.mxu0 %v8570
    %v8778 = vpop.f32.mrf.mxu0
    %v8779 = vadd.f32 0.0, %v8778
    %8780 = vmatmul.f32.gmra.mxu0 %v8573
    %v8781 = vpop.f32.mrf.mxu0
    %v8782 = vadd.f32 0.0, %v8781
    %8783 = vmatmul.f32.gmra.mxu0 %v8576
    %v8784 = vpop.f32.mrf.mxu0
    %v8785 = vadd.f32 0.0, %v8784
    %8786 = vmatmul.f32.gmra.mxu0 %v8579
    %v8787 = vpop.f32.mrf.mxu0
    %v8788 = vadd.f32 0.0, %v8787
    %8789 = vmatmul.f32.gmra.mxu0 %v8582
    %v8790 = vpop.f32.mrf.mxu0
    %v8791 = vadd.f32 0.0, %v8790
    %8792 = vmatmul.f32.gmra.mxu0 %v8585
    %v8793 = vpop.f32.mrf.mxu0
    %v8794 = vadd.f32 0.0, %v8793
    %8795 = vmatmul.f32.gmra.mxu0 %v8588
    %v8796 = vpop.f32.mrf.mxu0
    %v8797 = vadd.f32 0.0, %v8796
    %8798 = vmatmul.f32.gmra.mxu0 %v8591
    %v8799 = vpop.f32.mrf.mxu0
    %v8800 = vadd.f32 0.0, %v8799
    %8801 = vmatmul.f32.gmra.mxu0 %v8594
    %v8802 = vpop.f32.mrf.mxu0
    %v8803 = vadd.f32 0.0, %v8802
    %8804 = vmatmul.f32.gmra.mxu0 %v8597
    %v8805 = vpop.f32.mrf.mxu0
    %v8806 = vadd.f32 0.0, %v8805
    %8807 = vmatmul.f32.gmra.mxu0 %v8600
    %v8808 = vpop.f32.mrf.mxu0
    %v8809 = vadd.f32 0.0, %v8808
    %8810 = vmatmul.f32.gmra.mxu0 %v8603
    %v8811 = vpop.f32.mrf.mxu0
    %v8812 = vadd.f32 0.0, %v8811
    %8813 = vmatmul.f32.gmra.mxu0 %v8606
    %v8814 = vpop.f32.mrf.mxu0
    %v8815 = vadd.f32 0.0, %v8814
    %8816 = vmatmul.f32.gmra.mxu0 %v8609
    %v8817 = vpop.f32.mrf.mxu0
    %v8818 = vadd.f32 0.0, %v8817
    %8819 = vmatmul.f32.gmra.mxu0 %v8612
    %v8820 = vpop.f32.mrf.mxu0
    %v8821 = vadd.f32 0.0, %v8820
    %8822 = vmatmul.f32.gmra.mxu0 %v8615
    %v8823 = vpop.f32.mrf.mxu0
    %v8824 = vadd.f32 0.0, %v8823
    %8825 = vmatmul.f32.gmra.mxu0 %v8618
    %v8826 = vpop.f32.mrf.mxu0
    %v8827 = vadd.f32 0.0, %v8826
    %8828 = vmatmul.f32.gmra.mxu0 %v8621
    %v8829 = vpop.f32.mrf.mxu0
    %v8830 = vadd.f32 0.0, %v8829
    %8831 = vmatmul.f32.gmra.mxu0 %v8624
    %v8832 = vpop.f32.mrf.mxu0
    %v8833 = vadd.f32 0.0, %v8832
    %8834 = vmatmul.f32.gmra.mxu0 %v8627
    %v8835 = vpop.f32.mrf.mxu0
    %v8836 = vadd.f32 0.0, %v8835
    %8837 = vmatmul.f32.gmra.mxu0 %v8630
    %v8838 = vpop.f32.mrf.mxu0
    %v8839 = vadd.f32 0.0, %v8838
    %8840 = vmatmul.f32.gmra.mxu0 %v8633
    %v8841 = vpop.f32.mrf.mxu0
    %v8842 = vadd.f32 0.0, %v8841
    %8843 = vmatmul.f32.gmra.mxu0 %v8636
    %v8844 = vpop.f32.mrf.mxu0
    %v8845 = vadd.f32 0.0, %v8844
    %8846 = vmatmul.f32.gmra.mxu0 %v8639
    %v8847 = vpop.f32.mrf.mxu0
    %v8848 = vadd.f32 0.0, %v8847
    %8849 = vmatmul.f32.gmra.mxu0 %v8642
    %v8850 = vpop.f32.mrf.mxu0
    %v8851 = vadd.f32 0.0, %v8850
    %8852 = vmatmul.f32.gmra.mxu0 %v8645
    %v8853 = vpop.f32.mrf.mxu0
    %v8854 = vadd.f32 0.0, %v8853
    %8855 = vmatmul.f32.gmra.mxu0 %v8648
    %v8856 = vpop.f32.mrf.mxu0
    %v8857 = vadd.f32 0.0, %v8856
    %8858 = vmatmul.f32.gmra.mxu0 %v8651
    %v8859 = vpop.f32.mrf.mxu0
    %v8860 = vadd.f32 0.0, %v8859
    %8861 = vmatmul.f32.gmra.mxu0 %v8654
    %v8862 = vpop.f32.mrf.mxu0
    %v8863 = vadd.f32 0.0, %v8862
    %8864 = vmatmul.f32.gmra.mxu0 %v8657
    %v8865 = vpop.f32.mrf.mxu0
    %v8866 = vadd.f32 0.0, %v8865
    %8867 = vmatmul.f32.gmra.mxu0 %v8660
    %v8868 = vpop.f32.mrf.mxu0
    %v8869 = vadd.f32 0.0, %v8868
    %8870 = vmatmul.f32.gmra.mxu0 %v8663
    %v8871 = vpop.f32.mrf.mxu0
    %v8872 = vadd.f32 0.0, %v8871
    %8873 = vmatmul.f32.gmra.mxu0 %v8666
    %v8874 = vpop.f32.mrf.mxu0
    %v8875 = vadd.f32 0.0, %v8874
    %8876 = vmatmul.f32.gmra.mxu0 %v8669
    %v8877 = vpop.f32.mrf.mxu0
    %v8878 = vadd.f32 0.0, %v8877
    %8879 = vmatmul.f32.gmra.mxu0 %v8672
    %v8880 = vpop.f32.mrf.mxu0
    %v8881 = vadd.f32 0.0, %v8880
    %8882 = vmatmul.f32.gmra.mxu0 %v8675
    %v8883 = vpop.f32.mrf.mxu0
    %v8884 = vadd.f32 0.0, %v8883
    %8885 = vmatmul.f32.gmra.mxu0 %v8678
    %v8886 = vpop.f32.mrf.mxu0
    %v8887 = vadd.f32 0.0, %v8886
    %8888 = vmatmul.f32.gmra.mxu0 %v8681
    %v8889 = vpop.f32.mrf.mxu0
    %v8890 = vadd.f32 0.0, %v8889
    %8891 = vmatmul.f32.gmra.mxu0 %v8684
    %v8892 = vpop.f32.mrf.mxu0
    %v8893 = vadd.f32 0.0, %v8892
    %8894 = vmatmul.f32.gmra.mxu0 %v8687
    %v8895 = vpop.f32.mrf.mxu0
    %v8896 = vadd.f32 0.0, %v8895
    %8897 = vmatmul.f32.gmra.mxu0 %v8690
    %v8898 = vpop.f32.mrf.mxu0
    %v8899 = vadd.f32 0.0, %v8898
    %8900 = vmatmul.f32.gmra.mxu0 %v8693
    %v8901 = vpop.f32.mrf.mxu0
    %v8902 = vadd.f32 0.0, %v8901
    %8903 = vmatmul.f32.gmra.mxu0 %v8696
    %v8904 = vpop.f32.mrf.mxu0
    %v8905 = vadd.f32 0.0, %v8904
    %8906 = vmatmul.f32.gmra.mxu0 %v8699
    %v8907 = vpop.f32.mrf.mxu0
    %v8908 = vadd.f32 0.0, %v8907
    %8909 = vmatmul.f32.gmra.mxu0 %v8702
    %v8910 = vpop.f32.mrf.mxu0
    %v8911 = vadd.f32 0.0, %v8910
    %8912 = vmatmul.f32.gmra.mxu0 %v8705
    %v8913 = vpop.f32.mrf.mxu0
    %v8914 = vadd.f32 0.0, %v8913
    %8915 = vmatmul.f32.gmra.mxu0 %v8708
    %v8916 = vpop.f32.mrf.mxu0
    %v8917 = vadd.f32 0.0, %v8916
    %8918 = vmatmul.f32.gmra.mxu0 %v8711
    %v8919 = vpop.f32.mrf.mxu0
    %v8920 = vadd.f32 0.0, %v8919
    %8921 = vmatmul.f32.gmra.mxu0 %v8714
    %v8922 = vpop.f32.mrf.mxu0
    %v8923 = vadd.f32 0.0, %v8922
    %8924 = vmatmul.f32.gmra.mxu0 %v8717
    %v8925 = vpop.f32.mrf.mxu0
    %v8926 = vadd.f32 0.0, %v8925
    %8927 = vmatmul.f32.gmra.mxu0 %v8720
    %v8928 = vpop.f32.mrf.mxu0
    %v8929 = vadd.f32 0.0, %v8928
    %8930 = vmatmul.f32.gmra.mxu0 %v8723
    %v8931 = vpop.f32.mrf.mxu0
    %v8932 = vadd.f32 0.0, %v8931
    %8933 = vmatmul.f32.gmra.mxu0 %v8726
    %v8934 = vpop.f32.mrf.mxu0
    %v8935 = vadd.f32 0.0, %v8934
    %8936 = vdwg.mxu0
    %8937 = vxpose.xlu0.b32.start [1/16] %v8746, 128
    %8938 = vxpose.xlu0.b32.cont [2/16] %v8749, 128
    %8939 = vxpose.xlu0.b32.cont [3/16] %v8752, 128
    %8940 = vxpose.xlu0.b32.cont [4/16] %v8755, 128
    %8941 = vxpose.xlu0.b32.cont [5/16] %v8758, 128
    %8942 = vxpose.xlu0.b32.cont [6/16] %v8761, 128
    %8943 = vxpose.xlu0.b32.cont [7/16] %v8764, 128
    %8944 = vxpose.xlu0.b32.cont [8/16] %v8767, 128
    %8945 = vxpose.xlu0.b32.cont [9/16] %v8770, 128
    %8946 = vxpose.xlu0.b32.cont [10/16] %v8773, 128
    %8947 = vxpose.xlu0.b32.cont [11/16] %v8776, 128
    %8948 = vxpose.xlu0.b32.cont [12/16] %v8779, 128
    %8949 = vxpose.xlu0.b32.cont [13/16] %v8782, 128
    %8950 = vxpose.xlu0.b32.cont [14/16] %v8785, 128
    %8951 = vxpose.xlu0.b32.cont [15/16] %v8788, 128
    %8952 = vxpose.xlu0.b32.end [16/16] %v8791, 128
    %v8953 = vpop.trf.xlu0
    %v8954 = vpop.trf.xlu0
    %v8955 = vpop.trf.xlu0
    %v8956 = vpop.trf.xlu0
    %v8957 = vpop.trf.xlu0
    %v8958 = vpop.trf.xlu0
    %v8959 = vpop.trf.xlu0
    %v8960 = vpop.trf.xlu0
    %v8961 = vpop.trf.xlu0
    %v8962 = vpop.trf.xlu0
    %v8963 = vpop.trf.xlu0
    %v8964 = vpop.trf.xlu0
    %v8965 = vpop.trf.xlu0
    %v8966 = vpop.trf.xlu0
    %v8967 = vpop.trf.xlu0
    %v8968 = vpop.trf.xlu0
    %8969 = vxpose.xlu0.b32.start [1/16] %v8794, 128
    %8970 = vxpose.xlu0.b32.cont [2/16] %v8797, 128
    %8971 = vxpose.xlu0.b32.cont [3/16] %v8800, 128
    %8972 = vxpose.xlu0.b32.cont [4/16] %v8803, 128
    %8973 = vxpose.xlu0.b32.cont [5/16] %v8806, 128
    %8974 = vxpose.xlu0.b32.cont [6/16] %v8809, 128
    %8975 = vxpose.xlu0.b32.cont [7/16] %v8812, 128
    %8976 = vxpose.xlu0.b32.cont [8/16] %v8815, 128
    %8977 = vxpose.xlu0.b32.cont [9/16] %v8818, 128
    %8978 = vxpose.xlu0.b32.cont [10/16] %v8821, 128
    %8979 = vxpose.xlu0.b32.cont [11/16] %v8824, 128
    %8980 = vxpose.xlu0.b32.cont [12/16] %v8827, 128
    %8981 = vxpose.xlu0.b32.cont [13/16] %v8830, 128
    %8982 = vxpose.xlu0.b32.cont [14/16] %v8833, 128
    %8983 = vxpose.xlu0.b32.cont [15/16] %v8836, 128
    %8984 = vxpose.xlu0.b32.end [16/16] %v8839, 128
    %v8985 = vpop.trf.xlu0
    %v8986 = vpop.trf.xlu0
    %v8987 = vpop.trf.xlu0
    %v8988 = vpop.trf.xlu0
    %v8989 = vpop.trf.xlu0
    %v8990 = vpop.trf.xlu0
    %v8991 = vpop.trf.xlu0
    %v8992 = vpop.trf.xlu0
    %v8993 = vpop.trf.xlu0
    %v8994 = vpop.trf.xlu0
    %v8995 = vpop.trf.xlu0
    %v8996 = vpop.trf.xlu0
    %v8997 = vpop.trf.xlu0
    %v8998 = vpop.trf.xlu0
    %v8999 = vpop.trf.xlu0
    %v9000 = vpop.trf.xlu0
    %9001 = vxpose.xlu0.b32.start [1/16] %v8842, 128
    %9002 = vxpose.xlu0.b32.cont [2/16] %v8845, 128
    %9003 = vxpose.xlu0.b32.cont [3/16] %v8848, 128
    %9004 = vxpose.xlu0.b32.cont [4/16] %v8851, 128
    %9005 = vxpose.xlu0.b32.cont [5/16] %v8854, 128
    %9006 = vxpose.xlu0.b32.cont [6/16] %v8857, 128
    %9007 = vxpose.xlu0.b32.cont [7/16] %v8860, 128
    %9008 = vxpose.xlu0.b32.cont [8/16] %v8863, 128
    %9009 = vxpose.xlu0.b32.cont [9/16] %v8866, 128
    %9010 = vxpose.xlu0.b32.cont [10/16] %v8869, 128
    %9011 = vxpose.xlu0.b32.cont [11/16] %v8872, 128
    %9012 = vxpose.xlu0.b32.cont [12/16] %v8875, 128
    %9013 = vxpose.xlu0.b32.cont [13/16] %v8878, 128
    %9014 = vxpose.xlu0.b32.cont [14/16] %v8881, 128
    %9015 = vxpose.xlu0.b32.cont [15/16] %v8884, 128
    %9016 = vxpose.xlu0.b32.end [16/16] %v8887, 128
    %v9017 = vpop.trf.xlu0
    %v9018 = vpop.trf.xlu0
    %v9019 = vpop.trf.xlu0
    %v9020 = vpop.trf.xlu0
    %v9021 = vpop.trf.xlu0
    %v9022 = vpop.trf.xlu0
    %v9023 = vpop.trf.xlu0
    %v9024 = vpop.trf.xlu0
    %v9025 = vpop.trf.xlu0
    %v9026 = vpop.trf.xlu0
    %v9027 = vpop.trf.xlu0
    %v9028 = vpop.trf.xlu0
    %v9029 = vpop.trf.xlu0
    %v9030 = vpop.trf.xlu0
    %v9031 = vpop.trf.xlu0
    %v9032 = vpop.trf.xlu0
    %9033 = vxpose.xlu0.b32.start [1/16] %v8890, 128
    %9034 = vxpose.xlu0.b32.cont [2/16] %v8893, 128
    %9035 = vxpose.xlu0.b32.cont [3/16] %v8896, 128
    %9036 = vxpose.xlu0.b32.cont [4/16] %v8899, 128
    %9037 = vxpose.xlu0.b32.cont [5/16] %v8902, 128
    %9038 = vxpose.xlu0.b32.cont [6/16] %v8905, 128
    %9039 = vxpose.xlu0.b32.cont [7/16] %v8908, 128
    %9040 = vxpose.xlu0.b32.cont [8/16] %v8911, 128
    %9041 = vxpose.xlu0.b32.cont [9/16] %v8914, 128
    %9042 = vxpose.xlu0.b32.cont [10/16] %v8917, 128
    %9043 = vxpose.xlu0.b32.cont [11/16] %v8920, 128
    %9044 = vxpose.xlu0.b32.cont [12/16] %v8923, 128
    %9045 = vxpose.xlu0.b32.cont [13/16] %v8926, 128
    %9046 = vxpose.xlu0.b32.cont [14/16] %v8929, 128
    %9047 = vxpose.xlu0.b32.cont [15/16] %v8932, 128
    %9048 = vxpose.xlu0.b32.end [16/16] %v8935, 128
    %v9049 = vpop.trf.xlu0
    %v9050 = vpop.trf.xlu0
    %v9051 = vpop.trf.xlu0
    %v9052 = vpop.trf.xlu0
    %v9053 = vpop.trf.xlu0
    %v9054 = vpop.trf.xlu0
    %v9055 = vpop.trf.xlu0
    %v9056 = vpop.trf.xlu0
    %v9057 = vpop.trf.xlu0
    %v9058 = vpop.trf.xlu0
    %v9059 = vpop.trf.xlu0
    %v9060 = vpop.trf.xlu0
    %v9061 = vpop.trf.xlu0
    %v9062 = vpop.trf.xlu0
    %v9063 = vpop.trf.xlu0
    %v9064 = vpop.trf.xlu0
    %v9065 = vadd.f32 %v8953, %v8985
    %v9066 = vadd.f32 %v9065, %v9017
    %v9067 = vadd.f32 %v9066, %v9049
    %9068 = vadd.xlane.f32.xlu0 %v9067
    %v9069 = vpop.xlane.xlu0 %9068
    %v9070 = vmul.f32 %v8953, %v8953
    %v9071 = vmul.f32 %v8985, %v8985
    %v9072 = vmul.f32 %v9017, %v9017
    %v9073 = vmul.f32 %v9049, %v9049
    %v9074 = vadd.f32 %v9070, %v9071
    %v9075 = vadd.f32 %v9074, %v9072
    %v9076 = vadd.f32 %v9075, %v9073
    %9077 = vadd.xlane.f32.xlu0 %v9076
    %v9078 = vpop.xlane.xlu0 %9077
    %v9079 = vmul.f32 %v9069, 0.001953125
    %v9080 = vmul.f32 %v9078, 0.001953125
    %v9081 = vmul.f32 %v9079, %v9079
    %v9082 = vsub.f32 %v9080, %v9081
    %v9083 = vmax.f32 %v9082, 0.0
    %v9084 = vld [vmem:[%s5] sm:$0xff]
    %v9085 = vadd.f32 %v9083, 1e-05
    %v9086 = vrsqrt.pop %v9085
    %v9087 = vmul.f32 %v9086, %v9085
    %v9088 = vmul.f32 %v9087, %v9086
    %v9089 = vmul.f32 0.5, %v9088
    %v9090 = vsub.f32 1.5, %v9089
    %v9091 = vmul.f32 %v9086, %v9090
    %vm9092 = vweird.f32 %v9085
    %vm9093 = vweird.f32 %v9086
    %vm9094 = vmor %vm9092, %vm9093
    %v9095 = vsel %vm9094, %v9086, %v9091
    %v9096 = vmul.f32 %v9084, %v9095
    %v9097 = vld [vmem:[%s6] sm:$0xff]
    %v9098 = vmul.f32 %v9079, %v9096
    %v9099 = vsub.f32 %v9097, %v9098
    %9101 = vset.pattern.permute.xlu0 0
    %9102 = vperm.xlu0 %9101, %v9096
    %v9103 = vpop.permute.xlu0 %9102
    %v9105 = vmul.f32 %v8953, %v9103
    %v9106 = vmul.f32 %v8985, %v9103
    %v9107 = vmul.f32 %v9017, %v9103
    %v9108 = vmul.f32 %v9049, %v9103
    %9110 = vset.pattern.permute.xlu0 0
    %9111 = vperm.xlu0 %9110, %v9099
    %v9112 = vpop.permute.xlu0 %9111
    %v9114 = vadd.f32 %v9105, %v9112
    %v9115 = vadd.f32 %v9106, %v9112
    %v9116 = vadd.f32 %v9107, %v9112
    %v9117 = vadd.f32 %v9108, %v9112
    %v9118 = vmax.f32 %v9114, 0.0
    %v9119 = vmax.f32 %v9115, 0.0
    %v9120 = vmax.f32 %v9116, 0.0
    %v9121 = vmax.f32 %v9117, 0.0
    %9122 = vst [vmem:[#allocation2] sm:$0xff] %v9118
    %9123 = vst [vmem:[#allocation2 + $0x8] sm:$0xff] %v9119
    %9124 = vst [vmem:[#allocation2 + $0x10] sm:$0xff] %v9120
    %9125 = vst [vmem:[#allocation2 + $0x18] sm:$0xff] %v9121
    // Predicated region
    $region30: #{tpu_custom_call.1} parent=1 // pred_check
      _
    $region31: #{tpu_custom_call.1} parent=1 // pred_check_branch
      %9127 = sbr.rel (0) target = $region33
    $region32: #{tpu_custom_call.1} parent=1 // pred_region
      %9129 = vsyncadd [#allocation3], 0
      %s9131 = sshll.u32 [#allocation2], 4
      %s9132 = int_to_ptr.vmem [resolvable:$true] %s9131
      %s9133 = sshll.u32 %s7, 4
      %s9134 = int_to_ptr.hbm [resolvable:$true] %s9133
      %9136 = dma.vmem_to_hbm [thread:$0]  %s9132, 512, %s9134, [#allocation3]
    $region33: #{tpu_custom_call.1} parent=1 // pred_fallthru
      _
    // Predicated region
    $region34: #{tpu_custom_call.1} parent=1 // pred_check
      _
    $region35: #{tpu_custom_call.1} parent=1 // pred_check_branch
      %9138 = sbr.rel (0) target = $region37
    $region36: #{tpu_custom_call.1} parent=1 // pred_region
      %9140 = dma.done [#allocation3], 512
    $region37: #{tpu_custom_call.1} parent=1 // pred_fallthru
      _
    %9141 = vsyncpa [#allocation3], 1

</llo_original>
